<compile_context>
chip_gen: v7x
topology: tpu7x:2x2x1
jax: 0.10.0
libtpu: 0.0.40
codegen_flags: <defaults>
</compile_context>

<pallas_src>
import functools

import numpy as np

import jax
import jax.numpy as jnp
from jax.experimental import pallas as pl
from jax.experimental.pallas import tpu as pltpu


_SENTINEL = 2 ** 30  # "no column found yet" marker for first-index tracking


def _round_up(x, m):
  return ((x + m - 1) // m) * m


def _margin_loss_kernel(
    x_row_ref, xt_col_ref, tcol_ref, trow_ref, beta_ref,      # inputs
    loss_ref,                                                  # output
    pos_max_ref, pos_sum_ref, pos_fidx_ref, pos_fval_ref,      # scratch
    neg_max_ref, neg_sum_ref, neg_fidx_ref, neg_fval_ref,      # scratch
    *, alpha, n_valid, block_rows, block_cols):
  i = pl.program_id(0)
  j = pl.program_id(1)
  num_j = pl.num_programs(1)

  beta = beta_ref[0, 0]

  # (tm, K) @ (K, tn) on the MXU; RHS is pre-transposed in the wrapper so no
  # per-tile relayout is needed.  bf16 inputs, f32 accumulation.
  sim = jax.lax.dot_general(
      x_row_ref[...], xt_col_ref[...],
      (((1,), (0,)), ((), ())),
      preferred_element_type=jnp.float32,
  )

  # One shared (sim - beta) pass; relu(alpha+beta-sim) / relu(sim-beta+alpha).
  d = sim - beta
  pos_all = jnp.maximum(alpha - d, 0.0)
  neg_all = jnp.maximum(alpha + d, 0.0)

  # Global column indices + validity of (possibly padded) columns.
  col_ids = j * block_cols + jax.lax.broadcasted_iota(
      jnp.int32, (block_rows, block_cols), 1)
  valid_col = col_ids < n_valid
  eq = tcol_ref[...] == trow_ref[...]                    # (tm,1)==(1,tn)
  pos_mask = jnp.logical_and(eq, valid_col)
  neg_mask = jnp.logical_and(jnp.logical_not(eq), valid_col)

  pos_v = jnp.where(pos_mask, pos_all, 0.0)
  neg_v = jnp.where(neg_mask, neg_all, 0.0)

  sentinel = jnp.int32(_SENTINEL)

  @pl.when(j == 0)
  def _first_column_tile():
    # Fused init: write the first column tile's contributions directly
    # (no separate zero/sentinel pass, no j==0 loads).
    pos_max_ref[...] = pos_v
    pos_sum_ref[...] = pos_v
    pos_fidx_ref[...] = jnp.where(pos_mask, col_ids, sentinel)
    pos_fval_ref[...] = pos_v
    neg_max_ref[...] = neg_v
    neg_sum_ref[...] = neg_v
    neg_fidx_ref[...] = jnp.where(neg_mask, col_ids, sentinel)
    neg_fval_ref[...] = neg_v

  @pl.when(j > 0)
  def _accumulate():
    # Elementwise (VPU-only) accumulation across column tiles.
    pos_max_ref[...] = jnp.maximum(pos_max_ref[...], pos_v)
    pos_sum_ref[...] = pos_sum_ref[...] + pos_v
    neg_max_ref[...] = jnp.maximum(neg_max_ref[...], neg_v)
    neg_sum_ref[...] = neg_sum_ref[...] + neg_v

    # Per-lane "first column" tracking: candidates arrive in increasing global
    # index order per lane, so only a lane with no hit yet may take one.
    old_idx = pos_fidx_ref[...]
    take = jnp.logical_and(pos_mask, old_idx == sentinel)
    pos_fidx_ref[...] = jnp.where(take, col_ids, old_idx)
    pos_fval_ref[...] = jnp.where(take, pos_v, pos_fval_ref[...])

    old_idx = neg_fidx_ref[...]
    take = jnp.logical_and(neg_mask, old_idx == sentinel)
    neg_fidx_ref[...] = jnp.where(take, col_ids, old_idx)
    neg_fval_ref[...] = jnp.where(take, neg_v, neg_fval_ref[...])

  @pl.when(j == num_j - 1)
  def _finalize():
    # Single set of lane (XLU) reductions per row tile.
    pmax = jnp.max(pos_max_ref[...], axis=1, keepdims=True)
    psum = jnp.sum(pos_sum_ref[...], axis=1, keepdims=True)
    nmax = jnp.max(neg_max_ref[...], axis=1, keepdims=True)
    nsum = jnp.sum(neg_sum_ref[...], axis=1, keepdims=True)

    pidx = pos_fidx_ref[...]
    pmin = jnp.min(pidx, axis=1, keepdims=True)
    pfirst = jnp.sum(jnp.where(pidx == pmin, pos_fval_ref[...], 0.0),
                     axis=1, keepdims=True)
    nidx = neg_fidx_ref[...]
    nmin = jnp.min(nidx, axis=1, keepdims=True)
    nfirst = jnp.sum(jnp.where(nidx == nmin, neg_fval_ref[...], 0.0),
                     axis=1, keepdims=True)

    # max / (sum + 1e-5) > 0.5  <=>  2*max > sum + 1e-5  (denominator > 0).
    pos_take = (2.0 * pmax) > (psum + 1e-5)
    neg_take = (2.0 * nmax) > (nsum + 1e-5)

    loss_rows = (jnp.where(pos_take, pfirst, 0.0)
                 + jnp.where(neg_take, nfirst, 0.0))

    # Mask padded rows of the last row tile.
    row_ids = i * block_rows + jax.lax.broadcasted_iota(
        jnp.int32, (block_rows, 1), 0)
    loss_ref[...] = jnp.where(row_ids < n_valid, loss_rows, 0.0)


def modified_margin_loss(inputs, targets, beta, alpha=0.1, *,
                         block_rows=512, block_cols=256,
                         matmul_dtype=jnp.bfloat16, col_buffers=3):
  """Pallas implementation of ModifiedMarginLoss.forward.

  block_rows/block_cols default to 512x256: 128-aligned (v5e 4x128^2 MXU),
  256-aligned on the column axis (v6e/v7x 2x256^2 MXU), and block_rows large
  enough that the per-row-tile HBM re-read of the column operand is amortized.
  On v7x, keep n_pad_r/block_rows >= 2 if you want both TensorCores busy.
  """
  n, feat = inputs.shape

  # Shrink tiles for small problems, keeping 128-alignment for MXU/layout.
  block_rows = min(block_rows, _round_up(n, 128))
  block_cols = min(block_cols, _round_up(n, 128))

  # Pad rows and columns independently (< one tile of waste per axis).
  n_pad_r = _round_up(n, block_rows)
  n_pad_c = _round_up(n, block_cols)
  grid = (n_pad_r // block_rows, n_pad_c // block_cols)

  x = inputs.astype(matmul_dtype)                       # bf16 MXU inputs
  t = targets.astype(jnp.int32)

  x_rows = x if n_pad_r == n else jnp.pad(x, ((0, n_pad_r - n), (0, 0)))
  x_cols = x if n_pad_c == n else jnp.pad(x, ((0, n_pad_c - n), (0, 0)))
  x_cols_t = x_cols.T                                   # (feat, n_pad_c), K-major RHS

  t_rows = (t if n_pad_r == n
            else jnp.pad(t, (0, n_pad_r - n), constant_values=-1))
  t_cols = (t if n_pad_c == n
            else jnp.pad(t, (0, n_pad_c - n), constant_values=-1))
  tcol = t_rows.reshape(n_pad_r, 1)
  trow = t_cols.reshape(1, n_pad_c)
  beta2d = jnp.asarray(beta, jnp.float32).reshape(1, 1)

  kernel = functools.partial(
      _margin_loss_kernel, alpha=float(alpha), n_valid=n,
      block_rows=block_rows, block_cols=block_cols)

  # Only the column operand changes every inner grid step: buffer it deeper
  # than the default double buffering when there are enough column tiles.
  col_buffers = max(2, min(col_buffers, grid[1]))
  if col_buffers > 2:
    xt_spec = pl.BlockSpec((feat, block_cols), lambda i, j: (0, j),
                           pipeline_mode=pl.Buffered(col_buffers))
  else:
    xt_spec = pl.BlockSpec((feat, block_cols), lambda i, j: (0, j))

  itemsize = int(np.dtype(matmul_dtype).itemsize)
  cost = pl.CostEstimate(
      flops=2 * n_pad_r * n_pad_c * feat + 30 * n_pad_r * n_pad_c,
      transcendentals=0,
      bytes_accessed=(n_pad_r * feat * itemsize              # row operand (once)
                      + grid[0] * n_pad_c * feat * itemsize  # column operand per row tile
                      + 4 * (n_pad_r + n_pad_c)              # targets
                      + 4 * n_pad_r),                        # per-row losses
  )

  # VMEM budget: 8 f32/i32 scratch tiles + pipelined operand buffers (the
  # 1-lane-wide target/loss blocks pad to 128 lanes in VMEM).  Kept in f32/i32
  # (no bf16/i16 scratch) to preserve exact loss values and avoid packing
  # relayouts.  Cap at 64 MiB = v7x physical VMEM.
  feat_pad = _round_up(feat, 128)
  vmem_needed = (
      8 * block_rows * block_cols * 4
      + 2 * block_rows * feat_pad * itemsize
      + col_buffers * feat_pad * block_cols * itemsize
      + 4 * block_rows * 128 * 4
      + 2 * 8 * block_cols * 4)
  vmem_limit = min(max(32 * 1024 * 1024, int(vmem_needed * 1.25)),
                   64 * 1024 * 1024)

  per_row_loss = pl.pallas_call(
      kernel,
      out_shape=jax.ShapeDtypeStruct((n_pad_r, 1), jnp.float32),
      grid=grid,
      in_specs=[
          pl.BlockSpec((block_rows, feat), lambda i, j: (i, 0)),   # X row tile
          xt_spec,                                                  # X^T column tile
          pl.BlockSpec((block_rows, 1), lambda i, j: (i, 0)),       # targets (rows)
          pl.BlockSpec((1, block_cols), lambda i, j: (0, j)),       # targets (cols)
          pl.BlockSpec(memory_space=pltpu.MemorySpace.SMEM),        # beta scalar
      ],
      out_specs=pl.BlockSpec((block_rows, 1), lambda i, j: (i, 0)),
      scratch_shapes=[
          pltpu.VMEM((block_rows, block_cols), jnp.float32),  # pos running max
          pltpu.VMEM((block_rows, block_cols), jnp.float32),  # pos running sum
          pltpu.VMEM((block_rows, block_cols), jnp.int32),    # pos first col idx
          pltpu.VMEM((block_rows, block_cols), jnp.float32),  # pos first value
          pltpu.VMEM((block_rows, block_cols), jnp.float32),  # neg running max
          pltpu.VMEM((block_rows, block_cols), jnp.float32),  # neg running sum
          pltpu.VMEM((block_rows, block_cols), jnp.int32),    # neg first col idx
          pltpu.VMEM((block_rows, block_cols), jnp.float32),  # neg first value
      ],
      compiler_params=pltpu.CompilerParams(
          dimension_semantics=("parallel", "arbitrary"),
          vmem_limit_bytes=vmem_limit,
      ),
      cost_estimate=cost,
  )(x_rows, x_cols_t, tcol, trow, beta2d)

  # Tiny reduction over per-row losses; keeps the row grid axis parallel.
  return jnp.sum(per_row_loss).reshape(1)


def _reference(x, t, beta, alpha):
  # NumPy port of the PyTorch loop (sanity check only).
  x = np.asarray(x, np.float32)
  t = np.asarray(t)
  sim = x @ x.T
  loss = 0.0
  for i in range(x.shape[0]):
    pos = np.maximum(alpha + beta - sim[i][t == t[i]], 0.0)
    neg = np.maximum(sim[i][t != t[i]] - beta + alpha, 0.0)
    if pos.size and pos.max() / (pos.sum() + 1e-5) > 0.5:
      loss += pos[0]
    if neg.size and neg.max() / (neg.sum() + 1e-5) > 0.5:
      loss += neg[0]
  return np.float32(loss)


if __name__ == "__main__":
  alpha = 0.1
  beta = jnp.array([0.5], dtype=jnp.float32)   # nn.Parameter([0.5]) init

  def run_case(n, d, *, same_class=False, **kw):
    key = jax.random.PRNGKey(0)
    kx, kt = jax.random.split(key)
    x = jax.random.normal(kx, (n, d), dtype=jnp.float32)
    x = x / jnp.linalg.norm(x, axis=1, keepdims=True)
    if same_class:
      t = jnp.zeros((n,), dtype=jnp.int32)
    else:
      t = jax.random.randint(kt, (n,), 0, 64, dtype=jnp.int32)

    loss = modified_margin_loss(x, t, beta, alpha=alpha, **kw)
    loss = jax.block_until_ready(loss)

    # Reference uses the same bf16-rounded inputs the kernel feeds to the MXU.
    x_bf = np.asarray(x.astype(jnp.bfloat16).astype(jnp.float32))
    ref = _reference(x_bf, np.asarray(t), float(beta[0]), alpha)
    got = float(loss[0])
    assert abs(got - float(ref)) <= 1e-3 + 1e-3 * abs(float(ref)), \
        (n, d, kw, got, float(ref))

  # 1) defaults: tiles auto-shrunk to 256x256, single tile, padded rows/cols.
  run_case(200, 64)
  # 2) explicit 128x128 tiles: 2x2 grid, multi row/column tiles, accumulation
  #    + first-hit tracking across column tiles + padded-row masking.
  run_case(200, 64, block_rows=128, block_cols=128)
  # 3) three column tiles: exercises the triple-buffered column pipeline.
  run_case(300, 32, block_cols=128)
  # 4) all targets identical: empty negative sets (sentinel / no-hit path).
  run_case(50, 32, same_class=True)

  print("KERNEL_OK")
</pallas_src>

<mosaic_0001>
module attributes {stable_mosaic.version = 11 : i64} {
  func.func @_margin_loss_kernel(%arg0: i32, %arg1: i32, %arg2: memref<256x64xbf16, #tpu.memory_space<vmem>>, %arg3: memref<64x256xbf16, #tpu.memory_space<vmem>>, %arg4: memref<256x1xi32, #tpu.memory_space<vmem>>, %arg5: memref<1x256xi32, #tpu.memory_space<vmem>>, %arg6: memref<1x1xf32, #tpu.memory_space<smem>>, %arg7: memref<256x1xf32, #tpu.memory_space<vmem>>, %arg8: memref<256x256xf32, #tpu.memory_space<vmem>>, %arg9: memref<256x256xf32, #tpu.memory_space<vmem>>, %arg10: memref<256x256xi32, #tpu.memory_space<vmem>>, %arg11: memref<256x256xf32, #tpu.memory_space<vmem>>, %arg12: memref<256x256xf32, #tpu.memory_space<vmem>>, %arg13: memref<256x256xf32, #tpu.memory_space<vmem>>, %arg14: memref<256x256xi32, #tpu.memory_space<vmem>>, %arg15: memref<256x256xf32, #tpu.memory_space<vmem>>) attributes {dimension_semantics = [#tpu.dimension_semantics<parallel>, #tpu.dimension_semantics<arbitrary>], iteration_bounds = array<i64: 1, 1>, scalar_prefetch = 0 : i64, scratch_operands = 8 : i64, tpu.core_type = #tpu.core_type<tc>, window_params = [{transform_indices = @transform_0, window_bounds = array<i64: 256, 64>}, {transform_indices = @transform_1, window_bounds = array<i64: 64, 256>}, {transform_indices = @transform_2, window_bounds = array<i64: 256, 1>}, {transform_indices = @transform_3, window_bounds = array<i64: 1, 256>}, {transform_indices = @transform_4, window_bounds = array<i64: 1, 1>}, {transform_indices = @transform_5, window_bounds = array<i64: 256, 1>}]} {
    %c0 = arith.constant 0 : index
    %c0_0 = arith.constant 0 : index
    %0 = memref.load %arg6[%c0, %c0_0] : memref<1x1xf32, #tpu.memory_space<smem>>
    %c0_1 = arith.constant 0 : index
    %c0_2 = arith.constant 0 : index
    %1 = vector.load %arg2[%c0_1, %c0_2] : memref<256x64xbf16, #tpu.memory_space<vmem>>, vector<256x64xbf16>
    %c0_3 = arith.constant 0 : index
    %c0_4 = arith.constant 0 : index
    %2 = vector.load %arg3[%c0_3, %c0_4] : memref<64x256xbf16, #tpu.memory_space<vmem>>, vector<64x256xbf16>
    %cst = arith.constant dense<0.000000e+00> : vector<256x256xf32>
    %3 = tpu.matmul %1, %2, %cst {dimension_numbers = #tpu.dot_dimension_numbers<[1], [0], [0], [1], [0, 0, 1, 1], [], []>} : vector<256x64xbf16>, vector<64x256xbf16>, vector<256x256xf32> -> vector<256x256xf32>
    %4 = vector.broadcast %0 : f32 to vector<256x256xf32>
    %5 = arith.subf %3, %4 : vector<256x256xf32>
    %cst_5 = arith.constant 1.000000e-01 : f32
    %6 = vector.broadcast %cst_5 : f32 to vector<256x256xf32>
    %7 = arith.subf %6, %5 : vector<256x256xf32>
    %cst_6 = arith.constant 0.000000e+00 : f32
    %8 = vector.broadcast %cst_6 : f32 to vector<256x256xf32>
    %9 = arith.maximumf %7, %8 : vector<256x256xf32>
    %cst_7 = arith.constant 1.000000e-01 : f32
    %10 = vector.broadcast %cst_7 : f32 to vector<256x256xf32>
    %11 = arith.addf %10, %5 : vector<256x256xf32>
    %cst_8 = arith.constant 0.000000e+00 : f32
    %12 = vector.broadcast %cst_8 : f32 to vector<256x256xf32>
    %13 = arith.maximumf %11, %12 : vector<256x256xf32>
    %c256_i32 = arith.constant 256 : i32
    %14 = arith.muli %arg1, %c256_i32 : i32
    %15 = tpu.iota {dimensions = array<i32: 1>} : vector<256x256xi32>
    %16 = vector.broadcast %14 : i32 to vector<256x256xi32>
    %17 = arith.addi %16, %15 : vector<256x256xi32>
    %c200_i32 = arith.constant 200 : i32
    %18 = vector.broadcast %c200_i32 : i32 to vector<256x256xi32>
    %19 = arith.cmpi slt, %17, %18 : vector<256x256xi32>
    %c0_9 = arith.constant 0 : index
    %c0_10 = arith.constant 0 : index
    %20 = vector.load %arg4[%c0_9, %c0_10] : memref<256x1xi32, #tpu.memory_space<vmem>>, vector<256x1xi32>
    %c0_11 = arith.constant 0 : index
    %c0_12 = arith.constant 0 : index
    %21 = vector.load %arg5[%c0_11, %c0_12] : memref<1x256xi32, #tpu.memory_space<vmem>>, vector<1x256xi32>
    %22 = vector.broadcast %20 : vector<256x1xi32> to vector<256x256xi32>
    %23 = vector.broadcast %21 : vector<1x256xi32> to vector<256x256xi32>
    %24 = arith.cmpi eq, %22, %23 : vector<256x256xi32>
    %25 = arith.andi %24, %19 : vector<256x256xi1>
    %cst_13 = arith.constant dense<true> : vector<256x256xi1>
    %26 = arith.xori %24, %cst_13 : vector<256x256xi1>
    %27 = arith.andi %26, %19 : vector<256x256xi1>
    %cst_14 = arith.constant 0.000000e+00 : f32
    %28 = vector.broadcast %cst_14 : f32 to vector<256x256xf32>
    %29 = arith.select %25, %9, %28 : vector<256x256xi1>, vector<256x256xf32>
    %cst_15 = arith.constant 0.000000e+00 : f32
    %30 = vector.broadcast %cst_15 : f32 to vector<256x256xf32>
    %31 = arith.select %27, %13, %30 : vector<256x256xi1>, vector<256x256xf32>
    %c0_i32 = arith.constant 0 : i32
    %32 = arith.cmpi eq, %arg1, %c0_i32 : i32
    %33 = arith.extui %32 : i1 to i32
    %c1073741824_i32 = arith.constant 1073741824 : i32
    %c0_i32_16 = arith.constant 0 : i32
    %34 = arith.cmpi ne, %33, %c0_i32_16 : i32
    scf.if %34 {
      %c0_22 = arith.constant 0 : index
      %c0_23 = arith.constant 0 : index
      %41 = vector.load %arg8[%c0_22, %c0_23] : memref<256x256xf32, #tpu.memory_space<vmem>>, vector<256x256xf32>
      tpu.vector_store %arg8[%c0_22, %c0_23], %29 {strides = array<i32>} : memref<256x256xf32, #tpu.memory_space<vmem>>, vector<256x256xf32>,
      %c0_24 = arith.constant 0 : index
      %c0_25 = arith.constant 0 : index
      %42 = vector.load %arg9[%c0_24, %c0_25] : memref<256x256xf32, #tpu.memory_space<vmem>>, vector<256x256xf32>
      tpu.vector_store %arg9[%c0_24, %c0_25], %29 {strides = array<i32>} : memref<256x256xf32, #tpu.memory_space<vmem>>, vector<256x256xf32>,
      %43 = vector.broadcast %c1073741824_i32 : i32 to vector<256x256xi32>
      %44 = arith.select %25, %17, %43 : vector<256x256xi1>, vector<256x256xi32>
      %c0_26 = arith.constant 0 : index
      %c0_27 = arith.constant 0 : index
      %45 = vector.load %arg10[%c0_26, %c0_27] : memref<256x256xi32, #tpu.memory_space<vmem>>, vector<256x256xi32>
      tpu.vector_store %arg10[%c0_26, %c0_27], %44 {strides = array<i32>} : memref<256x256xi32, #tpu.memory_space<vmem>>, vector<256x256xi32>,
      %c0_28 = arith.constant 0 : index
      %c0_29 = arith.constant 0 : index
      %46 = vector.load %arg11[%c0_28, %c0_29] : memref<256x256xf32, #tpu.memory_space<vmem>>, vector<256x256xf32>
      tpu.vector_store %arg11[%c0_28, %c0_29], %29 {strides = array<i32>} : memref<256x256xf32, #tpu.memory_space<vmem>>, vector<256x256xf32>,
      %c0_30 = arith.constant 0 : index
      %c0_31 = arith.constant 0 : index
      %47 = vector.load %arg12[%c0_30, %c0_31] : memref<256x256xf32, #tpu.memory_space<vmem>>, vector<256x256xf32>
      tpu.vector_store %arg12[%c0_30, %c0_31], %31 {strides = array<i32>} : memref<256x256xf32, #tpu.memory_space<vmem>>, vector<256x256xf32>,
      %c0_32 = arith.constant 0 : index
      %c0_33 = arith.constant 0 : index
      %48 = vector.load %arg13[%c0_32, %c0_33] : memref<256x256xf32, #tpu.memory_space<vmem>>, vector<256x256xf32>
      tpu.vector_store %arg13[%c0_32, %c0_33], %31 {strides = array<i32>} : memref<256x256xf32, #tpu.memory_space<vmem>>, vector<256x256xf32>,
      %49 = vector.broadcast %c1073741824_i32 : i32 to vector<256x256xi32>
      %50 = arith.select %27, %17, %49 : vector<256x256xi1>, vector<256x256xi32>
      %c0_34 = arith.constant 0 : index
      %c0_35 = arith.constant 0 : index
      %51 = vector.load %arg14[%c0_34, %c0_35] : memref<256x256xi32, #tpu.memory_space<vmem>>, vector<256x256xi32>
      tpu.vector_store %arg14[%c0_34, %c0_35], %50 {strides = array<i32>} : memref<256x256xi32, #tpu.memory_space<vmem>>, vector<256x256xi32>,
      %c0_36 = arith.constant 0 : index
      %c0_37 = arith.constant 0 : index
      %52 = vector.load %arg15[%c0_36, %c0_37] : memref<256x256xf32, #tpu.memory_space<vmem>>, vector<256x256xf32>
      tpu.vector_store %arg15[%c0_36, %c0_37], %31 {strides = array<i32>} : memref<256x256xf32, #tpu.memory_space<vmem>>, vector<256x256xf32>,
    } else {
    }
    %c0_i32_17 = arith.constant 0 : i32
    %35 = arith.cmpi sgt, %arg1, %c0_i32_17 : i32
    %36 = arith.extui %35 : i1 to i32
    %c1073741824_i32_18 = arith.constant 1073741824 : i32
    %c0_i32_19 = arith.constant 0 : i32
    %37 = arith.cmpi ne, %36, %c0_i32_19 : i32
    scf.if %37 {
      %c0_22 = arith.constant 0 : index
      %c0_23 = arith.constant 0 : index
      %41 = vector.load %arg8[%c0_22, %c0_23] : memref<256x256xf32, #tpu.memory_space<vmem>>, vector<256x256xf32>
      %42 = arith.maximumf %41, %29 : vector<256x256xf32>
      %c0_24 = arith.constant 0 : index
      %c0_25 = arith.constant 0 : index
      %43 = vector.load %arg8[%c0_24, %c0_25] : memref<256x256xf32, #tpu.memory_space<vmem>>, vector<256x256xf32>
      tpu.vector_store %arg8[%c0_24, %c0_25], %42 {strides = array<i32>} : memref<256x256xf32, #tpu.memory_space<vmem>>, vector<256x256xf32>,
      %c0_26 = arith.constant 0 : index
      %c0_27 = arith.constant 0 : index
      %44 = vector.load %arg9[%c0_26, %c0_27] : memref<256x256xf32, #tpu.memory_space<vmem>>, vector<256x256xf32>
      %45 = arith.addf %44, %29 : vector<256x256xf32>
      %c0_28 = arith.constant 0 : index
      %c0_29 = arith.constant 0 : index
      %46 = vector.load %arg9[%c0_28, %c0_29] : memref<256x256xf32, #tpu.memory_space<vmem>>, vector<256x256xf32>
      tpu.vector_store %arg9[%c0_28, %c0_29], %45 {strides = array<i32>} : memref<256x256xf32, #tpu.memory_space<vmem>>, vector<256x256xf32>,
      %c0_30 = arith.constant 0 : index
      %c0_31 = arith.constant 0 : index
      %47 = vector.load %arg12[%c0_30, %c0_31] : memref<256x256xf32, #tpu.memory_space<vmem>>, vector<256x256xf32>
      %48 = arith.maximumf %47, %31 : vector<256x256xf32>
      %c0_32 = arith.constant 0 : index
      %c0_33 = arith.constant 0 : index
      %49 = vector.load %arg12[%c0_32, %c0_33] : memref<256x256xf32, #tpu.memory_space<vmem>>, vector<256x256xf32>
      tpu.vector_store %arg12[%c0_32, %c0_33], %48 {strides = array<i32>} : memref<256x256xf32, #tpu.memory_space<vmem>>, vector<256x256xf32>,
      %c0_34 = arith.constant 0 : index
      %c0_35 = arith.constant 0 : index
      %50 = vector.load %arg13[%c0_34, %c0_35] : memref<256x256xf32, #tpu.memory_space<vmem>>, vector<256x256xf32>
      %51 = arith.addf %50, %31 : vector<256x256xf32>
      %c0_36 = arith.constant 0 : index
      %c0_37 = arith.constant 0 : index
      %52 = vector.load %arg13[%c0_36, %c0_37] : memref<256x256xf32, #tpu.memory_space<vmem>>, vector<256x256xf32>
      tpu.vector_store %arg13[%c0_36, %c0_37], %51 {strides = array<i32>} : memref<256x256xf32, #tpu.memory_space<vmem>>, vector<256x256xf32>,
      %c0_38 = arith.constant 0 : index
      %c0_39 = arith.constant 0 : index
      %53 = vector.load %arg10[%c0_38, %c0_39] : memref<256x256xi32, #tpu.memory_space<vmem>>, vector<256x256xi32>
      %54 = vector.broadcast %c1073741824_i32_18 : i32 to vector<256x256xi32>
      %55 = arith.cmpi eq, %53, %54 : vector<256x256xi32>
      %56 = arith.andi %25, %55 : vector<256x256xi1>
      %57 = arith.select %56, %17, %53 : vector<256x256xi1>, vector<256x256xi32>
      %c0_40 = arith.constant 0 : index
      %c0_41 = arith.constant 0 : index
      %58 = vector.load %arg10[%c0_40, %c0_41] : memref<256x256xi32, #tpu.memory_space<vmem>>, vector<256x256xi32>
      tpu.vector_store %arg10[%c0_40, %c0_41], %57 {strides = array<i32>} : memref<256x256xi32, #tpu.memory_space<vmem>>, vector<256x256xi32>,
      %c0_42 = arith.constant 0 : index
      %c0_43 = arith.constant 0 : index
      %59 = vector.load %arg11[%c0_42, %c0_43] : memref<256x256xf32, #tpu.memory_space<vmem>>, vector<256x256xf32>
      %60 = arith.select %56, %29, %59 : vector<256x256xi1>, vector<256x256xf32>
      %c0_44 = arith.constant 0 : index
      %c0_45 = arith.constant 0 : index
      %61 = vector.load %arg11[%c0_44, %c0_45] : memref<256x256xf32, #tpu.memory_space<vmem>>, vector<256x256xf32>
      tpu.vector_store %arg11[%c0_44, %c0_45], %60 {strides = array<i32>} : memref<256x256xf32, #tpu.memory_space<vmem>>, vector<256x256xf32>,
      %c0_46 = arith.constant 0 : index
      %c0_47 = arith.constant 0 : index
      %62 = vector.load %arg14[%c0_46, %c0_47] : memref<256x256xi32, #tpu.memory_space<vmem>>, vector<256x256xi32>
      %63 = vector.broadcast %c1073741824_i32_18 : i32 to vector<256x256xi32>
      %64 = arith.cmpi eq, %62, %63 : vector<256x256xi32>
      %65 = arith.andi %27, %64 : vector<256x256xi1>
      %66 = arith.select %65, %17, %62 : vector<256x256xi1>, vector<256x256xi32>
      %c0_48 = arith.constant 0 : index
      %c0_49 = arith.constant 0 : index
      %67 = vector.load %arg14[%c0_48, %c0_49] : memref<256x256xi32, #tpu.memory_space<vmem>>, vector<256x256xi32>
      tpu.vector_store %arg14[%c0_48, %c0_49], %66 {strides = array<i32>} : memref<256x256xi32, #tpu.memory_space<vmem>>, vector<256x256xi32>,
      %c0_50 = arith.constant 0 : index
      %c0_51 = arith.constant 0 : index
      %68 = vector.load %arg15[%c0_50, %c0_51] : memref<256x256xf32, #tpu.memory_space<vmem>>, vector<256x256xf32>
      %69 = arith.select %65, %31, %68 : vector<256x256xi1>, vector<256x256xf32>
      %c0_52 = arith.constant 0 : index
      %c0_53 = arith.constant 0 : index
      %70 = vector.load %arg15[%c0_52, %c0_53] : memref<256x256xf32, #tpu.memory_space<vmem>>, vector<256x256xf32>
      tpu.vector_store %arg15[%c0_52, %c0_53], %69 {strides = array<i32>} : memref<256x256xf32, #tpu.memory_space<vmem>>, vector<256x256xf32>,
    } else {
    }
    %c0_i32_20 = arith.constant 0 : i32
    %38 = arith.cmpi eq, %arg1, %c0_i32_20 : i32
    %39 = arith.extui %38 : i1 to i32
    %c0_i32_21 = arith.constant 0 : i32
    %40 = arith.cmpi ne, %39, %c0_i32_21 : i32
    scf.if %40 {
      %c0_22 = arith.constant 0 : index
      %c0_23 = arith.constant 0 : index
      %41 = vector.load %arg8[%c0_22, %c0_23] : memref<256x256xf32, #tpu.memory_space<vmem>>, vector<256x256xf32>
      %cst_24 = arith.constant dense<0xFF800000> : vector<256xf32>
      %42 = vector.multi_reduction <maximumf>, %41, %cst_24 [1] : vector<256x256xf32> to vector<256xf32>
      %43 = vector.shape_cast %42 : vector<256xf32> to vector<256x1xf32>
      %c0_25 = arith.constant 0 : index
      %c0_26 = arith.constant 0 : index
      %44 = vector.load %arg9[%c0_25, %c0_26] : memref<256x256xf32, #tpu.memory_space<vmem>>, vector<256x256xf32>
      %cst_27 = arith.constant dense<0.000000e+00> : vector<256xf32>
      %45 = vector.multi_reduction <add>, %44, %cst_27 [1] : vector<256x256xf32> to vector<256xf32>
      %46 = vector.shape_cast %45 : vector<256xf32> to vector<256x1xf32>
      %c0_28 = arith.constant 0 : index
      %c0_29 = arith.constant 0 : index
      %47 = vector.load %arg12[%c0_28, %c0_29] : memref<256x256xf32, #tpu.memory_space<vmem>>, vector<256x256xf32>
      %cst_30 = arith.constant dense<0xFF800000> : vector<256xf32>
      %48 = vector.multi_reduction <maximumf>, %47, %cst_30 [1] : vector<256x256xf32> to vector<256xf32>
      %49 = vector.shape_cast %48 : vector<256xf32> to vector<256x1xf32>
      %c0_31 = arith.constant 0 : index
      %c0_32 = arith.constant 0 : index
      %50 = vector.load %arg13[%c0_31, %c0_32] : memref<256x256xf32, #tpu.memory_space<vmem>>, vector<256x256xf32>
      %cst_33 = arith.constant dense<0.000000e+00> : vector<256xf32>
      %51 = vector.multi_reduction <add>, %50, %cst_33 [1] : vector<256x256xf32> to vector<256xf32>
      %52 = vector.shape_cast %51 : vector<256xf32> to vector<256x1xf32>
      %c0_34 = arith.constant 0 : index
      %c0_35 = arith.constant 0 : index
      %53 = vector.load %arg10[%c0_34, %c0_35] : memref<256x256xi32, #tpu.memory_space<vmem>>, vector<256x256xi32>
      %cst_36 = arith.constant dense<2147483647> : vector<256xi32>
      %54 = vector.multi_reduction <minsi>, %53, %cst_36 [1] : vector<256x256xi32> to vector<256xi32>
      %55 = vector.shape_cast %54 : vector<256xi32> to vector<256x1xi32>
      %56 = vector.broadcast %55 : vector<256x1xi32> to vector<256x256xi32>
      %57 = arith.cmpi eq, %53, %56 : vector<256x256xi32>
      %c0_37 = arith.constant 0 : index
      %c0_38 = arith.constant 0 : index
      %58 = vector.load %arg11[%c0_37, %c0_38] : memref<256x256xf32, #tpu.memory_space<vmem>>, vector<256x256xf32>
      %cst_39 = arith.constant 0.000000e+00 : f32
      %59 = vector.broadcast %cst_39 : f32 to vector<256x256xf32>
      %60 = arith.select %57, %58, %59 : vector<256x256xi1>, vector<256x256xf32>
      %cst_40 = arith.constant dense<0.000000e+00> : vector<256xf32>
      %61 = vector.multi_reduction <add>, %60, %cst_40 [1] : vector<256x256xf32> to vector<256xf32>
      %62 = vector.shape_cast %61 : vector<256xf32> to vector<256x1xf32>
      %c0_41 = arith.constant 0 : index
      %c0_42 = arith.constant 0 : index
      %63 = vector.load %arg14[%c0_41, %c0_42] : memref<256x256xi32, #tpu.memory_space<vmem>>, vector<256x256xi32>
      %cst_43 = arith.constant dense<2147483647> : vector<256xi32>
      %64 = vector.multi_reduction <minsi>, %63, %cst_43 [1] : vector<256x256xi32> to vector<256xi32>
      %65 = vector.shape_cast %64 : vector<256xi32> to vector<256x1xi32>
      %66 = vector.broadcast %65 : vector<256x1xi32> to vector<256x256xi32>
      %67 = arith.cmpi eq, %63, %66 : vector<256x256xi32>
      %c0_44 = arith.constant 0 : index
      %c0_45 = arith.constant 0 : index
      %68 = vector.load %arg15[%c0_44, %c0_45] : memref<256x256xf32, #tpu.memory_space<vmem>>, vector<256x256xf32>
      %cst_46 = arith.constant 0.000000e+00 : f32
      %69 = vector.broadcast %cst_46 : f32 to vector<256x256xf32>
      %70 = arith.select %67, %68, %69 : vector<256x256xi1>, vector<256x256xf32>
      %cst_47 = arith.constant dense<0.000000e+00> : vector<256xf32>
      %71 = vector.multi_reduction <add>, %70, %cst_47 [1] : vector<256x256xf32> to vector<256xf32>
      %72 = vector.shape_cast %71 : vector<256xf32> to vector<256x1xf32>
      %cst_48 = arith.constant 2.000000e+00 : f32
      %73 = vector.broadcast %cst_48 : f32 to vector<256x1xf32>
      %74 = arith.mulf %73, %43 : vector<256x1xf32>
      %cst_49 = arith.constant 9.99999974E-6 : f32
      %75 = vector.broadcast %cst_49 : f32 to vector<256x1xf32>
      %76 = arith.addf %46, %75 : vector<256x1xf32>
      %77 = arith.cmpf ogt, %74, %76 : vector<256x1xf32>
      %cst_50 = arith.constant 2.000000e+00 : f32
      %78 = vector.broadcast %cst_50 : f32 to vector<256x1xf32>
      %79 = arith.mulf %78, %49 : vector<256x1xf32>
      %cst_51 = arith.constant 9.99999974E-6 : f32
      %80 = vector.broadcast %cst_51 : f32 to vector<256x1xf32>
      %81 = arith.addf %52, %80 : vector<256x1xf32>
      %82 = arith.cmpf ogt, %79, %81 : vector<256x1xf32>
      %cst_52 = arith.constant 0.000000e+00 : f32
      %83 = vector.broadcast %cst_52 : f32 to vector<256x1xf32>
      %84 = arith.select %77, %62, %83 : vector<256x1xi1>, vector<256x1xf32>
      %cst_53 = arith.constant 0.000000e+00 : f32
      %85 = vector.broadcast %cst_53 : f32 to vector<256x1xf32>
      %86 = arith.select %82, %72, %85 : vector<256x1xi1>, vector<256x1xf32>
      %87 = arith.addf %84, %86 : vector<256x1xf32>
      %c256_i32_54 = arith.constant 256 : i32
      %88 = arith.muli %arg0, %c256_i32_54 : i32
      %89 = tpu.iota {dimensions = array<i32: 0>} : vector<256x1xi32>
      %90 = vector.broadcast %88 : i32 to vector<256x1xi32>
      %91 = arith.addi %90, %89 : vector<256x1xi32>
      %c200_i32_55 = arith.constant 200 : i32
      %92 = vector.broadcast %c200_i32_55 : i32 to vector<256x1xi32>
      %93 = arith.cmpi slt, %91, %92 : vector<256x1xi32>
      %cst_56 = arith.constant 0.000000e+00 : f32
      %94 = vector.broadcast %cst_56 : f32 to vector<256x1xf32>
      %95 = arith.select %93, %87, %94 : vector<256x1xi1>, vector<256x1xf32>
      %c0_57 = arith.constant 0 : index
      %c0_58 = arith.constant 0 : index
      %96 = vector.load %arg7[%c0_57, %c0_58] : memref<256x1xf32, #tpu.memory_space<vmem>>, vector<256x1xf32>
      tpu.vector_store %arg7[%c0_57, %c0_58], %95 {strides = array<i32>} : memref<256x1xf32, #tpu.memory_space<vmem>>, vector<256x1xf32>,
    } else {
    }
    return
  }
  func.func @transform_0(%arg0: i32, %arg1: i32) -> (i32, i32) {
    %c0_i32 = arith.constant 0 : i32
    %c0_i32_0 = arith.constant 0 : i32
    return %arg0, %c0_i32 : i32, i32
  }
  func.func @transform_1(%arg0: i32, %arg1: i32) -> (i32, i32) {
    %c0_i32 = arith.constant 0 : i32
    %c0_i32_0 = arith.constant 0 : i32
    return %c0_i32, %arg1 : i32, i32
  }
  func.func @transform_2(%arg0: i32, %arg1: i32) -> (i32, i32) {
    %c0_i32 = arith.constant 0 : i32
    %c0_i32_0 = arith.constant 0 : i32
    return %arg0, %c0_i32 : i32, i32
  }
  func.func @transform_3(%arg0: i32, %arg1: i32) -> (i32, i32) {
    %c0_i32 = arith.constant 0 : i32
    %c0_i32_0 = arith.constant 0 : i32
    return %c0_i32, %arg1 : i32, i32
  }
  func.func @transform_4(%arg0: i32, %arg1: i32) -> (i32, i32) {
    %c0_i32 = arith.constant 0 : i32
    %c0_i32_0 = arith.constant 0 : i32
    %c0_i32_1 = arith.constant 0 : i32
    return %c0_i32, %c0_i32_0 : i32, i32
  }
  func.func @transform_5(%arg0: i32, %arg1: i32) -> (i32, i32) {
    %c0_i32 = arith.constant 0 : i32
    %c0_i32_0 = arith.constant 0 : i32
    return %arg0, %c0_i32 : i32, i32
  }
}

</mosaic_0001>

<llo_original>
// kernel: tpu_custom_call.1
$region0: #{tpu_custom_call.1}
  #allocation0 [shape = 'u32[]', space=smem, size = 0x4, offset = 0x4, fixed_abs, tag = 'smem constant byte address 0x4 - core index']
  #allocation1 [shape = 'u32[144,128]{1,0:T(1,128)}', space=vmem, size = 0x12000, scoped, tag = 'internal scratch']
  #allocation2 [shape = 'f32[256,256]{1,0:T(8,128)}', space=vmem, size = 0x40000, scoped, tag = 'scratch operand']
  #allocation3 [shape = 'f32[256,256]{1,0:T(8,128)}', space=vmem, size = 0x40000, scoped, tag = 'scratch operand']
  #allocation4 [shape = 's32[256,256]{1,0:T(8,128)}', space=vmem, size = 0x40000, scoped, tag = 'scratch operand']
  #allocation5 [shape = 'f32[256,256]{1,0:T(8,128)}', space=vmem, size = 0x40000, scoped, tag = 'scratch operand']
  #allocation6 [shape = 'f32[256,256]{1,0:T(8,128)}', space=vmem, size = 0x40000, scoped, tag = 'scratch operand']
  #allocation7 [shape = 'f32[256,256]{1,0:T(8,128)}', space=vmem, size = 0x40000, scoped, tag = 'scratch operand']
  #allocation8 [shape = 's32[256,256]{1,0:T(8,128)}', space=vmem, size = 0x40000, scoped, tag = 'scratch operand']
  #allocation9 [shape = 'f32[256,256]{1,0:T(8,128)}', space=vmem, size = 0x40000, scoped, tag = 'scratch operand']
  #allocation10 [shape = 'f32[1,1]{1,0:T(1,128)S(6)}', space=smem, size = 0x200, scoped, tag = 'scoped memory for tpu_custom_call.1']
  %s0 = inlined_call_operand.vmem [shape: bf16[256,64], index: 0, kind: input, shape index: {}]
  %s1 = inlined_call_operand.vmem [shape: bf16[64,256], index: 1, kind: input, shape index: {}]
  %s2 = inlined_call_operand.vmem [shape: s32[256,1], index: 2, kind: input, shape index: {}]
  %s3 = inlined_call_operand.vmem [shape: s32[1,256], index: 3, kind: input, shape index: {}]
  %s4 = inlined_call_operand.<no memory space> [shape: f32[1,1], index: 4, kind: input, shape index: {}]
  %s5 = inlined_call_operand.vmem [shape: f32[256,1], index: 5, kind: output, shape index: {}]
  %s6 = sld [smem:[#allocation0]]
  $region42: #{tpu_custom_call.1} parent=0
    _
  %s8 = ssub.s32 1, %s6
  %s9 = scalar_select 0, %s8, %s6
  %10 = sst [smem:[#allocation10]] %s4
  // Predicated region
  $region2: #{tpu_custom_call.1} parent=0 // pred_check
    _
  $region3: #{tpu_custom_call.1} parent=0 // pred_check_branch
    %12 = sbr.rel (0) target = $region5
  $region4: #{tpu_custom_call.1} parent=0 // pred_region
    _
  $region5: #{tpu_custom_call.1} parent=0 // pred_fallthru
    _
  // Predicated region
  $region6: #{tpu_custom_call.1} parent=0 // pred_check
    _
  $region7: #{tpu_custom_call.1} parent=0 // pred_check_branch
    %14 = sbr.rel (0) target = $region9
  $region8: #{tpu_custom_call.1} parent=0 // pred_region
    _
  $region9: #{tpu_custom_call.1} parent=0 // pred_fallthru
    _
  // Predicated region
  $region10: #{tpu_custom_call.1} parent=0 // pred_check
    _
  $region11: #{tpu_custom_call.1} parent=0 // pred_check_branch
    %16 = sbr.rel (0) target = $region13
  $region12: #{tpu_custom_call.1} parent=0 // pred_region
    _
  $region13: #{tpu_custom_call.1} parent=0 // pred_fallthru
    _
  // Predicated region
  $region14: #{tpu_custom_call.1} parent=0 // pred_check
    _
  $region15: #{tpu_custom_call.1} parent=0 // pred_check_branch
    %18 = sbr.rel (0) target = $region17
  $region16: #{tpu_custom_call.1} parent=0 // pred_region
    _
  $region17: #{tpu_custom_call.1} parent=0 // pred_fallthru
    _
  // Predicated region
  $region18: #{tpu_custom_call.1} parent=0 // pred_check
    _
  $region19: #{tpu_custom_call.1} parent=0 // pred_check_branch
    %20 = sbr.rel (0) target = $region21
  $region20: #{tpu_custom_call.1} parent=0 // pred_region
    _
  $region21: #{tpu_custom_call.1} parent=0 // pred_fallthru
    _
  %s22 = sld [smem:[#allocation10]]
  %v23 = vld [vmem:[%s0] sm:$0xf]
  %v24 = vld [vmem:[%s0 + $0x4] sm:$0xf]
  %v25 = vld [vmem:[%s0 + $0x8] sm:$0xf]
  %v26 = vld [vmem:[%s0 + $0xc] sm:$0xf]
  %v27 = vld [vmem:[%s0 + $0x10] sm:$0xf]
  %v28 = vld [vmem:[%s0 + $0x14] sm:$0xf]
  %v29 = vld [vmem:[%s0 + $0x18] sm:$0xf]
  %v30 = vld [vmem:[%s0 + $0x1c] sm:$0xf]
  %v31 = vld [vmem:[%s0 + $0x20] sm:$0xf]
  %v32 = vld [vmem:[%s0 + $0x24] sm:$0xf]
  %v33 = vld [vmem:[%s0 + $0x28] sm:$0xf]
  %v34 = vld [vmem:[%s0 + $0x2c] sm:$0xf]
  %v35 = vld [vmem:[%s0 + $0x30] sm:$0xf]
  %v36 = vld [vmem:[%s0 + $0x34] sm:$0xf]
  %v37 = vld [vmem:[%s0 + $0x38] sm:$0xf]
  %v38 = vld [vmem:[%s0 + $0x3c] sm:$0xf]
  %v39 = vld [vmem:[%s0 + $0x40] sm:$0xf]
  %v40 = vld [vmem:[%s0 + $0x44] sm:$0xf]
  %v41 = vld [vmem:[%s0 + $0x48] sm:$0xf]
  %v42 = vld [vmem:[%s0 + $0x4c] sm:$0xf]
  %v43 = vld [vmem:[%s0 + $0x50] sm:$0xf]
  %v44 = vld [vmem:[%s0 + $0x54] sm:$0xf]
  %v45 = vld [vmem:[%s0 + $0x58] sm:$0xf]
  %v46 = vld [vmem:[%s0 + $0x5c] sm:$0xf]
  %v47 = vld [vmem:[%s0 + $0x60] sm:$0xf]
  %v48 = vld [vmem:[%s0 + $0x64] sm:$0xf]
  %v49 = vld [vmem:[%s0 + $0x68] sm:$0xf]
  %v50 = vld [vmem:[%s0 + $0x6c] sm:$0xf]
  %v51 = vld [vmem:[%s0 + $0x70] sm:$0xf]
  %v52 = vld [vmem:[%s0 + $0x74] sm:$0xf]
  %v53 = vld [vmem:[%s0 + $0x78] sm:$0xf]
  %v54 = vld [vmem:[%s0 + $0x7c] sm:$0xf]
  %v55 = vld [vmem:[%s1] sm:$0xff]
  %v56 = vld [vmem:[%s1 + $0x8] sm:$0xff]
  %v57 = vld [vmem:[%s1 + $0x10] sm:$0xff]
  %v58 = vld [vmem:[%s1 + $0x18] sm:$0xff]
  %v59 = vld [vmem:[%s1 + $0x20] sm:$0xff]
  %v60 = vld [vmem:[%s1 + $0x28] sm:$0xff]
  %v61 = vld [vmem:[%s1 + $0x30] sm:$0xff]
  %v62 = vld [vmem:[%s1 + $0x38] sm:$0xff]
  %v95 = vunpack.c.l.b16 %v23
  %v96 = vunpack.c.l.b16 %v24
  %v97 = vunpack.c.l.b16 %v25
  %v98 = vunpack.c.l.b16 %v26
  %v99 = vunpack.c.l.b16 %v27
  %v100 = vunpack.c.l.b16 %v28
  %v101 = vunpack.c.l.b16 %v29
  %v102 = vunpack.c.l.b16 %v30
  %v103 = vunpack.c.l.b16 %v31
  %v104 = vunpack.c.l.b16 %v32
  %v105 = vunpack.c.l.b16 %v33
  %v106 = vunpack.c.l.b16 %v34
  %v107 = vunpack.c.l.b16 %v35
  %v108 = vunpack.c.l.b16 %v36
  %v109 = vunpack.c.l.b16 %v37
  %v110 = vunpack.c.l.b16 %v38
  %v111 = vunpack.c.l.b16 %v39
  %v112 = vunpack.c.l.b16 %v40
  %v113 = vunpack.c.l.b16 %v41
  %v114 = vunpack.c.l.b16 %v42
  %v115 = vunpack.c.l.b16 %v43
  %v116 = vunpack.c.l.b16 %v44
  %v117 = vunpack.c.l.b16 %v45
  %v118 = vunpack.c.l.b16 %v46
  %v119 = vunpack.c.l.b16 %v47
  %v120 = vunpack.c.l.b16 %v48
  %v121 = vunpack.c.l.b16 %v49
  %v122 = vunpack.c.l.b16 %v50
  %v123 = vunpack.c.l.b16 %v51
  %v124 = vunpack.c.l.b16 %v52
  %v125 = vunpack.c.l.b16 %v53
  %v126 = vunpack.c.l.b16 %v54
  %v127 = vpack.c.b16 %v96, %v95
  %v128 = vpack.c.b16 %v98, %v97
  %v129 = vpack.c.b16 %v100, %v99
  %v130 = vpack.c.b16 %v102, %v101
  %v131 = vpack.c.b16 %v104, %v103
  %v132 = vpack.c.b16 %v106, %v105
  %v133 = vpack.c.b16 %v108, %v107
  %v134 = vpack.c.b16 %v110, %v109
  %v135 = vpack.c.b16 %v112, %v111
  %v136 = vpack.c.b16 %v114, %v113
  %v137 = vpack.c.b16 %v116, %v115
  %v138 = vpack.c.b16 %v118, %v117
  %v139 = vpack.c.b16 %v120, %v119
  %v140 = vpack.c.b16 %v122, %v121
  %v141 = vpack.c.b16 %v124, %v123
  %v142 = vpack.c.b16 %v126, %v125
  %v151 = vunpack.c.l.b16 %v55
  %v152 = vunpack.c.h.b16 %v55
  %v153 = vunpack.c.l.b16 %v56
  %v154 = vunpack.c.h.b16 %v56
  %v155 = vunpack.c.l.b16 %v57
  %v156 = vunpack.c.h.b16 %v57
  %v157 = vunpack.c.l.b16 %v58
  %v158 = vunpack.c.h.b16 %v58
  %v159 = vunpack.c.l.b16 %v59
  %v160 = vunpack.c.h.b16 %v59
  %v161 = vunpack.c.l.b16 %v60
  %v162 = vunpack.c.h.b16 %v60
  %v163 = vunpack.c.l.b16 %v61
  %v164 = vunpack.c.h.b16 %v61
  %v165 = vunpack.c.l.b16 %v62
  %v166 = vunpack.c.h.b16 %v62
  %v167 = vpack.c.b16 %v153, %v151
  %v168 = vpack.c.b16 %v154, %v152
  %v169 = vpack.c.b16 %v157, %v155
  %v170 = vpack.c.b16 %v158, %v156
  %v171 = vpack.c.b16 %v161, %v159
  %v172 = vpack.c.b16 %v162, %v160
  %v173 = vpack.c.b16 %v165, %v163
  %v174 = vpack.c.b16 %v166, %v164
  %vm183 = vcmask 523264
  %v185 = vsel %vm183, %v127, 0
  %v188 = vsel %vm183, %v128, 0
  %v191 = vsel %vm183, %v129, 0
  %v194 = vsel %vm183, %v130, 0
  %v197 = vsel %vm183, %v131, 0
  %v200 = vsel %vm183, %v132, 0
  %v203 = vsel %vm183, %v133, 0
  %v206 = vsel %vm183, %v134, 0
  %v209 = vsel %vm183, %v135, 0
  %v212 = vsel %vm183, %v136, 0
  %v215 = vsel %vm183, %v137, 0
  %v218 = vsel %vm183, %v138, 0
  %v221 = vsel %vm183, %v139, 0
  %v224 = vsel %vm183, %v140, 0
  %v227 = vsel %vm183, %v141, 0
  %v230 = vsel %vm183, %v142, 0
  %232 = vmatprep.subr.bf16.mxu0 %v168
  %233 = vmatpush1.bf16.msra.mxu0 %v167
  %234 = vmatprep.subr.bf16.mxu0 %v170
  %235 = vmatpush1.bf16.msra.mxu0 %v169
  %236 = vmatprep.subr.bf16.mxu0 %v172
  %237 = vmatpush1.bf16.msra.mxu0 %v171
  %238 = vmatprep.subr.bf16.mxu0 %v174
  %239 = vmatpush1.bf16.msra.mxu0 %v173
  %240 = vmatprep.subr.bf16.mxu0 0
  %241 = vmatpush1.bf16.msra.mxu0 0
  %242 = vmatprep.subr.bf16.mxu0 0
  %243 = vmatpush1.bf16.msra.mxu0 0
  %244 = vmatprep.subr.bf16.mxu0 0
  %245 = vmatpush1.bf16.msra.mxu0 0
  %246 = vmatprep.subr.bf16.mxu0 0
  %247 = vmatpush1.bf16.msra.mxu0 0
  %248 = vmatprep.subr.bf16.mxu0 0
  %249 = vmatpush1.bf16.msra.mxu0 0
  %250 = vmatprep.subr.bf16.mxu0 0
  %251 = vmatpush1.bf16.msra.mxu0 0
  %252 = vmatprep.subr.bf16.mxu0 0
  %253 = vmatpush1.bf16.msra.mxu0 0
  %254 = vmatprep.subr.bf16.mxu0 0
  %255 = vmatpush1.bf16.msra.mxu0 0
  %256 = vmatprep.subr.bf16.mxu0 0
  %257 = vmatpush1.bf16.msra.mxu0 0
  %258 = vmatprep.subr.bf16.mxu0 0
  %259 = vmatpush1.bf16.msra.mxu0 0
  %260 = vmatprep.subr.bf16.mxu0 0
  %261 = vmatpush1.bf16.msra.mxu0 0
  %262 = vmatprep.subr.bf16.mxu0 0
  %263 = vmatpush1.bf16.msra.mxu0 0
  %264 = vmatprep.mubr.bf16.mxu0 0
  %265 = vmatmul.mubr.bf16.gmra.mrb[0].mxu0 %v185
  %v266 = vpop.f32.mrb[0].mxu0
  %v267 = vadd.f32 0.0, %v266
  %v268 = vpop.f32.mrb[0].mxu0
  %v269 = vadd.f32 0.0, %v268
  %v270 = vpop.f32.mrb[0].mxu0
  %v271 = vadd.f32 0.0, %v270
  %v272 = vpop.f32.mrb[0].mxu0
  %v273 = vadd.f32 0.0, %v272
  %274 = vmatprep.mubr.bf16.mxu0 0
  %275 = vmatmul.mubr.bf16.gmra.mrb[0].mxu0 %v188
  %v276 = vpop.f32.mrb[0].mxu0
  %v277 = vadd.f32 0.0, %v276
  %v278 = vpop.f32.mrb[0].mxu0
  %v279 = vadd.f32 0.0, %v278
  %v280 = vpop.f32.mrb[0].mxu0
  %v281 = vadd.f32 0.0, %v280
  %v282 = vpop.f32.mrb[0].mxu0
  %v283 = vadd.f32 0.0, %v282
  %284 = vmatprep.mubr.bf16.mxu0 0
  %285 = vmatmul.mubr.bf16.gmra.mrb[0].mxu0 %v191
  %v286 = vpop.f32.mrb[0].mxu0
  %v287 = vadd.f32 0.0, %v286
  %v288 = vpop.f32.mrb[0].mxu0
  %v289 = vadd.f32 0.0, %v288
  %v290 = vpop.f32.mrb[0].mxu0
  %v291 = vadd.f32 0.0, %v290
  %v292 = vpop.f32.mrb[0].mxu0
  %v293 = vadd.f32 0.0, %v292
  %294 = vmatprep.mubr.bf16.mxu0 0
  %295 = vmatmul.mubr.bf16.gmra.mrb[0].mxu0 %v194
  %v296 = vpop.f32.mrb[0].mxu0
  %v297 = vadd.f32 0.0, %v296
  %v298 = vpop.f32.mrb[0].mxu0
  %v299 = vadd.f32 0.0, %v298
  %v300 = vpop.f32.mrb[0].mxu0
  %v301 = vadd.f32 0.0, %v300
  %v302 = vpop.f32.mrb[0].mxu0
  %v303 = vadd.f32 0.0, %v302
  %304 = vmatprep.mubr.bf16.mxu0 0
  %305 = vmatmul.mubr.bf16.gmra.mrb[0].mxu0 %v197
  %v306 = vpop.f32.mrb[0].mxu0
  %v307 = vadd.f32 0.0, %v306
  %v308 = vpop.f32.mrb[0].mxu0
  %v309 = vadd.f32 0.0, %v308
  %v310 = vpop.f32.mrb[0].mxu0
  %v311 = vadd.f32 0.0, %v310
  %v312 = vpop.f32.mrb[0].mxu0
  %v313 = vadd.f32 0.0, %v312
  %314 = vmatprep.mubr.bf16.mxu0 0
  %315 = vmatmul.mubr.bf16.gmra.mrb[0].mxu0 %v200
  %v316 = vpop.f32.mrb[0].mxu0
  %v317 = vadd.f32 0.0, %v316
  %v318 = vpop.f32.mrb[0].mxu0
  %v319 = vadd.f32 0.0, %v318
  %v320 = vpop.f32.mrb[0].mxu0
  %v321 = vadd.f32 0.0, %v320
  %v322 = vpop.f32.mrb[0].mxu0
  %v323 = vadd.f32 0.0, %v322
  %324 = vmatprep.mubr.bf16.mxu0 0
  %325 = vmatmul.mubr.bf16.gmra.mrb[0].mxu0 %v203
  %v326 = vpop.f32.mrb[0].mxu0
  %v327 = vadd.f32 0.0, %v326
  %v328 = vpop.f32.mrb[0].mxu0
  %v329 = vadd.f32 0.0, %v328
  %v330 = vpop.f32.mrb[0].mxu0
  %v331 = vadd.f32 0.0, %v330
  %v332 = vpop.f32.mrb[0].mxu0
  %v333 = vadd.f32 0.0, %v332
  %334 = vmatprep.mubr.bf16.mxu0 0
  %335 = vmatmul.mubr.bf16.gmra.mrb[0].mxu0 %v206
  %v336 = vpop.f32.mrb[0].mxu0
  %v337 = vadd.f32 0.0, %v336
  %v338 = vpop.f32.mrb[0].mxu0
  %v339 = vadd.f32 0.0, %v338
  %v340 = vpop.f32.mrb[0].mxu0
  %v341 = vadd.f32 0.0, %v340
  %v342 = vpop.f32.mrb[0].mxu0
  %v343 = vadd.f32 0.0, %v342
  %344 = vmatprep.mubr.bf16.mxu0 0
  %345 = vmatmul.mubr.bf16.gmra.mrb[0].mxu0 %v209
  %v346 = vpop.f32.mrb[0].mxu0
  %v347 = vadd.f32 0.0, %v346
  %v348 = vpop.f32.mrb[0].mxu0
  %v349 = vadd.f32 0.0, %v348
  %v350 = vpop.f32.mrb[0].mxu0
  %v351 = vadd.f32 0.0, %v350
  %v352 = vpop.f32.mrb[0].mxu0
  %v353 = vadd.f32 0.0, %v352
  %354 = vmatprep.mubr.bf16.mxu0 0
  %355 = vmatmul.mubr.bf16.gmra.mrb[0].mxu0 %v212
  %v356 = vpop.f32.mrb[0].mxu0
  %v357 = vadd.f32 0.0, %v356
  %v358 = vpop.f32.mrb[0].mxu0
  %v359 = vadd.f32 0.0, %v358
  %v360 = vpop.f32.mrb[0].mxu0
  %v361 = vadd.f32 0.0, %v360
  %v362 = vpop.f32.mrb[0].mxu0
  %v363 = vadd.f32 0.0, %v362
  %364 = vmatprep.mubr.bf16.mxu0 0
  %365 = vmatmul.mubr.bf16.gmra.mrb[0].mxu0 %v215
  %v366 = vpop.f32.mrb[0].mxu0
  %v367 = vadd.f32 0.0, %v366
  %v368 = vpop.f32.mrb[0].mxu0
  %v369 = vadd.f32 0.0, %v368
  %v370 = vpop.f32.mrb[0].mxu0
  %v371 = vadd.f32 0.0, %v370
  %v372 = vpop.f32.mrb[0].mxu0
  %v373 = vadd.f32 0.0, %v372
  %374 = vmatprep.mubr.bf16.mxu0 0
  %375 = vmatmul.mubr.bf16.gmra.mrb[0].mxu0 %v218
  %v376 = vpop.f32.mrb[0].mxu0
  %v377 = vadd.f32 0.0, %v376
  %v378 = vpop.f32.mrb[0].mxu0
  %v379 = vadd.f32 0.0, %v378
  %v380 = vpop.f32.mrb[0].mxu0
  %v381 = vadd.f32 0.0, %v380
  %v382 = vpop.f32.mrb[0].mxu0
  %v383 = vadd.f32 0.0, %v382
  %384 = vmatprep.mubr.bf16.mxu0 0
  %385 = vmatmul.mubr.bf16.gmra.mrb[0].mxu0 %v221
  %v386 = vpop.f32.mrb[0].mxu0
  %v387 = vadd.f32 0.0, %v386
  %v388 = vpop.f32.mrb[0].mxu0
  %v389 = vadd.f32 0.0, %v388
  %v390 = vpop.f32.mrb[0].mxu0
  %v391 = vadd.f32 0.0, %v390
  %v392 = vpop.f32.mrb[0].mxu0
  %v393 = vadd.f32 0.0, %v392
  %394 = vmatprep.mubr.bf16.mxu0 0
  %395 = vmatmul.mubr.bf16.gmra.mrb[0].mxu0 %v224
  %v396 = vpop.f32.mrb[0].mxu0
  %v397 = vadd.f32 0.0, %v396
  %v398 = vpop.f32.mrb[0].mxu0
  %v399 = vadd.f32 0.0, %v398
  %v400 = vpop.f32.mrb[0].mxu0
  %v401 = vadd.f32 0.0, %v400
  %v402 = vpop.f32.mrb[0].mxu0
  %v403 = vadd.f32 0.0, %v402
  %404 = vmatprep.mubr.bf16.mxu0 0
  %405 = vmatmul.mubr.bf16.gmra.mrb[0].mxu0 %v227
  %v406 = vpop.f32.mrb[0].mxu0
  %v407 = vadd.f32 0.0, %v406
  %v408 = vpop.f32.mrb[0].mxu0
  %v409 = vadd.f32 0.0, %v408
  %v410 = vpop.f32.mrb[0].mxu0
  %v411 = vadd.f32 0.0, %v410
  %v412 = vpop.f32.mrb[0].mxu0
  %v413 = vadd.f32 0.0, %v412
  %414 = vmatprep.mubr.bf16.mxu0 0
  %415 = vmatmul.mubr.bf16.gmra.mrb[0].mxu0 %v230
  %v416 = vpop.f32.mrb[0].mxu0
  %v417 = vadd.f32 0.0, %v416
  %v418 = vpop.f32.mrb[0].mxu0
  %v419 = vadd.f32 0.0, %v418
  %v420 = vpop.f32.mrb[0].mxu0
  %v421 = vadd.f32 0.0, %v420
  %v422 = vpop.f32.mrb[0].mxu0
  %v423 = vadd.f32 0.0, %v422
  %424 = vdwg.mxu0
  %v425 = vstv %s22
  %v426 = vsub.f32 %v267, %v425
  %v427 = vsub.f32 %v269, %v425
  %v428 = vsub.f32 %v271, %v425
  %v429 = vsub.f32 %v273, %v425
  %v430 = vsub.f32 %v277, %v425
  %v431 = vsub.f32 %v279, %v425
  %v432 = vsub.f32 %v281, %v425
  %v433 = vsub.f32 %v283, %v425
  %v434 = vsub.f32 %v287, %v425
  %v435 = vsub.f32 %v289, %v425
  %v436 = vsub.f32 %v291, %v425
  %v437 = vsub.f32 %v293, %v425
  %v438 = vsub.f32 %v297, %v425
  %v439 = vsub.f32 %v299, %v425
  %v440 = vsub.f32 %v301, %v425
  %v441 = vsub.f32 %v303, %v425
  %v442 = vsub.f32 %v307, %v425
  %v443 = vsub.f32 %v309, %v425
  %v444 = vsub.f32 %v311, %v425
  %v445 = vsub.f32 %v313, %v425
  %v446 = vsub.f32 %v317, %v425
  %v447 = vsub.f32 %v319, %v425
  %v448 = vsub.f32 %v321, %v425
  %v449 = vsub.f32 %v323, %v425
  %v450 = vsub.f32 %v327, %v425
  %v451 = vsub.f32 %v329, %v425
  %v452 = vsub.f32 %v331, %v425
  %v453 = vsub.f32 %v333, %v425
  %v454 = vsub.f32 %v337, %v425
  %v455 = vsub.f32 %v339, %v425
  %v456 = vsub.f32 %v341, %v425
  %v457 = vsub.f32 %v343, %v425
  %v458 = vsub.f32 %v347, %v425
  %v459 = vsub.f32 %v349, %v425
  %v460 = vsub.f32 %v351, %v425
  %v461 = vsub.f32 %v353, %v425
  %v462 = vsub.f32 %v357, %v425
  %v463 = vsub.f32 %v359, %v425
  %v464 = vsub.f32 %v361, %v425
  %v465 = vsub.f32 %v363, %v425
  %v466 = vsub.f32 %v367, %v425
  %v467 = vsub.f32 %v369, %v425
  %v468 = vsub.f32 %v371, %v425
  %v469 = vsub.f32 %v373, %v425
  %v470 = vsub.f32 %v377, %v425
  %v471 = vsub.f32 %v379, %v425
  %v472 = vsub.f32 %v381, %v425
  %v473 = vsub.f32 %v383, %v425
  %v474 = vsub.f32 %v387, %v425
  %v475 = vsub.f32 %v389, %v425
  %v476 = vsub.f32 %v391, %v425
  %v477 = vsub.f32 %v393, %v425
  %v478 = vsub.f32 %v397, %v425
  %v479 = vsub.f32 %v399, %v425
  %v480 = vsub.f32 %v401, %v425
  %v481 = vsub.f32 %v403, %v425
  %v482 = vsub.f32 %v407, %v425
  %v483 = vsub.f32 %v409, %v425
  %v484 = vsub.f32 %v411, %v425
  %v485 = vsub.f32 %v413, %v425
  %v486 = vsub.f32 %v417, %v425
  %v487 = vsub.f32 %v419, %v425
  %v488 = vsub.f32 %v421, %v425
  %v489 = vsub.f32 %v423, %v425
  %v490 = vsub.f32 0.1, %v426
  %v491 = vsub.f32 0.1, %v427
  %v492 = vsub.f32 0.1, %v428
  %v493 = vsub.f32 0.1, %v429
  %v494 = vsub.f32 0.1, %v430
  %v495 = vsub.f32 0.1, %v431
  %v496 = vsub.f32 0.1, %v432
  %v497 = vsub.f32 0.1, %v433
  %v498 = vsub.f32 0.1, %v434
  %v499 = vsub.f32 0.1, %v435
  %v500 = vsub.f32 0.1, %v436
  %v501 = vsub.f32 0.1, %v437
  %v502 = vsub.f32 0.1, %v438
  %v503 = vsub.f32 0.1, %v439
  %v504 = vsub.f32 0.1, %v440
  %v505 = vsub.f32 0.1, %v441
  %v506 = vsub.f32 0.1, %v442
  %v507 = vsub.f32 0.1, %v443
  %v508 = vsub.f32 0.1, %v444
  %v509 = vsub.f32 0.1, %v445
  %v510 = vsub.f32 0.1, %v446
  %v511 = vsub.f32 0.1, %v447
  %v512 = vsub.f32 0.1, %v448
  %v513 = vsub.f32 0.1, %v449
  %v514 = vsub.f32 0.1, %v450
  %v515 = vsub.f32 0.1, %v451
  %v516 = vsub.f32 0.1, %v452
  %v517 = vsub.f32 0.1, %v453
  %v518 = vsub.f32 0.1, %v454
  %v519 = vsub.f32 0.1, %v455
  %v520 = vsub.f32 0.1, %v456
  %v521 = vsub.f32 0.1, %v457
  %v522 = vsub.f32 0.1, %v458
  %v523 = vsub.f32 0.1, %v459
  %v524 = vsub.f32 0.1, %v460
  %v525 = vsub.f32 0.1, %v461
  %v526 = vsub.f32 0.1, %v462
  %v527 = vsub.f32 0.1, %v463
  %v528 = vsub.f32 0.1, %v464
  %v529 = vsub.f32 0.1, %v465
  %v530 = vsub.f32 0.1, %v466
  %v531 = vsub.f32 0.1, %v467
  %v532 = vsub.f32 0.1, %v468
  %v533 = vsub.f32 0.1, %v469
  %v534 = vsub.f32 0.1, %v470
  %v535 = vsub.f32 0.1, %v471
  %v536 = vsub.f32 0.1, %v472
  %v537 = vsub.f32 0.1, %v473
  %v538 = vsub.f32 0.1, %v474
  %v539 = vsub.f32 0.1, %v475
  %v540 = vsub.f32 0.1, %v476
  %v541 = vsub.f32 0.1, %v477
  %v542 = vsub.f32 0.1, %v478
  %v543 = vsub.f32 0.1, %v479
  %v544 = vsub.f32 0.1, %v480
  %v545 = vsub.f32 0.1, %v481
  %v546 = vsub.f32 0.1, %v482
  %v547 = vsub.f32 0.1, %v483
  %v548 = vsub.f32 0.1, %v484
  %v549 = vsub.f32 0.1, %v485
  %v550 = vsub.f32 0.1, %v486
  %v551 = vsub.f32 0.1, %v487
  %v552 = vsub.f32 0.1, %v488
  %v553 = vsub.f32 0.1, %v489
  %v554 = vmax.f32 %v490, 0.0
  %v555 = vmax.f32 %v491, 0.0
  %v556 = vmax.f32 %v492, 0.0
  %v557 = vmax.f32 %v493, 0.0
  %v558 = vmax.f32 %v494, 0.0
  %v559 = vmax.f32 %v495, 0.0
  %v560 = vmax.f32 %v496, 0.0
  %v561 = vmax.f32 %v497, 0.0
  %v562 = vmax.f32 %v498, 0.0
  %v563 = vmax.f32 %v499, 0.0
  %v564 = vmax.f32 %v500, 0.0
  %v565 = vmax.f32 %v501, 0.0
  %v566 = vmax.f32 %v502, 0.0
  %v567 = vmax.f32 %v503, 0.0
  %v568 = vmax.f32 %v504, 0.0
  %v569 = vmax.f32 %v505, 0.0
  %v570 = vmax.f32 %v506, 0.0
  %v571 = vmax.f32 %v507, 0.0
  %v572 = vmax.f32 %v508, 0.0
  %v573 = vmax.f32 %v509, 0.0
  %v574 = vmax.f32 %v510, 0.0
  %v575 = vmax.f32 %v511, 0.0
  %v576 = vmax.f32 %v512, 0.0
  %v577 = vmax.f32 %v513, 0.0
  %v578 = vmax.f32 %v514, 0.0
  %v579 = vmax.f32 %v515, 0.0
  %v580 = vmax.f32 %v516, 0.0
  %v581 = vmax.f32 %v517, 0.0
  %v582 = vmax.f32 %v518, 0.0
  %v583 = vmax.f32 %v519, 0.0
  %v584 = vmax.f32 %v520, 0.0
  %v585 = vmax.f32 %v521, 0.0
  %v586 = vmax.f32 %v522, 0.0
  %v587 = vmax.f32 %v523, 0.0
  %v588 = vmax.f32 %v524, 0.0
  %v589 = vmax.f32 %v525, 0.0
  %v590 = vmax.f32 %v526, 0.0
  %v591 = vmax.f32 %v527, 0.0
  %v592 = vmax.f32 %v528, 0.0
  %v593 = vmax.f32 %v529, 0.0
  %v594 = vmax.f32 %v530, 0.0
  %v595 = vmax.f32 %v531, 0.0
  %v596 = vmax.f32 %v532, 0.0
  %v597 = vmax.f32 %v533, 0.0
  %v598 = vmax.f32 %v534, 0.0
  %v599 = vmax.f32 %v535, 0.0
  %v600 = vmax.f32 %v536, 0.0
  %v601 = vmax.f32 %v537, 0.0
  %v602 = vmax.f32 %v538, 0.0
  %v603 = vmax.f32 %v539, 0.0
  %v604 = vmax.f32 %v540, 0.0
  %v605 = vmax.f32 %v541, 0.0
  %v606 = vmax.f32 %v542, 0.0
  %v607 = vmax.f32 %v543, 0.0
  %v608 = vmax.f32 %v544, 0.0
  %v609 = vmax.f32 %v545, 0.0
  %v610 = vmax.f32 %v546, 0.0
  %v611 = vmax.f32 %v547, 0.0
  %v612 = vmax.f32 %v548, 0.0
  %v613 = vmax.f32 %v549, 0.0
  %v614 = vmax.f32 %v550, 0.0
  %v615 = vmax.f32 %v551, 0.0
  %v616 = vmax.f32 %v552, 0.0
  %v617 = vmax.f32 %v553, 0.0
  %v618 = vadd.f32 %v426, 0.1
  %v619 = vadd.f32 %v427, 0.1
  %v620 = vadd.f32 %v428, 0.1
  %v621 = vadd.f32 %v429, 0.1
  %v622 = vadd.f32 %v430, 0.1
  %v623 = vadd.f32 %v431, 0.1
  %v624 = vadd.f32 %v432, 0.1
  %v625 = vadd.f32 %v433, 0.1
  %v626 = vadd.f32 %v434, 0.1
  %v627 = vadd.f32 %v435, 0.1
  %v628 = vadd.f32 %v436, 0.1
  %v629 = vadd.f32 %v437, 0.1
  %v630 = vadd.f32 %v438, 0.1
  %v631 = vadd.f32 %v439, 0.1
  %v632 = vadd.f32 %v440, 0.1
  %v633 = vadd.f32 %v441, 0.1
  %v634 = vadd.f32 %v442, 0.1
  %v635 = vadd.f32 %v443, 0.1
  %v636 = vadd.f32 %v444, 0.1
  %v637 = vadd.f32 %v445, 0.1
  %v638 = vadd.f32 %v446, 0.1
  %v639 = vadd.f32 %v447, 0.1
  %v640 = vadd.f32 %v448, 0.1
  %v641 = vadd.f32 %v449, 0.1
  %v642 = vadd.f32 %v450, 0.1
  %v643 = vadd.f32 %v451, 0.1
  %v644 = vadd.f32 %v452, 0.1
  %v645 = vadd.f32 %v453, 0.1
  %v646 = vadd.f32 %v454, 0.1
  %v647 = vadd.f32 %v455, 0.1
  %v648 = vadd.f32 %v456, 0.1
  %v649 = vadd.f32 %v457, 0.1
  %v650 = vadd.f32 %v458, 0.1
  %v651 = vadd.f32 %v459, 0.1
  %v652 = vadd.f32 %v460, 0.1
  %v653 = vadd.f32 %v461, 0.1
  %v654 = vadd.f32 %v462, 0.1
  %v655 = vadd.f32 %v463, 0.1
  %v656 = vadd.f32 %v464, 0.1
  %v657 = vadd.f32 %v465, 0.1
  %v658 = vadd.f32 %v466, 0.1
  %v659 = vadd.f32 %v467, 0.1
  %v660 = vadd.f32 %v468, 0.1
  %v661 = vadd.f32 %v469, 0.1
  %v662 = vadd.f32 %v470, 0.1
  %v663 = vadd.f32 %v471, 0.1
  %v664 = vadd.f32 %v472, 0.1
  %v665 = vadd.f32 %v473, 0.1
  %v666 = vadd.f32 %v474, 0.1
  %v667 = vadd.f32 %v475, 0.1
  %v668 = vadd.f32 %v476, 0.1
  %v669 = vadd.f32 %v477, 0.1
  %v670 = vadd.f32 %v478, 0.1
  %v671 = vadd.f32 %v479, 0.1
  %v672 = vadd.f32 %v480, 0.1
  %v673 = vadd.f32 %v481, 0.1
  %v674 = vadd.f32 %v482, 0.1
  %v675 = vadd.f32 %v483, 0.1
  %v676 = vadd.f32 %v484, 0.1
  %v677 = vadd.f32 %v485, 0.1
  %v678 = vadd.f32 %v486, 0.1
  %v679 = vadd.f32 %v487, 0.1
  %v680 = vadd.f32 %v488, 0.1
  %v681 = vadd.f32 %v489, 0.1
  %v682 = vmax.f32 %v618, 0.0
  %v683 = vmax.f32 %v619, 0.0
  %v684 = vmax.f32 %v620, 0.0
  %v685 = vmax.f32 %v621, 0.0
  %v686 = vmax.f32 %v622, 0.0
  %v687 = vmax.f32 %v623, 0.0
  %v688 = vmax.f32 %v624, 0.0
  %v689 = vmax.f32 %v625, 0.0
  %v690 = vmax.f32 %v626, 0.0
  %v691 = vmax.f32 %v627, 0.0
  %v692 = vmax.f32 %v628, 0.0
  %v693 = vmax.f32 %v629, 0.0
  %v694 = vmax.f32 %v630, 0.0
  %v695 = vmax.f32 %v631, 0.0
  %v696 = vmax.f32 %v632, 0.0
  %v697 = vmax.f32 %v633, 0.0
  %v698 = vmax.f32 %v634, 0.0
  %v699 = vmax.f32 %v635, 0.0
  %v700 = vmax.f32 %v636, 0.0
  %v701 = vmax.f32 %v637, 0.0
  %v702 = vmax.f32 %v638, 0.0
  %v703 = vmax.f32 %v639, 0.0
  %v704 = vmax.f32 %v640, 0.0
  %v705 = vmax.f32 %v641, 0.0
  %v706 = vmax.f32 %v642, 0.0
  %v707 = vmax.f32 %v643, 0.0
  %v708 = vmax.f32 %v644, 0.0
  %v709 = vmax.f32 %v645, 0.0
  %v710 = vmax.f32 %v646, 0.0
  %v711 = vmax.f32 %v647, 0.0
  %v712 = vmax.f32 %v648, 0.0
  %v713 = vmax.f32 %v649, 0.0
  %v714 = vmax.f32 %v650, 0.0
  %v715 = vmax.f32 %v651, 0.0
  %v716 = vmax.f32 %v652, 0.0
  %v717 = vmax.f32 %v653, 0.0
  %v718 = vmax.f32 %v654, 0.0
  %v719 = vmax.f32 %v655, 0.0
  %v720 = vmax.f32 %v656, 0.0
  %v721 = vmax.f32 %v657, 0.0
  %v722 = vmax.f32 %v658, 0.0
  %v723 = vmax.f32 %v659, 0.0
  %v724 = vmax.f32 %v660, 0.0
  %v725 = vmax.f32 %v661, 0.0
  %v726 = vmax.f32 %v662, 0.0
  %v727 = vmax.f32 %v663, 0.0
  %v728 = vmax.f32 %v664, 0.0
  %v729 = vmax.f32 %v665, 0.0
  %v730 = vmax.f32 %v666, 0.0
  %v731 = vmax.f32 %v667, 0.0
  %v732 = vmax.f32 %v668, 0.0
  %v733 = vmax.f32 %v669, 0.0
  %v734 = vmax.f32 %v670, 0.0
  %v735 = vmax.f32 %v671, 0.0
  %v736 = vmax.f32 %v672, 0.0
  %v737 = vmax.f32 %v673, 0.0
  %v738 = vmax.f32 %v674, 0.0
  %v739 = vmax.f32 %v675, 0.0
  %v740 = vmax.f32 %v676, 0.0
  %v741 = vmax.f32 %v677, 0.0
  %v742 = vmax.f32 %v678, 0.0
  %v743 = vmax.f32 %v679, 0.0
  %v744 = vmax.f32 %v680, 0.0
  %v745 = vmax.f32 %v681, 0.0
  %s746 = smul.u32 0, 256
  %v747 = vlaneseq
  %v748 = vand.u32 %v747, 127
  %v749 = vadd.s32 %v748, 128
  %v750 = vstv %s746
  %v751 = vadd.s32 %v750, %v748
  %v752 = vadd.s32 %v750, %v749
  %vm753 = vcmp.lt.s32.totalorder %v751, 200
  %vm754 = vcmp.lt.s32.totalorder %v752, 200
  %v755 = vld [vmem:[%s2] sm:$0xff]
  %v756 = vld [vmem:[%s2 + $0x8] sm:$0xff]
  %v757 = vld [vmem:[%s2 + $0x10] sm:$0xff]
  %v758 = vld [vmem:[%s2 + $0x18] sm:$0xff]
  %v759 = vld [vmem:[%s2 + $0x20] sm:$0xff]
  %v760 = vld [vmem:[%s2 + $0x28] sm:$0xff]
  %v761 = vld [vmem:[%s2 + $0x30] sm:$0xff]
  %v762 = vld [vmem:[%s2 + $0x38] sm:$0xff]
  %v763 = vld [vmem:[%s2 + $0x40] sm:$0xff]
  %v764 = vld [vmem:[%s2 + $0x48] sm:$0xff]
  %v765 = vld [vmem:[%s2 + $0x50] sm:$0xff]
  %v766 = vld [vmem:[%s2 + $0x58] sm:$0xff]
  %v767 = vld [vmem:[%s2 + $0x60] sm:$0xff]
  %v768 = vld [vmem:[%s2 + $0x68] sm:$0xff]
  %v769 = vld [vmem:[%s2 + $0x70] sm:$0xff]
  %v770 = vld [vmem:[%s2 + $0x78] sm:$0xff]
  %v771 = vld [vmem:[%s2 + $0x80] sm:$0xff]
  %v772 = vld [vmem:[%s2 + $0x88] sm:$0xff]
  %v773 = vld [vmem:[%s2 + $0x90] sm:$0xff]
  %v774 = vld [vmem:[%s2 + $0x98] sm:$0xff]
  %v775 = vld [vmem:[%s2 + $0xa0] sm:$0xff]
  %v776 = vld [vmem:[%s2 + $0xa8] sm:$0xff]
  %v777 = vld [vmem:[%s2 + $0xb0] sm:$0xff]
  %v778 = vld [vmem:[%s2 + $0xb8] sm:$0xff]
  %v779 = vld [vmem:[%s2 + $0xc0] sm:$0xff]
  %v780 = vld [vmem:[%s2 + $0xc8] sm:$0xff]
  %v781 = vld [vmem:[%s2 + $0xd0] sm:$0xff]
  %v782 = vld [vmem:[%s2 + $0xd8] sm:$0xff]
  %v783 = vld [vmem:[%s2 + $0xe0] sm:$0xff]
  %v784 = vld [vmem:[%s2 + $0xe8] sm:$0xff]
  %v785 = vld [vmem:[%s2 + $0xf0] sm:$0xff]
  %v786 = vld [vmem:[%s2 + $0xf8] sm:$0xff]
  %v787 = vld [vmem:[%s3] sm:$0x3]
  %788 = vset.pattern.permute.xlu0 0
  %789 = vperm.xlu0 %788, %v755
  %v790 = vpop.permute.xlu0 %789
  %791 = vset.pattern.permute.xlu0 0
  %792 = vperm.xlu0 %791, %v756
  %v793 = vpop.permute.xlu0 %792
  %794 = vset.pattern.permute.xlu0 0
  %795 = vperm.xlu0 %794, %v757
  %v796 = vpop.permute.xlu0 %795
  %797 = vset.pattern.permute.xlu0 0
  %798 = vperm.xlu0 %797, %v758
  %v799 = vpop.permute.xlu0 %798
  %800 = vset.pattern.permute.xlu0 0
  %801 = vperm.xlu0 %800, %v759
  %v802 = vpop.permute.xlu0 %801
  %803 = vset.pattern.permute.xlu0 0
  %804 = vperm.xlu0 %803, %v760
  %v805 = vpop.permute.xlu0 %804
  %806 = vset.pattern.permute.xlu0 0
  %807 = vperm.xlu0 %806, %v761
  %v808 = vpop.permute.xlu0 %807
  %809 = vset.pattern.permute.xlu0 0
  %810 = vperm.xlu0 %809, %v762
  %v811 = vpop.permute.xlu0 %810
  %812 = vset.pattern.permute.xlu0 0
  %813 = vperm.xlu0 %812, %v763
  %v814 = vpop.permute.xlu0 %813
  %815 = vset.pattern.permute.xlu0 0
  %816 = vperm.xlu0 %815, %v764
  %v817 = vpop.permute.xlu0 %816
  %818 = vset.pattern.permute.xlu0 0
  %819 = vperm.xlu0 %818, %v765
  %v820 = vpop.permute.xlu0 %819
  %821 = vset.pattern.permute.xlu0 0
  %822 = vperm.xlu0 %821, %v766
  %v823 = vpop.permute.xlu0 %822
  %824 = vset.pattern.permute.xlu0 0
  %825 = vperm.xlu0 %824, %v767
  %v826 = vpop.permute.xlu0 %825
  %827 = vset.pattern.permute.xlu0 0
  %828 = vperm.xlu0 %827, %v768
  %v829 = vpop.permute.xlu0 %828
  %830 = vset.pattern.permute.xlu0 0
  %831 = vperm.xlu0 %830, %v769
  %v832 = vpop.permute.xlu0 %831
  %833 = vset.pattern.permute.xlu0 0
  %834 = vperm.xlu0 %833, %v770
  %v835 = vpop.permute.xlu0 %834
  %836 = vset.pattern.permute.xlu0 0
  %837 = vperm.xlu0 %836, %v771
  %v838 = vpop.permute.xlu0 %837
  %839 = vset.pattern.permute.xlu0 0
  %840 = vperm.xlu0 %839, %v772
  %v841 = vpop.permute.xlu0 %840
  %842 = vset.pattern.permute.xlu0 0
  %843 = vperm.xlu0 %842, %v773
  %v844 = vpop.permute.xlu0 %843
  %845 = vset.pattern.permute.xlu0 0
  %846 = vperm.xlu0 %845, %v774
  %v847 = vpop.permute.xlu0 %846
  %848 = vset.pattern.permute.xlu0 0
  %849 = vperm.xlu0 %848, %v775
  %v850 = vpop.permute.xlu0 %849
  %851 = vset.pattern.permute.xlu0 0
  %852 = vperm.xlu0 %851, %v776
  %v853 = vpop.permute.xlu0 %852
  %854 = vset.pattern.permute.xlu0 0
  %855 = vperm.xlu0 %854, %v777
  %v856 = vpop.permute.xlu0 %855
  %857 = vset.pattern.permute.xlu0 0
  %858 = vperm.xlu0 %857, %v778
  %v859 = vpop.permute.xlu0 %858
  %860 = vset.pattern.permute.xlu0 0
  %861 = vperm.xlu0 %860, %v779
  %v862 = vpop.permute.xlu0 %861
  %863 = vset.pattern.permute.xlu0 0
  %864 = vperm.xlu0 %863, %v780
  %v865 = vpop.permute.xlu0 %864
  %866 = vset.pattern.permute.xlu0 0
  %867 = vperm.xlu0 %866, %v781
  %v868 = vpop.permute.xlu0 %867
  %869 = vset.pattern.permute.xlu0 0
  %870 = vperm.xlu0 %869, %v782
  %v871 = vpop.permute.xlu0 %870
  %872 = vset.pattern.permute.xlu0 0
  %873 = vperm.xlu0 %872, %v783
  %v874 = vpop.permute.xlu0 %873
  %875 = vset.pattern.permute.xlu0 0
  %876 = vperm.xlu0 %875, %v784
  %v877 = vpop.permute.xlu0 %876
  %878 = vset.pattern.permute.xlu0 0
  %879 = vperm.xlu0 %878, %v785
  %v880 = vpop.permute.xlu0 %879
  %881 = vset.pattern.permute.xlu0 0
  %882 = vperm.xlu0 %881, %v786
  %v883 = vpop.permute.xlu0 %882
  %v884 = vlaneseq
  %v885 = vshrl.u32 %v884, 7
  %v886 = vsub.s32 0, %v885
  %v887 = vrot.slane %v787, %v886
  %v888 = vlaneseq
  %v889 = vshrl.u32 %v888, 7
  %v890 = vsub.s32 1, %v889
  %v891 = vrot.slane %v787, %v890
  %vm892 = vcmp.eq.s32.totalorder %v790, %v887
  %vm893 = vcmp.eq.s32.totalorder %v790, %v891
  %vm894 = vcmp.eq.s32.totalorder %v793, %v887
  %vm895 = vcmp.eq.s32.totalorder %v793, %v891
  %vm896 = vcmp.eq.s32.totalorder %v796, %v887
  %vm897 = vcmp.eq.s32.totalorder %v796, %v891
  %vm898 = vcmp.eq.s32.totalorder %v799, %v887
  %vm899 = vcmp.eq.s32.totalorder %v799, %v891
  %vm900 = vcmp.eq.s32.totalorder %v802, %v887
  %vm901 = vcmp.eq.s32.totalorder %v802, %v891
  %vm902 = vcmp.eq.s32.totalorder %v805, %v887
  %vm903 = vcmp.eq.s32.totalorder %v805, %v891
  %vm904 = vcmp.eq.s32.totalorder %v808, %v887
  %vm905 = vcmp.eq.s32.totalorder %v808, %v891
  %vm906 = vcmp.eq.s32.totalorder %v811, %v887
  %vm907 = vcmp.eq.s32.totalorder %v811, %v891
  %vm908 = vcmp.eq.s32.totalorder %v814, %v887
  %vm909 = vcmp.eq.s32.totalorder %v814, %v891
  %vm910 = vcmp.eq.s32.totalorder %v817, %v887
  %vm911 = vcmp.eq.s32.totalorder %v817, %v891
  %vm912 = vcmp.eq.s32.totalorder %v820, %v887
  %vm913 = vcmp.eq.s32.totalorder %v820, %v891
  %vm914 = vcmp.eq.s32.totalorder %v823, %v887
  %vm915 = vcmp.eq.s32.totalorder %v823, %v891
  %vm916 = vcmp.eq.s32.totalorder %v826, %v887
  %vm917 = vcmp.eq.s32.totalorder %v826, %v891
  %vm918 = vcmp.eq.s32.totalorder %v829, %v887
  %vm919 = vcmp.eq.s32.totalorder %v829, %v891
  %vm920 = vcmp.eq.s32.totalorder %v832, %v887
  %vm921 = vcmp.eq.s32.totalorder %v832, %v891
  %vm922 = vcmp.eq.s32.totalorder %v835, %v887
  %vm923 = vcmp.eq.s32.totalorder %v835, %v891
  %vm924 = vcmp.eq.s32.totalorder %v838, %v887
  %vm925 = vcmp.eq.s32.totalorder %v838, %v891
  %vm926 = vcmp.eq.s32.totalorder %v841, %v887
  %vm927 = vcmp.eq.s32.totalorder %v841, %v891
  %vm928 = vcmp.eq.s32.totalorder %v844, %v887
  %vm929 = vcmp.eq.s32.totalorder %v844, %v891
  %vm930 = vcmp.eq.s32.totalorder %v847, %v887
  %vm931 = vcmp.eq.s32.totalorder %v847, %v891
  %vm932 = vcmp.eq.s32.totalorder %v850, %v887
  %vm933 = vcmp.eq.s32.totalorder %v850, %v891
  %vm934 = vcmp.eq.s32.totalorder %v853, %v887
  %vm935 = vcmp.eq.s32.totalorder %v853, %v891
  %vm936 = vcmp.eq.s32.totalorder %v856, %v887
  %vm937 = vcmp.eq.s32.totalorder %v856, %v891
  %vm938 = vcmp.eq.s32.totalorder %v859, %v887
  %vm939 = vcmp.eq.s32.totalorder %v859, %v891
  %vm940 = vcmp.eq.s32.totalorder %v862, %v887
  %vm941 = vcmp.eq.s32.totalorder %v862, %v891
  %vm942 = vcmp.eq.s32.totalorder %v865, %v887
  %vm943 = vcmp.eq.s32.totalorder %v865, %v891
  %vm944 = vcmp.eq.s32.totalorder %v868, %v887
  %vm945 = vcmp.eq.s32.totalorder %v868, %v891
  %vm946 = vcmp.eq.s32.totalorder %v871, %v887
  %vm947 = vcmp.eq.s32.totalorder %v871, %v891
  %vm948 = vcmp.eq.s32.totalorder %v874, %v887
  %vm949 = vcmp.eq.s32.totalorder %v874, %v891
  %vm950 = vcmp.eq.s32.totalorder %v877, %v887
  %vm951 = vcmp.eq.s32.totalorder %v877, %v891
  %vm952 = vcmp.eq.s32.totalorder %v880, %v887
  %vm953 = vcmp.eq.s32.totalorder %v880, %v891
  %vm954 = vcmp.eq.s32.totalorder %v883, %v887
  %vm955 = vcmp.eq.s32.totalorder %v883, %v891
  %vm956 = vmand %vm892, %vm753
  %vm957 = vmand %vm893, %vm754
  %vm958 = vmand %vm894, %vm753
  %vm959 = vmand %vm895, %vm754
  %vm960 = vmand %vm896, %vm753
  %vm961 = vmand %vm897, %vm754
  %vm962 = vmand %vm898, %vm753
  %vm963 = vmand %vm899, %vm754
  %vm964 = vmand %vm900, %vm753
  %vm965 = vmand %vm901, %vm754
  %vm966 = vmand %vm902, %vm753
  %vm967 = vmand %vm903, %vm754
  %vm968 = vmand %vm904, %vm753
  %vm969 = vmand %vm905, %vm754
  %vm970 = vmand %vm906, %vm753
  %vm971 = vmand %vm907, %vm754
  %vm972 = vmand %vm908, %vm753
  %vm973 = vmand %vm909, %vm754
  %vm974 = vmand %vm910, %vm753
  %vm975 = vmand %vm911, %vm754
  %vm976 = vmand %vm912, %vm753
  %vm977 = vmand %vm913, %vm754
  %vm978 = vmand %vm914, %vm753
  %vm979 = vmand %vm915, %vm754
  %vm980 = vmand %vm916, %vm753
  %vm981 = vmand %vm917, %vm754
  %vm982 = vmand %vm918, %vm753
  %vm983 = vmand %vm919, %vm754
  %vm984 = vmand %vm920, %vm753
  %vm985 = vmand %vm921, %vm754
  %vm986 = vmand %vm922, %vm753
  %vm987 = vmand %vm923, %vm754
  %vm988 = vmand %vm924, %vm753
  %vm989 = vmand %vm925, %vm754
  %vm990 = vmand %vm926, %vm753
  %vm991 = vmand %vm927, %vm754
  %vm992 = vmand %vm928, %vm753
  %vm993 = vmand %vm929, %vm754
  %vm994 = vmand %vm930, %vm753
  %vm995 = vmand %vm931, %vm754
  %vm996 = vmand %vm932, %vm753
  %vm997 = vmand %vm933, %vm754
  %vm998 = vmand %vm934, %vm753
  %vm999 = vmand %vm935, %vm754
  %vm1000 = vmand %vm936, %vm753
  %vm1001 = vmand %vm937, %vm754
  %vm1002 = vmand %vm938, %vm753
  %vm1003 = vmand %vm939, %vm754
  %vm1004 = vmand %vm940, %vm753
  %vm1005 = vmand %vm941, %vm754
  %vm1006 = vmand %vm942, %vm753
  %vm1007 = vmand %vm943, %vm754
  %vm1008 = vmand %vm944, %vm753
  %vm1009 = vmand %vm945, %vm754
  %vm1010 = vmand %vm946, %vm753
  %vm1011 = vmand %vm947, %vm754
  %vm1012 = vmand %vm948, %vm753
  %vm1013 = vmand %vm949, %vm754
  %vm1014 = vmand %vm950, %vm753
  %vm1015 = vmand %vm951, %vm754
  %vm1016 = vmand %vm952, %vm753
  %vm1017 = vmand %vm953, %vm754
  %vm1018 = vmand %vm954, %vm753
  %vm1019 = vmand %vm955, %vm754
  %vm1020 = vmxor %vm892, 1
  %vm1021 = vmxor %vm893, 1
  %vm1022 = vmxor %vm894, 1
  %vm1023 = vmxor %vm895, 1
  %vm1024 = vmxor %vm896, 1
  %vm1025 = vmxor %vm897, 1
  %vm1026 = vmxor %vm898, 1
  %vm1027 = vmxor %vm899, 1
  %vm1028 = vmxor %vm900, 1
  %vm1029 = vmxor %vm901, 1
  %vm1030 = vmxor %vm902, 1
  %vm1031 = vmxor %vm903, 1
  %vm1032 = vmxor %vm904, 1
  %vm1033 = vmxor %vm905, 1
  %vm1034 = vmxor %vm906, 1
  %vm1035 = vmxor %vm907, 1
  %vm1036 = vmxor %vm908, 1
  %vm1037 = vmxor %vm909, 1
  %vm1038 = vmxor %vm910, 1
  %vm1039 = vmxor %vm911, 1
  %vm1040 = vmxor %vm912, 1
  %vm1041 = vmxor %vm913, 1
  %vm1042 = vmxor %vm914, 1
  %vm1043 = vmxor %vm915, 1
  %vm1044 = vmxor %vm916, 1
  %vm1045 = vmxor %vm917, 1
  %vm1046 = vmxor %vm918, 1
  %vm1047 = vmxor %vm919, 1
  %vm1048 = vmxor %vm920, 1
  %vm1049 = vmxor %vm921, 1
  %vm1050 = vmxor %vm922, 1
  %vm1051 = vmxor %vm923, 1
  %vm1052 = vmxor %vm924, 1
  %vm1053 = vmxor %vm925, 1
  %vm1054 = vmxor %vm926, 1
  %vm1055 = vmxor %vm927, 1
  %vm1056 = vmxor %vm928, 1
  %vm1057 = vmxor %vm929, 1
  %vm1058 = vmxor %vm930, 1
  %vm1059 = vmxor %vm931, 1
  %vm1060 = vmxor %vm932, 1
  %vm1061 = vmxor %vm933, 1
  %vm1062 = vmxor %vm934, 1
  %vm1063 = vmxor %vm935, 1
  %vm1064 = vmxor %vm936, 1
  %vm1065 = vmxor %vm937, 1
  %vm1066 = vmxor %vm938, 1
  %vm1067 = vmxor %vm939, 1
  %vm1068 = vmxor %vm940, 1
  %vm1069 = vmxor %vm941, 1
  %vm1070 = vmxor %vm942, 1
  %vm1071 = vmxor %vm943, 1
  %vm1072 = vmxor %vm944, 1
  %vm1073 = vmxor %vm945, 1
  %vm1074 = vmxor %vm946, 1
  %vm1075 = vmxor %vm947, 1
  %vm1076 = vmxor %vm948, 1
  %vm1077 = vmxor %vm949, 1
  %vm1078 = vmxor %vm950, 1
  %vm1079 = vmxor %vm951, 1
  %vm1080 = vmxor %vm952, 1
  %vm1081 = vmxor %vm953, 1
  %vm1082 = vmxor %vm954, 1
  %vm1083 = vmxor %vm955, 1
  %vm1084 = vmand %vm1020, %vm753
  %vm1085 = vmand %vm1021, %vm754
  %vm1086 = vmand %vm1022, %vm753
  %vm1087 = vmand %vm1023, %vm754
  %vm1088 = vmand %vm1024, %vm753
  %vm1089 = vmand %vm1025, %vm754
  %vm1090 = vmand %vm1026, %vm753
  %vm1091 = vmand %vm1027, %vm754
  %vm1092 = vmand %vm1028, %vm753
  %vm1093 = vmand %vm1029, %vm754
  %vm1094 = vmand %vm1030, %vm753
  %vm1095 = vmand %vm1031, %vm754
  %vm1096 = vmand %vm1032, %vm753
  %vm1097 = vmand %vm1033, %vm754
  %vm1098 = vmand %vm1034, %vm753
  %vm1099 = vmand %vm1035, %vm754
  %vm1100 = vmand %vm1036, %vm753
  %vm1101 = vmand %vm1037, %vm754
  %vm1102 = vmand %vm1038, %vm753
  %vm1103 = vmand %vm1039, %vm754
  %vm1104 = vmand %vm1040, %vm753
  %vm1105 = vmand %vm1041, %vm754
  %vm1106 = vmand %vm1042, %vm753
  %vm1107 = vmand %vm1043, %vm754
  %vm1108 = vmand %vm1044, %vm753
  %vm1109 = vmand %vm1045, %vm754
  %vm1110 = vmand %vm1046, %vm753
  %vm1111 = vmand %vm1047, %vm754
  %vm1112 = vmand %vm1048, %vm753
  %vm1113 = vmand %vm1049, %vm754
  %vm1114 = vmand %vm1050, %vm753
  %vm1115 = vmand %vm1051, %vm754
  %vm1116 = vmand %vm1052, %vm753
  %vm1117 = vmand %vm1053, %vm754
  %vm1118 = vmand %vm1054, %vm753
  %vm1119 = vmand %vm1055, %vm754
  %vm1120 = vmand %vm1056, %vm753
  %vm1121 = vmand %vm1057, %vm754
  %vm1122 = vmand %vm1058, %vm753
  %vm1123 = vmand %vm1059, %vm754
  %vm1124 = vmand %vm1060, %vm753
  %vm1125 = vmand %vm1061, %vm754
  %vm1126 = vmand %vm1062, %vm753
  %vm1127 = vmand %vm1063, %vm754
  %vm1128 = vmand %vm1064, %vm753
  %vm1129 = vmand %vm1065, %vm754
  %vm1130 = vmand %vm1066, %vm753
  %vm1131 = vmand %vm1067, %vm754
  %vm1132 = vmand %vm1068, %vm753
  %vm1133 = vmand %vm1069, %vm754
  %vm1134 = vmand %vm1070, %vm753
  %vm1135 = vmand %vm1071, %vm754
  %vm1136 = vmand %vm1072, %vm753
  %vm1137 = vmand %vm1073, %vm754
  %vm1138 = vmand %vm1074, %vm753
  %vm1139 = vmand %vm1075, %vm754
  %vm1140 = vmand %vm1076, %vm753
  %vm1141 = vmand %vm1077, %vm754
  %vm1142 = vmand %vm1078, %vm753
  %vm1143 = vmand %vm1079, %vm754
  %vm1144 = vmand %vm1080, %vm753
  %vm1145 = vmand %vm1081, %vm754
  %vm1146 = vmand %vm1082, %vm753
  %vm1147 = vmand %vm1083, %vm754
  %v1148 = vsel %vm956, %v554, 0.0
  %v1149 = vsel %vm957, %v555, 0.0
  %v1150 = vsel %vm958, %v556, 0.0
  %v1151 = vsel %vm959, %v557, 0.0
  %v1152 = vsel %vm960, %v558, 0.0
  %v1153 = vsel %vm961, %v559, 0.0
  %v1154 = vsel %vm962, %v560, 0.0
  %v1155 = vsel %vm963, %v561, 0.0
  %v1156 = vsel %vm964, %v562, 0.0
  %v1157 = vsel %vm965, %v563, 0.0
  %v1158 = vsel %vm966, %v564, 0.0
  %v1159 = vsel %vm967, %v565, 0.0
  %v1160 = vsel %vm968, %v566, 0.0
  %v1161 = vsel %vm969, %v567, 0.0
  %v1162 = vsel %vm970, %v568, 0.0
  %v1163 = vsel %vm971, %v569, 0.0
  %v1164 = vsel %vm972, %v570, 0.0
  %v1165 = vsel %vm973, %v571, 0.0
  %v1166 = vsel %vm974, %v572, 0.0
  %v1167 = vsel %vm975, %v573, 0.0
  %v1168 = vsel %vm976, %v574, 0.0
  %v1169 = vsel %vm977, %v575, 0.0
  %v1170 = vsel %vm978, %v576, 0.0
  %v1171 = vsel %vm979, %v577, 0.0
  %v1172 = vsel %vm980, %v578, 0.0
  %v1173 = vsel %vm981, %v579, 0.0
  %v1174 = vsel %vm982, %v580, 0.0
  %v1175 = vsel %vm983, %v581, 0.0
  %v1176 = vsel %vm984, %v582, 0.0
  %v1177 = vsel %vm985, %v583, 0.0
  %v1178 = vsel %vm986, %v584, 0.0
  %v1179 = vsel %vm987, %v585, 0.0
  %v1180 = vsel %vm988, %v586, 0.0
  %v1181 = vsel %vm989, %v587, 0.0
  %v1182 = vsel %vm990, %v588, 0.0
  %v1183 = vsel %vm991, %v589, 0.0
  %v1184 = vsel %vm992, %v590, 0.0
  %v1185 = vsel %vm993, %v591, 0.0
  %v1186 = vsel %vm994, %v592, 0.0
  %v1187 = vsel %vm995, %v593, 0.0
  %v1188 = vsel %vm996, %v594, 0.0
  %v1189 = vsel %vm997, %v595, 0.0
  %v1190 = vsel %vm998, %v596, 0.0
  %v1191 = vsel %vm999, %v597, 0.0
  %v1192 = vsel %vm1000, %v598, 0.0
  %v1193 = vsel %vm1001, %v599, 0.0
  %v1194 = vsel %vm1002, %v600, 0.0
  %v1195 = vsel %vm1003, %v601, 0.0
  %v1196 = vsel %vm1004, %v602, 0.0
  %v1197 = vsel %vm1005, %v603, 0.0
  %v1198 = vsel %vm1006, %v604, 0.0
  %v1199 = vsel %vm1007, %v605, 0.0
  %v1200 = vsel %vm1008, %v606, 0.0
  %v1201 = vsel %vm1009, %v607, 0.0
  %v1202 = vsel %vm1010, %v608, 0.0
  %v1203 = vsel %vm1011, %v609, 0.0
  %v1204 = vsel %vm1012, %v610, 0.0
  %v1205 = vsel %vm1013, %v611, 0.0
  %v1206 = vsel %vm1014, %v612, 0.0
  %v1207 = vsel %vm1015, %v613, 0.0
  %v1208 = vsel %vm1016, %v614, 0.0
  %v1209 = vsel %vm1017, %v615, 0.0
  %v1210 = vsel %vm1018, %v616, 0.0
  %v1211 = vsel %vm1019, %v617, 0.0
  %v1212 = vsel %vm1084, %v682, 0.0
  %v1213 = vsel %vm1085, %v683, 0.0
  %v1214 = vsel %vm1086, %v684, 0.0
  %v1215 = vsel %vm1087, %v685, 0.0
  %v1216 = vsel %vm1088, %v686, 0.0
  %v1217 = vsel %vm1089, %v687, 0.0
  %v1218 = vsel %vm1090, %v688, 0.0
  %v1219 = vsel %vm1091, %v689, 0.0
  %v1220 = vsel %vm1092, %v690, 0.0
  %v1221 = vsel %vm1093, %v691, 0.0
  %v1222 = vsel %vm1094, %v692, 0.0
  %v1223 = vsel %vm1095, %v693, 0.0
  %v1224 = vsel %vm1096, %v694, 0.0
  %v1225 = vsel %vm1097, %v695, 0.0
  %v1226 = vsel %vm1098, %v696, 0.0
  %v1227 = vsel %vm1099, %v697, 0.0
  %v1228 = vsel %vm1100, %v698, 0.0
  %v1229 = vsel %vm1101, %v699, 0.0
  %v1230 = vsel %vm1102, %v700, 0.0
  %v1231 = vsel %vm1103, %v701, 0.0
  %v1232 = vsel %vm1104, %v702, 0.0
  %v1233 = vsel %vm1105, %v703, 0.0
  %v1234 = vsel %vm1106, %v704, 0.0
  %v1235 = vsel %vm1107, %v705, 0.0
  %v1236 = vsel %vm1108, %v706, 0.0
  %v1237 = vsel %vm1109, %v707, 0.0
  %v1238 = vsel %vm1110, %v708, 0.0
  %v1239 = vsel %vm1111, %v709, 0.0
  %v1240 = vsel %vm1112, %v710, 0.0
  %v1241 = vsel %vm1113, %v711, 0.0
  %v1242 = vsel %vm1114, %v712, 0.0
  %v1243 = vsel %vm1115, %v713, 0.0
  %v1244 = vsel %vm1116, %v714, 0.0
  %v1245 = vsel %vm1117, %v715, 0.0
  %v1246 = vsel %vm1118, %v716, 0.0
  %v1247 = vsel %vm1119, %v717, 0.0
  %v1248 = vsel %vm1120, %v718, 0.0
  %v1249 = vsel %vm1121, %v719, 0.0
  %v1250 = vsel %vm1122, %v720, 0.0
  %v1251 = vsel %vm1123, %v721, 0.0
  %v1252 = vsel %vm1124, %v722, 0.0
  %v1253 = vsel %vm1125, %v723, 0.0
  %v1254 = vsel %vm1126, %v724, 0.0
  %v1255 = vsel %vm1127, %v725, 0.0
  %v1256 = vsel %vm1128, %v726, 0.0
  %v1257 = vsel %vm1129, %v727, 0.0
  %v1258 = vsel %vm1130, %v728, 0.0
  %v1259 = vsel %vm1131, %v729, 0.0
  %v1260 = vsel %vm1132, %v730, 0.0
  %v1261 = vsel %vm1133, %v731, 0.0
  %v1262 = vsel %vm1134, %v732, 0.0
  %v1263 = vsel %vm1135, %v733, 0.0
  %v1264 = vsel %vm1136, %v734, 0.0
  %v1265 = vsel %vm1137, %v735, 0.0
  %v1266 = vsel %vm1138, %v736, 0.0
  %v1267 = vsel %vm1139, %v737, 0.0
  %v1268 = vsel %vm1140, %v738, 0.0
  %v1269 = vsel %vm1141, %v739, 0.0
  %v1270 = vsel %vm1142, %v740, 0.0
  %v1271 = vsel %vm1143, %v741, 0.0
  %v1272 = vsel %vm1144, %v742, 0.0
  %v1273 = vsel %vm1145, %v743, 0.0
  %v1274 = vsel %vm1146, %v744, 0.0
  %v1275 = vsel %vm1147, %v745, 0.0
  %p1276 = scmp.eq.s32.totalorder 0, 0
  // Predicated region
  $region22: #{tpu_custom_call.1} parent=0 // pred_check
    %p1277 = pneg %p1276
  $region23: #{tpu_custom_call.1} parent=0 // pred_check_branch
    %1279 = sbr.rel (%p1277) target = $region25
  $region24: #{tpu_custom_call.1} parent=0 // pred_region
    %1280 = vst [vmem:[#allocation2] sm:$0xff] %v1148
    %1281 = vst [vmem:[#allocation2 + $0x8] sm:$0xff] %v1149
    %1282 = vst [vmem:[#allocation2 + $0x10] sm:$0xff] %v1150
    %1283 = vst [vmem:[#allocation2 + $0x18] sm:$0xff] %v1151
    %1284 = vst [vmem:[#allocation2 + $0x20] sm:$0xff] %v1152
    %1285 = vst [vmem:[#allocation2 + $0x28] sm:$0xff] %v1153
    %1286 = vst [vmem:[#allocation2 + $0x30] sm:$0xff] %v1154
    %1287 = vst [vmem:[#allocation2 + $0x38] sm:$0xff] %v1155
    %1288 = vst [vmem:[#allocation2 + $0x40] sm:$0xff] %v1156
    %1289 = vst [vmem:[#allocation2 + $0x48] sm:$0xff] %v1157
    %1290 = vst [vmem:[#allocation2 + $0x50] sm:$0xff] %v1158
    %1291 = vst [vmem:[#allocation2 + $0x58] sm:$0xff] %v1159
    %1292 = vst [vmem:[#allocation2 + $0x60] sm:$0xff] %v1160
    %1293 = vst [vmem:[#allocation2 + $0x68] sm:$0xff] %v1161
    %1294 = vst [vmem:[#allocation2 + $0x70] sm:$0xff] %v1162
    %1295 = vst [vmem:[#allocation2 + $0x78] sm:$0xff] %v1163
    %1296 = vst [vmem:[#allocation2 + $0x80] sm:$0xff] %v1164
    %1297 = vst [vmem:[#allocation2 + $0x88] sm:$0xff] %v1165
    %1298 = vst [vmem:[#allocation2 + $0x90] sm:$0xff] %v1166
    %1299 = vst [vmem:[#allocation2 + $0x98] sm:$0xff] %v1167
    %1300 = vst [vmem:[#allocation2 + $0xa0] sm:$0xff] %v1168
    %1301 = vst [vmem:[#allocation2 + $0xa8] sm:$0xff] %v1169
    %1302 = vst [vmem:[#allocation2 + $0xb0] sm:$0xff] %v1170
    %1303 = vst [vmem:[#allocation2 + $0xb8] sm:$0xff] %v1171
    %1304 = vst [vmem:[#allocation2 + $0xc0] sm:$0xff] %v1172
    %1305 = vst [vmem:[#allocation2 + $0xc8] sm:$0xff] %v1173
    %1306 = vst [vmem:[#allocation2 + $0xd0] sm:$0xff] %v1174
    %1307 = vst [vmem:[#allocation2 + $0xd8] sm:$0xff] %v1175
    %1308 = vst [vmem:[#allocation2 + $0xe0] sm:$0xff] %v1176
    %1309 = vst [vmem:[#allocation2 + $0xe8] sm:$0xff] %v1177
    %1310 = vst [vmem:[#allocation2 + $0xf0] sm:$0xff] %v1178
    %1311 = vst [vmem:[#allocation2 + $0xf8] sm:$0xff] %v1179
    %1312 = vst [vmem:[#allocation2 + $0x100] sm:$0xff] %v1180
    %1313 = vst [vmem:[#allocation2 + $0x108] sm:$0xff] %v1181
    %1314 = vst [vmem:[#allocation2 + $0x110] sm:$0xff] %v1182
    %1315 = vst [vmem:[#allocation2 + $0x118] sm:$0xff] %v1183
    %1316 = vst [vmem:[#allocation2 + $0x120] sm:$0xff] %v1184
    %1317 = vst [vmem:[#allocation2 + $0x128] sm:$0xff] %v1185
    %1318 = vst [vmem:[#allocation2 + $0x130] sm:$0xff] %v1186
    %1319 = vst [vmem:[#allocation2 + $0x138] sm:$0xff] %v1187
    %1320 = vst [vmem:[#allocation2 + $0x140] sm:$0xff] %v1188
    %1321 = vst [vmem:[#allocation2 + $0x148] sm:$0xff] %v1189
    %1322 = vst [vmem:[#allocation2 + $0x150] sm:$0xff] %v1190
    %1323 = vst [vmem:[#allocation2 + $0x158] sm:$0xff] %v1191
    %1324 = vst [vmem:[#allocation2 + $0x160] sm:$0xff] %v1192
    %1325 = vst [vmem:[#allocation2 + $0x168] sm:$0xff] %v1193
    %1326 = vst [vmem:[#allocation2 + $0x170] sm:$0xff] %v1194
    %1327 = vst [vmem:[#allocation2 + $0x178] sm:$0xff] %v1195
    %1328 = vst [vmem:[#allocation2 + $0x180] sm:$0xff] %v1196
    %1329 = vst [vmem:[#allocation2 + $0x188] sm:$0xff] %v1197
    %1330 = vst [vmem:[#allocation2 + $0x190] sm:$0xff] %v1198
    %1331 = vst [vmem:[#allocation2 + $0x198] sm:$0xff] %v1199
    %1332 = vst [vmem:[#allocation2 + $0x1a0] sm:$0xff] %v1200
    %1333 = vst [vmem:[#allocation2 + $0x1a8] sm:$0xff] %v1201
    %1334 = vst [vmem:[#allocation2 + $0x1b0] sm:$0xff] %v1202
    %1335 = vst [vmem:[#allocation2 + $0x1b8] sm:$0xff] %v1203
    %1336 = vst [vmem:[#allocation2 + $0x1c0] sm:$0xff] %v1204
    %1337 = vst [vmem:[#allocation2 + $0x1c8] sm:$0xff] %v1205
    %1338 = vst [vmem:[#allocation2 + $0x1d0] sm:$0xff] %v1206
    %1339 = vst [vmem:[#allocation2 + $0x1d8] sm:$0xff] %v1207
    %1340 = vst [vmem:[#allocation2 + $0x1e0] sm:$0xff] %v1208
    %1341 = vst [vmem:[#allocation2 + $0x1e8] sm:$0xff] %v1209
    %1342 = vst [vmem:[#allocation2 + $0x1f0] sm:$0xff] %v1210
    %1343 = vst [vmem:[#allocation2 + $0x1f8] sm:$0xff] %v1211
    %1344 = vst [vmem:[#allocation3] sm:$0xff] %v1148
    %1345 = vst [vmem:[#allocation3 + $0x8] sm:$0xff] %v1149
    %1346 = vst [vmem:[#allocation3 + $0x10] sm:$0xff] %v1150
    %1347 = vst [vmem:[#allocation3 + $0x18] sm:$0xff] %v1151
    %1348 = vst [vmem:[#allocation3 + $0x20] sm:$0xff] %v1152
    %1349 = vst [vmem:[#allocation3 + $0x28] sm:$0xff] %v1153
    %1350 = vst [vmem:[#allocation3 + $0x30] sm:$0xff] %v1154
    %1351 = vst [vmem:[#allocation3 + $0x38] sm:$0xff] %v1155
    %1352 = vst [vmem:[#allocation3 + $0x40] sm:$0xff] %v1156
    %1353 = vst [vmem:[#allocation3 + $0x48] sm:$0xff] %v1157
    %1354 = vst [vmem:[#allocation3 + $0x50] sm:$0xff] %v1158
    %1355 = vst [vmem:[#allocation3 + $0x58] sm:$0xff] %v1159
    %1356 = vst [vmem:[#allocation3 + $0x60] sm:$0xff] %v1160
    %1357 = vst [vmem:[#allocation3 + $0x68] sm:$0xff] %v1161
    %1358 = vst [vmem:[#allocation3 + $0x70] sm:$0xff] %v1162
    %1359 = vst [vmem:[#allocation3 + $0x78] sm:$0xff] %v1163
    %1360 = vst [vmem:[#allocation3 + $0x80] sm:$0xff] %v1164
    %1361 = vst [vmem:[#allocation3 + $0x88] sm:$0xff] %v1165
    %1362 = vst [vmem:[#allocation3 + $0x90] sm:$0xff] %v1166
    %1363 = vst [vmem:[#allocation3 + $0x98] sm:$0xff] %v1167
    %1364 = vst [vmem:[#allocation3 + $0xa0] sm:$0xff] %v1168
    %1365 = vst [vmem:[#allocation3 + $0xa8] sm:$0xff] %v1169
    %1366 = vst [vmem:[#allocation3 + $0xb0] sm:$0xff] %v1170
    %1367 = vst [vmem:[#allocation3 + $0xb8] sm:$0xff] %v1171
    %1368 = vst [vmem:[#allocation3 + $0xc0] sm:$0xff] %v1172
    %1369 = vst [vmem:[#allocation3 + $0xc8] sm:$0xff] %v1173
    %1370 = vst [vmem:[#allocation3 + $0xd0] sm:$0xff] %v1174
    %1371 = vst [vmem:[#allocation3 + $0xd8] sm:$0xff] %v1175
    %1372 = vst [vmem:[#allocation3 + $0xe0] sm:$0xff] %v1176
    %1373 = vst [vmem:[#allocation3 + $0xe8] sm:$0xff] %v1177
    %1374 = vst [vmem:[#allocation3 + $0xf0] sm:$0xff] %v1178
    %1375 = vst [vmem:[#allocation3 + $0xf8] sm:$0xff] %v1179
    %1376 = vst [vmem:[#allocation3 + $0x100] sm:$0xff] %v1180
    %1377 = vst [vmem:[#allocation3 + $0x108] sm:$0xff] %v1181
    %1378 = vst [vmem:[#allocation3 + $0x110] sm:$0xff] %v1182
    %1379 = vst [vmem:[#allocation3 + $0x118] sm:$0xff] %v1183
    %1380 = vst [vmem:[#allocation3 + $0x120] sm:$0xff] %v1184
    %1381 = vst [vmem:[#allocation3 + $0x128] sm:$0xff] %v1185
    %1382 = vst [vmem:[#allocation3 + $0x130] sm:$0xff] %v1186
    %1383 = vst [vmem:[#allocation3 + $0x138] sm:$0xff] %v1187
    %1384 = vst [vmem:[#allocation3 + $0x140] sm:$0xff] %v1188
    %1385 = vst [vmem:[#allocation3 + $0x148] sm:$0xff] %v1189
    %1386 = vst [vmem:[#allocation3 + $0x150] sm:$0xff] %v1190
    %1387 = vst [vmem:[#allocation3 + $0x158] sm:$0xff] %v1191
    %1388 = vst [vmem:[#allocation3 + $0x160] sm:$0xff] %v1192
    %1389 = vst [vmem:[#allocation3 + $0x168] sm:$0xff] %v1193
    %1390 = vst [vmem:[#allocation3 + $0x170] sm:$0xff] %v1194
    %1391 = vst [vmem:[#allocation3 + $0x178] sm:$0xff] %v1195
    %1392 = vst [vmem:[#allocation3 + $0x180] sm:$0xff] %v1196
    %1393 = vst [vmem:[#allocation3 + $0x188] sm:$0xff] %v1197
    %1394 = vst [vmem:[#allocation3 + $0x190] sm:$0xff] %v1198
    %1395 = vst [vmem:[#allocation3 + $0x198] sm:$0xff] %v1199
    %1396 = vst [vmem:[#allocation3 + $0x1a0] sm:$0xff] %v1200
    %1397 = vst [vmem:[#allocation3 + $0x1a8] sm:$0xff] %v1201
    %1398 = vst [vmem:[#allocation3 + $0x1b0] sm:$0xff] %v1202
    %1399 = vst [vmem:[#allocation3 + $0x1b8] sm:$0xff] %v1203
    %1400 = vst [vmem:[#allocation3 + $0x1c0] sm:$0xff] %v1204
    %1401 = vst [vmem:[#allocation3 + $0x1c8] sm:$0xff] %v1205
    %1402 = vst [vmem:[#allocation3 + $0x1d0] sm:$0xff] %v1206
    %1403 = vst [vmem:[#allocation3 + $0x1d8] sm:$0xff] %v1207
    %1404 = vst [vmem:[#allocation3 + $0x1e0] sm:$0xff] %v1208
    %1405 = vst [vmem:[#allocation3 + $0x1e8] sm:$0xff] %v1209
    %1406 = vst [vmem:[#allocation3 + $0x1f0] sm:$0xff] %v1210
    %1407 = vst [vmem:[#allocation3 + $0x1f8] sm:$0xff] %v1211
    %v1408 = vsel %vm956, %v751, 1073741824
    %v1409 = vsel %vm957, %v752, 1073741824
    %v1410 = vsel %vm958, %v751, 1073741824
    %v1411 = vsel %vm959, %v752, 1073741824
    %v1412 = vsel %vm960, %v751, 1073741824
    %v1413 = vsel %vm961, %v752, 1073741824
    %v1414 = vsel %vm962, %v751, 1073741824
    %v1415 = vsel %vm963, %v752, 1073741824
    %v1416 = vsel %vm964, %v751, 1073741824
    %v1417 = vsel %vm965, %v752, 1073741824
    %v1418 = vsel %vm966, %v751, 1073741824
    %v1419 = vsel %vm967, %v752, 1073741824
    %v1420 = vsel %vm968, %v751, 1073741824
    %v1421 = vsel %vm969, %v752, 1073741824
    %v1422 = vsel %vm970, %v751, 1073741824
    %v1423 = vsel %vm971, %v752, 1073741824
    %v1424 = vsel %vm972, %v751, 1073741824
    %v1425 = vsel %vm973, %v752, 1073741824
    %v1426 = vsel %vm974, %v751, 1073741824
    %v1427 = vsel %vm975, %v752, 1073741824
    %v1428 = vsel %vm976, %v751, 1073741824
    %v1429 = vsel %vm977, %v752, 1073741824
    %v1430 = vsel %vm978, %v751, 1073741824
    %v1431 = vsel %vm979, %v752, 1073741824
    %v1432 = vsel %vm980, %v751, 1073741824
    %v1433 = vsel %vm981, %v752, 1073741824
    %v1434 = vsel %vm982, %v751, 1073741824
    %v1435 = vsel %vm983, %v752, 1073741824
    %v1436 = vsel %vm984, %v751, 1073741824
    %v1437 = vsel %vm985, %v752, 1073741824
    %v1438 = vsel %vm986, %v751, 1073741824
    %v1439 = vsel %vm987, %v752, 1073741824
    %v1440 = vsel %vm988, %v751, 1073741824
    %v1441 = vsel %vm989, %v752, 1073741824
    %v1442 = vsel %vm990, %v751, 1073741824
    %v1443 = vsel %vm991, %v752, 1073741824
    %v1444 = vsel %vm992, %v751, 1073741824
    %v1445 = vsel %vm993, %v752, 1073741824
    %v1446 = vsel %vm994, %v751, 1073741824
    %v1447 = vsel %vm995, %v752, 1073741824
    %v1448 = vsel %vm996, %v751, 1073741824
    %v1449 = vsel %vm997, %v752, 1073741824
    %v1450 = vsel %vm998, %v751, 1073741824
    %v1451 = vsel %vm999, %v752, 1073741824
    %v1452 = vsel %vm1000, %v751, 1073741824
    %v1453 = vsel %vm1001, %v752, 1073741824
    %v1454 = vsel %vm1002, %v751, 1073741824
    %v1455 = vsel %vm1003, %v752, 1073741824
    %v1456 = vsel %vm1004, %v751, 1073741824
    %v1457 = vsel %vm1005, %v752, 1073741824
    %v1458 = vsel %vm1006, %v751, 1073741824
    %v1459 = vsel %vm1007, %v752, 1073741824
    %v1460 = vsel %vm1008, %v751, 1073741824
    %v1461 = vsel %vm1009, %v752, 1073741824
    %v1462 = vsel %vm1010, %v751, 1073741824
    %v1463 = vsel %vm1011, %v752, 1073741824
    %v1464 = vsel %vm1012, %v751, 1073741824
    %v1465 = vsel %vm1013, %v752, 1073741824
    %v1466 = vsel %vm1014, %v751, 1073741824
    %v1467 = vsel %vm1015, %v752, 1073741824
    %v1468 = vsel %vm1016, %v751, 1073741824
    %v1469 = vsel %vm1017, %v752, 1073741824
    %v1470 = vsel %vm1018, %v751, 1073741824
    %v1471 = vsel %vm1019, %v752, 1073741824
    %1472 = vst [vmem:[#allocation4] sm:$0xff] %v1408
    %1473 = vst [vmem:[#allocation4 + $0x8] sm:$0xff] %v1409
    %1474 = vst [vmem:[#allocation4 + $0x10] sm:$0xff] %v1410
    %1475 = vst [vmem:[#allocation4 + $0x18] sm:$0xff] %v1411
    %1476 = vst [vmem:[#allocation4 + $0x20] sm:$0xff] %v1412
    %1477 = vst [vmem:[#allocation4 + $0x28] sm:$0xff] %v1413
    %1478 = vst [vmem:[#allocation4 + $0x30] sm:$0xff] %v1414
    %1479 = vst [vmem:[#allocation4 + $0x38] sm:$0xff] %v1415
    %1480 = vst [vmem:[#allocation4 + $0x40] sm:$0xff] %v1416
    %1481 = vst [vmem:[#allocation4 + $0x48] sm:$0xff] %v1417
    %1482 = vst [vmem:[#allocation4 + $0x50] sm:$0xff] %v1418
    %1483 = vst [vmem:[#allocation4 + $0x58] sm:$0xff] %v1419
    %1484 = vst [vmem:[#allocation4 + $0x60] sm:$0xff] %v1420
    %1485 = vst [vmem:[#allocation4 + $0x68] sm:$0xff] %v1421
    %1486 = vst [vmem:[#allocation4 + $0x70] sm:$0xff] %v1422
    %1487 = vst [vmem:[#allocation4 + $0x78] sm:$0xff] %v1423
    %1488 = vst [vmem:[#allocation4 + $0x80] sm:$0xff] %v1424
    %1489 = vst [vmem:[#allocation4 + $0x88] sm:$0xff] %v1425
    %1490 = vst [vmem:[#allocation4 + $0x90] sm:$0xff] %v1426
    %1491 = vst [vmem:[#allocation4 + $0x98] sm:$0xff] %v1427
    %1492 = vst [vmem:[#allocation4 + $0xa0] sm:$0xff] %v1428
    %1493 = vst [vmem:[#allocation4 + $0xa8] sm:$0xff] %v1429
    %1494 = vst [vmem:[#allocation4 + $0xb0] sm:$0xff] %v1430
    %1495 = vst [vmem:[#allocation4 + $0xb8] sm:$0xff] %v1431
    %1496 = vst [vmem:[#allocation4 + $0xc0] sm:$0xff] %v1432
    %1497 = vst [vmem:[#allocation4 + $0xc8] sm:$0xff] %v1433
    %1498 = vst [vmem:[#allocation4 + $0xd0] sm:$0xff] %v1434
    %1499 = vst [vmem:[#allocation4 + $0xd8] sm:$0xff] %v1435
    %1500 = vst [vmem:[#allocation4 + $0xe0] sm:$0xff] %v1436
    %1501 = vst [vmem:[#allocation4 + $0xe8] sm:$0xff] %v1437
    %1502 = vst [vmem:[#allocation4 + $0xf0] sm:$0xff] %v1438
    %1503 = vst [vmem:[#allocation4 + $0xf8] sm:$0xff] %v1439
    %1504 = vst [vmem:[#allocation4 + $0x100] sm:$0xff] %v1440
    %1505 = vst [vmem:[#allocation4 + $0x108] sm:$0xff] %v1441
    %1506 = vst [vmem:[#allocation4 + $0x110] sm:$0xff] %v1442
    %1507 = vst [vmem:[#allocation4 + $0x118] sm:$0xff] %v1443
    %1508 = vst [vmem:[#allocation4 + $0x120] sm:$0xff] %v1444
    %1509 = vst [vmem:[#allocation4 + $0x128] sm:$0xff] %v1445
    %1510 = vst [vmem:[#allocation4 + $0x130] sm:$0xff] %v1446
    %1511 = vst [vmem:[#allocation4 + $0x138] sm:$0xff] %v1447
    %1512 = vst [vmem:[#allocation4 + $0x140] sm:$0xff] %v1448
    %1513 = vst [vmem:[#allocation4 + $0x148] sm:$0xff] %v1449
    %1514 = vst [vmem:[#allocation4 + $0x150] sm:$0xff] %v1450
    %1515 = vst [vmem:[#allocation4 + $0x158] sm:$0xff] %v1451
    %1516 = vst [vmem:[#allocation4 + $0x160] sm:$0xff] %v1452
    %1517 = vst [vmem:[#allocation4 + $0x168] sm:$0xff] %v1453
    %1518 = vst [vmem:[#allocation4 + $0x170] sm:$0xff] %v1454
    %1519 = vst [vmem:[#allocation4 + $0x178] sm:$0xff] %v1455
    %1520 = vst [vmem:[#allocation4 + $0x180] sm:$0xff] %v1456
    %1521 = vst [vmem:[#allocation4 + $0x188] sm:$0xff] %v1457
    %1522 = vst [vmem:[#allocation4 + $0x190] sm:$0xff] %v1458
    %1523 = vst [vmem:[#allocation4 + $0x198] sm:$0xff] %v1459
    %1524 = vst [vmem:[#allocation4 + $0x1a0] sm:$0xff] %v1460
    %1525 = vst [vmem:[#allocation4 + $0x1a8] sm:$0xff] %v1461
    %1526 = vst [vmem:[#allocation4 + $0x1b0] sm:$0xff] %v1462
    %1527 = vst [vmem:[#allocation4 + $0x1b8] sm:$0xff] %v1463
    %1528 = vst [vmem:[#allocation4 + $0x1c0] sm:$0xff] %v1464
    %1529 = vst [vmem:[#allocation4 + $0x1c8] sm:$0xff] %v1465
    %1530 = vst [vmem:[#allocation4 + $0x1d0] sm:$0xff] %v1466
    %1531 = vst [vmem:[#allocation4 + $0x1d8] sm:$0xff] %v1467
    %1532 = vst [vmem:[#allocation4 + $0x1e0] sm:$0xff] %v1468
    %1533 = vst [vmem:[#allocation4 + $0x1e8] sm:$0xff] %v1469
    %1534 = vst [vmem:[#allocation4 + $0x1f0] sm:$0xff] %v1470
    %1535 = vst [vmem:[#allocation4 + $0x1f8] sm:$0xff] %v1471
    %1536 = vst [vmem:[#allocation5] sm:$0xff] %v1148
    %1537 = vst [vmem:[#allocation5 + $0x8] sm:$0xff] %v1149
    %1538 = vst [vmem:[#allocation5 + $0x10] sm:$0xff] %v1150
    %1539 = vst [vmem:[#allocation5 + $0x18] sm:$0xff] %v1151
    %1540 = vst [vmem:[#allocation5 + $0x20] sm:$0xff] %v1152
    %1541 = vst [vmem:[#allocation5 + $0x28] sm:$0xff] %v1153
    %1542 = vst [vmem:[#allocation5 + $0x30] sm:$0xff] %v1154
    %1543 = vst [vmem:[#allocation5 + $0x38] sm:$0xff] %v1155
    %1544 = vst [vmem:[#allocation5 + $0x40] sm:$0xff] %v1156
    %1545 = vst [vmem:[#allocation5 + $0x48] sm:$0xff] %v1157
    %1546 = vst [vmem:[#allocation5 + $0x50] sm:$0xff] %v1158
    %1547 = vst [vmem:[#allocation5 + $0x58] sm:$0xff] %v1159
    %1548 = vst [vmem:[#allocation5 + $0x60] sm:$0xff] %v1160
    %1549 = vst [vmem:[#allocation5 + $0x68] sm:$0xff] %v1161
    %1550 = vst [vmem:[#allocation5 + $0x70] sm:$0xff] %v1162
    %1551 = vst [vmem:[#allocation5 + $0x78] sm:$0xff] %v1163
    %1552 = vst [vmem:[#allocation5 + $0x80] sm:$0xff] %v1164
    %1553 = vst [vmem:[#allocation5 + $0x88] sm:$0xff] %v1165
    %1554 = vst [vmem:[#allocation5 + $0x90] sm:$0xff] %v1166
    %1555 = vst [vmem:[#allocation5 + $0x98] sm:$0xff] %v1167
    %1556 = vst [vmem:[#allocation5 + $0xa0] sm:$0xff] %v1168
    %1557 = vst [vmem:[#allocation5 + $0xa8] sm:$0xff] %v1169
    %1558 = vst [vmem:[#allocation5 + $0xb0] sm:$0xff] %v1170
    %1559 = vst [vmem:[#allocation5 + $0xb8] sm:$0xff] %v1171
    %1560 = vst [vmem:[#allocation5 + $0xc0] sm:$0xff] %v1172
    %1561 = vst [vmem:[#allocation5 + $0xc8] sm:$0xff] %v1173
    %1562 = vst [vmem:[#allocation5 + $0xd0] sm:$0xff] %v1174
    %1563 = vst [vmem:[#allocation5 + $0xd8] sm:$0xff] %v1175
    %1564 = vst [vmem:[#allocation5 + $0xe0] sm:$0xff] %v1176
    %1565 = vst [vmem:[#allocation5 + $0xe8] sm:$0xff] %v1177
    %1566 = vst [vmem:[#allocation5 + $0xf0] sm:$0xff] %v1178
    %1567 = vst [vmem:[#allocation5 + $0xf8] sm:$0xff] %v1179
    %1568 = vst [vmem:[#allocation5 + $0x100] sm:$0xff] %v1180
    %1569 = vst [vmem:[#allocation5 + $0x108] sm:$0xff] %v1181
    %1570 = vst [vmem:[#allocation5 + $0x110] sm:$0xff] %v1182
    %1571 = vst [vmem:[#allocation5 + $0x118] sm:$0xff] %v1183
    %1572 = vst [vmem:[#allocation5 + $0x120] sm:$0xff] %v1184
    %1573 = vst [vmem:[#allocation5 + $0x128] sm:$0xff] %v1185
    %1574 = vst [vmem:[#allocation5 + $0x130] sm:$0xff] %v1186
    %1575 = vst [vmem:[#allocation5 + $0x138] sm:$0xff] %v1187
    %1576 = vst [vmem:[#allocation5 + $0x140] sm:$0xff] %v1188
    %1577 = vst [vmem:[#allocation5 + $0x148] sm:$0xff] %v1189
    %1578 = vst [vmem:[#allocation5 + $0x150] sm:$0xff] %v1190
    %1579 = vst [vmem:[#allocation5 + $0x158] sm:$0xff] %v1191
    %1580 = vst [vmem:[#allocation5 + $0x160] sm:$0xff] %v1192
    %1581 = vst [vmem:[#allocation5 + $0x168] sm:$0xff] %v1193
    %1582 = vst [vmem:[#allocation5 + $0x170] sm:$0xff] %v1194
    %1583 = vst [vmem:[#allocation5 + $0x178] sm:$0xff] %v1195
    %1584 = vst [vmem:[#allocation5 + $0x180] sm:$0xff] %v1196
    %1585 = vst [vmem:[#allocation5 + $0x188] sm:$0xff] %v1197
    %1586 = vst [vmem:[#allocation5 + $0x190] sm:$0xff] %v1198
    %1587 = vst [vmem:[#allocation5 + $0x198] sm:$0xff] %v1199
    %1588 = vst [vmem:[#allocation5 + $0x1a0] sm:$0xff] %v1200
    %1589 = vst [vmem:[#allocation5 + $0x1a8] sm:$0xff] %v1201
    %1590 = vst [vmem:[#allocation5 + $0x1b0] sm:$0xff] %v1202
    %1591 = vst [vmem:[#allocation5 + $0x1b8] sm:$0xff] %v1203
    %1592 = vst [vmem:[#allocation5 + $0x1c0] sm:$0xff] %v1204
    %1593 = vst [vmem:[#allocation5 + $0x1c8] sm:$0xff] %v1205
    %1594 = vst [vmem:[#allocation5 + $0x1d0] sm:$0xff] %v1206
    %1595 = vst [vmem:[#allocation5 + $0x1d8] sm:$0xff] %v1207
    %1596 = vst [vmem:[#allocation5 + $0x1e0] sm:$0xff] %v1208
    %1597 = vst [vmem:[#allocation5 + $0x1e8] sm:$0xff] %v1209
    %1598 = vst [vmem:[#allocation5 + $0x1f0] sm:$0xff] %v1210
    %1599 = vst [vmem:[#allocation5 + $0x1f8] sm:$0xff] %v1211
    %1600 = vst [vmem:[#allocation6] sm:$0xff] %v1212
    %1601 = vst [vmem:[#allocation6 + $0x8] sm:$0xff] %v1213
    %1602 = vst [vmem:[#allocation6 + $0x10] sm:$0xff] %v1214
    %1603 = vst [vmem:[#allocation6 + $0x18] sm:$0xff] %v1215
    %1604 = vst [vmem:[#allocation6 + $0x20] sm:$0xff] %v1216
    %1605 = vst [vmem:[#allocation6 + $0x28] sm:$0xff] %v1217
    %1606 = vst [vmem:[#allocation6 + $0x30] sm:$0xff] %v1218
    %1607 = vst [vmem:[#allocation6 + $0x38] sm:$0xff] %v1219
    %1608 = vst [vmem:[#allocation6 + $0x40] sm:$0xff] %v1220
    %1609 = vst [vmem:[#allocation6 + $0x48] sm:$0xff] %v1221
    %1610 = vst [vmem:[#allocation6 + $0x50] sm:$0xff] %v1222
    %1611 = vst [vmem:[#allocation6 + $0x58] sm:$0xff] %v1223
    %1612 = vst [vmem:[#allocation6 + $0x60] sm:$0xff] %v1224
    %1613 = vst [vmem:[#allocation6 + $0x68] sm:$0xff] %v1225
    %1614 = vst [vmem:[#allocation6 + $0x70] sm:$0xff] %v1226
    %1615 = vst [vmem:[#allocation6 + $0x78] sm:$0xff] %v1227
    %1616 = vst [vmem:[#allocation6 + $0x80] sm:$0xff] %v1228
    %1617 = vst [vmem:[#allocation6 + $0x88] sm:$0xff] %v1229
    %1618 = vst [vmem:[#allocation6 + $0x90] sm:$0xff] %v1230
    %1619 = vst [vmem:[#allocation6 + $0x98] sm:$0xff] %v1231
    %1620 = vst [vmem:[#allocation6 + $0xa0] sm:$0xff] %v1232
    %1621 = vst [vmem:[#allocation6 + $0xa8] sm:$0xff] %v1233
    %1622 = vst [vmem:[#allocation6 + $0xb0] sm:$0xff] %v1234
    %1623 = vst [vmem:[#allocation6 + $0xb8] sm:$0xff] %v1235
    %1624 = vst [vmem:[#allocation6 + $0xc0] sm:$0xff] %v1236
    %1625 = vst [vmem:[#allocation6 + $0xc8] sm:$0xff] %v1237
    %1626 = vst [vmem:[#allocation6 + $0xd0] sm:$0xff] %v1238
    %1627 = vst [vmem:[#allocation6 + $0xd8] sm:$0xff] %v1239
    %1628 = vst [vmem:[#allocation6 + $0xe0] sm:$0xff] %v1240
    %1629 = vst [vmem:[#allocation6 + $0xe8] sm:$0xff] %v1241
    %1630 = vst [vmem:[#allocation6 + $0xf0] sm:$0xff] %v1242
    %1631 = vst [vmem:[#allocation6 + $0xf8] sm:$0xff] %v1243
    %1632 = vst [vmem:[#allocation6 + $0x100] sm:$0xff] %v1244
    %1633 = vst [vmem:[#allocation6 + $0x108] sm:$0xff] %v1245
    %1634 = vst [vmem:[#allocation6 + $0x110] sm:$0xff] %v1246
    %1635 = vst [vmem:[#allocation6 + $0x118] sm:$0xff] %v1247
    %1636 = vst [vmem:[#allocation6 + $0x120] sm:$0xff] %v1248
    %1637 = vst [vmem:[#allocation6 + $0x128] sm:$0xff] %v1249
    %1638 = vst [vmem:[#allocation6 + $0x130] sm:$0xff] %v1250
    %1639 = vst [vmem:[#allocation6 + $0x138] sm:$0xff] %v1251
    %1640 = vst [vmem:[#allocation6 + $0x140] sm:$0xff] %v1252
    %1641 = vst [vmem:[#allocation6 + $0x148] sm:$0xff] %v1253
    %1642 = vst [vmem:[#allocation6 + $0x150] sm:$0xff] %v1254
    %1643 = vst [vmem:[#allocation6 + $0x158] sm:$0xff] %v1255
    %1644 = vst [vmem:[#allocation6 + $0x160] sm:$0xff] %v1256
    %1645 = vst [vmem:[#allocation6 + $0x168] sm:$0xff] %v1257
    %1646 = vst [vmem:[#allocation6 + $0x170] sm:$0xff] %v1258
    %1647 = vst [vmem:[#allocation6 + $0x178] sm:$0xff] %v1259
    %1648 = vst [vmem:[#allocation6 + $0x180] sm:$0xff] %v1260
    %1649 = vst [vmem:[#allocation6 + $0x188] sm:$0xff] %v1261
    %1650 = vst [vmem:[#allocation6 + $0x190] sm:$0xff] %v1262
    %1651 = vst [vmem:[#allocation6 + $0x198] sm:$0xff] %v1263
    %1652 = vst [vmem:[#allocation6 + $0x1a0] sm:$0xff] %v1264
    %1653 = vst [vmem:[#allocation6 + $0x1a8] sm:$0xff] %v1265
    %1654 = vst [vmem:[#allocation6 + $0x1b0] sm:$0xff] %v1266
    %1655 = vst [vmem:[#allocation6 + $0x1b8] sm:$0xff] %v1267
    %1656 = vst [vmem:[#allocation6 + $0x1c0] sm:$0xff] %v1268
    %1657 = vst [vmem:[#allocation6 + $0x1c8] sm:$0xff] %v1269
    %1658 = vst [vmem:[#allocation6 + $0x1d0] sm:$0xff] %v1270
    %1659 = vst [vmem:[#allocation6 + $0x1d8] sm:$0xff] %v1271
    %1660 = vst [vmem:[#allocation6 + $0x1e0] sm:$0xff] %v1272
    %1661 = vst [vmem:[#allocation6 + $0x1e8] sm:$0xff] %v1273
    %1662 = vst [vmem:[#allocation6 + $0x1f0] sm:$0xff] %v1274
    %1663 = vst [vmem:[#allocation6 + $0x1f8] sm:$0xff] %v1275
    %1664 = vst [vmem:[#allocation7] sm:$0xff] %v1212
    %1665 = vst [vmem:[#allocation7 + $0x8] sm:$0xff] %v1213
    %1666 = vst [vmem:[#allocation7 + $0x10] sm:$0xff] %v1214
    %1667 = vst [vmem:[#allocation7 + $0x18] sm:$0xff] %v1215
    %1668 = vst [vmem:[#allocation7 + $0x20] sm:$0xff] %v1216
    %1669 = vst [vmem:[#allocation7 + $0x28] sm:$0xff] %v1217
    %1670 = vst [vmem:[#allocation7 + $0x30] sm:$0xff] %v1218
    %1671 = vst [vmem:[#allocation7 + $0x38] sm:$0xff] %v1219
    %1672 = vst [vmem:[#allocation7 + $0x40] sm:$0xff] %v1220
    %1673 = vst [vmem:[#allocation7 + $0x48] sm:$0xff] %v1221
    %1674 = vst [vmem:[#allocation7 + $0x50] sm:$0xff] %v1222
    %1675 = vst [vmem:[#allocation7 + $0x58] sm:$0xff] %v1223
    %1676 = vst [vmem:[#allocation7 + $0x60] sm:$0xff] %v1224
    %1677 = vst [vmem:[#allocation7 + $0x68] sm:$0xff] %v1225
    %1678 = vst [vmem:[#allocation7 + $0x70] sm:$0xff] %v1226
    %1679 = vst [vmem:[#allocation7 + $0x78] sm:$0xff] %v1227
    %1680 = vst [vmem:[#allocation7 + $0x80] sm:$0xff] %v1228
    %1681 = vst [vmem:[#allocation7 + $0x88] sm:$0xff] %v1229
    %1682 = vst [vmem:[#allocation7 + $0x90] sm:$0xff] %v1230
    %1683 = vst [vmem:[#allocation7 + $0x98] sm:$0xff] %v1231
    %1684 = vst [vmem:[#allocation7 + $0xa0] sm:$0xff] %v1232
    %1685 = vst [vmem:[#allocation7 + $0xa8] sm:$0xff] %v1233
    %1686 = vst [vmem:[#allocation7 + $0xb0] sm:$0xff] %v1234
    %1687 = vst [vmem:[#allocation7 + $0xb8] sm:$0xff] %v1235
    %1688 = vst [vmem:[#allocation7 + $0xc0] sm:$0xff] %v1236
    %1689 = vst [vmem:[#allocation7 + $0xc8] sm:$0xff] %v1237
    %1690 = vst [vmem:[#allocation7 + $0xd0] sm:$0xff] %v1238
    %1691 = vst [vmem:[#allocation7 + $0xd8] sm:$0xff] %v1239
    %1692 = vst [vmem:[#allocation7 + $0xe0] sm:$0xff] %v1240
    %1693 = vst [vmem:[#allocation7 + $0xe8] sm:$0xff] %v1241
    %1694 = vst [vmem:[#allocation7 + $0xf0] sm:$0xff] %v1242
    %1695 = vst [vmem:[#allocation7 + $0xf8] sm:$0xff] %v1243
    %1696 = vst [vmem:[#allocation7 + $0x100] sm:$0xff] %v1244
    %1697 = vst [vmem:[#allocation7 + $0x108] sm:$0xff] %v1245
    %1698 = vst [vmem:[#allocation7 + $0x110] sm:$0xff] %v1246
    %1699 = vst [vmem:[#allocation7 + $0x118] sm:$0xff] %v1247
    %1700 = vst [vmem:[#allocation7 + $0x120] sm:$0xff] %v1248
    %1701 = vst [vmem:[#allocation7 + $0x128] sm:$0xff] %v1249
    %1702 = vst [vmem:[#allocation7 + $0x130] sm:$0xff] %v1250
    %1703 = vst [vmem:[#allocation7 + $0x138] sm:$0xff] %v1251
    %1704 = vst [vmem:[#allocation7 + $0x140] sm:$0xff] %v1252
    %1705 = vst [vmem:[#allocation7 + $0x148] sm:$0xff] %v1253
    %1706 = vst [vmem:[#allocation7 + $0x150] sm:$0xff] %v1254
    %1707 = vst [vmem:[#allocation7 + $0x158] sm:$0xff] %v1255
    %1708 = vst [vmem:[#allocation7 + $0x160] sm:$0xff] %v1256
    %1709 = vst [vmem:[#allocation7 + $0x168] sm:$0xff] %v1257
    %1710 = vst [vmem:[#allocation7 + $0x170] sm:$0xff] %v1258
    %1711 = vst [vmem:[#allocation7 + $0x178] sm:$0xff] %v1259
    %1712 = vst [vmem:[#allocation7 + $0x180] sm:$0xff] %v1260
    %1713 = vst [vmem:[#allocation7 + $0x188] sm:$0xff] %v1261
    %1714 = vst [vmem:[#allocation7 + $0x190] sm:$0xff] %v1262
    %1715 = vst [vmem:[#allocation7 + $0x198] sm:$0xff] %v1263
    %1716 = vst [vmem:[#allocation7 + $0x1a0] sm:$0xff] %v1264
    %1717 = vst [vmem:[#allocation7 + $0x1a8] sm:$0xff] %v1265
    %1718 = vst [vmem:[#allocation7 + $0x1b0] sm:$0xff] %v1266
    %1719 = vst [vmem:[#allocation7 + $0x1b8] sm:$0xff] %v1267
    %1720 = vst [vmem:[#allocation7 + $0x1c0] sm:$0xff] %v1268
    %1721 = vst [vmem:[#allocation7 + $0x1c8] sm:$0xff] %v1269
    %1722 = vst [vmem:[#allocation7 + $0x1d0] sm:$0xff] %v1270
    %1723 = vst [vmem:[#allocation7 + $0x1d8] sm:$0xff] %v1271
    %1724 = vst [vmem:[#allocation7 + $0x1e0] sm:$0xff] %v1272
    %1725 = vst [vmem:[#allocation7 + $0x1e8] sm:$0xff] %v1273
    %1726 = vst [vmem:[#allocation7 + $0x1f0] sm:$0xff] %v1274
    %1727 = vst [vmem:[#allocation7 + $0x1f8] sm:$0xff] %v1275
    %v1728 = vsel %vm1084, %v751, 1073741824
    %v1729 = vsel %vm1085, %v752, 1073741824
    %v1730 = vsel %vm1086, %v751, 1073741824
    %v1731 = vsel %vm1087, %v752, 1073741824
    %v1732 = vsel %vm1088, %v751, 1073741824
    %v1733 = vsel %vm1089, %v752, 1073741824
    %v1734 = vsel %vm1090, %v751, 1073741824
    %v1735 = vsel %vm1091, %v752, 1073741824
    %v1736 = vsel %vm1092, %v751, 1073741824
    %v1737 = vsel %vm1093, %v752, 1073741824
    %v1738 = vsel %vm1094, %v751, 1073741824
    %v1739 = vsel %vm1095, %v752, 1073741824
    %v1740 = vsel %vm1096, %v751, 1073741824
    %v1741 = vsel %vm1097, %v752, 1073741824
    %v1742 = vsel %vm1098, %v751, 1073741824
    %v1743 = vsel %vm1099, %v752, 1073741824
    %v1744 = vsel %vm1100, %v751, 1073741824
    %v1745 = vsel %vm1101, %v752, 1073741824
    %v1746 = vsel %vm1102, %v751, 1073741824
    %v1747 = vsel %vm1103, %v752, 1073741824
    %v1748 = vsel %vm1104, %v751, 1073741824
    %v1749 = vsel %vm1105, %v752, 1073741824
    %v1750 = vsel %vm1106, %v751, 1073741824
    %v1751 = vsel %vm1107, %v752, 1073741824
    %v1752 = vsel %vm1108, %v751, 1073741824
    %v1753 = vsel %vm1109, %v752, 1073741824
    %v1754 = vsel %vm1110, %v751, 1073741824
    %v1755 = vsel %vm1111, %v752, 1073741824
    %v1756 = vsel %vm1112, %v751, 1073741824
    %v1757 = vsel %vm1113, %v752, 1073741824
    %v1758 = vsel %vm1114, %v751, 1073741824
    %v1759 = vsel %vm1115, %v752, 1073741824
    %v1760 = vsel %vm1116, %v751, 1073741824
    %v1761 = vsel %vm1117, %v752, 1073741824
    %v1762 = vsel %vm1118, %v751, 1073741824
    %v1763 = vsel %vm1119, %v752, 1073741824
    %v1764 = vsel %vm1120, %v751, 1073741824
    %v1765 = vsel %vm1121, %v752, 1073741824
    %v1766 = vsel %vm1122, %v751, 1073741824
    %v1767 = vsel %vm1123, %v752, 1073741824
    %v1768 = vsel %vm1124, %v751, 1073741824
    %v1769 = vsel %vm1125, %v752, 1073741824
    %v1770 = vsel %vm1126, %v751, 1073741824
    %v1771 = vsel %vm1127, %v752, 1073741824
    %v1772 = vsel %vm1128, %v751, 1073741824
    %v1773 = vsel %vm1129, %v752, 1073741824
    %v1774 = vsel %vm1130, %v751, 1073741824
    %v1775 = vsel %vm1131, %v752, 1073741824
    %v1776 = vsel %vm1132, %v751, 1073741824
    %v1777 = vsel %vm1133, %v752, 1073741824
    %v1778 = vsel %vm1134, %v751, 1073741824
    %v1779 = vsel %vm1135, %v752, 1073741824
    %v1780 = vsel %vm1136, %v751, 1073741824
    %v1781 = vsel %vm1137, %v752, 1073741824
    %v1782 = vsel %vm1138, %v751, 1073741824
    %v1783 = vsel %vm1139, %v752, 1073741824
    %v1784 = vsel %vm1140, %v751, 1073741824
    %v1785 = vsel %vm1141, %v752, 1073741824
    %v1786 = vsel %vm1142, %v751, 1073741824
    %v1787 = vsel %vm1143, %v752, 1073741824
    %v1788 = vsel %vm1144, %v751, 1073741824
    %v1789 = vsel %vm1145, %v752, 1073741824
    %v1790 = vsel %vm1146, %v751, 1073741824
    %v1791 = vsel %vm1147, %v752, 1073741824
    %1792 = vst [vmem:[#allocation8] sm:$0xff] %v1728
    %1793 = vst [vmem:[#allocation8 + $0x8] sm:$0xff] %v1729
    %1794 = vst [vmem:[#allocation8 + $0x10] sm:$0xff] %v1730
    %1795 = vst [vmem:[#allocation8 + $0x18] sm:$0xff] %v1731
    %1796 = vst [vmem:[#allocation8 + $0x20] sm:$0xff] %v1732
    %1797 = vst [vmem:[#allocation8 + $0x28] sm:$0xff] %v1733
    %1798 = vst [vmem:[#allocation8 + $0x30] sm:$0xff] %v1734
    %1799 = vst [vmem:[#allocation8 + $0x38] sm:$0xff] %v1735
    %1800 = vst [vmem:[#allocation8 + $0x40] sm:$0xff] %v1736
    %1801 = vst [vmem:[#allocation8 + $0x48] sm:$0xff] %v1737
    %1802 = vst [vmem:[#allocation8 + $0x50] sm:$0xff] %v1738
    %1803 = vst [vmem:[#allocation8 + $0x58] sm:$0xff] %v1739
    %1804 = vst [vmem:[#allocation8 + $0x60] sm:$0xff] %v1740
    %1805 = vst [vmem:[#allocation8 + $0x68] sm:$0xff] %v1741
    %1806 = vst [vmem:[#allocation8 + $0x70] sm:$0xff] %v1742
    %1807 = vst [vmem:[#allocation8 + $0x78] sm:$0xff] %v1743
    %1808 = vst [vmem:[#allocation8 + $0x80] sm:$0xff] %v1744
    %1809 = vst [vmem:[#allocation8 + $0x88] sm:$0xff] %v1745
    %1810 = vst [vmem:[#allocation8 + $0x90] sm:$0xff] %v1746
    %1811 = vst [vmem:[#allocation8 + $0x98] sm:$0xff] %v1747
    %1812 = vst [vmem:[#allocation8 + $0xa0] sm:$0xff] %v1748
    %1813 = vst [vmem:[#allocation8 + $0xa8] sm:$0xff] %v1749
    %1814 = vst [vmem:[#allocation8 + $0xb0] sm:$0xff] %v1750
    %1815 = vst [vmem:[#allocation8 + $0xb8] sm:$0xff] %v1751
    %1816 = vst [vmem:[#allocation8 + $0xc0] sm:$0xff] %v1752
    %1817 = vst [vmem:[#allocation8 + $0xc8] sm:$0xff] %v1753
    %1818 = vst [vmem:[#allocation8 + $0xd0] sm:$0xff] %v1754
    %1819 = vst [vmem:[#allocation8 + $0xd8] sm:$0xff] %v1755
    %1820 = vst [vmem:[#allocation8 + $0xe0] sm:$0xff] %v1756
    %1821 = vst [vmem:[#allocation8 + $0xe8] sm:$0xff] %v1757
    %1822 = vst [vmem:[#allocation8 + $0xf0] sm:$0xff] %v1758
    %1823 = vst [vmem:[#allocation8 + $0xf8] sm:$0xff] %v1759
    %1824 = vst [vmem:[#allocation8 + $0x100] sm:$0xff] %v1760
    %1825 = vst [vmem:[#allocation8 + $0x108] sm:$0xff] %v1761
    %1826 = vst [vmem:[#allocation8 + $0x110] sm:$0xff] %v1762
    %1827 = vst [vmem:[#allocation8 + $0x118] sm:$0xff] %v1763
    %1828 = vst [vmem:[#allocation8 + $0x120] sm:$0xff] %v1764
    %1829 = vst [vmem:[#allocation8 + $0x128] sm:$0xff] %v1765
    %1830 = vst [vmem:[#allocation8 + $0x130] sm:$0xff] %v1766
    %1831 = vst [vmem:[#allocation8 + $0x138] sm:$0xff] %v1767
    %1832 = vst [vmem:[#allocation8 + $0x140] sm:$0xff] %v1768
    %1833 = vst [vmem:[#allocation8 + $0x148] sm:$0xff] %v1769
    %1834 = vst [vmem:[#allocation8 + $0x150] sm:$0xff] %v1770
    %1835 = vst [vmem:[#allocation8 + $0x158] sm:$0xff] %v1771
    %1836 = vst [vmem:[#allocation8 + $0x160] sm:$0xff] %v1772
    %1837 = vst [vmem:[#allocation8 + $0x168] sm:$0xff] %v1773
    %1838 = vst [vmem:[#allocation8 + $0x170] sm:$0xff] %v1774
    %1839 = vst [vmem:[#allocation8 + $0x178] sm:$0xff] %v1775
    %1840 = vst [vmem:[#allocation8 + $0x180] sm:$0xff] %v1776
    %1841 = vst [vmem:[#allocation8 + $0x188] sm:$0xff] %v1777
    %1842 = vst [vmem:[#allocation8 + $0x190] sm:$0xff] %v1778
    %1843 = vst [vmem:[#allocation8 + $0x198] sm:$0xff] %v1779
    %1844 = vst [vmem:[#allocation8 + $0x1a0] sm:$0xff] %v1780
    %1845 = vst [vmem:[#allocation8 + $0x1a8] sm:$0xff] %v1781
    %1846 = vst [vmem:[#allocation8 + $0x1b0] sm:$0xff] %v1782
    %1847 = vst [vmem:[#allocation8 + $0x1b8] sm:$0xff] %v1783
    %1848 = vst [vmem:[#allocation8 + $0x1c0] sm:$0xff] %v1784
    %1849 = vst [vmem:[#allocation8 + $0x1c8] sm:$0xff] %v1785
    %1850 = vst [vmem:[#allocation8 + $0x1d0] sm:$0xff] %v1786
    %1851 = vst [vmem:[#allocation8 + $0x1d8] sm:$0xff] %v1787
    %1852 = vst [vmem:[#allocation8 + $0x1e0] sm:$0xff] %v1788
    %1853 = vst [vmem:[#allocation8 + $0x1e8] sm:$0xff] %v1789
    %1854 = vst [vmem:[#allocation8 + $0x1f0] sm:$0xff] %v1790
    %1855 = vst [vmem:[#allocation8 + $0x1f8] sm:$0xff] %v1791
    %1856 = vst [vmem:[#allocation9] sm:$0xff] %v1212
    %1857 = vst [vmem:[#allocation9 + $0x8] sm:$0xff] %v1213
    %1858 = vst [vmem:[#allocation9 + $0x10] sm:$0xff] %v1214
    %1859 = vst [vmem:[#allocation9 + $0x18] sm:$0xff] %v1215
    %1860 = vst [vmem:[#allocation9 + $0x20] sm:$0xff] %v1216
    %1861 = vst [vmem:[#allocation9 + $0x28] sm:$0xff] %v1217
    %1862 = vst [vmem:[#allocation9 + $0x30] sm:$0xff] %v1218
    %1863 = vst [vmem:[#allocation9 + $0x38] sm:$0xff] %v1219
    %1864 = vst [vmem:[#allocation9 + $0x40] sm:$0xff] %v1220
    %1865 = vst [vmem:[#allocation9 + $0x48] sm:$0xff] %v1221
    %1866 = vst [vmem:[#allocation9 + $0x50] sm:$0xff] %v1222
    %1867 = vst [vmem:[#allocation9 + $0x58] sm:$0xff] %v1223
    %1868 = vst [vmem:[#allocation9 + $0x60] sm:$0xff] %v1224
    %1869 = vst [vmem:[#allocation9 + $0x68] sm:$0xff] %v1225
    %1870 = vst [vmem:[#allocation9 + $0x70] sm:$0xff] %v1226
    %1871 = vst [vmem:[#allocation9 + $0x78] sm:$0xff] %v1227
    %1872 = vst [vmem:[#allocation9 + $0x80] sm:$0xff] %v1228
    %1873 = vst [vmem:[#allocation9 + $0x88] sm:$0xff] %v1229
    %1874 = vst [vmem:[#allocation9 + $0x90] sm:$0xff] %v1230
    %1875 = vst [vmem:[#allocation9 + $0x98] sm:$0xff] %v1231
    %1876 = vst [vmem:[#allocation9 + $0xa0] sm:$0xff] %v1232
    %1877 = vst [vmem:[#allocation9 + $0xa8] sm:$0xff] %v1233
    %1878 = vst [vmem:[#allocation9 + $0xb0] sm:$0xff] %v1234
    %1879 = vst [vmem:[#allocation9 + $0xb8] sm:$0xff] %v1235
    %1880 = vst [vmem:[#allocation9 + $0xc0] sm:$0xff] %v1236
    %1881 = vst [vmem:[#allocation9 + $0xc8] sm:$0xff] %v1237
    %1882 = vst [vmem:[#allocation9 + $0xd0] sm:$0xff] %v1238
    %1883 = vst [vmem:[#allocation9 + $0xd8] sm:$0xff] %v1239
    %1884 = vst [vmem:[#allocation9 + $0xe0] sm:$0xff] %v1240
    %1885 = vst [vmem:[#allocation9 + $0xe8] sm:$0xff] %v1241
    %1886 = vst [vmem:[#allocation9 + $0xf0] sm:$0xff] %v1242
    %1887 = vst [vmem:[#allocation9 + $0xf8] sm:$0xff] %v1243
    %1888 = vst [vmem:[#allocation9 + $0x100] sm:$0xff] %v1244
    %1889 = vst [vmem:[#allocation9 + $0x108] sm:$0xff] %v1245
    %1890 = vst [vmem:[#allocation9 + $0x110] sm:$0xff] %v1246
    %1891 = vst [vmem:[#allocation9 + $0x118] sm:$0xff] %v1247
    %1892 = vst [vmem:[#allocation9 + $0x120] sm:$0xff] %v1248
    %1893 = vst [vmem:[#allocation9 + $0x128] sm:$0xff] %v1249
    %1894 = vst [vmem:[#allocation9 + $0x130] sm:$0xff] %v1250
    %1895 = vst [vmem:[#allocation9 + $0x138] sm:$0xff] %v1251
    %1896 = vst [vmem:[#allocation9 + $0x140] sm:$0xff] %v1252
    %1897 = vst [vmem:[#allocation9 + $0x148] sm:$0xff] %v1253
    %1898 = vst [vmem:[#allocation9 + $0x150] sm:$0xff] %v1254
    %1899 = vst [vmem:[#allocation9 + $0x158] sm:$0xff] %v1255
    %1900 = vst [vmem:[#allocation9 + $0x160] sm:$0xff] %v1256
    %1901 = vst [vmem:[#allocation9 + $0x168] sm:$0xff] %v1257
    %1902 = vst [vmem:[#allocation9 + $0x170] sm:$0xff] %v1258
    %1903 = vst [vmem:[#allocation9 + $0x178] sm:$0xff] %v1259
    %1904 = vst [vmem:[#allocation9 + $0x180] sm:$0xff] %v1260
    %1905 = vst [vmem:[#allocation9 + $0x188] sm:$0xff] %v1261
    %1906 = vst [vmem:[#allocation9 + $0x190] sm:$0xff] %v1262
    %1907 = vst [vmem:[#allocation9 + $0x198] sm:$0xff] %v1263
    %1908 = vst [vmem:[#allocation9 + $0x1a0] sm:$0xff] %v1264
    %1909 = vst [vmem:[#allocation9 + $0x1a8] sm:$0xff] %v1265
    %1910 = vst [vmem:[#allocation9 + $0x1b0] sm:$0xff] %v1266
    %1911 = vst [vmem:[#allocation9 + $0x1b8] sm:$0xff] %v1267
    %1912 = vst [vmem:[#allocation9 + $0x1c0] sm:$0xff] %v1268
    %1913 = vst [vmem:[#allocation9 + $0x1c8] sm:$0xff] %v1269
    %1914 = vst [vmem:[#allocation9 + $0x1d0] sm:$0xff] %v1270
    %1915 = vst [vmem:[#allocation9 + $0x1d8] sm:$0xff] %v1271
    %1916 = vst [vmem:[#allocation9 + $0x1e0] sm:$0xff] %v1272
    %1917 = vst [vmem:[#allocation9 + $0x1e8] sm:$0xff] %v1273
    %1918 = vst [vmem:[#allocation9 + $0x1f0] sm:$0xff] %v1274
    %1919 = vst [vmem:[#allocation9 + $0x1f8] sm:$0xff] %v1275
  $region25: #{tpu_custom_call.1} parent=0 // pred_fallthru
    _
  %p1920 = scmp.gt.s32.totalorder 0, 0
  // Predicated region
  $region26: #{tpu_custom_call.1} parent=0 // pred_check
    %p1921 = pneg %p1920
  $region27: #{tpu_custom_call.1} parent=0 // pred_check_branch
    %1923 = sbr.rel (%p1921) target = $region29
  $region28: #{tpu_custom_call.1} parent=0 // pred_region
    %v1924 = vld [vmem:[#allocation2] sm:$0xff]
    %v1925 = vld [vmem:[#allocation2 + $0x8] sm:$0xff]
    %v1926 = vld [vmem:[#allocation2 + $0x10] sm:$0xff]
    %v1927 = vld [vmem:[#allocation2 + $0x18] sm:$0xff]
    %v1928 = vld [vmem:[#allocation2 + $0x20] sm:$0xff]
    %v1929 = vld [vmem:[#allocation2 + $0x28] sm:$0xff]
    %v1930 = vld [vmem:[#allocation2 + $0x30] sm:$0xff]
    %v1931 = vld [vmem:[#allocation2 + $0x38] sm:$0xff]
    %v1932 = vld [vmem:[#allocation2 + $0x40] sm:$0xff]
    %v1933 = vld [vmem:[#allocation2 + $0x48] sm:$0xff]
    %v1934 = vld [vmem:[#allocation2 + $0x50] sm:$0xff]
    %v1935 = vld [vmem:[#allocation2 + $0x58] sm:$0xff]
    %v1936 = vld [vmem:[#allocation2 + $0x60] sm:$0xff]
    %v1937 = vld [vmem:[#allocation2 + $0x68] sm:$0xff]
    %v1938 = vld [vmem:[#allocation2 + $0x70] sm:$0xff]
    %v1939 = vld [vmem:[#allocation2 + $0x78] sm:$0xff]
    %v1940 = vld [vmem:[#allocation2 + $0x80] sm:$0xff]
    %v1941 = vld [vmem:[#allocation2 + $0x88] sm:$0xff]
    %v1942 = vld [vmem:[#allocation2 + $0x90] sm:$0xff]
    %v1943 = vld [vmem:[#allocation2 + $0x98] sm:$0xff]
    %v1944 = vld [vmem:[#allocation2 + $0xa0] sm:$0xff]
    %v1945 = vld [vmem:[#allocation2 + $0xa8] sm:$0xff]
    %v1946 = vld [vmem:[#allocation2 + $0xb0] sm:$0xff]
    %v1947 = vld [vmem:[#allocation2 + $0xb8] sm:$0xff]
    %v1948 = vld [vmem:[#allocation2 + $0xc0] sm:$0xff]
    %v1949 = vld [vmem:[#allocation2 + $0xc8] sm:$0xff]
    %v1950 = vld [vmem:[#allocation2 + $0xd0] sm:$0xff]
    %v1951 = vld [vmem:[#allocation2 + $0xd8] sm:$0xff]
    %v1952 = vld [vmem:[#allocation2 + $0xe0] sm:$0xff]
    %v1953 = vld [vmem:[#allocation2 + $0xe8] sm:$0xff]
    %v1954 = vld [vmem:[#allocation2 + $0xf0] sm:$0xff]
    %v1955 = vld [vmem:[#allocation2 + $0xf8] sm:$0xff]
    %v1956 = vld [vmem:[#allocation2 + $0x100] sm:$0xff]
    %v1957 = vld [vmem:[#allocation2 + $0x108] sm:$0xff]
    %v1958 = vld [vmem:[#allocation2 + $0x110] sm:$0xff]
    %v1959 = vld [vmem:[#allocation2 + $0x118] sm:$0xff]
    %v1960 = vld [vmem:[#allocation2 + $0x120] sm:$0xff]
    %v1961 = vld [vmem:[#allocation2 + $0x128] sm:$0xff]
    %v1962 = vld [vmem:[#allocation2 + $0x130] sm:$0xff]
    %v1963 = vld [vmem:[#allocation2 + $0x138] sm:$0xff]
    %v1964 = vld [vmem:[#allocation2 + $0x140] sm:$0xff]
    %v1965 = vld [vmem:[#allocation2 + $0x148] sm:$0xff]
    %v1966 = vld [vmem:[#allocation2 + $0x150] sm:$0xff]
    %v1967 = vld [vmem:[#allocation2 + $0x158] sm:$0xff]
    %v1968 = vld [vmem:[#allocation2 + $0x160] sm:$0xff]
    %v1969 = vld [vmem:[#allocation2 + $0x168] sm:$0xff]
    %v1970 = vld [vmem:[#allocation2 + $0x170] sm:$0xff]
    %v1971 = vld [vmem:[#allocation2 + $0x178] sm:$0xff]
    %v1972 = vld [vmem:[#allocation2 + $0x180] sm:$0xff]
    %v1973 = vld [vmem:[#allocation2 + $0x188] sm:$0xff]
    %v1974 = vld [vmem:[#allocation2 + $0x190] sm:$0xff]
    %v1975 = vld [vmem:[#allocation2 + $0x198] sm:$0xff]
    %v1976 = vld [vmem:[#allocation2 + $0x1a0] sm:$0xff]
    %v1977 = vld [vmem:[#allocation2 + $0x1a8] sm:$0xff]
    %v1978 = vld [vmem:[#allocation2 + $0x1b0] sm:$0xff]
    %v1979 = vld [vmem:[#allocation2 + $0x1b8] sm:$0xff]
    %v1980 = vld [vmem:[#allocation2 + $0x1c0] sm:$0xff]
    %v1981 = vld [vmem:[#allocation2 + $0x1c8] sm:$0xff]
    %v1982 = vld [vmem:[#allocation2 + $0x1d0] sm:$0xff]
    %v1983 = vld [vmem:[#allocation2 + $0x1d8] sm:$0xff]
    %v1984 = vld [vmem:[#allocation2 + $0x1e0] sm:$0xff]
    %v1985 = vld [vmem:[#allocation2 + $0x1e8] sm:$0xff]
    %v1986 = vld [vmem:[#allocation2 + $0x1f0] sm:$0xff]
    %v1987 = vld [vmem:[#allocation2 + $0x1f8] sm:$0xff]
    %v1988 = vmax.f32 %v1924, %v1148
    %v1989 = vmax.f32 %v1925, %v1149
    %v1990 = vmax.f32 %v1926, %v1150
    %v1991 = vmax.f32 %v1927, %v1151
    %v1992 = vmax.f32 %v1928, %v1152
    %v1993 = vmax.f32 %v1929, %v1153
    %v1994 = vmax.f32 %v1930, %v1154
    %v1995 = vmax.f32 %v1931, %v1155
    %v1996 = vmax.f32 %v1932, %v1156
    %v1997 = vmax.f32 %v1933, %v1157
    %v1998 = vmax.f32 %v1934, %v1158
    %v1999 = vmax.f32 %v1935, %v1159
    %v2000 = vmax.f32 %v1936, %v1160
    %v2001 = vmax.f32 %v1937, %v1161
    %v2002 = vmax.f32 %v1938, %v1162
    %v2003 = vmax.f32 %v1939, %v1163
    %v2004 = vmax.f32 %v1940, %v1164
    %v2005 = vmax.f32 %v1941, %v1165
    %v2006 = vmax.f32 %v1942, %v1166
    %v2007 = vmax.f32 %v1943, %v1167
    %v2008 = vmax.f32 %v1944, %v1168
    %v2009 = vmax.f32 %v1945, %v1169
    %v2010 = vmax.f32 %v1946, %v1170
    %v2011 = vmax.f32 %v1947, %v1171
    %v2012 = vmax.f32 %v1948, %v1172
    %v2013 = vmax.f32 %v1949, %v1173
    %v2014 = vmax.f32 %v1950, %v1174
    %v2015 = vmax.f32 %v1951, %v1175
    %v2016 = vmax.f32 %v1952, %v1176
    %v2017 = vmax.f32 %v1953, %v1177
    %v2018 = vmax.f32 %v1954, %v1178
    %v2019 = vmax.f32 %v1955, %v1179
    %v2020 = vmax.f32 %v1956, %v1180
    %v2021 = vmax.f32 %v1957, %v1181
    %v2022 = vmax.f32 %v1958, %v1182
    %v2023 = vmax.f32 %v1959, %v1183
    %v2024 = vmax.f32 %v1960, %v1184
    %v2025 = vmax.f32 %v1961, %v1185
    %v2026 = vmax.f32 %v1962, %v1186
    %v2027 = vmax.f32 %v1963, %v1187
    %v2028 = vmax.f32 %v1964, %v1188
    %v2029 = vmax.f32 %v1965, %v1189
    %v2030 = vmax.f32 %v1966, %v1190
    %v2031 = vmax.f32 %v1967, %v1191
    %v2032 = vmax.f32 %v1968, %v1192
    %v2033 = vmax.f32 %v1969, %v1193
    %v2034 = vmax.f32 %v1970, %v1194
    %v2035 = vmax.f32 %v1971, %v1195
    %v2036 = vmax.f32 %v1972, %v1196
    %v2037 = vmax.f32 %v1973, %v1197
    %v2038 = vmax.f32 %v1974, %v1198
    %v2039 = vmax.f32 %v1975, %v1199
    %v2040 = vmax.f32 %v1976, %v1200
    %v2041 = vmax.f32 %v1977, %v1201
    %v2042 = vmax.f32 %v1978, %v1202
    %v2043 = vmax.f32 %v1979, %v1203
    %v2044 = vmax.f32 %v1980, %v1204
    %v2045 = vmax.f32 %v1981, %v1205
    %v2046 = vmax.f32 %v1982, %v1206
    %v2047 = vmax.f32 %v1983, %v1207
    %v2048 = vmax.f32 %v1984, %v1208
    %v2049 = vmax.f32 %v1985, %v1209
    %v2050 = vmax.f32 %v1986, %v1210
    %v2051 = vmax.f32 %v1987, %v1211
    %2052 = vst [vmem:[#allocation2] sm:$0xff] %v1988
    %2053 = vst [vmem:[#allocation2 + $0x8] sm:$0xff] %v1989
    %2054 = vst [vmem:[#allocation2 + $0x10] sm:$0xff] %v1990
    %2055 = vst [vmem:[#allocation2 + $0x18] sm:$0xff] %v1991
    %2056 = vst [vmem:[#allocation2 + $0x20] sm:$0xff] %v1992
    %2057 = vst [vmem:[#allocation2 + $0x28] sm:$0xff] %v1993
    %2058 = vst [vmem:[#allocation2 + $0x30] sm:$0xff] %v1994
    %2059 = vst [vmem:[#allocation2 + $0x38] sm:$0xff] %v1995
    %2060 = vst [vmem:[#allocation2 + $0x40] sm:$0xff] %v1996
    %2061 = vst [vmem:[#allocation2 + $0x48] sm:$0xff] %v1997
    %2062 = vst [vmem:[#allocation2 + $0x50] sm:$0xff] %v1998
    %2063 = vst [vmem:[#allocation2 + $0x58] sm:$0xff] %v1999
    %2064 = vst [vmem:[#allocation2 + $0x60] sm:$0xff] %v2000
    %2065 = vst [vmem:[#allocation2 + $0x68] sm:$0xff] %v2001
    %2066 = vst [vmem:[#allocation2 + $0x70] sm:$0xff] %v2002
    %2067 = vst [vmem:[#allocation2 + $0x78] sm:$0xff] %v2003
    %2068 = vst [vmem:[#allocation2 + $0x80] sm:$0xff] %v2004
    %2069 = vst [vmem:[#allocation2 + $0x88] sm:$0xff] %v2005
    %2070 = vst [vmem:[#allocation2 + $0x90] sm:$0xff] %v2006
    %2071 = vst [vmem:[#allocation2 + $0x98] sm:$0xff] %v2007
    %2072 = vst [vmem:[#allocation2 + $0xa0] sm:$0xff] %v2008
    %2073 = vst [vmem:[#allocation2 + $0xa8] sm:$0xff] %v2009
    %2074 = vst [vmem:[#allocation2 + $0xb0] sm:$0xff] %v2010
    %2075 = vst [vmem:[#allocation2 + $0xb8] sm:$0xff] %v2011
    %2076 = vst [vmem:[#allocation2 + $0xc0] sm:$0xff] %v2012
    %2077 = vst [vmem:[#allocation2 + $0xc8] sm:$0xff] %v2013
    %2078 = vst [vmem:[#allocation2 + $0xd0] sm:$0xff] %v2014
    %2079 = vst [vmem:[#allocation2 + $0xd8] sm:$0xff] %v2015
    %2080 = vst [vmem:[#allocation2 + $0xe0] sm:$0xff] %v2016
    %2081 = vst [vmem:[#allocation2 + $0xe8] sm:$0xff] %v2017
    %2082 = vst [vmem:[#allocation2 + $0xf0] sm:$0xff] %v2018
    %2083 = vst [vmem:[#allocation2 + $0xf8] sm:$0xff] %v2019
    %2084 = vst [vmem:[#allocation2 + $0x100] sm:$0xff] %v2020
    %2085 = vst [vmem:[#allocation2 + $0x108] sm:$0xff] %v2021
    %2086 = vst [vmem:[#allocation2 + $0x110] sm:$0xff] %v2022
    %2087 = vst [vmem:[#allocation2 + $0x118] sm:$0xff] %v2023
    %2088 = vst [vmem:[#allocation2 + $0x120] sm:$0xff] %v2024
    %2089 = vst [vmem:[#allocation2 + $0x128] sm:$0xff] %v2025
    %2090 = vst [vmem:[#allocation2 + $0x130] sm:$0xff] %v2026
    %2091 = vst [vmem:[#allocation2 + $0x138] sm:$0xff] %v2027
    %2092 = vst [vmem:[#allocation2 + $0x140] sm:$0xff] %v2028
    %2093 = vst [vmem:[#allocation2 + $0x148] sm:$0xff] %v2029
    %2094 = vst [vmem:[#allocation2 + $0x150] sm:$0xff] %v2030
    %2095 = vst [vmem:[#allocation2 + $0x158] sm:$0xff] %v2031
    %2096 = vst [vmem:[#allocation2 + $0x160] sm:$0xff] %v2032
    %2097 = vst [vmem:[#allocation2 + $0x168] sm:$0xff] %v2033
    %2098 = vst [vmem:[#allocation2 + $0x170] sm:$0xff] %v2034
    %2099 = vst [vmem:[#allocation2 + $0x178] sm:$0xff] %v2035
    %2100 = vst [vmem:[#allocation2 + $0x180] sm:$0xff] %v2036
    %2101 = vst [vmem:[#allocation2 + $0x188] sm:$0xff] %v2037
    %2102 = vst [vmem:[#allocation2 + $0x190] sm:$0xff] %v2038
    %2103 = vst [vmem:[#allocation2 + $0x198] sm:$0xff] %v2039
    %2104 = vst [vmem:[#allocation2 + $0x1a0] sm:$0xff] %v2040
    %2105 = vst [vmem:[#allocation2 + $0x1a8] sm:$0xff] %v2041
    %2106 = vst [vmem:[#allocation2 + $0x1b0] sm:$0xff] %v2042
    %2107 = vst [vmem:[#allocation2 + $0x1b8] sm:$0xff] %v2043
    %2108 = vst [vmem:[#allocation2 + $0x1c0] sm:$0xff] %v2044
    %2109 = vst [vmem:[#allocation2 + $0x1c8] sm:$0xff] %v2045
    %2110 = vst [vmem:[#allocation2 + $0x1d0] sm:$0xff] %v2046
    %2111 = vst [vmem:[#allocation2 + $0x1d8] sm:$0xff] %v2047
    %2112 = vst [vmem:[#allocation2 + $0x1e0] sm:$0xff] %v2048
    %2113 = vst [vmem:[#allocation2 + $0x1e8] sm:$0xff] %v2049
    %2114 = vst [vmem:[#allocation2 + $0x1f0] sm:$0xff] %v2050
    %2115 = vst [vmem:[#allocation2 + $0x1f8] sm:$0xff] %v2051
    %v2116 = vld [vmem:[#allocation3] sm:$0xff]
    %v2117 = vld [vmem:[#allocation3 + $0x8] sm:$0xff]
    %v2118 = vld [vmem:[#allocation3 + $0x10] sm:$0xff]
    %v2119 = vld [vmem:[#allocation3 + $0x18] sm:$0xff]
    %v2120 = vld [vmem:[#allocation3 + $0x20] sm:$0xff]
    %v2121 = vld [vmem:[#allocation3 + $0x28] sm:$0xff]
    %v2122 = vld [vmem:[#allocation3 + $0x30] sm:$0xff]
    %v2123 = vld [vmem:[#allocation3 + $0x38] sm:$0xff]
    %v2124 = vld [vmem:[#allocation3 + $0x40] sm:$0xff]
    %v2125 = vld [vmem:[#allocation3 + $0x48] sm:$0xff]
    %v2126 = vld [vmem:[#allocation3 + $0x50] sm:$0xff]
    %v2127 = vld [vmem:[#allocation3 + $0x58] sm:$0xff]
    %v2128 = vld [vmem:[#allocation3 + $0x60] sm:$0xff]
    %v2129 = vld [vmem:[#allocation3 + $0x68] sm:$0xff]
    %v2130 = vld [vmem:[#allocation3 + $0x70] sm:$0xff]
    %v2131 = vld [vmem:[#allocation3 + $0x78] sm:$0xff]
    %v2132 = vld [vmem:[#allocation3 + $0x80] sm:$0xff]
    %v2133 = vld [vmem:[#allocation3 + $0x88] sm:$0xff]
    %v2134 = vld [vmem:[#allocation3 + $0x90] sm:$0xff]
    %v2135 = vld [vmem:[#allocation3 + $0x98] sm:$0xff]
    %v2136 = vld [vmem:[#allocation3 + $0xa0] sm:$0xff]
    %v2137 = vld [vmem:[#allocation3 + $0xa8] sm:$0xff]
    %v2138 = vld [vmem:[#allocation3 + $0xb0] sm:$0xff]
    %v2139 = vld [vmem:[#allocation3 + $0xb8] sm:$0xff]
    %v2140 = vld [vmem:[#allocation3 + $0xc0] sm:$0xff]
    %v2141 = vld [vmem:[#allocation3 + $0xc8] sm:$0xff]
    %v2142 = vld [vmem:[#allocation3 + $0xd0] sm:$0xff]
    %v2143 = vld [vmem:[#allocation3 + $0xd8] sm:$0xff]
    %v2144 = vld [vmem:[#allocation3 + $0xe0] sm:$0xff]
    %v2145 = vld [vmem:[#allocation3 + $0xe8] sm:$0xff]
    %v2146 = vld [vmem:[#allocation3 + $0xf0] sm:$0xff]
    %v2147 = vld [vmem:[#allocation3 + $0xf8] sm:$0xff]
    %v2148 = vld [vmem:[#allocation3 + $0x100] sm:$0xff]
    %v2149 = vld [vmem:[#allocation3 + $0x108] sm:$0xff]
    %v2150 = vld [vmem:[#allocation3 + $0x110] sm:$0xff]
    %v2151 = vld [vmem:[#allocation3 + $0x118] sm:$0xff]
    %v2152 = vld [vmem:[#allocation3 + $0x120] sm:$0xff]
    %v2153 = vld [vmem:[#allocation3 + $0x128] sm:$0xff]
    %v2154 = vld [vmem:[#allocation3 + $0x130] sm:$0xff]
    %v2155 = vld [vmem:[#allocation3 + $0x138] sm:$0xff]
    %v2156 = vld [vmem:[#allocation3 + $0x140] sm:$0xff]
    %v2157 = vld [vmem:[#allocation3 + $0x148] sm:$0xff]
    %v2158 = vld [vmem:[#allocation3 + $0x150] sm:$0xff]
    %v2159 = vld [vmem:[#allocation3 + $0x158] sm:$0xff]
    %v2160 = vld [vmem:[#allocation3 + $0x160] sm:$0xff]
    %v2161 = vld [vmem:[#allocation3 + $0x168] sm:$0xff]
    %v2162 = vld [vmem:[#allocation3 + $0x170] sm:$0xff]
    %v2163 = vld [vmem:[#allocation3 + $0x178] sm:$0xff]
    %v2164 = vld [vmem:[#allocation3 + $0x180] sm:$0xff]
    %v2165 = vld [vmem:[#allocation3 + $0x188] sm:$0xff]
    %v2166 = vld [vmem:[#allocation3 + $0x190] sm:$0xff]
    %v2167 = vld [vmem:[#allocation3 + $0x198] sm:$0xff]
    %v2168 = vld [vmem:[#allocation3 + $0x1a0] sm:$0xff]
    %v2169 = vld [vmem:[#allocation3 + $0x1a8] sm:$0xff]
    %v2170 = vld [vmem:[#allocation3 + $0x1b0] sm:$0xff]
    %v2171 = vld [vmem:[#allocation3 + $0x1b8] sm:$0xff]
    %v2172 = vld [vmem:[#allocation3 + $0x1c0] sm:$0xff]
    %v2173 = vld [vmem:[#allocation3 + $0x1c8] sm:$0xff]
    %v2174 = vld [vmem:[#allocation3 + $0x1d0] sm:$0xff]
    %v2175 = vld [vmem:[#allocation3 + $0x1d8] sm:$0xff]
    %v2176 = vld [vmem:[#allocation3 + $0x1e0] sm:$0xff]
    %v2177 = vld [vmem:[#allocation3 + $0x1e8] sm:$0xff]
    %v2178 = vld [vmem:[#allocation3 + $0x1f0] sm:$0xff]
    %v2179 = vld [vmem:[#allocation3 + $0x1f8] sm:$0xff]
    %v2180 = vadd.f32 %v2116, %v1148
    %v2181 = vadd.f32 %v2117, %v1149
    %v2182 = vadd.f32 %v2118, %v1150
    %v2183 = vadd.f32 %v2119, %v1151
    %v2184 = vadd.f32 %v2120, %v1152
    %v2185 = vadd.f32 %v2121, %v1153
    %v2186 = vadd.f32 %v2122, %v1154
    %v2187 = vadd.f32 %v2123, %v1155
    %v2188 = vadd.f32 %v2124, %v1156
    %v2189 = vadd.f32 %v2125, %v1157
    %v2190 = vadd.f32 %v2126, %v1158
    %v2191 = vadd.f32 %v2127, %v1159
    %v2192 = vadd.f32 %v2128, %v1160
    %v2193 = vadd.f32 %v2129, %v1161
    %v2194 = vadd.f32 %v2130, %v1162
    %v2195 = vadd.f32 %v2131, %v1163
    %v2196 = vadd.f32 %v2132, %v1164
    %v2197 = vadd.f32 %v2133, %v1165
    %v2198 = vadd.f32 %v2134, %v1166
    %v2199 = vadd.f32 %v2135, %v1167
    %v2200 = vadd.f32 %v2136, %v1168
    %v2201 = vadd.f32 %v2137, %v1169
    %v2202 = vadd.f32 %v2138, %v1170
    %v2203 = vadd.f32 %v2139, %v1171
    %v2204 = vadd.f32 %v2140, %v1172
    %v2205 = vadd.f32 %v2141, %v1173
    %v2206 = vadd.f32 %v2142, %v1174
    %v2207 = vadd.f32 %v2143, %v1175
    %v2208 = vadd.f32 %v2144, %v1176
    %v2209 = vadd.f32 %v2145, %v1177
    %v2210 = vadd.f32 %v2146, %v1178
    %v2211 = vadd.f32 %v2147, %v1179
    %v2212 = vadd.f32 %v2148, %v1180
    %v2213 = vadd.f32 %v2149, %v1181
    %v2214 = vadd.f32 %v2150, %v1182
    %v2215 = vadd.f32 %v2151, %v1183
    %v2216 = vadd.f32 %v2152, %v1184
    %v2217 = vadd.f32 %v2153, %v1185
    %v2218 = vadd.f32 %v2154, %v1186
    %v2219 = vadd.f32 %v2155, %v1187
    %v2220 = vadd.f32 %v2156, %v1188
    %v2221 = vadd.f32 %v2157, %v1189
    %v2222 = vadd.f32 %v2158, %v1190
    %v2223 = vadd.f32 %v2159, %v1191
    %v2224 = vadd.f32 %v2160, %v1192
    %v2225 = vadd.f32 %v2161, %v1193
    %v2226 = vadd.f32 %v2162, %v1194
    %v2227 = vadd.f32 %v2163, %v1195
    %v2228 = vadd.f32 %v2164, %v1196
    %v2229 = vadd.f32 %v2165, %v1197
    %v2230 = vadd.f32 %v2166, %v1198
    %v2231 = vadd.f32 %v2167, %v1199
    %v2232 = vadd.f32 %v2168, %v1200
    %v2233 = vadd.f32 %v2169, %v1201
    %v2234 = vadd.f32 %v2170, %v1202
    %v2235 = vadd.f32 %v2171, %v1203
    %v2236 = vadd.f32 %v2172, %v1204
    %v2237 = vadd.f32 %v2173, %v1205
    %v2238 = vadd.f32 %v2174, %v1206
    %v2239 = vadd.f32 %v2175, %v1207
    %v2240 = vadd.f32 %v2176, %v1208
    %v2241 = vadd.f32 %v2177, %v1209
    %v2242 = vadd.f32 %v2178, %v1210
    %v2243 = vadd.f32 %v2179, %v1211
    %2244 = vst [vmem:[#allocation3] sm:$0xff] %v2180
    %2245 = vst [vmem:[#allocation3 + $0x8] sm:$0xff] %v2181
    %2246 = vst [vmem:[#allocation3 + $0x10] sm:$0xff] %v2182
    %2247 = vst [vmem:[#allocation3 + $0x18] sm:$0xff] %v2183
    %2248 = vst [vmem:[#allocation3 + $0x20] sm:$0xff] %v2184
    %2249 = vst [vmem:[#allocation3 + $0x28] sm:$0xff] %v2185
    %2250 = vst [vmem:[#allocation3 + $0x30] sm:$0xff] %v2186
    %2251 = vst [vmem:[#allocation3 + $0x38] sm:$0xff] %v2187
    %2252 = vst [vmem:[#allocation3 + $0x40] sm:$0xff] %v2188
    %2253 = vst [vmem:[#allocation3 + $0x48] sm:$0xff] %v2189
    %2254 = vst [vmem:[#allocation3 + $0x50] sm:$0xff] %v2190
    %2255 = vst [vmem:[#allocation3 + $0x58] sm:$0xff] %v2191
    %2256 = vst [vmem:[#allocation3 + $0x60] sm:$0xff] %v2192
    %2257 = vst [vmem:[#allocation3 + $0x68] sm:$0xff] %v2193
    %2258 = vst [vmem:[#allocation3 + $0x70] sm:$0xff] %v2194
    %2259 = vst [vmem:[#allocation3 + $0x78] sm:$0xff] %v2195
    %2260 = vst [vmem:[#allocation3 + $0x80] sm:$0xff] %v2196
    %2261 = vst [vmem:[#allocation3 + $0x88] sm:$0xff] %v2197
    %2262 = vst [vmem:[#allocation3 + $0x90] sm:$0xff] %v2198
    %2263 = vst [vmem:[#allocation3 + $0x98] sm:$0xff] %v2199
    %2264 = vst [vmem:[#allocation3 + $0xa0] sm:$0xff] %v2200
    %2265 = vst [vmem:[#allocation3 + $0xa8] sm:$0xff] %v2201
    %2266 = vst [vmem:[#allocation3 + $0xb0] sm:$0xff] %v2202
    %2267 = vst [vmem:[#allocation3 + $0xb8] sm:$0xff] %v2203
    %2268 = vst [vmem:[#allocation3 + $0xc0] sm:$0xff] %v2204
    %2269 = vst [vmem:[#allocation3 + $0xc8] sm:$0xff] %v2205
    %2270 = vst [vmem:[#allocation3 + $0xd0] sm:$0xff] %v2206
    %2271 = vst [vmem:[#allocation3 + $0xd8] sm:$0xff] %v2207
    %2272 = vst [vmem:[#allocation3 + $0xe0] sm:$0xff] %v2208
    %2273 = vst [vmem:[#allocation3 + $0xe8] sm:$0xff] %v2209
    %2274 = vst [vmem:[#allocation3 + $0xf0] sm:$0xff] %v2210
    %2275 = vst [vmem:[#allocation3 + $0xf8] sm:$0xff] %v2211
    %2276 = vst [vmem:[#allocation3 + $0x100] sm:$0xff] %v2212
    %2277 = vst [vmem:[#allocation3 + $0x108] sm:$0xff] %v2213
    %2278 = vst [vmem:[#allocation3 + $0x110] sm:$0xff] %v2214
    %2279 = vst [vmem:[#allocation3 + $0x118] sm:$0xff] %v2215
    %2280 = vst [vmem:[#allocation3 + $0x120] sm:$0xff] %v2216
    %2281 = vst [vmem:[#allocation3 + $0x128] sm:$0xff] %v2217
    %2282 = vst [vmem:[#allocation3 + $0x130] sm:$0xff] %v2218
    %2283 = vst [vmem:[#allocation3 + $0x138] sm:$0xff] %v2219
    %2284 = vst [vmem:[#allocation3 + $0x140] sm:$0xff] %v2220
    %2285 = vst [vmem:[#allocation3 + $0x148] sm:$0xff] %v2221
    %2286 = vst [vmem:[#allocation3 + $0x150] sm:$0xff] %v2222
    %2287 = vst [vmem:[#allocation3 + $0x158] sm:$0xff] %v2223
    %2288 = vst [vmem:[#allocation3 + $0x160] sm:$0xff] %v2224
    %2289 = vst [vmem:[#allocation3 + $0x168] sm:$0xff] %v2225
    %2290 = vst [vmem:[#allocation3 + $0x170] sm:$0xff] %v2226
    %2291 = vst [vmem:[#allocation3 + $0x178] sm:$0xff] %v2227
    %2292 = vst [vmem:[#allocation3 + $0x180] sm:$0xff] %v2228
    %2293 = vst [vmem:[#allocation3 + $0x188] sm:$0xff] %v2229
    %2294 = vst [vmem:[#allocation3 + $0x190] sm:$0xff] %v2230
    %2295 = vst [vmem:[#allocation3 + $0x198] sm:$0xff] %v2231
    %2296 = vst [vmem:[#allocation3 + $0x1a0] sm:$0xff] %v2232
    %2297 = vst [vmem:[#allocation3 + $0x1a8] sm:$0xff] %v2233
    %2298 = vst [vmem:[#allocation3 + $0x1b0] sm:$0xff] %v2234
    %2299 = vst [vmem:[#allocation3 + $0x1b8] sm:$0xff] %v2235
    %2300 = vst [vmem:[#allocation3 + $0x1c0] sm:$0xff] %v2236
    %2301 = vst [vmem:[#allocation3 + $0x1c8] sm:$0xff] %v2237
    %2302 = vst [vmem:[#allocation3 + $0x1d0] sm:$0xff] %v2238
    %2303 = vst [vmem:[#allocation3 + $0x1d8] sm:$0xff] %v2239
    %2304 = vst [vmem:[#allocation3 + $0x1e0] sm:$0xff] %v2240
    %2305 = vst [vmem:[#allocation3 + $0x1e8] sm:$0xff] %v2241
    %2306 = vst [vmem:[#allocation3 + $0x1f0] sm:$0xff] %v2242
    %2307 = vst [vmem:[#allocation3 + $0x1f8] sm:$0xff] %v2243
    %v2308 = vld [vmem:[#allocation6] sm:$0xff]
    %v2309 = vld [vmem:[#allocation6 + $0x8] sm:$0xff]
    %v2310 = vld [vmem:[#allocation6 + $0x10] sm:$0xff]
    %v2311 = vld [vmem:[#allocation6 + $0x18] sm:$0xff]
    %v2312 = vld [vmem:[#allocation6 + $0x20] sm:$0xff]
    %v2313 = vld [vmem:[#allocation6 + $0x28] sm:$0xff]
    %v2314 = vld [vmem:[#allocation6 + $0x30] sm:$0xff]
    %v2315 = vld [vmem:[#allocation6 + $0x38] sm:$0xff]
    %v2316 = vld [vmem:[#allocation6 + $0x40] sm:$0xff]
    %v2317 = vld [vmem:[#allocation6 + $0x48] sm:$0xff]
    %v2318 = vld [vmem:[#allocation6 + $0x50] sm:$0xff]
    %v2319 = vld [vmem:[#allocation6 + $0x58] sm:$0xff]
    %v2320 = vld [vmem:[#allocation6 + $0x60] sm:$0xff]
    %v2321 = vld [vmem:[#allocation6 + $0x68] sm:$0xff]
    %v2322 = vld [vmem:[#allocation6 + $0x70] sm:$0xff]
    %v2323 = vld [vmem:[#allocation6 + $0x78] sm:$0xff]
    %v2324 = vld [vmem:[#allocation6 + $0x80] sm:$0xff]
    %v2325 = vld [vmem:[#allocation6 + $0x88] sm:$0xff]
    %v2326 = vld [vmem:[#allocation6 + $0x90] sm:$0xff]
    %v2327 = vld [vmem:[#allocation6 + $0x98] sm:$0xff]
    %v2328 = vld [vmem:[#allocation6 + $0xa0] sm:$0xff]
    %v2329 = vld [vmem:[#allocation6 + $0xa8] sm:$0xff]
    %v2330 = vld [vmem:[#allocation6 + $0xb0] sm:$0xff]
    %v2331 = vld [vmem:[#allocation6 + $0xb8] sm:$0xff]
    %v2332 = vld [vmem:[#allocation6 + $0xc0] sm:$0xff]
    %v2333 = vld [vmem:[#allocation6 + $0xc8] sm:$0xff]
    %v2334 = vld [vmem:[#allocation6 + $0xd0] sm:$0xff]
    %v2335 = vld [vmem:[#allocation6 + $0xd8] sm:$0xff]
    %v2336 = vld [vmem:[#allocation6 + $0xe0] sm:$0xff]
    %v2337 = vld [vmem:[#allocation6 + $0xe8] sm:$0xff]
    %v2338 = vld [vmem:[#allocation6 + $0xf0] sm:$0xff]
    %v2339 = vld [vmem:[#allocation6 + $0xf8] sm:$0xff]
    %v2340 = vld [vmem:[#allocation6 + $0x100] sm:$0xff]
    %v2341 = vld [vmem:[#allocation6 + $0x108] sm:$0xff]
    %v2342 = vld [vmem:[#allocation6 + $0x110] sm:$0xff]
    %v2343 = vld [vmem:[#allocation6 + $0x118] sm:$0xff]
    %v2344 = vld [vmem:[#allocation6 + $0x120] sm:$0xff]
    %v2345 = vld [vmem:[#allocation6 + $0x128] sm:$0xff]
    %v2346 = vld [vmem:[#allocation6 + $0x130] sm:$0xff]
    %v2347 = vld [vmem:[#allocation6 + $0x138] sm:$0xff]
    %v2348 = vld [vmem:[#allocation6 + $0x140] sm:$0xff]
    %v2349 = vld [vmem:[#allocation6 + $0x148] sm:$0xff]
    %v2350 = vld [vmem:[#allocation6 + $0x150] sm:$0xff]
    %v2351 = vld [vmem:[#allocation6 + $0x158] sm:$0xff]
    %v2352 = vld [vmem:[#allocation6 + $0x160] sm:$0xff]
    %v2353 = vld [vmem:[#allocation6 + $0x168] sm:$0xff]
    %v2354 = vld [vmem:[#allocation6 + $0x170] sm:$0xff]
    %v2355 = vld [vmem:[#allocation6 + $0x178] sm:$0xff]
    %v2356 = vld [vmem:[#allocation6 + $0x180] sm:$0xff]
    %v2357 = vld [vmem:[#allocation6 + $0x188] sm:$0xff]
    %v2358 = vld [vmem:[#allocation6 + $0x190] sm:$0xff]
    %v2359 = vld [vmem:[#allocation6 + $0x198] sm:$0xff]
    %v2360 = vld [vmem:[#allocation6 + $0x1a0] sm:$0xff]
    %v2361 = vld [vmem:[#allocation6 + $0x1a8] sm:$0xff]
    %v2362 = vld [vmem:[#allocation6 + $0x1b0] sm:$0xff]
    %v2363 = vld [vmem:[#allocation6 + $0x1b8] sm:$0xff]
    %v2364 = vld [vmem:[#allocation6 + $0x1c0] sm:$0xff]
    %v2365 = vld [vmem:[#allocation6 + $0x1c8] sm:$0xff]
    %v2366 = vld [vmem:[#allocation6 + $0x1d0] sm:$0xff]
    %v2367 = vld [vmem:[#allocation6 + $0x1d8] sm:$0xff]
    %v2368 = vld [vmem:[#allocation6 + $0x1e0] sm:$0xff]
    %v2369 = vld [vmem:[#allocation6 + $0x1e8] sm:$0xff]
    %v2370 = vld [vmem:[#allocation6 + $0x1f0] sm:$0xff]
    %v2371 = vld [vmem:[#allocation6 + $0x1f8] sm:$0xff]
    %v2372 = vmax.f32 %v2308, %v1212
    %v2373 = vmax.f32 %v2309, %v1213
    %v2374 = vmax.f32 %v2310, %v1214
    %v2375 = vmax.f32 %v2311, %v1215
    %v2376 = vmax.f32 %v2312, %v1216
    %v2377 = vmax.f32 %v2313, %v1217
    %v2378 = vmax.f32 %v2314, %v1218
    %v2379 = vmax.f32 %v2315, %v1219
    %v2380 = vmax.f32 %v2316, %v1220
    %v2381 = vmax.f32 %v2317, %v1221
    %v2382 = vmax.f32 %v2318, %v1222
    %v2383 = vmax.f32 %v2319, %v1223
    %v2384 = vmax.f32 %v2320, %v1224
    %v2385 = vmax.f32 %v2321, %v1225
    %v2386 = vmax.f32 %v2322, %v1226
    %v2387 = vmax.f32 %v2323, %v1227
    %v2388 = vmax.f32 %v2324, %v1228
    %v2389 = vmax.f32 %v2325, %v1229
    %v2390 = vmax.f32 %v2326, %v1230
    %v2391 = vmax.f32 %v2327, %v1231
    %v2392 = vmax.f32 %v2328, %v1232
    %v2393 = vmax.f32 %v2329, %v1233
    %v2394 = vmax.f32 %v2330, %v1234
    %v2395 = vmax.f32 %v2331, %v1235
    %v2396 = vmax.f32 %v2332, %v1236
    %v2397 = vmax.f32 %v2333, %v1237
    %v2398 = vmax.f32 %v2334, %v1238
    %v2399 = vmax.f32 %v2335, %v1239
    %v2400 = vmax.f32 %v2336, %v1240
    %v2401 = vmax.f32 %v2337, %v1241
    %v2402 = vmax.f32 %v2338, %v1242
    %v2403 = vmax.f32 %v2339, %v1243
    %v2404 = vmax.f32 %v2340, %v1244
    %v2405 = vmax.f32 %v2341, %v1245
    %v2406 = vmax.f32 %v2342, %v1246
    %v2407 = vmax.f32 %v2343, %v1247
    %v2408 = vmax.f32 %v2344, %v1248
    %v2409 = vmax.f32 %v2345, %v1249
    %v2410 = vmax.f32 %v2346, %v1250
    %v2411 = vmax.f32 %v2347, %v1251
    %v2412 = vmax.f32 %v2348, %v1252
    %v2413 = vmax.f32 %v2349, %v1253
    %v2414 = vmax.f32 %v2350, %v1254
    %v2415 = vmax.f32 %v2351, %v1255
    %v2416 = vmax.f32 %v2352, %v1256
    %v2417 = vmax.f32 %v2353, %v1257
    %v2418 = vmax.f32 %v2354, %v1258
    %v2419 = vmax.f32 %v2355, %v1259
    %v2420 = vmax.f32 %v2356, %v1260
    %v2421 = vmax.f32 %v2357, %v1261
    %v2422 = vmax.f32 %v2358, %v1262
    %v2423 = vmax.f32 %v2359, %v1263
    %v2424 = vmax.f32 %v2360, %v1264
    %v2425 = vmax.f32 %v2361, %v1265
    %v2426 = vmax.f32 %v2362, %v1266
    %v2427 = vmax.f32 %v2363, %v1267
    %v2428 = vmax.f32 %v2364, %v1268
    %v2429 = vmax.f32 %v2365, %v1269
    %v2430 = vmax.f32 %v2366, %v1270
    %v2431 = vmax.f32 %v2367, %v1271
    %v2432 = vmax.f32 %v2368, %v1272
    %v2433 = vmax.f32 %v2369, %v1273
    %v2434 = vmax.f32 %v2370, %v1274
    %v2435 = vmax.f32 %v2371, %v1275
    %2436 = vst [vmem:[#allocation6] sm:$0xff] %v2372
    %2437 = vst [vmem:[#allocation6 + $0x8] sm:$0xff] %v2373
    %2438 = vst [vmem:[#allocation6 + $0x10] sm:$0xff] %v2374
    %2439 = vst [vmem:[#allocation6 + $0x18] sm:$0xff] %v2375
    %2440 = vst [vmem:[#allocation6 + $0x20] sm:$0xff] %v2376
    %2441 = vst [vmem:[#allocation6 + $0x28] sm:$0xff] %v2377
    %2442 = vst [vmem:[#allocation6 + $0x30] sm:$0xff] %v2378
    %2443 = vst [vmem:[#allocation6 + $0x38] sm:$0xff] %v2379
    %2444 = vst [vmem:[#allocation6 + $0x40] sm:$0xff] %v2380
    %2445 = vst [vmem:[#allocation6 + $0x48] sm:$0xff] %v2381
    %2446 = vst [vmem:[#allocation6 + $0x50] sm:$0xff] %v2382
    %2447 = vst [vmem:[#allocation6 + $0x58] sm:$0xff] %v2383
    %2448 = vst [vmem:[#allocation6 + $0x60] sm:$0xff] %v2384
    %2449 = vst [vmem:[#allocation6 + $0x68] sm:$0xff] %v2385
    %2450 = vst [vmem:[#allocation6 + $0x70] sm:$0xff] %v2386
    %2451 = vst [vmem:[#allocation6 + $0x78] sm:$0xff] %v2387
    %2452 = vst [vmem:[#allocation6 + $0x80] sm:$0xff] %v2388
    %2453 = vst [vmem:[#allocation6 + $0x88] sm:$0xff] %v2389
    %2454 = vst [vmem:[#allocation6 + $0x90] sm:$0xff] %v2390
    %2455 = vst [vmem:[#allocation6 + $0x98] sm:$0xff] %v2391
    %2456 = vst [vmem:[#allocation6 + $0xa0] sm:$0xff] %v2392
    %2457 = vst [vmem:[#allocation6 + $0xa8] sm:$0xff] %v2393
    %2458 = vst [vmem:[#allocation6 + $0xb0] sm:$0xff] %v2394
    %2459 = vst [vmem:[#allocation6 + $0xb8] sm:$0xff] %v2395
    %2460 = vst [vmem:[#allocation6 + $0xc0] sm:$0xff] %v2396
    %2461 = vst [vmem:[#allocation6 + $0xc8] sm:$0xff] %v2397
    %2462 = vst [vmem:[#allocation6 + $0xd0] sm:$0xff] %v2398
    %2463 = vst [vmem:[#allocation6 + $0xd8] sm:$0xff] %v2399
    %2464 = vst [vmem:[#allocation6 + $0xe0] sm:$0xff] %v2400
    %2465 = vst [vmem:[#allocation6 + $0xe8] sm:$0xff] %v2401
    %2466 = vst [vmem:[#allocation6 + $0xf0] sm:$0xff] %v2402
    %2467 = vst [vmem:[#allocation6 + $0xf8] sm:$0xff] %v2403
    %2468 = vst [vmem:[#allocation6 + $0x100] sm:$0xff] %v2404
    %2469 = vst [vmem:[#allocation6 + $0x108] sm:$0xff] %v2405
    %2470 = vst [vmem:[#allocation6 + $0x110] sm:$0xff] %v2406
    %2471 = vst [vmem:[#allocation6 + $0x118] sm:$0xff] %v2407
    %2472 = vst [vmem:[#allocation6 + $0x120] sm:$0xff] %v2408
    %2473 = vst [vmem:[#allocation6 + $0x128] sm:$0xff] %v2409
    %2474 = vst [vmem:[#allocation6 + $0x130] sm:$0xff] %v2410
    %2475 = vst [vmem:[#allocation6 + $0x138] sm:$0xff] %v2411
    %2476 = vst [vmem:[#allocation6 + $0x140] sm:$0xff] %v2412
    %2477 = vst [vmem:[#allocation6 + $0x148] sm:$0xff] %v2413
    %2478 = vst [vmem:[#allocation6 + $0x150] sm:$0xff] %v2414
    %2479 = vst [vmem:[#allocation6 + $0x158] sm:$0xff] %v2415
    %2480 = vst [vmem:[#allocation6 + $0x160] sm:$0xff] %v2416
    %2481 = vst [vmem:[#allocation6 + $0x168] sm:$0xff] %v2417
    %2482 = vst [vmem:[#allocation6 + $0x170] sm:$0xff] %v2418
    %2483 = vst [vmem:[#allocation6 + $0x178] sm:$0xff] %v2419
    %2484 = vst [vmem:[#allocation6 + $0x180] sm:$0xff] %v2420
    %2485 = vst [vmem:[#allocation6 + $0x188] sm:$0xff] %v2421
    %2486 = vst [vmem:[#allocation6 + $0x190] sm:$0xff] %v2422
    %2487 = vst [vmem:[#allocation6 + $0x198] sm:$0xff] %v2423
    %2488 = vst [vmem:[#allocation6 + $0x1a0] sm:$0xff] %v2424
    %2489 = vst [vmem:[#allocation6 + $0x1a8] sm:$0xff] %v2425
    %2490 = vst [vmem:[#allocation6 + $0x1b0] sm:$0xff] %v2426
    %2491 = vst [vmem:[#allocation6 + $0x1b8] sm:$0xff] %v2427
    %2492 = vst [vmem:[#allocation6 + $0x1c0] sm:$0xff] %v2428
    %2493 = vst [vmem:[#allocation6 + $0x1c8] sm:$0xff] %v2429
    %2494 = vst [vmem:[#allocation6 + $0x1d0] sm:$0xff] %v2430
    %2495 = vst [vmem:[#allocation6 + $0x1d8] sm:$0xff] %v2431
    %2496 = vst [vmem:[#allocation6 + $0x1e0] sm:$0xff] %v2432
    %2497 = vst [vmem:[#allocation6 + $0x1e8] sm:$0xff] %v2433
    %2498 = vst [vmem:[#allocation6 + $0x1f0] sm:$0xff] %v2434
    %2499 = vst [vmem:[#allocation6 + $0x1f8] sm:$0xff] %v2435
    %v2500 = vld [vmem:[#allocation7] sm:$0xff]
    %v2501 = vld [vmem:[#allocation7 + $0x8] sm:$0xff]
    %v2502 = vld [vmem:[#allocation7 + $0x10] sm:$0xff]
    %v2503 = vld [vmem:[#allocation7 + $0x18] sm:$0xff]
    %v2504 = vld [vmem:[#allocation7 + $0x20] sm:$0xff]
    %v2505 = vld [vmem:[#allocation7 + $0x28] sm:$0xff]
    %v2506 = vld [vmem:[#allocation7 + $0x30] sm:$0xff]
    %v2507 = vld [vmem:[#allocation7 + $0x38] sm:$0xff]
    %v2508 = vld [vmem:[#allocation7 + $0x40] sm:$0xff]
    %v2509 = vld [vmem:[#allocation7 + $0x48] sm:$0xff]
    %v2510 = vld [vmem:[#allocation7 + $0x50] sm:$0xff]
    %v2511 = vld [vmem:[#allocation7 + $0x58] sm:$0xff]
    %v2512 = vld [vmem:[#allocation7 + $0x60] sm:$0xff]
    %v2513 = vld [vmem:[#allocation7 + $0x68] sm:$0xff]
    %v2514 = vld [vmem:[#allocation7 + $0x70] sm:$0xff]
    %v2515 = vld [vmem:[#allocation7 + $0x78] sm:$0xff]
    %v2516 = vld [vmem:[#allocation7 + $0x80] sm:$0xff]
    %v2517 = vld [vmem:[#allocation7 + $0x88] sm:$0xff]
    %v2518 = vld [vmem:[#allocation7 + $0x90] sm:$0xff]
    %v2519 = vld [vmem:[#allocation7 + $0x98] sm:$0xff]
    %v2520 = vld [vmem:[#allocation7 + $0xa0] sm:$0xff]
    %v2521 = vld [vmem:[#allocation7 + $0xa8] sm:$0xff]
    %v2522 = vld [vmem:[#allocation7 + $0xb0] sm:$0xff]
    %v2523 = vld [vmem:[#allocation7 + $0xb8] sm:$0xff]
    %v2524 = vld [vmem:[#allocation7 + $0xc0] sm:$0xff]
    %v2525 = vld [vmem:[#allocation7 + $0xc8] sm:$0xff]
    %v2526 = vld [vmem:[#allocation7 + $0xd0] sm:$0xff]
    %v2527 = vld [vmem:[#allocation7 + $0xd8] sm:$0xff]
    %v2528 = vld [vmem:[#allocation7 + $0xe0] sm:$0xff]
    %v2529 = vld [vmem:[#allocation7 + $0xe8] sm:$0xff]
    %v2530 = vld [vmem:[#allocation7 + $0xf0] sm:$0xff]
    %v2531 = vld [vmem:[#allocation7 + $0xf8] sm:$0xff]
    %v2532 = vld [vmem:[#allocation7 + $0x100] sm:$0xff]
    %v2533 = vld [vmem:[#allocation7 + $0x108] sm:$0xff]
    %v2534 = vld [vmem:[#allocation7 + $0x110] sm:$0xff]
    %v2535 = vld [vmem:[#allocation7 + $0x118] sm:$0xff]
    %v2536 = vld [vmem:[#allocation7 + $0x120] sm:$0xff]
    %v2537 = vld [vmem:[#allocation7 + $0x128] sm:$0xff]
    %v2538 = vld [vmem:[#allocation7 + $0x130] sm:$0xff]
    %v2539 = vld [vmem:[#allocation7 + $0x138] sm:$0xff]
    %v2540 = vld [vmem:[#allocation7 + $0x140] sm:$0xff]
    %v2541 = vld [vmem:[#allocation7 + $0x148] sm:$0xff]
    %v2542 = vld [vmem:[#allocation7 + $0x150] sm:$0xff]
    %v2543 = vld [vmem:[#allocation7 + $0x158] sm:$0xff]
    %v2544 = vld [vmem:[#allocation7 + $0x160] sm:$0xff]
    %v2545 = vld [vmem:[#allocation7 + $0x168] sm:$0xff]
    %v2546 = vld [vmem:[#allocation7 + $0x170] sm:$0xff]
    %v2547 = vld [vmem:[#allocation7 + $0x178] sm:$0xff]
    %v2548 = vld [vmem:[#allocation7 + $0x180] sm:$0xff]
    %v2549 = vld [vmem:[#allocation7 + $0x188] sm:$0xff]
    %v2550 = vld [vmem:[#allocation7 + $0x190] sm:$0xff]
    %v2551 = vld [vmem:[#allocation7 + $0x198] sm:$0xff]
    %v2552 = vld [vmem:[#allocation7 + $0x1a0] sm:$0xff]
    %v2553 = vld [vmem:[#allocation7 + $0x1a8] sm:$0xff]
    %v2554 = vld [vmem:[#allocation7 + $0x1b0] sm:$0xff]
    %v2555 = vld [vmem:[#allocation7 + $0x1b8] sm:$0xff]
    %v2556 = vld [vmem:[#allocation7 + $0x1c0] sm:$0xff]
    %v2557 = vld [vmem:[#allocation7 + $0x1c8] sm:$0xff]
    %v2558 = vld [vmem:[#allocation7 + $0x1d0] sm:$0xff]
    %v2559 = vld [vmem:[#allocation7 + $0x1d8] sm:$0xff]
    %v2560 = vld [vmem:[#allocation7 + $0x1e0] sm:$0xff]
    %v2561 = vld [vmem:[#allocation7 + $0x1e8] sm:$0xff]
    %v2562 = vld [vmem:[#allocation7 + $0x1f0] sm:$0xff]
    %v2563 = vld [vmem:[#allocation7 + $0x1f8] sm:$0xff]
    %v2564 = vadd.f32 %v2500, %v1212
    %v2565 = vadd.f32 %v2501, %v1213
    %v2566 = vadd.f32 %v2502, %v1214
    %v2567 = vadd.f32 %v2503, %v1215
    %v2568 = vadd.f32 %v2504, %v1216
    %v2569 = vadd.f32 %v2505, %v1217
    %v2570 = vadd.f32 %v2506, %v1218
    %v2571 = vadd.f32 %v2507, %v1219
    %v2572 = vadd.f32 %v2508, %v1220
    %v2573 = vadd.f32 %v2509, %v1221
    %v2574 = vadd.f32 %v2510, %v1222
    %v2575 = vadd.f32 %v2511, %v1223
    %v2576 = vadd.f32 %v2512, %v1224
    %v2577 = vadd.f32 %v2513, %v1225
    %v2578 = vadd.f32 %v2514, %v1226
    %v2579 = vadd.f32 %v2515, %v1227
    %v2580 = vadd.f32 %v2516, %v1228
    %v2581 = vadd.f32 %v2517, %v1229
    %v2582 = vadd.f32 %v2518, %v1230
    %v2583 = vadd.f32 %v2519, %v1231
    %v2584 = vadd.f32 %v2520, %v1232
    %v2585 = vadd.f32 %v2521, %v1233
    %v2586 = vadd.f32 %v2522, %v1234
    %v2587 = vadd.f32 %v2523, %v1235
    %v2588 = vadd.f32 %v2524, %v1236
    %v2589 = vadd.f32 %v2525, %v1237
    %v2590 = vadd.f32 %v2526, %v1238
    %v2591 = vadd.f32 %v2527, %v1239
    %v2592 = vadd.f32 %v2528, %v1240
    %v2593 = vadd.f32 %v2529, %v1241
    %v2594 = vadd.f32 %v2530, %v1242
    %v2595 = vadd.f32 %v2531, %v1243
    %v2596 = vadd.f32 %v2532, %v1244
    %v2597 = vadd.f32 %v2533, %v1245
    %v2598 = vadd.f32 %v2534, %v1246
    %v2599 = vadd.f32 %v2535, %v1247
    %v2600 = vadd.f32 %v2536, %v1248
    %v2601 = vadd.f32 %v2537, %v1249
    %v2602 = vadd.f32 %v2538, %v1250
    %v2603 = vadd.f32 %v2539, %v1251
    %v2604 = vadd.f32 %v2540, %v1252
    %v2605 = vadd.f32 %v2541, %v1253
    %v2606 = vadd.f32 %v2542, %v1254
    %v2607 = vadd.f32 %v2543, %v1255
    %v2608 = vadd.f32 %v2544, %v1256
    %v2609 = vadd.f32 %v2545, %v1257
    %v2610 = vadd.f32 %v2546, %v1258
    %v2611 = vadd.f32 %v2547, %v1259
    %v2612 = vadd.f32 %v2548, %v1260
    %v2613 = vadd.f32 %v2549, %v1261
    %v2614 = vadd.f32 %v2550, %v1262
    %v2615 = vadd.f32 %v2551, %v1263
    %v2616 = vadd.f32 %v2552, %v1264
    %v2617 = vadd.f32 %v2553, %v1265
    %v2618 = vadd.f32 %v2554, %v1266
    %v2619 = vadd.f32 %v2555, %v1267
    %v2620 = vadd.f32 %v2556, %v1268
    %v2621 = vadd.f32 %v2557, %v1269
    %v2622 = vadd.f32 %v2558, %v1270
    %v2623 = vadd.f32 %v2559, %v1271
    %v2624 = vadd.f32 %v2560, %v1272
    %v2625 = vadd.f32 %v2561, %v1273
    %v2626 = vadd.f32 %v2562, %v1274
    %v2627 = vadd.f32 %v2563, %v1275
    %2628 = vst [vmem:[#allocation7] sm:$0xff] %v2564
    %2629 = vst [vmem:[#allocation7 + $0x8] sm:$0xff] %v2565
    %2630 = vst [vmem:[#allocation7 + $0x10] sm:$0xff] %v2566
    %2631 = vst [vmem:[#allocation7 + $0x18] sm:$0xff] %v2567
    %2632 = vst [vmem:[#allocation7 + $0x20] sm:$0xff] %v2568
    %2633 = vst [vmem:[#allocation7 + $0x28] sm:$0xff] %v2569
    %2634 = vst [vmem:[#allocation7 + $0x30] sm:$0xff] %v2570
    %2635 = vst [vmem:[#allocation7 + $0x38] sm:$0xff] %v2571
    %2636 = vst [vmem:[#allocation7 + $0x40] sm:$0xff] %v2572
    %2637 = vst [vmem:[#allocation7 + $0x48] sm:$0xff] %v2573
    %2638 = vst [vmem:[#allocation7 + $0x50] sm:$0xff] %v2574
    %2639 = vst [vmem:[#allocation7 + $0x58] sm:$0xff] %v2575
    %2640 = vst [vmem:[#allocation7 + $0x60] sm:$0xff] %v2576
    %2641 = vst [vmem:[#allocation7 + $0x68] sm:$0xff] %v2577
    %2642 = vst [vmem:[#allocation7 + $0x70] sm:$0xff] %v2578
    %2643 = vst [vmem:[#allocation7 + $0x78] sm:$0xff] %v2579
    %2644 = vst [vmem:[#allocation7 + $0x80] sm:$0xff] %v2580
    %2645 = vst [vmem:[#allocation7 + $0x88] sm:$0xff] %v2581
    %2646 = vst [vmem:[#allocation7 + $0x90] sm:$0xff] %v2582
    %2647 = vst [vmem:[#allocation7 + $0x98] sm:$0xff] %v2583
    %2648 = vst [vmem:[#allocation7 + $0xa0] sm:$0xff] %v2584
    %2649 = vst [vmem:[#allocation7 + $0xa8] sm:$0xff] %v2585
    %2650 = vst [vmem:[#allocation7 + $0xb0] sm:$0xff] %v2586
    %2651 = vst [vmem:[#allocation7 + $0xb8] sm:$0xff] %v2587
    %2652 = vst [vmem:[#allocation7 + $0xc0] sm:$0xff] %v2588
    %2653 = vst [vmem:[#allocation7 + $0xc8] sm:$0xff] %v2589
    %2654 = vst [vmem:[#allocation7 + $0xd0] sm:$0xff] %v2590
    %2655 = vst [vmem:[#allocation7 + $0xd8] sm:$0xff] %v2591
    %2656 = vst [vmem:[#allocation7 + $0xe0] sm:$0xff] %v2592
    %2657 = vst [vmem:[#allocation7 + $0xe8] sm:$0xff] %v2593
    %2658 = vst [vmem:[#allocation7 + $0xf0] sm:$0xff] %v2594
    %2659 = vst [vmem:[#allocation7 + $0xf8] sm:$0xff] %v2595
    %2660 = vst [vmem:[#allocation7 + $0x100] sm:$0xff] %v2596
    %2661 = vst [vmem:[#allocation7 + $0x108] sm:$0xff] %v2597
    %2662 = vst [vmem:[#allocation7 + $0x110] sm:$0xff] %v2598
    %2663 = vst [vmem:[#allocation7 + $0x118] sm:$0xff] %v2599
    %2664 = vst [vmem:[#allocation7 + $0x120] sm:$0xff] %v2600
    %2665 = vst [vmem:[#allocation7 + $0x128] sm:$0xff] %v2601
    %2666 = vst [vmem:[#allocation7 + $0x130] sm:$0xff] %v2602
    %2667 = vst [vmem:[#allocation7 + $0x138] sm:$0xff] %v2603
    %2668 = vst [vmem:[#allocation7 + $0x140] sm:$0xff] %v2604
    %2669 = vst [vmem:[#allocation7 + $0x148] sm:$0xff] %v2605
    %2670 = vst [vmem:[#allocation7 + $0x150] sm:$0xff] %v2606
    %2671 = vst [vmem:[#allocation7 + $0x158] sm:$0xff] %v2607
    %2672 = vst [vmem:[#allocation7 + $0x160] sm:$0xff] %v2608
    %2673 = vst [vmem:[#allocation7 + $0x168] sm:$0xff] %v2609
    %2674 = vst [vmem:[#allocation7 + $0x170] sm:$0xff] %v2610
    %2675 = vst [vmem:[#allocation7 + $0x178] sm:$0xff] %v2611
    %2676 = vst [vmem:[#allocation7 + $0x180] sm:$0xff] %v2612
    %2677 = vst [vmem:[#allocation7 + $0x188] sm:$0xff] %v2613
    %2678 = vst [vmem:[#allocation7 + $0x190] sm:$0xff] %v2614
    %2679 = vst [vmem:[#allocation7 + $0x198] sm:$0xff] %v2615
    %2680 = vst [vmem:[#allocation7 + $0x1a0] sm:$0xff] %v2616
    %2681 = vst [vmem:[#allocation7 + $0x1a8] sm:$0xff] %v2617
    %2682 = vst [vmem:[#allocation7 + $0x1b0] sm:$0xff] %v2618
    %2683 = vst [vmem:[#allocation7 + $0x1b8] sm:$0xff] %v2619
    %2684 = vst [vmem:[#allocation7 + $0x1c0] sm:$0xff] %v2620
    %2685 = vst [vmem:[#allocation7 + $0x1c8] sm:$0xff] %v2621
    %2686 = vst [vmem:[#allocation7 + $0x1d0] sm:$0xff] %v2622
    %2687 = vst [vmem:[#allocation7 + $0x1d8] sm:$0xff] %v2623
    %2688 = vst [vmem:[#allocation7 + $0x1e0] sm:$0xff] %v2624
    %2689 = vst [vmem:[#allocation7 + $0x1e8] sm:$0xff] %v2625
    %2690 = vst [vmem:[#allocation7 + $0x1f0] sm:$0xff] %v2626
    %2691 = vst [vmem:[#allocation7 + $0x1f8] sm:$0xff] %v2627
    %v2692 = vld [vmem:[#allocation4] sm:$0xff]
    %v2693 = vld [vmem:[#allocation4 + $0x8] sm:$0xff]
    %v2694 = vld [vmem:[#allocation4 + $0x10] sm:$0xff]
    %v2695 = vld [vmem:[#allocation4 + $0x18] sm:$0xff]
    %v2696 = vld [vmem:[#allocation4 + $0x20] sm:$0xff]
    %v2697 = vld [vmem:[#allocation4 + $0x28] sm:$0xff]
    %v2698 = vld [vmem:[#allocation4 + $0x30] sm:$0xff]
    %v2699 = vld [vmem:[#allocation4 + $0x38] sm:$0xff]
    %v2700 = vld [vmem:[#allocation4 + $0x40] sm:$0xff]
    %v2701 = vld [vmem:[#allocation4 + $0x48] sm:$0xff]
    %v2702 = vld [vmem:[#allocation4 + $0x50] sm:$0xff]
    %v2703 = vld [vmem:[#allocation4 + $0x58] sm:$0xff]
    %v2704 = vld [vmem:[#allocation4 + $0x60] sm:$0xff]
    %v2705 = vld [vmem:[#allocation4 + $0x68] sm:$0xff]
    %v2706 = vld [vmem:[#allocation4 + $0x70] sm:$0xff]
    %v2707 = vld [vmem:[#allocation4 + $0x78] sm:$0xff]
    %v2708 = vld [vmem:[#allocation4 + $0x80] sm:$0xff]
    %v2709 = vld [vmem:[#allocation4 + $0x88] sm:$0xff]
    %v2710 = vld [vmem:[#allocation4 + $0x90] sm:$0xff]
    %v2711 = vld [vmem:[#allocation4 + $0x98] sm:$0xff]
    %v2712 = vld [vmem:[#allocation4 + $0xa0] sm:$0xff]
    %v2713 = vld [vmem:[#allocation4 + $0xa8] sm:$0xff]
    %v2714 = vld [vmem:[#allocation4 + $0xb0] sm:$0xff]
    %v2715 = vld [vmem:[#allocation4 + $0xb8] sm:$0xff]
    %v2716 = vld [vmem:[#allocation4 + $0xc0] sm:$0xff]
    %v2717 = vld [vmem:[#allocation4 + $0xc8] sm:$0xff]
    %v2718 = vld [vmem:[#allocation4 + $0xd0] sm:$0xff]
    %v2719 = vld [vmem:[#allocation4 + $0xd8] sm:$0xff]
    %v2720 = vld [vmem:[#allocation4 + $0xe0] sm:$0xff]
    %v2721 = vld [vmem:[#allocation4 + $0xe8] sm:$0xff]
    %v2722 = vld [vmem:[#allocation4 + $0xf0] sm:$0xff]
    %v2723 = vld [vmem:[#allocation4 + $0xf8] sm:$0xff]
    %v2724 = vld [vmem:[#allocation4 + $0x100] sm:$0xff]
    %v2725 = vld [vmem:[#allocation4 + $0x108] sm:$0xff]
    %v2726 = vld [vmem:[#allocation4 + $0x110] sm:$0xff]
    %v2727 = vld [vmem:[#allocation4 + $0x118] sm:$0xff]
    %v2728 = vld [vmem:[#allocation4 + $0x120] sm:$0xff]
    %v2729 = vld [vmem:[#allocation4 + $0x128] sm:$0xff]
    %v2730 = vld [vmem:[#allocation4 + $0x130] sm:$0xff]
    %v2731 = vld [vmem:[#allocation4 + $0x138] sm:$0xff]
    %v2732 = vld [vmem:[#allocation4 + $0x140] sm:$0xff]
    %v2733 = vld [vmem:[#allocation4 + $0x148] sm:$0xff]
    %v2734 = vld [vmem:[#allocation4 + $0x150] sm:$0xff]
    %v2735 = vld [vmem:[#allocation4 + $0x158] sm:$0xff]
    %v2736 = vld [vmem:[#allocation4 + $0x160] sm:$0xff]
    %v2737 = vld [vmem:[#allocation4 + $0x168] sm:$0xff]
    %v2738 = vld [vmem:[#allocation4 + $0x170] sm:$0xff]
    %v2739 = vld [vmem:[#allocation4 + $0x178] sm:$0xff]
    %v2740 = vld [vmem:[#allocation4 + $0x180] sm:$0xff]
    %v2741 = vld [vmem:[#allocation4 + $0x188] sm:$0xff]
    %v2742 = vld [vmem:[#allocation4 + $0x190] sm:$0xff]
    %v2743 = vld [vmem:[#allocation4 + $0x198] sm:$0xff]
    %v2744 = vld [vmem:[#allocation4 + $0x1a0] sm:$0xff]
    %v2745 = vld [vmem:[#allocation4 + $0x1a8] sm:$0xff]
    %v2746 = vld [vmem:[#allocation4 + $0x1b0] sm:$0xff]
    %v2747 = vld [vmem:[#allocation4 + $0x1b8] sm:$0xff]
    %v2748 = vld [vmem:[#allocation4 + $0x1c0] sm:$0xff]
    %v2749 = vld [vmem:[#allocation4 + $0x1c8] sm:$0xff]
    %v2750 = vld [vmem:[#allocation4 + $0x1d0] sm:$0xff]
    %v2751 = vld [vmem:[#allocation4 + $0x1d8] sm:$0xff]
    %v2752 = vld [vmem:[#allocation4 + $0x1e0] sm:$0xff]
    %v2753 = vld [vmem:[#allocation4 + $0x1e8] sm:$0xff]
    %v2754 = vld [vmem:[#allocation4 + $0x1f0] sm:$0xff]
    %v2755 = vld [vmem:[#allocation4 + $0x1f8] sm:$0xff]
    %vm2756 = vcmp.eq.s32.totalorder %v2692, 1073741824
    %vm2757 = vcmp.eq.s32.totalorder %v2693, 1073741824
    %vm2758 = vcmp.eq.s32.totalorder %v2694, 1073741824
    %vm2759 = vcmp.eq.s32.totalorder %v2695, 1073741824
    %vm2760 = vcmp.eq.s32.totalorder %v2696, 1073741824
    %vm2761 = vcmp.eq.s32.totalorder %v2697, 1073741824
    %vm2762 = vcmp.eq.s32.totalorder %v2698, 1073741824
    %vm2763 = vcmp.eq.s32.totalorder %v2699, 1073741824
    %vm2764 = vcmp.eq.s32.totalorder %v2700, 1073741824
    %vm2765 = vcmp.eq.s32.totalorder %v2701, 1073741824
    %vm2766 = vcmp.eq.s32.totalorder %v2702, 1073741824
    %vm2767 = vcmp.eq.s32.totalorder %v2703, 1073741824
    %vm2768 = vcmp.eq.s32.totalorder %v2704, 1073741824
    %vm2769 = vcmp.eq.s32.totalorder %v2705, 1073741824
    %vm2770 = vcmp.eq.s32.totalorder %v2706, 1073741824
    %vm2771 = vcmp.eq.s32.totalorder %v2707, 1073741824
    %vm2772 = vcmp.eq.s32.totalorder %v2708, 1073741824
    %vm2773 = vcmp.eq.s32.totalorder %v2709, 1073741824
    %vm2774 = vcmp.eq.s32.totalorder %v2710, 1073741824
    %vm2775 = vcmp.eq.s32.totalorder %v2711, 1073741824
    %vm2776 = vcmp.eq.s32.totalorder %v2712, 1073741824
    %vm2777 = vcmp.eq.s32.totalorder %v2713, 1073741824
    %vm2778 = vcmp.eq.s32.totalorder %v2714, 1073741824
    %vm2779 = vcmp.eq.s32.totalorder %v2715, 1073741824
    %vm2780 = vcmp.eq.s32.totalorder %v2716, 1073741824
    %vm2781 = vcmp.eq.s32.totalorder %v2717, 1073741824
    %vm2782 = vcmp.eq.s32.totalorder %v2718, 1073741824
    %vm2783 = vcmp.eq.s32.totalorder %v2719, 1073741824
    %vm2784 = vcmp.eq.s32.totalorder %v2720, 1073741824
    %vm2785 = vcmp.eq.s32.totalorder %v2721, 1073741824
    %vm2786 = vcmp.eq.s32.totalorder %v2722, 1073741824
    %vm2787 = vcmp.eq.s32.totalorder %v2723, 1073741824
    %vm2788 = vcmp.eq.s32.totalorder %v2724, 1073741824
    %vm2789 = vcmp.eq.s32.totalorder %v2725, 1073741824
    %vm2790 = vcmp.eq.s32.totalorder %v2726, 1073741824
    %vm2791 = vcmp.eq.s32.totalorder %v2727, 1073741824
    %vm2792 = vcmp.eq.s32.totalorder %v2728, 1073741824
    %vm2793 = vcmp.eq.s32.totalorder %v2729, 1073741824
    %vm2794 = vcmp.eq.s32.totalorder %v2730, 1073741824
    %vm2795 = vcmp.eq.s32.totalorder %v2731, 1073741824
    %vm2796 = vcmp.eq.s32.totalorder %v2732, 1073741824
    %vm2797 = vcmp.eq.s32.totalorder %v2733, 1073741824
    %vm2798 = vcmp.eq.s32.totalorder %v2734, 1073741824
    %vm2799 = vcmp.eq.s32.totalorder %v2735, 1073741824
    %vm2800 = vcmp.eq.s32.totalorder %v2736, 1073741824
    %vm2801 = vcmp.eq.s32.totalorder %v2737, 1073741824
    %vm2802 = vcmp.eq.s32.totalorder %v2738, 1073741824
    %vm2803 = vcmp.eq.s32.totalorder %v2739, 1073741824
    %vm2804 = vcmp.eq.s32.totalorder %v2740, 1073741824
    %vm2805 = vcmp.eq.s32.totalorder %v2741, 1073741824
    %vm2806 = vcmp.eq.s32.totalorder %v2742, 1073741824
    %vm2807 = vcmp.eq.s32.totalorder %v2743, 1073741824
    %vm2808 = vcmp.eq.s32.totalorder %v2744, 1073741824
    %vm2809 = vcmp.eq.s32.totalorder %v2745, 1073741824
    %vm2810 = vcmp.eq.s32.totalorder %v2746, 1073741824
    %vm2811 = vcmp.eq.s32.totalorder %v2747, 1073741824
    %vm2812 = vcmp.eq.s32.totalorder %v2748, 1073741824
    %vm2813 = vcmp.eq.s32.totalorder %v2749, 1073741824
    %vm2814 = vcmp.eq.s32.totalorder %v2750, 1073741824
    %vm2815 = vcmp.eq.s32.totalorder %v2751, 1073741824
    %vm2816 = vcmp.eq.s32.totalorder %v2752, 1073741824
    %vm2817 = vcmp.eq.s32.totalorder %v2753, 1073741824
    %vm2818 = vcmp.eq.s32.totalorder %v2754, 1073741824
    %vm2819 = vcmp.eq.s32.totalorder %v2755, 1073741824
    %vm2820 = vmand %vm956, %vm2756
    %vm2821 = vmand %vm957, %vm2757
    %vm2822 = vmand %vm958, %vm2758
    %vm2823 = vmand %vm959, %vm2759
    %vm2824 = vmand %vm960, %vm2760
    %vm2825 = vmand %vm961, %vm2761
    %vm2826 = vmand %vm962, %vm2762
    %vm2827 = vmand %vm963, %vm2763
    %vm2828 = vmand %vm964, %vm2764
    %vm2829 = vmand %vm965, %vm2765
    %vm2830 = vmand %vm966, %vm2766
    %vm2831 = vmand %vm967, %vm2767
    %vm2832 = vmand %vm968, %vm2768
    %vm2833 = vmand %vm969, %vm2769
    %vm2834 = vmand %vm970, %vm2770
    %vm2835 = vmand %vm971, %vm2771
    %vm2836 = vmand %vm972, %vm2772
    %vm2837 = vmand %vm973, %vm2773
    %vm2838 = vmand %vm974, %vm2774
    %vm2839 = vmand %vm975, %vm2775
    %vm2840 = vmand %vm976, %vm2776
    %vm2841 = vmand %vm977, %vm2777
    %vm2842 = vmand %vm978, %vm2778
    %vm2843 = vmand %vm979, %vm2779
    %vm2844 = vmand %vm980, %vm2780
    %vm2845 = vmand %vm981, %vm2781
    %vm2846 = vmand %vm982, %vm2782
    %vm2847 = vmand %vm983, %vm2783
    %vm2848 = vmand %vm984, %vm2784
    %vm2849 = vmand %vm985, %vm2785
    %vm2850 = vmand %vm986, %vm2786
    %vm2851 = vmand %vm987, %vm2787
    %vm2852 = vmand %vm988, %vm2788
    %vm2853 = vmand %vm989, %vm2789
    %vm2854 = vmand %vm990, %vm2790
    %vm2855 = vmand %vm991, %vm2791
    %vm2856 = vmand %vm992, %vm2792
    %vm2857 = vmand %vm993, %vm2793
    %vm2858 = vmand %vm994, %vm2794
    %vm2859 = vmand %vm995, %vm2795
    %vm2860 = vmand %vm996, %vm2796
    %vm2861 = vmand %vm997, %vm2797
    %vm2862 = vmand %vm998, %vm2798
    %vm2863 = vmand %vm999, %vm2799
    %vm2864 = vmand %vm1000, %vm2800
    %vm2865 = vmand %vm1001, %vm2801
    %vm2866 = vmand %vm1002, %vm2802
    %vm2867 = vmand %vm1003, %vm2803
    %vm2868 = vmand %vm1004, %vm2804
    %vm2869 = vmand %vm1005, %vm2805
    %vm2870 = vmand %vm1006, %vm2806
    %vm2871 = vmand %vm1007, %vm2807
    %vm2872 = vmand %vm1008, %vm2808
    %vm2873 = vmand %vm1009, %vm2809
    %vm2874 = vmand %vm1010, %vm2810
    %vm2875 = vmand %vm1011, %vm2811
    %vm2876 = vmand %vm1012, %vm2812
    %vm2877 = vmand %vm1013, %vm2813
    %vm2878 = vmand %vm1014, %vm2814
    %vm2879 = vmand %vm1015, %vm2815
    %vm2880 = vmand %vm1016, %vm2816
    %vm2881 = vmand %vm1017, %vm2817
    %vm2882 = vmand %vm1018, %vm2818
    %vm2883 = vmand %vm1019, %vm2819
    %v2884 = vsel %vm2820, %v751, %v2692
    %v2885 = vsel %vm2821, %v752, %v2693
    %v2886 = vsel %vm2822, %v751, %v2694
    %v2887 = vsel %vm2823, %v752, %v2695
    %v2888 = vsel %vm2824, %v751, %v2696
    %v2889 = vsel %vm2825, %v752, %v2697
    %v2890 = vsel %vm2826, %v751, %v2698
    %v2891 = vsel %vm2827, %v752, %v2699
    %v2892 = vsel %vm2828, %v751, %v2700
    %v2893 = vsel %vm2829, %v752, %v2701
    %v2894 = vsel %vm2830, %v751, %v2702
    %v2895 = vsel %vm2831, %v752, %v2703
    %v2896 = vsel %vm2832, %v751, %v2704
    %v2897 = vsel %vm2833, %v752, %v2705
    %v2898 = vsel %vm2834, %v751, %v2706
    %v2899 = vsel %vm2835, %v752, %v2707
    %v2900 = vsel %vm2836, %v751, %v2708
    %v2901 = vsel %vm2837, %v752, %v2709
    %v2902 = vsel %vm2838, %v751, %v2710
    %v2903 = vsel %vm2839, %v752, %v2711
    %v2904 = vsel %vm2840, %v751, %v2712
    %v2905 = vsel %vm2841, %v752, %v2713
    %v2906 = vsel %vm2842, %v751, %v2714
    %v2907 = vsel %vm2843, %v752, %v2715
    %v2908 = vsel %vm2844, %v751, %v2716
    %v2909 = vsel %vm2845, %v752, %v2717
    %v2910 = vsel %vm2846, %v751, %v2718
    %v2911 = vsel %vm2847, %v752, %v2719
    %v2912 = vsel %vm2848, %v751, %v2720
    %v2913 = vsel %vm2849, %v752, %v2721
    %v2914 = vsel %vm2850, %v751, %v2722
    %v2915 = vsel %vm2851, %v752, %v2723
    %v2916 = vsel %vm2852, %v751, %v2724
    %v2917 = vsel %vm2853, %v752, %v2725
    %v2918 = vsel %vm2854, %v751, %v2726
    %v2919 = vsel %vm2855, %v752, %v2727
    %v2920 = vsel %vm2856, %v751, %v2728
    %v2921 = vsel %vm2857, %v752, %v2729
    %v2922 = vsel %vm2858, %v751, %v2730
    %v2923 = vsel %vm2859, %v752, %v2731
    %v2924 = vsel %vm2860, %v751, %v2732
    %v2925 = vsel %vm2861, %v752, %v2733
    %v2926 = vsel %vm2862, %v751, %v2734
    %v2927 = vsel %vm2863, %v752, %v2735
    %v2928 = vsel %vm2864, %v751, %v2736
    %v2929 = vsel %vm2865, %v752, %v2737
    %v2930 = vsel %vm2866, %v751, %v2738
    %v2931 = vsel %vm2867, %v752, %v2739
    %v2932 = vsel %vm2868, %v751, %v2740
    %v2933 = vsel %vm2869, %v752, %v2741
    %v2934 = vsel %vm2870, %v751, %v2742
    %v2935 = vsel %vm2871, %v752, %v2743
    %v2936 = vsel %vm2872, %v751, %v2744
    %v2937 = vsel %vm2873, %v752, %v2745
    %v2938 = vsel %vm2874, %v751, %v2746
    %v2939 = vsel %vm2875, %v752, %v2747
    %v2940 = vsel %vm2876, %v751, %v2748
    %v2941 = vsel %vm2877, %v752, %v2749
    %v2942 = vsel %vm2878, %v751, %v2750
    %v2943 = vsel %vm2879, %v752, %v2751
    %v2944 = vsel %vm2880, %v751, %v2752
    %v2945 = vsel %vm2881, %v752, %v2753
    %v2946 = vsel %vm2882, %v751, %v2754
    %v2947 = vsel %vm2883, %v752, %v2755
    %2948 = vst [vmem:[#allocation4] sm:$0xff] %v2884
    %2949 = vst [vmem:[#allocation4 + $0x8] sm:$0xff] %v2885
    %2950 = vst [vmem:[#allocation4 + $0x10] sm:$0xff] %v2886
    %2951 = vst [vmem:[#allocation4 + $0x18] sm:$0xff] %v2887
    %2952 = vst [vmem:[#allocation4 + $0x20] sm:$0xff] %v2888
    %2953 = vst [vmem:[#allocation4 + $0x28] sm:$0xff] %v2889
    %2954 = vst [vmem:[#allocation4 + $0x30] sm:$0xff] %v2890
    %2955 = vst [vmem:[#allocation4 + $0x38] sm:$0xff] %v2891
    %2956 = vst [vmem:[#allocation4 + $0x40] sm:$0xff] %v2892
    %2957 = vst [vmem:[#allocation4 + $0x48] sm:$0xff] %v2893
    %2958 = vst [vmem:[#allocation4 + $0x50] sm:$0xff] %v2894
    %2959 = vst [vmem:[#allocation4 + $0x58] sm:$0xff] %v2895
    %2960 = vst [vmem:[#allocation4 + $0x60] sm:$0xff] %v2896
    %2961 = vst [vmem:[#allocation4 + $0x68] sm:$0xff] %v2897
    %2962 = vst [vmem:[#allocation4 + $0x70] sm:$0xff] %v2898
    %2963 = vst [vmem:[#allocation4 + $0x78] sm:$0xff] %v2899
    %2964 = vst [vmem:[#allocation4 + $0x80] sm:$0xff] %v2900
    %2965 = vst [vmem:[#allocation4 + $0x88] sm:$0xff] %v2901
    %2966 = vst [vmem:[#allocation4 + $0x90] sm:$0xff] %v2902
    %2967 = vst [vmem:[#allocation4 + $0x98] sm:$0xff] %v2903
    %2968 = vst [vmem:[#allocation4 + $0xa0] sm:$0xff] %v2904
    %2969 = vst [vmem:[#allocation4 + $0xa8] sm:$0xff] %v2905
    %2970 = vst [vmem:[#allocation4 + $0xb0] sm:$0xff] %v2906
    %2971 = vst [vmem:[#allocation4 + $0xb8] sm:$0xff] %v2907
    %2972 = vst [vmem:[#allocation4 + $0xc0] sm:$0xff] %v2908
    %2973 = vst [vmem:[#allocation4 + $0xc8] sm:$0xff] %v2909
    %2974 = vst [vmem:[#allocation4 + $0xd0] sm:$0xff] %v2910
    %2975 = vst [vmem:[#allocation4 + $0xd8] sm:$0xff] %v2911
    %2976 = vst [vmem:[#allocation4 + $0xe0] sm:$0xff] %v2912
    %2977 = vst [vmem:[#allocation4 + $0xe8] sm:$0xff] %v2913
    %2978 = vst [vmem:[#allocation4 + $0xf0] sm:$0xff] %v2914
    %2979 = vst [vmem:[#allocation4 + $0xf8] sm:$0xff] %v2915
    %2980 = vst [vmem:[#allocation4 + $0x100] sm:$0xff] %v2916
    %2981 = vst [vmem:[#allocation4 + $0x108] sm:$0xff] %v2917
    %2982 = vst [vmem:[#allocation4 + $0x110] sm:$0xff] %v2918
    %2983 = vst [vmem:[#allocation4 + $0x118] sm:$0xff] %v2919
    %2984 = vst [vmem:[#allocation4 + $0x120] sm:$0xff] %v2920
    %2985 = vst [vmem:[#allocation4 + $0x128] sm:$0xff] %v2921
    %2986 = vst [vmem:[#allocation4 + $0x130] sm:$0xff] %v2922
    %2987 = vst [vmem:[#allocation4 + $0x138] sm:$0xff] %v2923
    %2988 = vst [vmem:[#allocation4 + $0x140] sm:$0xff] %v2924
    %2989 = vst [vmem:[#allocation4 + $0x148] sm:$0xff] %v2925
    %2990 = vst [vmem:[#allocation4 + $0x150] sm:$0xff] %v2926
    %2991 = vst [vmem:[#allocation4 + $0x158] sm:$0xff] %v2927
    %2992 = vst [vmem:[#allocation4 + $0x160] sm:$0xff] %v2928
    %2993 = vst [vmem:[#allocation4 + $0x168] sm:$0xff] %v2929
    %2994 = vst [vmem:[#allocation4 + $0x170] sm:$0xff] %v2930
    %2995 = vst [vmem:[#allocation4 + $0x178] sm:$0xff] %v2931
    %2996 = vst [vmem:[#allocation4 + $0x180] sm:$0xff] %v2932
    %2997 = vst [vmem:[#allocation4 + $0x188] sm:$0xff] %v2933
    %2998 = vst [vmem:[#allocation4 + $0x190] sm:$0xff] %v2934
    %2999 = vst [vmem:[#allocation4 + $0x198] sm:$0xff] %v2935
    %3000 = vst [vmem:[#allocation4 + $0x1a0] sm:$0xff] %v2936
    %3001 = vst [vmem:[#allocation4 + $0x1a8] sm:$0xff] %v2937
    %3002 = vst [vmem:[#allocation4 + $0x1b0] sm:$0xff] %v2938
    %3003 = vst [vmem:[#allocation4 + $0x1b8] sm:$0xff] %v2939
    %3004 = vst [vmem:[#allocation4 + $0x1c0] sm:$0xff] %v2940
    %3005 = vst [vmem:[#allocation4 + $0x1c8] sm:$0xff] %v2941
    %3006 = vst [vmem:[#allocation4 + $0x1d0] sm:$0xff] %v2942
    %3007 = vst [vmem:[#allocation4 + $0x1d8] sm:$0xff] %v2943
    %3008 = vst [vmem:[#allocation4 + $0x1e0] sm:$0xff] %v2944
    %3009 = vst [vmem:[#allocation4 + $0x1e8] sm:$0xff] %v2945
    %3010 = vst [vmem:[#allocation4 + $0x1f0] sm:$0xff] %v2946
    %3011 = vst [vmem:[#allocation4 + $0x1f8] sm:$0xff] %v2947
    %v3012 = vld [vmem:[#allocation5] sm:$0xff]
    %v3013 = vld [vmem:[#allocation5 + $0x8] sm:$0xff]
    %v3014 = vld [vmem:[#allocation5 + $0x10] sm:$0xff]
    %v3015 = vld [vmem:[#allocation5 + $0x18] sm:$0xff]
    %v3016 = vld [vmem:[#allocation5 + $0x20] sm:$0xff]
    %v3017 = vld [vmem:[#allocation5 + $0x28] sm:$0xff]
    %v3018 = vld [vmem:[#allocation5 + $0x30] sm:$0xff]
    %v3019 = vld [vmem:[#allocation5 + $0x38] sm:$0xff]
    %v3020 = vld [vmem:[#allocation5 + $0x40] sm:$0xff]
    %v3021 = vld [vmem:[#allocation5 + $0x48] sm:$0xff]
    %v3022 = vld [vmem:[#allocation5 + $0x50] sm:$0xff]
    %v3023 = vld [vmem:[#allocation5 + $0x58] sm:$0xff]
    %v3024 = vld [vmem:[#allocation5 + $0x60] sm:$0xff]
    %v3025 = vld [vmem:[#allocation5 + $0x68] sm:$0xff]
    %v3026 = vld [vmem:[#allocation5 + $0x70] sm:$0xff]
    %v3027 = vld [vmem:[#allocation5 + $0x78] sm:$0xff]
    %v3028 = vld [vmem:[#allocation5 + $0x80] sm:$0xff]
    %v3029 = vld [vmem:[#allocation5 + $0x88] sm:$0xff]
    %v3030 = vld [vmem:[#allocation5 + $0x90] sm:$0xff]
    %v3031 = vld [vmem:[#allocation5 + $0x98] sm:$0xff]
    %v3032 = vld [vmem:[#allocation5 + $0xa0] sm:$0xff]
    %v3033 = vld [vmem:[#allocation5 + $0xa8] sm:$0xff]
    %v3034 = vld [vmem:[#allocation5 + $0xb0] sm:$0xff]
    %v3035 = vld [vmem:[#allocation5 + $0xb8] sm:$0xff]
    %v3036 = vld [vmem:[#allocation5 + $0xc0] sm:$0xff]
    %v3037 = vld [vmem:[#allocation5 + $0xc8] sm:$0xff]
    %v3038 = vld [vmem:[#allocation5 + $0xd0] sm:$0xff]
    %v3039 = vld [vmem:[#allocation5 + $0xd8] sm:$0xff]
    %v3040 = vld [vmem:[#allocation5 + $0xe0] sm:$0xff]
    %v3041 = vld [vmem:[#allocation5 + $0xe8] sm:$0xff]
    %v3042 = vld [vmem:[#allocation5 + $0xf0] sm:$0xff]
    %v3043 = vld [vmem:[#allocation5 + $0xf8] sm:$0xff]
    %v3044 = vld [vmem:[#allocation5 + $0x100] sm:$0xff]
    %v3045 = vld [vmem:[#allocation5 + $0x108] sm:$0xff]
    %v3046 = vld [vmem:[#allocation5 + $0x110] sm:$0xff]
    %v3047 = vld [vmem:[#allocation5 + $0x118] sm:$0xff]
    %v3048 = vld [vmem:[#allocation5 + $0x120] sm:$0xff]
    %v3049 = vld [vmem:[#allocation5 + $0x128] sm:$0xff]
    %v3050 = vld [vmem:[#allocation5 + $0x130] sm:$0xff]
    %v3051 = vld [vmem:[#allocation5 + $0x138] sm:$0xff]
    %v3052 = vld [vmem:[#allocation5 + $0x140] sm:$0xff]
    %v3053 = vld [vmem:[#allocation5 + $0x148] sm:$0xff]
    %v3054 = vld [vmem:[#allocation5 + $0x150] sm:$0xff]
    %v3055 = vld [vmem:[#allocation5 + $0x158] sm:$0xff]
    %v3056 = vld [vmem:[#allocation5 + $0x160] sm:$0xff]
    %v3057 = vld [vmem:[#allocation5 + $0x168] sm:$0xff]
    %v3058 = vld [vmem:[#allocation5 + $0x170] sm:$0xff]
    %v3059 = vld [vmem:[#allocation5 + $0x178] sm:$0xff]
    %v3060 = vld [vmem:[#allocation5 + $0x180] sm:$0xff]
    %v3061 = vld [vmem:[#allocation5 + $0x188] sm:$0xff]
    %v3062 = vld [vmem:[#allocation5 + $0x190] sm:$0xff]
    %v3063 = vld [vmem:[#allocation5 + $0x198] sm:$0xff]
    %v3064 = vld [vmem:[#allocation5 + $0x1a0] sm:$0xff]
    %v3065 = vld [vmem:[#allocation5 + $0x1a8] sm:$0xff]
    %v3066 = vld [vmem:[#allocation5 + $0x1b0] sm:$0xff]
    %v3067 = vld [vmem:[#allocation5 + $0x1b8] sm:$0xff]
    %v3068 = vld [vmem:[#allocation5 + $0x1c0] sm:$0xff]
    %v3069 = vld [vmem:[#allocation5 + $0x1c8] sm:$0xff]
    %v3070 = vld [vmem:[#allocation5 + $0x1d0] sm:$0xff]
    %v3071 = vld [vmem:[#allocation5 + $0x1d8] sm:$0xff]
    %v3072 = vld [vmem:[#allocation5 + $0x1e0] sm:$0xff]
    %v3073 = vld [vmem:[#allocation5 + $0x1e8] sm:$0xff]
    %v3074 = vld [vmem:[#allocation5 + $0x1f0] sm:$0xff]
    %v3075 = vld [vmem:[#allocation5 + $0x1f8] sm:$0xff]
    %v3076 = vsel %vm2820, %v1148, %v3012
    %v3077 = vsel %vm2821, %v1149, %v3013
    %v3078 = vsel %vm2822, %v1150, %v3014
    %v3079 = vsel %vm2823, %v1151, %v3015
    %v3080 = vsel %vm2824, %v1152, %v3016
    %v3081 = vsel %vm2825, %v1153, %v3017
    %v3082 = vsel %vm2826, %v1154, %v3018
    %v3083 = vsel %vm2827, %v1155, %v3019
    %v3084 = vsel %vm2828, %v1156, %v3020
    %v3085 = vsel %vm2829, %v1157, %v3021
    %v3086 = vsel %vm2830, %v1158, %v3022
    %v3087 = vsel %vm2831, %v1159, %v3023
    %v3088 = vsel %vm2832, %v1160, %v3024
    %v3089 = vsel %vm2833, %v1161, %v3025
    %v3090 = vsel %vm2834, %v1162, %v3026
    %v3091 = vsel %vm2835, %v1163, %v3027
    %v3092 = vsel %vm2836, %v1164, %v3028
    %v3093 = vsel %vm2837, %v1165, %v3029
    %v3094 = vsel %vm2838, %v1166, %v3030
    %v3095 = vsel %vm2839, %v1167, %v3031
    %v3096 = vsel %vm2840, %v1168, %v3032
    %v3097 = vsel %vm2841, %v1169, %v3033
    %v3098 = vsel %vm2842, %v1170, %v3034
    %v3099 = vsel %vm2843, %v1171, %v3035
    %v3100 = vsel %vm2844, %v1172, %v3036
    %v3101 = vsel %vm2845, %v1173, %v3037
    %v3102 = vsel %vm2846, %v1174, %v3038
    %v3103 = vsel %vm2847, %v1175, %v3039
    %v3104 = vsel %vm2848, %v1176, %v3040
    %v3105 = vsel %vm2849, %v1177, %v3041
    %v3106 = vsel %vm2850, %v1178, %v3042
    %v3107 = vsel %vm2851, %v1179, %v3043
    %v3108 = vsel %vm2852, %v1180, %v3044
    %v3109 = vsel %vm2853, %v1181, %v3045
    %v3110 = vsel %vm2854, %v1182, %v3046
    %v3111 = vsel %vm2855, %v1183, %v3047
    %v3112 = vsel %vm2856, %v1184, %v3048
    %v3113 = vsel %vm2857, %v1185, %v3049
    %v3114 = vsel %vm2858, %v1186, %v3050
    %v3115 = vsel %vm2859, %v1187, %v3051
    %v3116 = vsel %vm2860, %v1188, %v3052
    %v3117 = vsel %vm2861, %v1189, %v3053
    %v3118 = vsel %vm2862, %v1190, %v3054
    %v3119 = vsel %vm2863, %v1191, %v3055
    %v3120 = vsel %vm2864, %v1192, %v3056
    %v3121 = vsel %vm2865, %v1193, %v3057
    %v3122 = vsel %vm2866, %v1194, %v3058
    %v3123 = vsel %vm2867, %v1195, %v3059
    %v3124 = vsel %vm2868, %v1196, %v3060
    %v3125 = vsel %vm2869, %v1197, %v3061
    %v3126 = vsel %vm2870, %v1198, %v3062
    %v3127 = vsel %vm2871, %v1199, %v3063
    %v3128 = vsel %vm2872, %v1200, %v3064
    %v3129 = vsel %vm2873, %v1201, %v3065
    %v3130 = vsel %vm2874, %v1202, %v3066
    %v3131 = vsel %vm2875, %v1203, %v3067
    %v3132 = vsel %vm2876, %v1204, %v3068
    %v3133 = vsel %vm2877, %v1205, %v3069
    %v3134 = vsel %vm2878, %v1206, %v3070
    %v3135 = vsel %vm2879, %v1207, %v3071
    %v3136 = vsel %vm2880, %v1208, %v3072
    %v3137 = vsel %vm2881, %v1209, %v3073
    %v3138 = vsel %vm2882, %v1210, %v3074
    %v3139 = vsel %vm2883, %v1211, %v3075
    %3140 = vst [vmem:[#allocation5] sm:$0xff] %v3076
    %3141 = vst [vmem:[#allocation5 + $0x8] sm:$0xff] %v3077
    %3142 = vst [vmem:[#allocation5 + $0x10] sm:$0xff] %v3078
    %3143 = vst [vmem:[#allocation5 + $0x18] sm:$0xff] %v3079
    %3144 = vst [vmem:[#allocation5 + $0x20] sm:$0xff] %v3080
    %3145 = vst [vmem:[#allocation5 + $0x28] sm:$0xff] %v3081
    %3146 = vst [vmem:[#allocation5 + $0x30] sm:$0xff] %v3082
    %3147 = vst [vmem:[#allocation5 + $0x38] sm:$0xff] %v3083
    %3148 = vst [vmem:[#allocation5 + $0x40] sm:$0xff] %v3084
    %3149 = vst [vmem:[#allocation5 + $0x48] sm:$0xff] %v3085
    %3150 = vst [vmem:[#allocation5 + $0x50] sm:$0xff] %v3086
    %3151 = vst [vmem:[#allocation5 + $0x58] sm:$0xff] %v3087
    %3152 = vst [vmem:[#allocation5 + $0x60] sm:$0xff] %v3088
    %3153 = vst [vmem:[#allocation5 + $0x68] sm:$0xff] %v3089
    %3154 = vst [vmem:[#allocation5 + $0x70] sm:$0xff] %v3090
    %3155 = vst [vmem:[#allocation5 + $0x78] sm:$0xff] %v3091
    %3156 = vst [vmem:[#allocation5 + $0x80] sm:$0xff] %v3092
    %3157 = vst [vmem:[#allocation5 + $0x88] sm:$0xff] %v3093
    %3158 = vst [vmem:[#allocation5 + $0x90] sm:$0xff] %v3094
    %3159 = vst [vmem:[#allocation5 + $0x98] sm:$0xff] %v3095
    %3160 = vst [vmem:[#allocation5 + $0xa0] sm:$0xff] %v3096
    %3161 = vst [vmem:[#allocation5 + $0xa8] sm:$0xff] %v3097
    %3162 = vst [vmem:[#allocation5 + $0xb0] sm:$0xff] %v3098
    %3163 = vst [vmem:[#allocation5 + $0xb8] sm:$0xff] %v3099
    %3164 = vst [vmem:[#allocation5 + $0xc0] sm:$0xff] %v3100
    %3165 = vst [vmem:[#allocation5 + $0xc8] sm:$0xff] %v3101
    %3166 = vst [vmem:[#allocation5 + $0xd0] sm:$0xff] %v3102
    %3167 = vst [vmem:[#allocation5 + $0xd8] sm:$0xff] %v3103
    %3168 = vst [vmem:[#allocation5 + $0xe0] sm:$0xff] %v3104
    %3169 = vst [vmem:[#allocation5 + $0xe8] sm:$0xff] %v3105
    %3170 = vst [vmem:[#allocation5 + $0xf0] sm:$0xff] %v3106
    %3171 = vst [vmem:[#allocation5 + $0xf8] sm:$0xff] %v3107
    %3172 = vst [vmem:[#allocation5 + $0x100] sm:$0xff] %v3108
    %3173 = vst [vmem:[#allocation5 + $0x108] sm:$0xff] %v3109
    %3174 = vst [vmem:[#allocation5 + $0x110] sm:$0xff] %v3110
    %3175 = vst [vmem:[#allocation5 + $0x118] sm:$0xff] %v3111
    %3176 = vst [vmem:[#allocation5 + $0x120] sm:$0xff] %v3112
    %3177 = vst [vmem:[#allocation5 + $0x128] sm:$0xff] %v3113
    %3178 = vst [vmem:[#allocation5 + $0x130] sm:$0xff] %v3114
    %3179 = vst [vmem:[#allocation5 + $0x138] sm:$0xff] %v3115
    %3180 = vst [vmem:[#allocation5 + $0x140] sm:$0xff] %v3116
    %3181 = vst [vmem:[#allocation5 + $0x148] sm:$0xff] %v3117
    %3182 = vst [vmem:[#allocation5 + $0x150] sm:$0xff] %v3118
    %3183 = vst [vmem:[#allocation5 + $0x158] sm:$0xff] %v3119
    %3184 = vst [vmem:[#allocation5 + $0x160] sm:$0xff] %v3120
    %3185 = vst [vmem:[#allocation5 + $0x168] sm:$0xff] %v3121
    %3186 = vst [vmem:[#allocation5 + $0x170] sm:$0xff] %v3122
    %3187 = vst [vmem:[#allocation5 + $0x178] sm:$0xff] %v3123
    %3188 = vst [vmem:[#allocation5 + $0x180] sm:$0xff] %v3124
    %3189 = vst [vmem:[#allocation5 + $0x188] sm:$0xff] %v3125
    %3190 = vst [vmem:[#allocation5 + $0x190] sm:$0xff] %v3126
    %3191 = vst [vmem:[#allocation5 + $0x198] sm:$0xff] %v3127
    %3192 = vst [vmem:[#allocation5 + $0x1a0] sm:$0xff] %v3128
    %3193 = vst [vmem:[#allocation5 + $0x1a8] sm:$0xff] %v3129
    %3194 = vst [vmem:[#allocation5 + $0x1b0] sm:$0xff] %v3130
    %3195 = vst [vmem:[#allocation5 + $0x1b8] sm:$0xff] %v3131
    %3196 = vst [vmem:[#allocation5 + $0x1c0] sm:$0xff] %v3132
    %3197 = vst [vmem:[#allocation5 + $0x1c8] sm:$0xff] %v3133
    %3198 = vst [vmem:[#allocation5 + $0x1d0] sm:$0xff] %v3134
    %3199 = vst [vmem:[#allocation5 + $0x1d8] sm:$0xff] %v3135
    %3200 = vst [vmem:[#allocation5 + $0x1e0] sm:$0xff] %v3136
    %3201 = vst [vmem:[#allocation5 + $0x1e8] sm:$0xff] %v3137
    %3202 = vst [vmem:[#allocation5 + $0x1f0] sm:$0xff] %v3138
    %3203 = vst [vmem:[#allocation5 + $0x1f8] sm:$0xff] %v3139
    %v3204 = vld [vmem:[#allocation8] sm:$0xff]
    %v3205 = vld [vmem:[#allocation8 + $0x8] sm:$0xff]
    %v3206 = vld [vmem:[#allocation8 + $0x10] sm:$0xff]
    %v3207 = vld [vmem:[#allocation8 + $0x18] sm:$0xff]
    %v3208 = vld [vmem:[#allocation8 + $0x20] sm:$0xff]
    %v3209 = vld [vmem:[#allocation8 + $0x28] sm:$0xff]
    %v3210 = vld [vmem:[#allocation8 + $0x30] sm:$0xff]
    %v3211 = vld [vmem:[#allocation8 + $0x38] sm:$0xff]
    %v3212 = vld [vmem:[#allocation8 + $0x40] sm:$0xff]
    %v3213 = vld [vmem:[#allocation8 + $0x48] sm:$0xff]
    %v3214 = vld [vmem:[#allocation8 + $0x50] sm:$0xff]
    %v3215 = vld [vmem:[#allocation8 + $0x58] sm:$0xff]
    %v3216 = vld [vmem:[#allocation8 + $0x60] sm:$0xff]
    %v3217 = vld [vmem:[#allocation8 + $0x68] sm:$0xff]
    %v3218 = vld [vmem:[#allocation8 + $0x70] sm:$0xff]
    %v3219 = vld [vmem:[#allocation8 + $0x78] sm:$0xff]
    %v3220 = vld [vmem:[#allocation8 + $0x80] sm:$0xff]
    %v3221 = vld [vmem:[#allocation8 + $0x88] sm:$0xff]
    %v3222 = vld [vmem:[#allocation8 + $0x90] sm:$0xff]
    %v3223 = vld [vmem:[#allocation8 + $0x98] sm:$0xff]
    %v3224 = vld [vmem:[#allocation8 + $0xa0] sm:$0xff]
    %v3225 = vld [vmem:[#allocation8 + $0xa8] sm:$0xff]
    %v3226 = vld [vmem:[#allocation8 + $0xb0] sm:$0xff]
    %v3227 = vld [vmem:[#allocation8 + $0xb8] sm:$0xff]
    %v3228 = vld [vmem:[#allocation8 + $0xc0] sm:$0xff]
    %v3229 = vld [vmem:[#allocation8 + $0xc8] sm:$0xff]
    %v3230 = vld [vmem:[#allocation8 + $0xd0] sm:$0xff]
    %v3231 = vld [vmem:[#allocation8 + $0xd8] sm:$0xff]
    %v3232 = vld [vmem:[#allocation8 + $0xe0] sm:$0xff]
    %v3233 = vld [vmem:[#allocation8 + $0xe8] sm:$0xff]
    %v3234 = vld [vmem:[#allocation8 + $0xf0] sm:$0xff]
    %v3235 = vld [vmem:[#allocation8 + $0xf8] sm:$0xff]
    %v3236 = vld [vmem:[#allocation8 + $0x100] sm:$0xff]
    %v3237 = vld [vmem:[#allocation8 + $0x108] sm:$0xff]
    %v3238 = vld [vmem:[#allocation8 + $0x110] sm:$0xff]
    %v3239 = vld [vmem:[#allocation8 + $0x118] sm:$0xff]
    %v3240 = vld [vmem:[#allocation8 + $0x120] sm:$0xff]
    %v3241 = vld [vmem:[#allocation8 + $0x128] sm:$0xff]
    %v3242 = vld [vmem:[#allocation8 + $0x130] sm:$0xff]
    %v3243 = vld [vmem:[#allocation8 + $0x138] sm:$0xff]
    %v3244 = vld [vmem:[#allocation8 + $0x140] sm:$0xff]
    %v3245 = vld [vmem:[#allocation8 + $0x148] sm:$0xff]
    %v3246 = vld [vmem:[#allocation8 + $0x150] sm:$0xff]
    %v3247 = vld [vmem:[#allocation8 + $0x158] sm:$0xff]
    %v3248 = vld [vmem:[#allocation8 + $0x160] sm:$0xff]
    %v3249 = vld [vmem:[#allocation8 + $0x168] sm:$0xff]
    %v3250 = vld [vmem:[#allocation8 + $0x170] sm:$0xff]
    %v3251 = vld [vmem:[#allocation8 + $0x178] sm:$0xff]
    %v3252 = vld [vmem:[#allocation8 + $0x180] sm:$0xff]
    %v3253 = vld [vmem:[#allocation8 + $0x188] sm:$0xff]
    %v3254 = vld [vmem:[#allocation8 + $0x190] sm:$0xff]
    %v3255 = vld [vmem:[#allocation8 + $0x198] sm:$0xff]
    %v3256 = vld [vmem:[#allocation8 + $0x1a0] sm:$0xff]
    %v3257 = vld [vmem:[#allocation8 + $0x1a8] sm:$0xff]
    %v3258 = vld [vmem:[#allocation8 + $0x1b0] sm:$0xff]
    %v3259 = vld [vmem:[#allocation8 + $0x1b8] sm:$0xff]
    %v3260 = vld [vmem:[#allocation8 + $0x1c0] sm:$0xff]
    %v3261 = vld [vmem:[#allocation8 + $0x1c8] sm:$0xff]
    %v3262 = vld [vmem:[#allocation8 + $0x1d0] sm:$0xff]
    %v3263 = vld [vmem:[#allocation8 + $0x1d8] sm:$0xff]
    %v3264 = vld [vmem:[#allocation8 + $0x1e0] sm:$0xff]
    %v3265 = vld [vmem:[#allocation8 + $0x1e8] sm:$0xff]
    %v3266 = vld [vmem:[#allocation8 + $0x1f0] sm:$0xff]
    %v3267 = vld [vmem:[#allocation8 + $0x1f8] sm:$0xff]
    %vm3268 = vcmp.eq.s32.totalorder %v3204, 1073741824
    %vm3269 = vcmp.eq.s32.totalorder %v3205, 1073741824
    %vm3270 = vcmp.eq.s32.totalorder %v3206, 1073741824
    %vm3271 = vcmp.eq.s32.totalorder %v3207, 1073741824
    %vm3272 = vcmp.eq.s32.totalorder %v3208, 1073741824
    %vm3273 = vcmp.eq.s32.totalorder %v3209, 1073741824
    %vm3274 = vcmp.eq.s32.totalorder %v3210, 1073741824
    %vm3275 = vcmp.eq.s32.totalorder %v3211, 1073741824
    %vm3276 = vcmp.eq.s32.totalorder %v3212, 1073741824
    %vm3277 = vcmp.eq.s32.totalorder %v3213, 1073741824
    %vm3278 = vcmp.eq.s32.totalorder %v3214, 1073741824
    %vm3279 = vcmp.eq.s32.totalorder %v3215, 1073741824
    %vm3280 = vcmp.eq.s32.totalorder %v3216, 1073741824
    %vm3281 = vcmp.eq.s32.totalorder %v3217, 1073741824
    %vm3282 = vcmp.eq.s32.totalorder %v3218, 1073741824
    %vm3283 = vcmp.eq.s32.totalorder %v3219, 1073741824
    %vm3284 = vcmp.eq.s32.totalorder %v3220, 1073741824
    %vm3285 = vcmp.eq.s32.totalorder %v3221, 1073741824
    %vm3286 = vcmp.eq.s32.totalorder %v3222, 1073741824
    %vm3287 = vcmp.eq.s32.totalorder %v3223, 1073741824
    %vm3288 = vcmp.eq.s32.totalorder %v3224, 1073741824
    %vm3289 = vcmp.eq.s32.totalorder %v3225, 1073741824
    %vm3290 = vcmp.eq.s32.totalorder %v3226, 1073741824
    %vm3291 = vcmp.eq.s32.totalorder %v3227, 1073741824
    %vm3292 = vcmp.eq.s32.totalorder %v3228, 1073741824
    %vm3293 = vcmp.eq.s32.totalorder %v3229, 1073741824
    %vm3294 = vcmp.eq.s32.totalorder %v3230, 1073741824
    %vm3295 = vcmp.eq.s32.totalorder %v3231, 1073741824
    %vm3296 = vcmp.eq.s32.totalorder %v3232, 1073741824
    %vm3297 = vcmp.eq.s32.totalorder %v3233, 1073741824
    %vm3298 = vcmp.eq.s32.totalorder %v3234, 1073741824
    %vm3299 = vcmp.eq.s32.totalorder %v3235, 1073741824
    %vm3300 = vcmp.eq.s32.totalorder %v3236, 1073741824
    %vm3301 = vcmp.eq.s32.totalorder %v3237, 1073741824
    %vm3302 = vcmp.eq.s32.totalorder %v3238, 1073741824
    %vm3303 = vcmp.eq.s32.totalorder %v3239, 1073741824
    %vm3304 = vcmp.eq.s32.totalorder %v3240, 1073741824
    %vm3305 = vcmp.eq.s32.totalorder %v3241, 1073741824
    %vm3306 = vcmp.eq.s32.totalorder %v3242, 1073741824
    %vm3307 = vcmp.eq.s32.totalorder %v3243, 1073741824
    %vm3308 = vcmp.eq.s32.totalorder %v3244, 1073741824
    %vm3309 = vcmp.eq.s32.totalorder %v3245, 1073741824
    %vm3310 = vcmp.eq.s32.totalorder %v3246, 1073741824
    %vm3311 = vcmp.eq.s32.totalorder %v3247, 1073741824
    %vm3312 = vcmp.eq.s32.totalorder %v3248, 1073741824
    %vm3313 = vcmp.eq.s32.totalorder %v3249, 1073741824
    %vm3314 = vcmp.eq.s32.totalorder %v3250, 1073741824
    %vm3315 = vcmp.eq.s32.totalorder %v3251, 1073741824
    %vm3316 = vcmp.eq.s32.totalorder %v3252, 1073741824
    %vm3317 = vcmp.eq.s32.totalorder %v3253, 1073741824
    %vm3318 = vcmp.eq.s32.totalorder %v3254, 1073741824
    %vm3319 = vcmp.eq.s32.totalorder %v3255, 1073741824
    %vm3320 = vcmp.eq.s32.totalorder %v3256, 1073741824
    %vm3321 = vcmp.eq.s32.totalorder %v3257, 1073741824
    %vm3322 = vcmp.eq.s32.totalorder %v3258, 1073741824
    %vm3323 = vcmp.eq.s32.totalorder %v3259, 1073741824
    %vm3324 = vcmp.eq.s32.totalorder %v3260, 1073741824
    %vm3325 = vcmp.eq.s32.totalorder %v3261, 1073741824
    %vm3326 = vcmp.eq.s32.totalorder %v3262, 1073741824
    %vm3327 = vcmp.eq.s32.totalorder %v3263, 1073741824
    %vm3328 = vcmp.eq.s32.totalorder %v3264, 1073741824
    %vm3329 = vcmp.eq.s32.totalorder %v3265, 1073741824
    %vm3330 = vcmp.eq.s32.totalorder %v3266, 1073741824
    %vm3331 = vcmp.eq.s32.totalorder %v3267, 1073741824
    %vm3332 = vmand %vm1084, %vm3268
    %vm3333 = vmand %vm1085, %vm3269
    %vm3334 = vmand %vm1086, %vm3270
    %vm3335 = vmand %vm1087, %vm3271
    %vm3336 = vmand %vm1088, %vm3272
    %vm3337 = vmand %vm1089, %vm3273
    %vm3338 = vmand %vm1090, %vm3274
    %vm3339 = vmand %vm1091, %vm3275
    %vm3340 = vmand %vm1092, %vm3276
    %vm3341 = vmand %vm1093, %vm3277
    %vm3342 = vmand %vm1094, %vm3278
    %vm3343 = vmand %vm1095, %vm3279
    %vm3344 = vmand %vm1096, %vm3280
    %vm3345 = vmand %vm1097, %vm3281
    %vm3346 = vmand %vm1098, %vm3282
    %vm3347 = vmand %vm1099, %vm3283
    %vm3348 = vmand %vm1100, %vm3284
    %vm3349 = vmand %vm1101, %vm3285
    %vm3350 = vmand %vm1102, %vm3286
    %vm3351 = vmand %vm1103, %vm3287
    %vm3352 = vmand %vm1104, %vm3288
    %vm3353 = vmand %vm1105, %vm3289
    %vm3354 = vmand %vm1106, %vm3290
    %vm3355 = vmand %vm1107, %vm3291
    %vm3356 = vmand %vm1108, %vm3292
    %vm3357 = vmand %vm1109, %vm3293
    %vm3358 = vmand %vm1110, %vm3294
    %vm3359 = vmand %vm1111, %vm3295
    %vm3360 = vmand %vm1112, %vm3296
    %vm3361 = vmand %vm1113, %vm3297
    %vm3362 = vmand %vm1114, %vm3298
    %vm3363 = vmand %vm1115, %vm3299
    %vm3364 = vmand %vm1116, %vm3300
    %vm3365 = vmand %vm1117, %vm3301
    %vm3366 = vmand %vm1118, %vm3302
    %vm3367 = vmand %vm1119, %vm3303
    %vm3368 = vmand %vm1120, %vm3304
    %vm3369 = vmand %vm1121, %vm3305
    %vm3370 = vmand %vm1122, %vm3306
    %vm3371 = vmand %vm1123, %vm3307
    %vm3372 = vmand %vm1124, %vm3308
    %vm3373 = vmand %vm1125, %vm3309
    %vm3374 = vmand %vm1126, %vm3310
    %vm3375 = vmand %vm1127, %vm3311
    %vm3376 = vmand %vm1128, %vm3312
    %vm3377 = vmand %vm1129, %vm3313
    %vm3378 = vmand %vm1130, %vm3314
    %vm3379 = vmand %vm1131, %vm3315
    %vm3380 = vmand %vm1132, %vm3316
    %vm3381 = vmand %vm1133, %vm3317
    %vm3382 = vmand %vm1134, %vm3318
    %vm3383 = vmand %vm1135, %vm3319
    %vm3384 = vmand %vm1136, %vm3320
    %vm3385 = vmand %vm1137, %vm3321
    %vm3386 = vmand %vm1138, %vm3322
    %vm3387 = vmand %vm1139, %vm3323
    %vm3388 = vmand %vm1140, %vm3324
    %vm3389 = vmand %vm1141, %vm3325
    %vm3390 = vmand %vm1142, %vm3326
    %vm3391 = vmand %vm1143, %vm3327
    %vm3392 = vmand %vm1144, %vm3328
    %vm3393 = vmand %vm1145, %vm3329
    %vm3394 = vmand %vm1146, %vm3330
    %vm3395 = vmand %vm1147, %vm3331
    %v3396 = vsel %vm3332, %v751, %v3204
    %v3397 = vsel %vm3333, %v752, %v3205
    %v3398 = vsel %vm3334, %v751, %v3206
    %v3399 = vsel %vm3335, %v752, %v3207
    %v3400 = vsel %vm3336, %v751, %v3208
    %v3401 = vsel %vm3337, %v752, %v3209
    %v3402 = vsel %vm3338, %v751, %v3210
    %v3403 = vsel %vm3339, %v752, %v3211
    %v3404 = vsel %vm3340, %v751, %v3212
    %v3405 = vsel %vm3341, %v752, %v3213
    %v3406 = vsel %vm3342, %v751, %v3214
    %v3407 = vsel %vm3343, %v752, %v3215
    %v3408 = vsel %vm3344, %v751, %v3216
    %v3409 = vsel %vm3345, %v752, %v3217
    %v3410 = vsel %vm3346, %v751, %v3218
    %v3411 = vsel %vm3347, %v752, %v3219
    %v3412 = vsel %vm3348, %v751, %v3220
    %v3413 = vsel %vm3349, %v752, %v3221
    %v3414 = vsel %vm3350, %v751, %v3222
    %v3415 = vsel %vm3351, %v752, %v3223
    %v3416 = vsel %vm3352, %v751, %v3224
    %v3417 = vsel %vm3353, %v752, %v3225
    %v3418 = vsel %vm3354, %v751, %v3226
    %v3419 = vsel %vm3355, %v752, %v3227
    %v3420 = vsel %vm3356, %v751, %v3228
    %v3421 = vsel %vm3357, %v752, %v3229
    %v3422 = vsel %vm3358, %v751, %v3230
    %v3423 = vsel %vm3359, %v752, %v3231
    %v3424 = vsel %vm3360, %v751, %v3232
    %v3425 = vsel %vm3361, %v752, %v3233
    %v3426 = vsel %vm3362, %v751, %v3234
    %v3427 = vsel %vm3363, %v752, %v3235
    %v3428 = vsel %vm3364, %v751, %v3236
    %v3429 = vsel %vm3365, %v752, %v3237
    %v3430 = vsel %vm3366, %v751, %v3238
    %v3431 = vsel %vm3367, %v752, %v3239
    %v3432 = vsel %vm3368, %v751, %v3240
    %v3433 = vsel %vm3369, %v752, %v3241
    %v3434 = vsel %vm3370, %v751, %v3242
    %v3435 = vsel %vm3371, %v752, %v3243
    %v3436 = vsel %vm3372, %v751, %v3244
    %v3437 = vsel %vm3373, %v752, %v3245
    %v3438 = vsel %vm3374, %v751, %v3246
    %v3439 = vsel %vm3375, %v752, %v3247
    %v3440 = vsel %vm3376, %v751, %v3248
    %v3441 = vsel %vm3377, %v752, %v3249
    %v3442 = vsel %vm3378, %v751, %v3250
    %v3443 = vsel %vm3379, %v752, %v3251
    %v3444 = vsel %vm3380, %v751, %v3252
    %v3445 = vsel %vm3381, %v752, %v3253
    %v3446 = vsel %vm3382, %v751, %v3254
    %v3447 = vsel %vm3383, %v752, %v3255
    %v3448 = vsel %vm3384, %v751, %v3256
    %v3449 = vsel %vm3385, %v752, %v3257
    %v3450 = vsel %vm3386, %v751, %v3258
    %v3451 = vsel %vm3387, %v752, %v3259
    %v3452 = vsel %vm3388, %v751, %v3260
    %v3453 = vsel %vm3389, %v752, %v3261
    %v3454 = vsel %vm3390, %v751, %v3262
    %v3455 = vsel %vm3391, %v752, %v3263
    %v3456 = vsel %vm3392, %v751, %v3264
    %v3457 = vsel %vm3393, %v752, %v3265
    %v3458 = vsel %vm3394, %v751, %v3266
    %v3459 = vsel %vm3395, %v752, %v3267
    %3460 = vst [vmem:[#allocation8] sm:$0xff] %v3396
    %3461 = vst [vmem:[#allocation8 + $0x8] sm:$0xff] %v3397
    %3462 = vst [vmem:[#allocation8 + $0x10] sm:$0xff] %v3398
    %3463 = vst [vmem:[#allocation8 + $0x18] sm:$0xff] %v3399
    %3464 = vst [vmem:[#allocation8 + $0x20] sm:$0xff] %v3400
    %3465 = vst [vmem:[#allocation8 + $0x28] sm:$0xff] %v3401
    %3466 = vst [vmem:[#allocation8 + $0x30] sm:$0xff] %v3402
    %3467 = vst [vmem:[#allocation8 + $0x38] sm:$0xff] %v3403
    %3468 = vst [vmem:[#allocation8 + $0x40] sm:$0xff] %v3404
    %3469 = vst [vmem:[#allocation8 + $0x48] sm:$0xff] %v3405
    %3470 = vst [vmem:[#allocation8 + $0x50] sm:$0xff] %v3406
    %3471 = vst [vmem:[#allocation8 + $0x58] sm:$0xff] %v3407
    %3472 = vst [vmem:[#allocation8 + $0x60] sm:$0xff] %v3408
    %3473 = vst [vmem:[#allocation8 + $0x68] sm:$0xff] %v3409
    %3474 = vst [vmem:[#allocation8 + $0x70] sm:$0xff] %v3410
    %3475 = vst [vmem:[#allocation8 + $0x78] sm:$0xff] %v3411
    %3476 = vst [vmem:[#allocation8 + $0x80] sm:$0xff] %v3412
    %3477 = vst [vmem:[#allocation8 + $0x88] sm:$0xff] %v3413
    %3478 = vst [vmem:[#allocation8 + $0x90] sm:$0xff] %v3414
    %3479 = vst [vmem:[#allocation8 + $0x98] sm:$0xff] %v3415
    %3480 = vst [vmem:[#allocation8 + $0xa0] sm:$0xff] %v3416
    %3481 = vst [vmem:[#allocation8 + $0xa8] sm:$0xff] %v3417
    %3482 = vst [vmem:[#allocation8 + $0xb0] sm:$0xff] %v3418
    %3483 = vst [vmem:[#allocation8 + $0xb8] sm:$0xff] %v3419
    %3484 = vst [vmem:[#allocation8 + $0xc0] sm:$0xff] %v3420
    %3485 = vst [vmem:[#allocation8 + $0xc8] sm:$0xff] %v3421
    %3486 = vst [vmem:[#allocation8 + $0xd0] sm:$0xff] %v3422
    %3487 = vst [vmem:[#allocation8 + $0xd8] sm:$0xff] %v3423
    %3488 = vst [vmem:[#allocation8 + $0xe0] sm:$0xff] %v3424
    %3489 = vst [vmem:[#allocation8 + $0xe8] sm:$0xff] %v3425
    %3490 = vst [vmem:[#allocation8 + $0xf0] sm:$0xff] %v3426
    %3491 = vst [vmem:[#allocation8 + $0xf8] sm:$0xff] %v3427
    %3492 = vst [vmem:[#allocation8 + $0x100] sm:$0xff] %v3428
    %3493 = vst [vmem:[#allocation8 + $0x108] sm:$0xff] %v3429
    %3494 = vst [vmem:[#allocation8 + $0x110] sm:$0xff] %v3430
    %3495 = vst [vmem:[#allocation8 + $0x118] sm:$0xff] %v3431
    %3496 = vst [vmem:[#allocation8 + $0x120] sm:$0xff] %v3432
    %3497 = vst [vmem:[#allocation8 + $0x128] sm:$0xff] %v3433
    %3498 = vst [vmem:[#allocation8 + $0x130] sm:$0xff] %v3434
    %3499 = vst [vmem:[#allocation8 + $0x138] sm:$0xff] %v3435
    %3500 = vst [vmem:[#allocation8 + $0x140] sm:$0xff] %v3436
    %3501 = vst [vmem:[#allocation8 + $0x148] sm:$0xff] %v3437
    %3502 = vst [vmem:[#allocation8 + $0x150] sm:$0xff] %v3438
    %3503 = vst [vmem:[#allocation8 + $0x158] sm:$0xff] %v3439
    %3504 = vst [vmem:[#allocation8 + $0x160] sm:$0xff] %v3440
    %3505 = vst [vmem:[#allocation8 + $0x168] sm:$0xff] %v3441
    %3506 = vst [vmem:[#allocation8 + $0x170] sm:$0xff] %v3442
    %3507 = vst [vmem:[#allocation8 + $0x178] sm:$0xff] %v3443
    %3508 = vst [vmem:[#allocation8 + $0x180] sm:$0xff] %v3444
    %3509 = vst [vmem:[#allocation8 + $0x188] sm:$0xff] %v3445
    %3510 = vst [vmem:[#allocation8 + $0x190] sm:$0xff] %v3446
    %3511 = vst [vmem:[#allocation8 + $0x198] sm:$0xff] %v3447
    %3512 = vst [vmem:[#allocation8 + $0x1a0] sm:$0xff] %v3448
    %3513 = vst [vmem:[#allocation8 + $0x1a8] sm:$0xff] %v3449
    %3514 = vst [vmem:[#allocation8 + $0x1b0] sm:$0xff] %v3450
    %3515 = vst [vmem:[#allocation8 + $0x1b8] sm:$0xff] %v3451
    %3516 = vst [vmem:[#allocation8 + $0x1c0] sm:$0xff] %v3452
    %3517 = vst [vmem:[#allocation8 + $0x1c8] sm:$0xff] %v3453
    %3518 = vst [vmem:[#allocation8 + $0x1d0] sm:$0xff] %v3454
    %3519 = vst [vmem:[#allocation8 + $0x1d8] sm:$0xff] %v3455
    %3520 = vst [vmem:[#allocation8 + $0x1e0] sm:$0xff] %v3456
    %3521 = vst [vmem:[#allocation8 + $0x1e8] sm:$0xff] %v3457
    %3522 = vst [vmem:[#allocation8 + $0x1f0] sm:$0xff] %v3458
    %3523 = vst [vmem:[#allocation8 + $0x1f8] sm:$0xff] %v3459
    %v3524 = vld [vmem:[#allocation9] sm:$0xff]
    %v3525 = vld [vmem:[#allocation9 + $0x8] sm:$0xff]
    %v3526 = vld [vmem:[#allocation9 + $0x10] sm:$0xff]
    %v3527 = vld [vmem:[#allocation9 + $0x18] sm:$0xff]
    %v3528 = vld [vmem:[#allocation9 + $0x20] sm:$0xff]
    %v3529 = vld [vmem:[#allocation9 + $0x28] sm:$0xff]
    %v3530 = vld [vmem:[#allocation9 + $0x30] sm:$0xff]
    %v3531 = vld [vmem:[#allocation9 + $0x38] sm:$0xff]
    %v3532 = vld [vmem:[#allocation9 + $0x40] sm:$0xff]
    %v3533 = vld [vmem:[#allocation9 + $0x48] sm:$0xff]
    %v3534 = vld [vmem:[#allocation9 + $0x50] sm:$0xff]
    %v3535 = vld [vmem:[#allocation9 + $0x58] sm:$0xff]
    %v3536 = vld [vmem:[#allocation9 + $0x60] sm:$0xff]
    %v3537 = vld [vmem:[#allocation9 + $0x68] sm:$0xff]
    %v3538 = vld [vmem:[#allocation9 + $0x70] sm:$0xff]
    %v3539 = vld [vmem:[#allocation9 + $0x78] sm:$0xff]
    %v3540 = vld [vmem:[#allocation9 + $0x80] sm:$0xff]
    %v3541 = vld [vmem:[#allocation9 + $0x88] sm:$0xff]
    %v3542 = vld [vmem:[#allocation9 + $0x90] sm:$0xff]
    %v3543 = vld [vmem:[#allocation9 + $0x98] sm:$0xff]
    %v3544 = vld [vmem:[#allocation9 + $0xa0] sm:$0xff]
    %v3545 = vld [vmem:[#allocation9 + $0xa8] sm:$0xff]
    %v3546 = vld [vmem:[#allocation9 + $0xb0] sm:$0xff]
    %v3547 = vld [vmem:[#allocation9 + $0xb8] sm:$0xff]
    %v3548 = vld [vmem:[#allocation9 + $0xc0] sm:$0xff]
    %v3549 = vld [vmem:[#allocation9 + $0xc8] sm:$0xff]
    %v3550 = vld [vmem:[#allocation9 + $0xd0] sm:$0xff]
    %v3551 = vld [vmem:[#allocation9 + $0xd8] sm:$0xff]
    %v3552 = vld [vmem:[#allocation9 + $0xe0] sm:$0xff]
    %v3553 = vld [vmem:[#allocation9 + $0xe8] sm:$0xff]
    %v3554 = vld [vmem:[#allocation9 + $0xf0] sm:$0xff]
    %v3555 = vld [vmem:[#allocation9 + $0xf8] sm:$0xff]
    %v3556 = vld [vmem:[#allocation9 + $0x100] sm:$0xff]
    %v3557 = vld [vmem:[#allocation9 + $0x108] sm:$0xff]
    %v3558 = vld [vmem:[#allocation9 + $0x110] sm:$0xff]
    %v3559 = vld [vmem:[#allocation9 + $0x118] sm:$0xff]
    %v3560 = vld [vmem:[#allocation9 + $0x120] sm:$0xff]
    %v3561 = vld [vmem:[#allocation9 + $0x128] sm:$0xff]
    %v3562 = vld [vmem:[#allocation9 + $0x130] sm:$0xff]
    %v3563 = vld [vmem:[#allocation9 + $0x138] sm:$0xff]
    %v3564 = vld [vmem:[#allocation9 + $0x140] sm:$0xff]
    %v3565 = vld [vmem:[#allocation9 + $0x148] sm:$0xff]
    %v3566 = vld [vmem:[#allocation9 + $0x150] sm:$0xff]
    %v3567 = vld [vmem:[#allocation9 + $0x158] sm:$0xff]
    %v3568 = vld [vmem:[#allocation9 + $0x160] sm:$0xff]
    %v3569 = vld [vmem:[#allocation9 + $0x168] sm:$0xff]
    %v3570 = vld [vmem:[#allocation9 + $0x170] sm:$0xff]
    %v3571 = vld [vmem:[#allocation9 + $0x178] sm:$0xff]
    %v3572 = vld [vmem:[#allocation9 + $0x180] sm:$0xff]
    %v3573 = vld [vmem:[#allocation9 + $0x188] sm:$0xff]
    %v3574 = vld [vmem:[#allocation9 + $0x190] sm:$0xff]
    %v3575 = vld [vmem:[#allocation9 + $0x198] sm:$0xff]
    %v3576 = vld [vmem:[#allocation9 + $0x1a0] sm:$0xff]
    %v3577 = vld [vmem:[#allocation9 + $0x1a8] sm:$0xff]
    %v3578 = vld [vmem:[#allocation9 + $0x1b0] sm:$0xff]
    %v3579 = vld [vmem:[#allocation9 + $0x1b8] sm:$0xff]
    %v3580 = vld [vmem:[#allocation9 + $0x1c0] sm:$0xff]
    %v3581 = vld [vmem:[#allocation9 + $0x1c8] sm:$0xff]
    %v3582 = vld [vmem:[#allocation9 + $0x1d0] sm:$0xff]
    %v3583 = vld [vmem:[#allocation9 + $0x1d8] sm:$0xff]
    %v3584 = vld [vmem:[#allocation9 + $0x1e0] sm:$0xff]
    %v3585 = vld [vmem:[#allocation9 + $0x1e8] sm:$0xff]
    %v3586 = vld [vmem:[#allocation9 + $0x1f0] sm:$0xff]
    %v3587 = vld [vmem:[#allocation9 + $0x1f8] sm:$0xff]
    %v3588 = vsel %vm3332, %v1212, %v3524
    %v3589 = vsel %vm3333, %v1213, %v3525
    %v3590 = vsel %vm3334, %v1214, %v3526
    %v3591 = vsel %vm3335, %v1215, %v3527
    %v3592 = vsel %vm3336, %v1216, %v3528
    %v3593 = vsel %vm3337, %v1217, %v3529
    %v3594 = vsel %vm3338, %v1218, %v3530
    %v3595 = vsel %vm3339, %v1219, %v3531
    %v3596 = vsel %vm3340, %v1220, %v3532
    %v3597 = vsel %vm3341, %v1221, %v3533
    %v3598 = vsel %vm3342, %v1222, %v3534
    %v3599 = vsel %vm3343, %v1223, %v3535
    %v3600 = vsel %vm3344, %v1224, %v3536
    %v3601 = vsel %vm3345, %v1225, %v3537
    %v3602 = vsel %vm3346, %v1226, %v3538
    %v3603 = vsel %vm3347, %v1227, %v3539
    %v3604 = vsel %vm3348, %v1228, %v3540
    %v3605 = vsel %vm3349, %v1229, %v3541
    %v3606 = vsel %vm3350, %v1230, %v3542
    %v3607 = vsel %vm3351, %v1231, %v3543
    %v3608 = vsel %vm3352, %v1232, %v3544
    %v3609 = vsel %vm3353, %v1233, %v3545
    %v3610 = vsel %vm3354, %v1234, %v3546
    %v3611 = vsel %vm3355, %v1235, %v3547
    %v3612 = vsel %vm3356, %v1236, %v3548
    %v3613 = vsel %vm3357, %v1237, %v3549
    %v3614 = vsel %vm3358, %v1238, %v3550
    %v3615 = vsel %vm3359, %v1239, %v3551
    %v3616 = vsel %vm3360, %v1240, %v3552
    %v3617 = vsel %vm3361, %v1241, %v3553
    %v3618 = vsel %vm3362, %v1242, %v3554
    %v3619 = vsel %vm3363, %v1243, %v3555
    %v3620 = vsel %vm3364, %v1244, %v3556
    %v3621 = vsel %vm3365, %v1245, %v3557
    %v3622 = vsel %vm3366, %v1246, %v3558
    %v3623 = vsel %vm3367, %v1247, %v3559
    %v3624 = vsel %vm3368, %v1248, %v3560
    %v3625 = vsel %vm3369, %v1249, %v3561
    %v3626 = vsel %vm3370, %v1250, %v3562
    %v3627 = vsel %vm3371, %v1251, %v3563
    %v3628 = vsel %vm3372, %v1252, %v3564
    %v3629 = vsel %vm3373, %v1253, %v3565
    %v3630 = vsel %vm3374, %v1254, %v3566
    %v3631 = vsel %vm3375, %v1255, %v3567
    %v3632 = vsel %vm3376, %v1256, %v3568
    %v3633 = vsel %vm3377, %v1257, %v3569
    %v3634 = vsel %vm3378, %v1258, %v3570
    %v3635 = vsel %vm3379, %v1259, %v3571
    %v3636 = vsel %vm3380, %v1260, %v3572
    %v3637 = vsel %vm3381, %v1261, %v3573
    %v3638 = vsel %vm3382, %v1262, %v3574
    %v3639 = vsel %vm3383, %v1263, %v3575
    %v3640 = vsel %vm3384, %v1264, %v3576
    %v3641 = vsel %vm3385, %v1265, %v3577
    %v3642 = vsel %vm3386, %v1266, %v3578
    %v3643 = vsel %vm3387, %v1267, %v3579
    %v3644 = vsel %vm3388, %v1268, %v3580
    %v3645 = vsel %vm3389, %v1269, %v3581
    %v3646 = vsel %vm3390, %v1270, %v3582
    %v3647 = vsel %vm3391, %v1271, %v3583
    %v3648 = vsel %vm3392, %v1272, %v3584
    %v3649 = vsel %vm3393, %v1273, %v3585
    %v3650 = vsel %vm3394, %v1274, %v3586
    %v3651 = vsel %vm3395, %v1275, %v3587
    %3652 = vst [vmem:[#allocation9] sm:$0xff] %v3588
    %3653 = vst [vmem:[#allocation9 + $0x8] sm:$0xff] %v3589
    %3654 = vst [vmem:[#allocation9 + $0x10] sm:$0xff] %v3590
    %3655 = vst [vmem:[#allocation9 + $0x18] sm:$0xff] %v3591
    %3656 = vst [vmem:[#allocation9 + $0x20] sm:$0xff] %v3592
    %3657 = vst [vmem:[#allocation9 + $0x28] sm:$0xff] %v3593
    %3658 = vst [vmem:[#allocation9 + $0x30] sm:$0xff] %v3594
    %3659 = vst [vmem:[#allocation9 + $0x38] sm:$0xff] %v3595
    %3660 = vst [vmem:[#allocation9 + $0x40] sm:$0xff] %v3596
    %3661 = vst [vmem:[#allocation9 + $0x48] sm:$0xff] %v3597
    %3662 = vst [vmem:[#allocation9 + $0x50] sm:$0xff] %v3598
    %3663 = vst [vmem:[#allocation9 + $0x58] sm:$0xff] %v3599
    %3664 = vst [vmem:[#allocation9 + $0x60] sm:$0xff] %v3600
    %3665 = vst [vmem:[#allocation9 + $0x68] sm:$0xff] %v3601
    %3666 = vst [vmem:[#allocation9 + $0x70] sm:$0xff] %v3602
    %3667 = vst [vmem:[#allocation9 + $0x78] sm:$0xff] %v3603
    %3668 = vst [vmem:[#allocation9 + $0x80] sm:$0xff] %v3604
    %3669 = vst [vmem:[#allocation9 + $0x88] sm:$0xff] %v3605
    %3670 = vst [vmem:[#allocation9 + $0x90] sm:$0xff] %v3606
    %3671 = vst [vmem:[#allocation9 + $0x98] sm:$0xff] %v3607
    %3672 = vst [vmem:[#allocation9 + $0xa0] sm:$0xff] %v3608
    %3673 = vst [vmem:[#allocation9 + $0xa8] sm:$0xff] %v3609
    %3674 = vst [vmem:[#allocation9 + $0xb0] sm:$0xff] %v3610
    %3675 = vst [vmem:[#allocation9 + $0xb8] sm:$0xff] %v3611
    %3676 = vst [vmem:[#allocation9 + $0xc0] sm:$0xff] %v3612
    %3677 = vst [vmem:[#allocation9 + $0xc8] sm:$0xff] %v3613
    %3678 = vst [vmem:[#allocation9 + $0xd0] sm:$0xff] %v3614
    %3679 = vst [vmem:[#allocation9 + $0xd8] sm:$0xff] %v3615
    %3680 = vst [vmem:[#allocation9 + $0xe0] sm:$0xff] %v3616
    %3681 = vst [vmem:[#allocation9 + $0xe8] sm:$0xff] %v3617
    %3682 = vst [vmem:[#allocation9 + $0xf0] sm:$0xff] %v3618
    %3683 = vst [vmem:[#allocation9 + $0xf8] sm:$0xff] %v3619
    %3684 = vst [vmem:[#allocation9 + $0x100] sm:$0xff] %v3620
    %3685 = vst [vmem:[#allocation9 + $0x108] sm:$0xff] %v3621
    %3686 = vst [vmem:[#allocation9 + $0x110] sm:$0xff] %v3622
    %3687 = vst [vmem:[#allocation9 + $0x118] sm:$0xff] %v3623
    %3688 = vst [vmem:[#allocation9 + $0x120] sm:$0xff] %v3624
    %3689 = vst [vmem:[#allocation9 + $0x128] sm:$0xff] %v3625
    %3690 = vst [vmem:[#allocation9 + $0x130] sm:$0xff] %v3626
    %3691 = vst [vmem:[#allocation9 + $0x138] sm:$0xff] %v3627
    %3692 = vst [vmem:[#allocation9 + $0x140] sm:$0xff] %v3628
    %3693 = vst [vmem:[#allocation9 + $0x148] sm:$0xff] %v3629
    %3694 = vst [vmem:[#allocation9 + $0x150] sm:$0xff] %v3630
    %3695 = vst [vmem:[#allocation9 + $0x158] sm:$0xff] %v3631
    %3696 = vst [vmem:[#allocation9 + $0x160] sm:$0xff] %v3632
    %3697 = vst [vmem:[#allocation9 + $0x168] sm:$0xff] %v3633
    %3698 = vst [vmem:[#allocation9 + $0x170] sm:$0xff] %v3634
    %3699 = vst [vmem:[#allocation9 + $0x178] sm:$0xff] %v3635
    %3700 = vst [vmem:[#allocation9 + $0x180] sm:$0xff] %v3636
    %3701 = vst [vmem:[#allocation9 + $0x188] sm:$0xff] %v3637
    %3702 = vst [vmem:[#allocation9 + $0x190] sm:$0xff] %v3638
    %3703 = vst [vmem:[#allocation9 + $0x198] sm:$0xff] %v3639
    %3704 = vst [vmem:[#allocation9 + $0x1a0] sm:$0xff] %v3640
    %3705 = vst [vmem:[#allocation9 + $0x1a8] sm:$0xff] %v3641
    %3706 = vst [vmem:[#allocation9 + $0x1b0] sm:$0xff] %v3642
    %3707 = vst [vmem:[#allocation9 + $0x1b8] sm:$0xff] %v3643
    %3708 = vst [vmem:[#allocation9 + $0x1c0] sm:$0xff] %v3644
    %3709 = vst [vmem:[#allocation9 + $0x1c8] sm:$0xff] %v3645
    %3710 = vst [vmem:[#allocation9 + $0x1d0] sm:$0xff] %v3646
    %3711 = vst [vmem:[#allocation9 + $0x1d8] sm:$0xff] %v3647
    %3712 = vst [vmem:[#allocation9 + $0x1e0] sm:$0xff] %v3648
    %3713 = vst [vmem:[#allocation9 + $0x1e8] sm:$0xff] %v3649
    %3714 = vst [vmem:[#allocation9 + $0x1f0] sm:$0xff] %v3650
    %3715 = vst [vmem:[#allocation9 + $0x1f8] sm:$0xff] %v3651
  $region29: #{tpu_custom_call.1} parent=0 // pred_fallthru
    _
  // Predicated region
  $region30: #{tpu_custom_call.1} parent=0 // pred_check
    %p3716 = pneg %p1276
  $region31: #{tpu_custom_call.1} parent=0 // pred_check_branch
    %3718 = sbr.rel (%p3716) target = $region33
  $region32: #{tpu_custom_call.1} parent=0 // pred_region
    %v3719 = vld [vmem:[#allocation2] sm:$0xff]
    %v3720 = vld [vmem:[#allocation2 + $0x8] sm:$0xff]
    %v3721 = vld [vmem:[#allocation2 + $0x10] sm:$0xff]
    %v3722 = vld [vmem:[#allocation2 + $0x18] sm:$0xff]
    %v3723 = vld [vmem:[#allocation2 + $0x20] sm:$0xff]
    %v3724 = vld [vmem:[#allocation2 + $0x28] sm:$0xff]
    %v3725 = vld [vmem:[#allocation2 + $0x30] sm:$0xff]
    %v3726 = vld [vmem:[#allocation2 + $0x38] sm:$0xff]
    %v3727 = vld [vmem:[#allocation2 + $0x40] sm:$0xff]
    %v3728 = vld [vmem:[#allocation2 + $0x48] sm:$0xff]
    %v3729 = vld [vmem:[#allocation2 + $0x50] sm:$0xff]
    %v3730 = vld [vmem:[#allocation2 + $0x58] sm:$0xff]
    %v3731 = vld [vmem:[#allocation2 + $0x60] sm:$0xff]
    %v3732 = vld [vmem:[#allocation2 + $0x68] sm:$0xff]
    %v3733 = vld [vmem:[#allocation2 + $0x70] sm:$0xff]
    %v3734 = vld [vmem:[#allocation2 + $0x78] sm:$0xff]
    %v3735 = vld [vmem:[#allocation2 + $0x80] sm:$0xff]
    %v3736 = vld [vmem:[#allocation2 + $0x88] sm:$0xff]
    %v3737 = vld [vmem:[#allocation2 + $0x90] sm:$0xff]
    %v3738 = vld [vmem:[#allocation2 + $0x98] sm:$0xff]
    %v3739 = vld [vmem:[#allocation2 + $0xa0] sm:$0xff]
    %v3740 = vld [vmem:[#allocation2 + $0xa8] sm:$0xff]
    %v3741 = vld [vmem:[#allocation2 + $0xb0] sm:$0xff]
    %v3742 = vld [vmem:[#allocation2 + $0xb8] sm:$0xff]
    %v3743 = vld [vmem:[#allocation2 + $0xc0] sm:$0xff]
    %v3744 = vld [vmem:[#allocation2 + $0xc8] sm:$0xff]
    %v3745 = vld [vmem:[#allocation2 + $0xd0] sm:$0xff]
    %v3746 = vld [vmem:[#allocation2 + $0xd8] sm:$0xff]
    %v3747 = vld [vmem:[#allocation2 + $0xe0] sm:$0xff]
    %v3748 = vld [vmem:[#allocation2 + $0xe8] sm:$0xff]
    %v3749 = vld [vmem:[#allocation2 + $0xf0] sm:$0xff]
    %v3750 = vld [vmem:[#allocation2 + $0xf8] sm:$0xff]
    %v3751 = vld [vmem:[#allocation2 + $0x100] sm:$0xff]
    %v3752 = vld [vmem:[#allocation2 + $0x108] sm:$0xff]
    %v3753 = vld [vmem:[#allocation2 + $0x110] sm:$0xff]
    %v3754 = vld [vmem:[#allocation2 + $0x118] sm:$0xff]
    %v3755 = vld [vmem:[#allocation2 + $0x120] sm:$0xff]
    %v3756 = vld [vmem:[#allocation2 + $0x128] sm:$0xff]
    %v3757 = vld [vmem:[#allocation2 + $0x130] sm:$0xff]
    %v3758 = vld [vmem:[#allocation2 + $0x138] sm:$0xff]
    %v3759 = vld [vmem:[#allocation2 + $0x140] sm:$0xff]
    %v3760 = vld [vmem:[#allocation2 + $0x148] sm:$0xff]
    %v3761 = vld [vmem:[#allocation2 + $0x150] sm:$0xff]
    %v3762 = vld [vmem:[#allocation2 + $0x158] sm:$0xff]
    %v3763 = vld [vmem:[#allocation2 + $0x160] sm:$0xff]
    %v3764 = vld [vmem:[#allocation2 + $0x168] sm:$0xff]
    %v3765 = vld [vmem:[#allocation2 + $0x170] sm:$0xff]
    %v3766 = vld [vmem:[#allocation2 + $0x178] sm:$0xff]
    %v3767 = vld [vmem:[#allocation2 + $0x180] sm:$0xff]
    %v3768 = vld [vmem:[#allocation2 + $0x188] sm:$0xff]
    %v3769 = vld [vmem:[#allocation2 + $0x190] sm:$0xff]
    %v3770 = vld [vmem:[#allocation2 + $0x198] sm:$0xff]
    %v3771 = vld [vmem:[#allocation2 + $0x1a0] sm:$0xff]
    %v3772 = vld [vmem:[#allocation2 + $0x1a8] sm:$0xff]
    %v3773 = vld [vmem:[#allocation2 + $0x1b0] sm:$0xff]
    %v3774 = vld [vmem:[#allocation2 + $0x1b8] sm:$0xff]
    %v3775 = vld [vmem:[#allocation2 + $0x1c0] sm:$0xff]
    %v3776 = vld [vmem:[#allocation2 + $0x1c8] sm:$0xff]
    %v3777 = vld [vmem:[#allocation2 + $0x1d0] sm:$0xff]
    %v3778 = vld [vmem:[#allocation2 + $0x1d8] sm:$0xff]
    %v3779 = vld [vmem:[#allocation2 + $0x1e0] sm:$0xff]
    %v3780 = vld [vmem:[#allocation2 + $0x1e8] sm:$0xff]
    %v3781 = vld [vmem:[#allocation2 + $0x1f0] sm:$0xff]
    %v3782 = vld [vmem:[#allocation2 + $0x1f8] sm:$0xff]
    %v3783 = vmax.f32 %v3719, %v3720
    %3784 = vmax.xlane.f32.xlu0 %v3783
    %v3785 = vpop.xlane.xlu0 %3784
    %v3786 = vmax.f32 %v3721, %v3722
    %3787 = vmax.xlane.f32.xlu0 %v3786
    %v3788 = vpop.xlane.xlu0 %3787
    %v3789 = vmax.f32 %v3723, %v3724
    %3790 = vmax.xlane.f32.xlu0 %v3789
    %v3791 = vpop.xlane.xlu0 %3790
    %v3792 = vmax.f32 %v3725, %v3726
    %3793 = vmax.xlane.f32.xlu0 %v3792
    %v3794 = vpop.xlane.xlu0 %3793
    %v3795 = vmax.f32 %v3727, %v3728
    %3796 = vmax.xlane.f32.xlu0 %v3795
    %v3797 = vpop.xlane.xlu0 %3796
    %v3798 = vmax.f32 %v3729, %v3730
    %3799 = vmax.xlane.f32.xlu0 %v3798
    %v3800 = vpop.xlane.xlu0 %3799
    %v3801 = vmax.f32 %v3731, %v3732
    %3802 = vmax.xlane.f32.xlu0 %v3801
    %v3803 = vpop.xlane.xlu0 %3802
    %v3804 = vmax.f32 %v3733, %v3734
    %3805 = vmax.xlane.f32.xlu0 %v3804
    %v3806 = vpop.xlane.xlu0 %3805
    %v3807 = vmax.f32 %v3735, %v3736
    %3808 = vmax.xlane.f32.xlu0 %v3807
    %v3809 = vpop.xlane.xlu0 %3808
    %v3810 = vmax.f32 %v3737, %v3738
    %3811 = vmax.xlane.f32.xlu0 %v3810
    %v3812 = vpop.xlane.xlu0 %3811
    %v3813 = vmax.f32 %v3739, %v3740
    %3814 = vmax.xlane.f32.xlu0 %v3813
    %v3815 = vpop.xlane.xlu0 %3814
    %v3816 = vmax.f32 %v3741, %v3742
    %3817 = vmax.xlane.f32.xlu0 %v3816
    %v3818 = vpop.xlane.xlu0 %3817
    %v3819 = vmax.f32 %v3743, %v3744
    %3820 = vmax.xlane.f32.xlu0 %v3819
    %v3821 = vpop.xlane.xlu0 %3820
    %v3822 = vmax.f32 %v3745, %v3746
    %3823 = vmax.xlane.f32.xlu0 %v3822
    %v3824 = vpop.xlane.xlu0 %3823
    %v3825 = vmax.f32 %v3747, %v3748
    %3826 = vmax.xlane.f32.xlu0 %v3825
    %v3827 = vpop.xlane.xlu0 %3826
    %v3828 = vmax.f32 %v3749, %v3750
    %3829 = vmax.xlane.f32.xlu0 %v3828
    %v3830 = vpop.xlane.xlu0 %3829
    %v3831 = vmax.f32 %v3751, %v3752
    %3832 = vmax.xlane.f32.xlu0 %v3831
    %v3833 = vpop.xlane.xlu0 %3832
    %v3834 = vmax.f32 %v3753, %v3754
    %3835 = vmax.xlane.f32.xlu0 %v3834
    %v3836 = vpop.xlane.xlu0 %3835
    %v3837 = vmax.f32 %v3755, %v3756
    %3838 = vmax.xlane.f32.xlu0 %v3837
    %v3839 = vpop.xlane.xlu0 %3838
    %v3840 = vmax.f32 %v3757, %v3758
    %3841 = vmax.xlane.f32.xlu0 %v3840
    %v3842 = vpop.xlane.xlu0 %3841
    %v3843 = vmax.f32 %v3759, %v3760
    %3844 = vmax.xlane.f32.xlu0 %v3843
    %v3845 = vpop.xlane.xlu0 %3844
    %v3846 = vmax.f32 %v3761, %v3762
    %3847 = vmax.xlane.f32.xlu0 %v3846
    %v3848 = vpop.xlane.xlu0 %3847
    %v3849 = vmax.f32 %v3763, %v3764
    %3850 = vmax.xlane.f32.xlu0 %v3849
    %v3851 = vpop.xlane.xlu0 %3850
    %v3852 = vmax.f32 %v3765, %v3766
    %3853 = vmax.xlane.f32.xlu0 %v3852
    %v3854 = vpop.xlane.xlu0 %3853
    %v3855 = vmax.f32 %v3767, %v3768
    %3856 = vmax.xlane.f32.xlu0 %v3855
    %v3857 = vpop.xlane.xlu0 %3856
    %v3858 = vmax.f32 %v3769, %v3770
    %3859 = vmax.xlane.f32.xlu0 %v3858
    %v3860 = vpop.xlane.xlu0 %3859
    %v3861 = vmax.f32 %v3771, %v3772
    %3862 = vmax.xlane.f32.xlu0 %v3861
    %v3863 = vpop.xlane.xlu0 %3862
    %v3864 = vmax.f32 %v3773, %v3774
    %3865 = vmax.xlane.f32.xlu0 %v3864
    %v3866 = vpop.xlane.xlu0 %3865
    %v3867 = vmax.f32 %v3775, %v3776
    %3868 = vmax.xlane.f32.xlu0 %v3867
    %v3869 = vpop.xlane.xlu0 %3868
    %v3870 = vmax.f32 %v3777, %v3778
    %3871 = vmax.xlane.f32.xlu0 %v3870
    %v3872 = vpop.xlane.xlu0 %3871
    %v3873 = vmax.f32 %v3779, %v3780
    %3874 = vmax.xlane.f32.xlu0 %v3873
    %v3875 = vpop.xlane.xlu0 %3874
    %v3876 = vmax.f32 %v3781, %v3782
    %3877 = vmax.xlane.f32.xlu0 %v3876
    %v3878 = vpop.xlane.xlu0 %3877
    %v3879 = vld [vmem:[#allocation3] sm:$0xff]
    %v3880 = vld [vmem:[#allocation3 + $0x8] sm:$0xff]
    %v3881 = vld [vmem:[#allocation3 + $0x10] sm:$0xff]
    %v3882 = vld [vmem:[#allocation3 + $0x18] sm:$0xff]
    %v3883 = vld [vmem:[#allocation3 + $0x20] sm:$0xff]
    %v3884 = vld [vmem:[#allocation3 + $0x28] sm:$0xff]
    %v3885 = vld [vmem:[#allocation3 + $0x30] sm:$0xff]
    %v3886 = vld [vmem:[#allocation3 + $0x38] sm:$0xff]
    %v3887 = vld [vmem:[#allocation3 + $0x40] sm:$0xff]
    %v3888 = vld [vmem:[#allocation3 + $0x48] sm:$0xff]
    %v3889 = vld [vmem:[#allocation3 + $0x50] sm:$0xff]
    %v3890 = vld [vmem:[#allocation3 + $0x58] sm:$0xff]
    %v3891 = vld [vmem:[#allocation3 + $0x60] sm:$0xff]
    %v3892 = vld [vmem:[#allocation3 + $0x68] sm:$0xff]
    %v3893 = vld [vmem:[#allocation3 + $0x70] sm:$0xff]
    %v3894 = vld [vmem:[#allocation3 + $0x78] sm:$0xff]
    %v3895 = vld [vmem:[#allocation3 + $0x80] sm:$0xff]
    %v3896 = vld [vmem:[#allocation3 + $0x88] sm:$0xff]
    %v3897 = vld [vmem:[#allocation3 + $0x90] sm:$0xff]
    %v3898 = vld [vmem:[#allocation3 + $0x98] sm:$0xff]
    %v3899 = vld [vmem:[#allocation3 + $0xa0] sm:$0xff]
    %v3900 = vld [vmem:[#allocation3 + $0xa8] sm:$0xff]
    %v3901 = vld [vmem:[#allocation3 + $0xb0] sm:$0xff]
    %v3902 = vld [vmem:[#allocation3 + $0xb8] sm:$0xff]
    %v3903 = vld [vmem:[#allocation3 + $0xc0] sm:$0xff]
    %v3904 = vld [vmem:[#allocation3 + $0xc8] sm:$0xff]
    %v3905 = vld [vmem:[#allocation3 + $0xd0] sm:$0xff]
    %v3906 = vld [vmem:[#allocation3 + $0xd8] sm:$0xff]
    %v3907 = vld [vmem:[#allocation3 + $0xe0] sm:$0xff]
    %v3908 = vld [vmem:[#allocation3 + $0xe8] sm:$0xff]
    %v3909 = vld [vmem:[#allocation3 + $0xf0] sm:$0xff]
    %v3910 = vld [vmem:[#allocation3 + $0xf8] sm:$0xff]
    %v3911 = vld [vmem:[#allocation3 + $0x100] sm:$0xff]
    %v3912 = vld [vmem:[#allocation3 + $0x108] sm:$0xff]
    %v3913 = vld [vmem:[#allocation3 + $0x110] sm:$0xff]
    %v3914 = vld [vmem:[#allocation3 + $0x118] sm:$0xff]
    %v3915 = vld [vmem:[#allocation3 + $0x120] sm:$0xff]
    %v3916 = vld [vmem:[#allocation3 + $0x128] sm:$0xff]
    %v3917 = vld [vmem:[#allocation3 + $0x130] sm:$0xff]
    %v3918 = vld [vmem:[#allocation3 + $0x138] sm:$0xff]
    %v3919 = vld [vmem:[#allocation3 + $0x140] sm:$0xff]
    %v3920 = vld [vmem:[#allocation3 + $0x148] sm:$0xff]
    %v3921 = vld [vmem:[#allocation3 + $0x150] sm:$0xff]
    %v3922 = vld [vmem:[#allocation3 + $0x158] sm:$0xff]
    %v3923 = vld [vmem:[#allocation3 + $0x160] sm:$0xff]
    %v3924 = vld [vmem:[#allocation3 + $0x168] sm:$0xff]
    %v3925 = vld [vmem:[#allocation3 + $0x170] sm:$0xff]
    %v3926 = vld [vmem:[#allocation3 + $0x178] sm:$0xff]
    %v3927 = vld [vmem:[#allocation3 + $0x180] sm:$0xff]
    %v3928 = vld [vmem:[#allocation3 + $0x188] sm:$0xff]
    %v3929 = vld [vmem:[#allocation3 + $0x190] sm:$0xff]
    %v3930 = vld [vmem:[#allocation3 + $0x198] sm:$0xff]
    %v3931 = vld [vmem:[#allocation3 + $0x1a0] sm:$0xff]
    %v3932 = vld [vmem:[#allocation3 + $0x1a8] sm:$0xff]
    %v3933 = vld [vmem:[#allocation3 + $0x1b0] sm:$0xff]
    %v3934 = vld [vmem:[#allocation3 + $0x1b8] sm:$0xff]
    %v3935 = vld [vmem:[#allocation3 + $0x1c0] sm:$0xff]
    %v3936 = vld [vmem:[#allocation3 + $0x1c8] sm:$0xff]
    %v3937 = vld [vmem:[#allocation3 + $0x1d0] sm:$0xff]
    %v3938 = vld [vmem:[#allocation3 + $0x1d8] sm:$0xff]
    %v3939 = vld [vmem:[#allocation3 + $0x1e0] sm:$0xff]
    %v3940 = vld [vmem:[#allocation3 + $0x1e8] sm:$0xff]
    %v3941 = vld [vmem:[#allocation3 + $0x1f0] sm:$0xff]
    %v3942 = vld [vmem:[#allocation3 + $0x1f8] sm:$0xff]
    %v3943 = vadd.f32 %v3879, %v3880
    %3944 = vadd.xlane.f32.xlu0 %v3943
    %v3945 = vpop.xlane.xlu0 %3944
    %v3946 = vadd.f32 %v3881, %v3882
    %3947 = vadd.xlane.f32.xlu0 %v3946
    %v3948 = vpop.xlane.xlu0 %3947
    %v3949 = vadd.f32 %v3883, %v3884
    %3950 = vadd.xlane.f32.xlu0 %v3949
    %v3951 = vpop.xlane.xlu0 %3950
    %v3952 = vadd.f32 %v3885, %v3886
    %3953 = vadd.xlane.f32.xlu0 %v3952
    %v3954 = vpop.xlane.xlu0 %3953
    %v3955 = vadd.f32 %v3887, %v3888
    %3956 = vadd.xlane.f32.xlu0 %v3955
    %v3957 = vpop.xlane.xlu0 %3956
    %v3958 = vadd.f32 %v3889, %v3890
    %3959 = vadd.xlane.f32.xlu0 %v3958
    %v3960 = vpop.xlane.xlu0 %3959
    %v3961 = vadd.f32 %v3891, %v3892
    %3962 = vadd.xlane.f32.xlu0 %v3961
    %v3963 = vpop.xlane.xlu0 %3962
    %v3964 = vadd.f32 %v3893, %v3894
    %3965 = vadd.xlane.f32.xlu0 %v3964
    %v3966 = vpop.xlane.xlu0 %3965
    %v3967 = vadd.f32 %v3895, %v3896
    %3968 = vadd.xlane.f32.xlu0 %v3967
    %v3969 = vpop.xlane.xlu0 %3968
    %v3970 = vadd.f32 %v3897, %v3898
    %3971 = vadd.xlane.f32.xlu0 %v3970
    %v3972 = vpop.xlane.xlu0 %3971
    %v3973 = vadd.f32 %v3899, %v3900
    %3974 = vadd.xlane.f32.xlu0 %v3973
    %v3975 = vpop.xlane.xlu0 %3974
    %v3976 = vadd.f32 %v3901, %v3902
    %3977 = vadd.xlane.f32.xlu0 %v3976
    %v3978 = vpop.xlane.xlu0 %3977
    %v3979 = vadd.f32 %v3903, %v3904
    %3980 = vadd.xlane.f32.xlu0 %v3979
    %v3981 = vpop.xlane.xlu0 %3980
    %v3982 = vadd.f32 %v3905, %v3906
    %3983 = vadd.xlane.f32.xlu0 %v3982
    %v3984 = vpop.xlane.xlu0 %3983
    %v3985 = vadd.f32 %v3907, %v3908
    %3986 = vadd.xlane.f32.xlu0 %v3985
    %v3987 = vpop.xlane.xlu0 %3986
    %v3988 = vadd.f32 %v3909, %v3910
    %3989 = vadd.xlane.f32.xlu0 %v3988
    %v3990 = vpop.xlane.xlu0 %3989
    %v3991 = vadd.f32 %v3911, %v3912
    %3992 = vadd.xlane.f32.xlu0 %v3991
    %v3993 = vpop.xlane.xlu0 %3992
    %v3994 = vadd.f32 %v3913, %v3914
    %3995 = vadd.xlane.f32.xlu0 %v3994
    %v3996 = vpop.xlane.xlu0 %3995
    %v3997 = vadd.f32 %v3915, %v3916
    %3998 = vadd.xlane.f32.xlu0 %v3997
    %v3999 = vpop.xlane.xlu0 %3998
    %v4000 = vadd.f32 %v3917, %v3918
    %4001 = vadd.xlane.f32.xlu0 %v4000
    %v4002 = vpop.xlane.xlu0 %4001
    %v4003 = vadd.f32 %v3919, %v3920
    %4004 = vadd.xlane.f32.xlu0 %v4003
    %v4005 = vpop.xlane.xlu0 %4004
    %v4006 = vadd.f32 %v3921, %v3922
    %4007 = vadd.xlane.f32.xlu0 %v4006
    %v4008 = vpop.xlane.xlu0 %4007
    %v4009 = vadd.f32 %v3923, %v3924
    %4010 = vadd.xlane.f32.xlu0 %v4009
    %v4011 = vpop.xlane.xlu0 %4010
    %v4012 = vadd.f32 %v3925, %v3926
    %4013 = vadd.xlane.f32.xlu0 %v4012
    %v4014 = vpop.xlane.xlu0 %4013
    %v4015 = vadd.f32 %v3927, %v3928
    %4016 = vadd.xlane.f32.xlu0 %v4015
    %v4017 = vpop.xlane.xlu0 %4016
    %v4018 = vadd.f32 %v3929, %v3930
    %4019 = vadd.xlane.f32.xlu0 %v4018
    %v4020 = vpop.xlane.xlu0 %4019
    %v4021 = vadd.f32 %v3931, %v3932
    %4022 = vadd.xlane.f32.xlu0 %v4021
    %v4023 = vpop.xlane.xlu0 %4022
    %v4024 = vadd.f32 %v3933, %v3934
    %4025 = vadd.xlane.f32.xlu0 %v4024
    %v4026 = vpop.xlane.xlu0 %4025
    %v4027 = vadd.f32 %v3935, %v3936
    %4028 = vadd.xlane.f32.xlu0 %v4027
    %v4029 = vpop.xlane.xlu0 %4028
    %v4030 = vadd.f32 %v3937, %v3938
    %4031 = vadd.xlane.f32.xlu0 %v4030
    %v4032 = vpop.xlane.xlu0 %4031
    %v4033 = vadd.f32 %v3939, %v3940
    %4034 = vadd.xlane.f32.xlu0 %v4033
    %v4035 = vpop.xlane.xlu0 %4034
    %v4036 = vadd.f32 %v3941, %v3942
    %4037 = vadd.xlane.f32.xlu0 %v4036
    %v4038 = vpop.xlane.xlu0 %4037
    %v4039 = vld [vmem:[#allocation6] sm:$0xff]
    %v4040 = vld [vmem:[#allocation6 + $0x8] sm:$0xff]
    %v4041 = vld [vmem:[#allocation6 + $0x10] sm:$0xff]
    %v4042 = vld [vmem:[#allocation6 + $0x18] sm:$0xff]
    %v4043 = vld [vmem:[#allocation6 + $0x20] sm:$0xff]
    %v4044 = vld [vmem:[#allocation6 + $0x28] sm:$0xff]
    %v4045 = vld [vmem:[#allocation6 + $0x30] sm:$0xff]
    %v4046 = vld [vmem:[#allocation6 + $0x38] sm:$0xff]
    %v4047 = vld [vmem:[#allocation6 + $0x40] sm:$0xff]
    %v4048 = vld [vmem:[#allocation6 + $0x48] sm:$0xff]
    %v4049 = vld [vmem:[#allocation6 + $0x50] sm:$0xff]
    %v4050 = vld [vmem:[#allocation6 + $0x58] sm:$0xff]
    %v4051 = vld [vmem:[#allocation6 + $0x60] sm:$0xff]
    %v4052 = vld [vmem:[#allocation6 + $0x68] sm:$0xff]
    %v4053 = vld [vmem:[#allocation6 + $0x70] sm:$0xff]
    %v4054 = vld [vmem:[#allocation6 + $0x78] sm:$0xff]
    %v4055 = vld [vmem:[#allocation6 + $0x80] sm:$0xff]
    %v4056 = vld [vmem:[#allocation6 + $0x88] sm:$0xff]
    %v4057 = vld [vmem:[#allocation6 + $0x90] sm:$0xff]
    %v4058 = vld [vmem:[#allocation6 + $0x98] sm:$0xff]
    %v4059 = vld [vmem:[#allocation6 + $0xa0] sm:$0xff]
    %v4060 = vld [vmem:[#allocation6 + $0xa8] sm:$0xff]
    %v4061 = vld [vmem:[#allocation6 + $0xb0] sm:$0xff]
    %v4062 = vld [vmem:[#allocation6 + $0xb8] sm:$0xff]
    %v4063 = vld [vmem:[#allocation6 + $0xc0] sm:$0xff]
    %v4064 = vld [vmem:[#allocation6 + $0xc8] sm:$0xff]
    %v4065 = vld [vmem:[#allocation6 + $0xd0] sm:$0xff]
    %v4066 = vld [vmem:[#allocation6 + $0xd8] sm:$0xff]
    %v4067 = vld [vmem:[#allocation6 + $0xe0] sm:$0xff]
    %v4068 = vld [vmem:[#allocation6 + $0xe8] sm:$0xff]
    %v4069 = vld [vmem:[#allocation6 + $0xf0] sm:$0xff]
    %v4070 = vld [vmem:[#allocation6 + $0xf8] sm:$0xff]
    %v4071 = vld [vmem:[#allocation6 + $0x100] sm:$0xff]
    %v4072 = vld [vmem:[#allocation6 + $0x108] sm:$0xff]
    %v4073 = vld [vmem:[#allocation6 + $0x110] sm:$0xff]
    %v4074 = vld [vmem:[#allocation6 + $0x118] sm:$0xff]
    %v4075 = vld [vmem:[#allocation6 + $0x120] sm:$0xff]
    %v4076 = vld [vmem:[#allocation6 + $0x128] sm:$0xff]
    %v4077 = vld [vmem:[#allocation6 + $0x130] sm:$0xff]
    %v4078 = vld [vmem:[#allocation6 + $0x138] sm:$0xff]
    %v4079 = vld [vmem:[#allocation6 + $0x140] sm:$0xff]
    %v4080 = vld [vmem:[#allocation6 + $0x148] sm:$0xff]
    %v4081 = vld [vmem:[#allocation6 + $0x150] sm:$0xff]
    %v4082 = vld [vmem:[#allocation6 + $0x158] sm:$0xff]
    %v4083 = vld [vmem:[#allocation6 + $0x160] sm:$0xff]
    %v4084 = vld [vmem:[#allocation6 + $0x168] sm:$0xff]
    %v4085 = vld [vmem:[#allocation6 + $0x170] sm:$0xff]
    %v4086 = vld [vmem:[#allocation6 + $0x178] sm:$0xff]
    %v4087 = vld [vmem:[#allocation6 + $0x180] sm:$0xff]
    %v4088 = vld [vmem:[#allocation6 + $0x188] sm:$0xff]
    %v4089 = vld [vmem:[#allocation6 + $0x190] sm:$0xff]
    %v4090 = vld [vmem:[#allocation6 + $0x198] sm:$0xff]
    %v4091 = vld [vmem:[#allocation6 + $0x1a0] sm:$0xff]
    %v4092 = vld [vmem:[#allocation6 + $0x1a8] sm:$0xff]
    %v4093 = vld [vmem:[#allocation6 + $0x1b0] sm:$0xff]
    %v4094 = vld [vmem:[#allocation6 + $0x1b8] sm:$0xff]
    %v4095 = vld [vmem:[#allocation6 + $0x1c0] sm:$0xff]
    %v4096 = vld [vmem:[#allocation6 + $0x1c8] sm:$0xff]
    %v4097 = vld [vmem:[#allocation6 + $0x1d0] sm:$0xff]
    %v4098 = vld [vmem:[#allocation6 + $0x1d8] sm:$0xff]
    %v4099 = vld [vmem:[#allocation6 + $0x1e0] sm:$0xff]
    %v4100 = vld [vmem:[#allocation6 + $0x1e8] sm:$0xff]
    %v4101 = vld [vmem:[#allocation6 + $0x1f0] sm:$0xff]
    %v4102 = vld [vmem:[#allocation6 + $0x1f8] sm:$0xff]
    %v4103 = vmax.f32 %v4039, %v4040
    %4104 = vmax.xlane.f32.xlu0 %v4103
    %v4105 = vpop.xlane.xlu0 %4104
    %v4106 = vmax.f32 %v4041, %v4042
    %4107 = vmax.xlane.f32.xlu0 %v4106
    %v4108 = vpop.xlane.xlu0 %4107
    %v4109 = vmax.f32 %v4043, %v4044
    %4110 = vmax.xlane.f32.xlu0 %v4109
    %v4111 = vpop.xlane.xlu0 %4110
    %v4112 = vmax.f32 %v4045, %v4046
    %4113 = vmax.xlane.f32.xlu0 %v4112
    %v4114 = vpop.xlane.xlu0 %4113
    %v4115 = vmax.f32 %v4047, %v4048
    %4116 = vmax.xlane.f32.xlu0 %v4115
    %v4117 = vpop.xlane.xlu0 %4116
    %v4118 = vmax.f32 %v4049, %v4050
    %4119 = vmax.xlane.f32.xlu0 %v4118
    %v4120 = vpop.xlane.xlu0 %4119
    %v4121 = vmax.f32 %v4051, %v4052
    %4122 = vmax.xlane.f32.xlu0 %v4121
    %v4123 = vpop.xlane.xlu0 %4122
    %v4124 = vmax.f32 %v4053, %v4054
    %4125 = vmax.xlane.f32.xlu0 %v4124
    %v4126 = vpop.xlane.xlu0 %4125
    %v4127 = vmax.f32 %v4055, %v4056
    %4128 = vmax.xlane.f32.xlu0 %v4127
    %v4129 = vpop.xlane.xlu0 %4128
    %v4130 = vmax.f32 %v4057, %v4058
    %4131 = vmax.xlane.f32.xlu0 %v4130
    %v4132 = vpop.xlane.xlu0 %4131
    %v4133 = vmax.f32 %v4059, %v4060
    %4134 = vmax.xlane.f32.xlu0 %v4133
    %v4135 = vpop.xlane.xlu0 %4134
    %v4136 = vmax.f32 %v4061, %v4062
    %4137 = vmax.xlane.f32.xlu0 %v4136
    %v4138 = vpop.xlane.xlu0 %4137
    %v4139 = vmax.f32 %v4063, %v4064
    %4140 = vmax.xlane.f32.xlu0 %v4139
    %v4141 = vpop.xlane.xlu0 %4140
    %v4142 = vmax.f32 %v4065, %v4066
    %4143 = vmax.xlane.f32.xlu0 %v4142
    %v4144 = vpop.xlane.xlu0 %4143
    %v4145 = vmax.f32 %v4067, %v4068
    %4146 = vmax.xlane.f32.xlu0 %v4145
    %v4147 = vpop.xlane.xlu0 %4146
    %v4148 = vmax.f32 %v4069, %v4070
    %4149 = vmax.xlane.f32.xlu0 %v4148
    %v4150 = vpop.xlane.xlu0 %4149
    %v4151 = vmax.f32 %v4071, %v4072
    %4152 = vmax.xlane.f32.xlu0 %v4151
    %v4153 = vpop.xlane.xlu0 %4152
    %v4154 = vmax.f32 %v4073, %v4074
    %4155 = vmax.xlane.f32.xlu0 %v4154
    %v4156 = vpop.xlane.xlu0 %4155
    %v4157 = vmax.f32 %v4075, %v4076
    %4158 = vmax.xlane.f32.xlu0 %v4157
    %v4159 = vpop.xlane.xlu0 %4158
    %v4160 = vmax.f32 %v4077, %v4078
    %4161 = vmax.xlane.f32.xlu0 %v4160
    %v4162 = vpop.xlane.xlu0 %4161
    %v4163 = vmax.f32 %v4079, %v4080
    %4164 = vmax.xlane.f32.xlu0 %v4163
    %v4165 = vpop.xlane.xlu0 %4164
    %v4166 = vmax.f32 %v4081, %v4082
    %4167 = vmax.xlane.f32.xlu0 %v4166
    %v4168 = vpop.xlane.xlu0 %4167
    %v4169 = vmax.f32 %v4083, %v4084
    %4170 = vmax.xlane.f32.xlu0 %v4169
    %v4171 = vpop.xlane.xlu0 %4170
    %v4172 = vmax.f32 %v4085, %v4086
    %4173 = vmax.xlane.f32.xlu0 %v4172
    %v4174 = vpop.xlane.xlu0 %4173
    %v4175 = vmax.f32 %v4087, %v4088
    %4176 = vmax.xlane.f32.xlu0 %v4175
    %v4177 = vpop.xlane.xlu0 %4176
    %v4178 = vmax.f32 %v4089, %v4090
    %4179 = vmax.xlane.f32.xlu0 %v4178
    %v4180 = vpop.xlane.xlu0 %4179
    %v4181 = vmax.f32 %v4091, %v4092
    %4182 = vmax.xlane.f32.xlu0 %v4181
    %v4183 = vpop.xlane.xlu0 %4182
    %v4184 = vmax.f32 %v4093, %v4094
    %4185 = vmax.xlane.f32.xlu0 %v4184
    %v4186 = vpop.xlane.xlu0 %4185
    %v4187 = vmax.f32 %v4095, %v4096
    %4188 = vmax.xlane.f32.xlu0 %v4187
    %v4189 = vpop.xlane.xlu0 %4188
    %v4190 = vmax.f32 %v4097, %v4098
    %4191 = vmax.xlane.f32.xlu0 %v4190
    %v4192 = vpop.xlane.xlu0 %4191
    %v4193 = vmax.f32 %v4099, %v4100
    %4194 = vmax.xlane.f32.xlu0 %v4193
    %v4195 = vpop.xlane.xlu0 %4194
    %v4196 = vmax.f32 %v4101, %v4102
    %4197 = vmax.xlane.f32.xlu0 %v4196
    %v4198 = vpop.xlane.xlu0 %4197
    %v4199 = vld [vmem:[#allocation7] sm:$0xff]
    %v4200 = vld [vmem:[#allocation7 + $0x8] sm:$0xff]
    %v4201 = vld [vmem:[#allocation7 + $0x10] sm:$0xff]
    %v4202 = vld [vmem:[#allocation7 + $0x18] sm:$0xff]
    %v4203 = vld [vmem:[#allocation7 + $0x20] sm:$0xff]
    %v4204 = vld [vmem:[#allocation7 + $0x28] sm:$0xff]
    %v4205 = vld [vmem:[#allocation7 + $0x30] sm:$0xff]
    %v4206 = vld [vmem:[#allocation7 + $0x38] sm:$0xff]
    %v4207 = vld [vmem:[#allocation7 + $0x40] sm:$0xff]
    %v4208 = vld [vmem:[#allocation7 + $0x48] sm:$0xff]
    %v4209 = vld [vmem:[#allocation7 + $0x50] sm:$0xff]
    %v4210 = vld [vmem:[#allocation7 + $0x58] sm:$0xff]
    %v4211 = vld [vmem:[#allocation7 + $0x60] sm:$0xff]
    %v4212 = vld [vmem:[#allocation7 + $0x68] sm:$0xff]
    %v4213 = vld [vmem:[#allocation7 + $0x70] sm:$0xff]
    %v4214 = vld [vmem:[#allocation7 + $0x78] sm:$0xff]
    %v4215 = vld [vmem:[#allocation7 + $0x80] sm:$0xff]
    %v4216 = vld [vmem:[#allocation7 + $0x88] sm:$0xff]
    %v4217 = vld [vmem:[#allocation7 + $0x90] sm:$0xff]
    %v4218 = vld [vmem:[#allocation7 + $0x98] sm:$0xff]
    %v4219 = vld [vmem:[#allocation7 + $0xa0] sm:$0xff]
    %v4220 = vld [vmem:[#allocation7 + $0xa8] sm:$0xff]
    %v4221 = vld [vmem:[#allocation7 + $0xb0] sm:$0xff]
    %v4222 = vld [vmem:[#allocation7 + $0xb8] sm:$0xff]
    %v4223 = vld [vmem:[#allocation7 + $0xc0] sm:$0xff]
    %v4224 = vld [vmem:[#allocation7 + $0xc8] sm:$0xff]
    %v4225 = vld [vmem:[#allocation7 + $0xd0] sm:$0xff]
    %v4226 = vld [vmem:[#allocation7 + $0xd8] sm:$0xff]
    %v4227 = vld [vmem:[#allocation7 + $0xe0] sm:$0xff]
    %v4228 = vld [vmem:[#allocation7 + $0xe8] sm:$0xff]
    %v4229 = vld [vmem:[#allocation7 + $0xf0] sm:$0xff]
    %v4230 = vld [vmem:[#allocation7 + $0xf8] sm:$0xff]
    %v4231 = vld [vmem:[#allocation7 + $0x100] sm:$0xff]
    %v4232 = vld [vmem:[#allocation7 + $0x108] sm:$0xff]
    %v4233 = vld [vmem:[#allocation7 + $0x110] sm:$0xff]
    %v4234 = vld [vmem:[#allocation7 + $0x118] sm:$0xff]
    %v4235 = vld [vmem:[#allocation7 + $0x120] sm:$0xff]
    %v4236 = vld [vmem:[#allocation7 + $0x128] sm:$0xff]
    %v4237 = vld [vmem:[#allocation7 + $0x130] sm:$0xff]
    %v4238 = vld [vmem:[#allocation7 + $0x138] sm:$0xff]
    %v4239 = vld [vmem:[#allocation7 + $0x140] sm:$0xff]
    %v4240 = vld [vmem:[#allocation7 + $0x148] sm:$0xff]
    %v4241 = vld [vmem:[#allocation7 + $0x150] sm:$0xff]
    %v4242 = vld [vmem:[#allocation7 + $0x158] sm:$0xff]
    %v4243 = vld [vmem:[#allocation7 + $0x160] sm:$0xff]
    %v4244 = vld [vmem:[#allocation7 + $0x168] sm:$0xff]
    %v4245 = vld [vmem:[#allocation7 + $0x170] sm:$0xff]
    %v4246 = vld [vmem:[#allocation7 + $0x178] sm:$0xff]
    %v4247 = vld [vmem:[#allocation7 + $0x180] sm:$0xff]
    %v4248 = vld [vmem:[#allocation7 + $0x188] sm:$0xff]
    %v4249 = vld [vmem:[#allocation7 + $0x190] sm:$0xff]
    %v4250 = vld [vmem:[#allocation7 + $0x198] sm:$0xff]
    %v4251 = vld [vmem:[#allocation7 + $0x1a0] sm:$0xff]
    %v4252 = vld [vmem:[#allocation7 + $0x1a8] sm:$0xff]
    %v4253 = vld [vmem:[#allocation7 + $0x1b0] sm:$0xff]
    %v4254 = vld [vmem:[#allocation7 + $0x1b8] sm:$0xff]
    %v4255 = vld [vmem:[#allocation7 + $0x1c0] sm:$0xff]
    %v4256 = vld [vmem:[#allocation7 + $0x1c8] sm:$0xff]
    %v4257 = vld [vmem:[#allocation7 + $0x1d0] sm:$0xff]
    %v4258 = vld [vmem:[#allocation7 + $0x1d8] sm:$0xff]
    %v4259 = vld [vmem:[#allocation7 + $0x1e0] sm:$0xff]
    %v4260 = vld [vmem:[#allocation7 + $0x1e8] sm:$0xff]
    %v4261 = vld [vmem:[#allocation7 + $0x1f0] sm:$0xff]
    %v4262 = vld [vmem:[#allocation7 + $0x1f8] sm:$0xff]
    %v4263 = vadd.f32 %v4199, %v4200
    %4264 = vadd.xlane.f32.xlu0 %v4263
    %v4265 = vpop.xlane.xlu0 %4264
    %v4266 = vadd.f32 %v4201, %v4202
    %4267 = vadd.xlane.f32.xlu0 %v4266
    %v4268 = vpop.xlane.xlu0 %4267
    %v4269 = vadd.f32 %v4203, %v4204
    %4270 = vadd.xlane.f32.xlu0 %v4269
    %v4271 = vpop.xlane.xlu0 %4270
    %v4272 = vadd.f32 %v4205, %v4206
    %4273 = vadd.xlane.f32.xlu0 %v4272
    %v4274 = vpop.xlane.xlu0 %4273
    %v4275 = vadd.f32 %v4207, %v4208
    %4276 = vadd.xlane.f32.xlu0 %v4275
    %v4277 = vpop.xlane.xlu0 %4276
    %v4278 = vadd.f32 %v4209, %v4210
    %4279 = vadd.xlane.f32.xlu0 %v4278
    %v4280 = vpop.xlane.xlu0 %4279
    %v4281 = vadd.f32 %v4211, %v4212
    %4282 = vadd.xlane.f32.xlu0 %v4281
    %v4283 = vpop.xlane.xlu0 %4282
    %v4284 = vadd.f32 %v4213, %v4214
    %4285 = vadd.xlane.f32.xlu0 %v4284
    %v4286 = vpop.xlane.xlu0 %4285
    %v4287 = vadd.f32 %v4215, %v4216
    %4288 = vadd.xlane.f32.xlu0 %v4287
    %v4289 = vpop.xlane.xlu0 %4288
    %v4290 = vadd.f32 %v4217, %v4218
    %4291 = vadd.xlane.f32.xlu0 %v4290
    %v4292 = vpop.xlane.xlu0 %4291
    %v4293 = vadd.f32 %v4219, %v4220
    %4294 = vadd.xlane.f32.xlu0 %v4293
    %v4295 = vpop.xlane.xlu0 %4294
    %v4296 = vadd.f32 %v4221, %v4222
    %4297 = vadd.xlane.f32.xlu0 %v4296
    %v4298 = vpop.xlane.xlu0 %4297
    %v4299 = vadd.f32 %v4223, %v4224
    %4300 = vadd.xlane.f32.xlu0 %v4299
    %v4301 = vpop.xlane.xlu0 %4300
    %v4302 = vadd.f32 %v4225, %v4226
    %4303 = vadd.xlane.f32.xlu0 %v4302
    %v4304 = vpop.xlane.xlu0 %4303
    %v4305 = vadd.f32 %v4227, %v4228
    %4306 = vadd.xlane.f32.xlu0 %v4305
    %v4307 = vpop.xlane.xlu0 %4306
    %v4308 = vadd.f32 %v4229, %v4230
    %4309 = vadd.xlane.f32.xlu0 %v4308
    %v4310 = vpop.xlane.xlu0 %4309
    %v4311 = vadd.f32 %v4231, %v4232
    %4312 = vadd.xlane.f32.xlu0 %v4311
    %v4313 = vpop.xlane.xlu0 %4312
    %v4314 = vadd.f32 %v4233, %v4234
    %4315 = vadd.xlane.f32.xlu0 %v4314
    %v4316 = vpop.xlane.xlu0 %4315
    %v4317 = vadd.f32 %v4235, %v4236
    %4318 = vadd.xlane.f32.xlu0 %v4317
    %v4319 = vpop.xlane.xlu0 %4318
    %v4320 = vadd.f32 %v4237, %v4238
    %4321 = vadd.xlane.f32.xlu0 %v4320
    %v4322 = vpop.xlane.xlu0 %4321
    %v4323 = vadd.f32 %v4239, %v4240
    %4324 = vadd.xlane.f32.xlu0 %v4323
    %v4325 = vpop.xlane.xlu0 %4324
    %v4326 = vadd.f32 %v4241, %v4242
    %4327 = vadd.xlane.f32.xlu0 %v4326
    %v4328 = vpop.xlane.xlu0 %4327
    %v4329 = vadd.f32 %v4243, %v4244
    %4330 = vadd.xlane.f32.xlu0 %v4329
    %v4331 = vpop.xlane.xlu0 %4330
    %v4332 = vadd.f32 %v4245, %v4246
    %4333 = vadd.xlane.f32.xlu0 %v4332
    %v4334 = vpop.xlane.xlu0 %4333
    %v4335 = vadd.f32 %v4247, %v4248
    %4336 = vadd.xlane.f32.xlu0 %v4335
    %v4337 = vpop.xlane.xlu0 %4336
    %v4338 = vadd.f32 %v4249, %v4250
    %4339 = vadd.xlane.f32.xlu0 %v4338
    %v4340 = vpop.xlane.xlu0 %4339
    %v4341 = vadd.f32 %v4251, %v4252
    %4342 = vadd.xlane.f32.xlu0 %v4341
    %v4343 = vpop.xlane.xlu0 %4342
    %v4344 = vadd.f32 %v4253, %v4254
    %4345 = vadd.xlane.f32.xlu0 %v4344
    %v4346 = vpop.xlane.xlu0 %4345
    %v4347 = vadd.f32 %v4255, %v4256
    %4348 = vadd.xlane.f32.xlu0 %v4347
    %v4349 = vpop.xlane.xlu0 %4348
    %v4350 = vadd.f32 %v4257, %v4258
    %4351 = vadd.xlane.f32.xlu0 %v4350
    %v4352 = vpop.xlane.xlu0 %4351
    %v4353 = vadd.f32 %v4259, %v4260
    %4354 = vadd.xlane.f32.xlu0 %v4353
    %v4355 = vpop.xlane.xlu0 %4354
    %v4356 = vadd.f32 %v4261, %v4262
    %4357 = vadd.xlane.f32.xlu0 %v4356
    %v4358 = vpop.xlane.xlu0 %4357
    %v4359 = vld [vmem:[#allocation4] sm:$0xff]
    %v4360 = vld [vmem:[#allocation4 + $0x8] sm:$0xff]
    %v4361 = vld [vmem:[#allocation4 + $0x10] sm:$0xff]
    %v4362 = vld [vmem:[#allocation4 + $0x18] sm:$0xff]
    %v4363 = vld [vmem:[#allocation4 + $0x20] sm:$0xff]
    %v4364 = vld [vmem:[#allocation4 + $0x28] sm:$0xff]
    %v4365 = vld [vmem:[#allocation4 + $0x30] sm:$0xff]
    %v4366 = vld [vmem:[#allocation4 + $0x38] sm:$0xff]
    %v4367 = vld [vmem:[#allocation4 + $0x40] sm:$0xff]
    %v4368 = vld [vmem:[#allocation4 + $0x48] sm:$0xff]
    %v4369 = vld [vmem:[#allocation4 + $0x50] sm:$0xff]
    %v4370 = vld [vmem:[#allocation4 + $0x58] sm:$0xff]
    %v4371 = vld [vmem:[#allocation4 + $0x60] sm:$0xff]
    %v4372 = vld [vmem:[#allocation4 + $0x68] sm:$0xff]
    %v4373 = vld [vmem:[#allocation4 + $0x70] sm:$0xff]
    %v4374 = vld [vmem:[#allocation4 + $0x78] sm:$0xff]
    %v4375 = vld [vmem:[#allocation4 + $0x80] sm:$0xff]
    %v4376 = vld [vmem:[#allocation4 + $0x88] sm:$0xff]
    %v4377 = vld [vmem:[#allocation4 + $0x90] sm:$0xff]
    %v4378 = vld [vmem:[#allocation4 + $0x98] sm:$0xff]
    %v4379 = vld [vmem:[#allocation4 + $0xa0] sm:$0xff]
    %v4380 = vld [vmem:[#allocation4 + $0xa8] sm:$0xff]
    %v4381 = vld [vmem:[#allocation4 + $0xb0] sm:$0xff]
    %v4382 = vld [vmem:[#allocation4 + $0xb8] sm:$0xff]
    %v4383 = vld [vmem:[#allocation4 + $0xc0] sm:$0xff]
    %v4384 = vld [vmem:[#allocation4 + $0xc8] sm:$0xff]
    %v4385 = vld [vmem:[#allocation4 + $0xd0] sm:$0xff]
    %v4386 = vld [vmem:[#allocation4 + $0xd8] sm:$0xff]
    %v4387 = vld [vmem:[#allocation4 + $0xe0] sm:$0xff]
    %v4388 = vld [vmem:[#allocation4 + $0xe8] sm:$0xff]
    %v4389 = vld [vmem:[#allocation4 + $0xf0] sm:$0xff]
    %v4390 = vld [vmem:[#allocation4 + $0xf8] sm:$0xff]
    %v4391 = vld [vmem:[#allocation4 + $0x100] sm:$0xff]
    %v4392 = vld [vmem:[#allocation4 + $0x108] sm:$0xff]
    %v4393 = vld [vmem:[#allocation4 + $0x110] sm:$0xff]
    %v4394 = vld [vmem:[#allocation4 + $0x118] sm:$0xff]
    %v4395 = vld [vmem:[#allocation4 + $0x120] sm:$0xff]
    %v4396 = vld [vmem:[#allocation4 + $0x128] sm:$0xff]
    %v4397 = vld [vmem:[#allocation4 + $0x130] sm:$0xff]
    %v4398 = vld [vmem:[#allocation4 + $0x138] sm:$0xff]
    %v4399 = vld [vmem:[#allocation4 + $0x140] sm:$0xff]
    %v4400 = vld [vmem:[#allocation4 + $0x148] sm:$0xff]
    %v4401 = vld [vmem:[#allocation4 + $0x150] sm:$0xff]
    %v4402 = vld [vmem:[#allocation4 + $0x158] sm:$0xff]
    %v4403 = vld [vmem:[#allocation4 + $0x160] sm:$0xff]
    %v4404 = vld [vmem:[#allocation4 + $0x168] sm:$0xff]
    %v4405 = vld [vmem:[#allocation4 + $0x170] sm:$0xff]
    %v4406 = vld [vmem:[#allocation4 + $0x178] sm:$0xff]
    %v4407 = vld [vmem:[#allocation4 + $0x180] sm:$0xff]
    %v4408 = vld [vmem:[#allocation4 + $0x188] sm:$0xff]
    %v4409 = vld [vmem:[#allocation4 + $0x190] sm:$0xff]
    %v4410 = vld [vmem:[#allocation4 + $0x198] sm:$0xff]
    %v4411 = vld [vmem:[#allocation4 + $0x1a0] sm:$0xff]
    %v4412 = vld [vmem:[#allocation4 + $0x1a8] sm:$0xff]
    %v4413 = vld [vmem:[#allocation4 + $0x1b0] sm:$0xff]
    %v4414 = vld [vmem:[#allocation4 + $0x1b8] sm:$0xff]
    %v4415 = vld [vmem:[#allocation4 + $0x1c0] sm:$0xff]
    %v4416 = vld [vmem:[#allocation4 + $0x1c8] sm:$0xff]
    %v4417 = vld [vmem:[#allocation4 + $0x1d0] sm:$0xff]
    %v4418 = vld [vmem:[#allocation4 + $0x1d8] sm:$0xff]
    %v4419 = vld [vmem:[#allocation4 + $0x1e0] sm:$0xff]
    %v4420 = vld [vmem:[#allocation4 + $0x1e8] sm:$0xff]
    %v4421 = vld [vmem:[#allocation4 + $0x1f0] sm:$0xff]
    %v4422 = vld [vmem:[#allocation4 + $0x1f8] sm:$0xff]
    %vm4423 = vcmp.lt.s32.totalorder %v4359, %v4360
    %v4424 = vsel %vm4423, %v4359, %v4360
    %v4425 = vand.u32 %v4424, 65535
    %v4426 = vshra.s32 %v4424, 16
    %v4427 = vcvt.s32.f32 %v4425
    %v4428 = vcvt.s32.f32 %v4426
    %4429 = vmin.xlane.f32.xlu0 %v4428
    %v4430 = vpop.xlane.xlu0 %4429
    %vm4431 = vcmp.eq.f32.partialorder %v4428, %v4430
    %v4432 = vsel %vm4431, %v4427, inf
    %4433 = vmin.xlane.f32.xlu0 %v4432
    %v4434 = vpop.xlane.xlu0 %4433
    %v4435 = vcvt.f32.s32 %v4434
    %v4436 = vcvt.f32.s32 %v4430
    %v4437 = vshll.u32 %v4436, 16
    %v4438 = vadd.s32 %v4437, %v4435
    %vm4439 = vcmp.lt.s32.totalorder %v4361, %v4362
    %v4440 = vsel %vm4439, %v4361, %v4362
    %v4441 = vand.u32 %v4440, 65535
    %v4442 = vshra.s32 %v4440, 16
    %v4443 = vcvt.s32.f32 %v4441
    %v4444 = vcvt.s32.f32 %v4442
    %4445 = vmin.xlane.f32.xlu0 %v4444
    %v4446 = vpop.xlane.xlu0 %4445
    %vm4447 = vcmp.eq.f32.partialorder %v4444, %v4446
    %v4448 = vsel %vm4447, %v4443, inf
    %4449 = vmin.xlane.f32.xlu0 %v4448
    %v4450 = vpop.xlane.xlu0 %4449
    %v4451 = vcvt.f32.s32 %v4450
    %v4452 = vcvt.f32.s32 %v4446
    %v4453 = vshll.u32 %v4452, 16
    %v4454 = vadd.s32 %v4453, %v4451
    %vm4455 = vcmp.lt.s32.totalorder %v4363, %v4364
    %v4456 = vsel %vm4455, %v4363, %v4364
    %v4457 = vand.u32 %v4456, 65535
    %v4458 = vshra.s32 %v4456, 16
    %v4459 = vcvt.s32.f32 %v4457
    %v4460 = vcvt.s32.f32 %v4458
    %4461 = vmin.xlane.f32.xlu0 %v4460
    %v4462 = vpop.xlane.xlu0 %4461
    %vm4463 = vcmp.eq.f32.partialorder %v4460, %v4462
    %v4464 = vsel %vm4463, %v4459, inf
    %4465 = vmin.xlane.f32.xlu0 %v4464
    %v4466 = vpop.xlane.xlu0 %4465
    %v4467 = vcvt.f32.s32 %v4466
    %v4468 = vcvt.f32.s32 %v4462
    %v4469 = vshll.u32 %v4468, 16
    %v4470 = vadd.s32 %v4469, %v4467
    %vm4471 = vcmp.lt.s32.totalorder %v4365, %v4366
    %v4472 = vsel %vm4471, %v4365, %v4366
    %v4473 = vand.u32 %v4472, 65535
    %v4474 = vshra.s32 %v4472, 16
    %v4475 = vcvt.s32.f32 %v4473
    %v4476 = vcvt.s32.f32 %v4474
    %4477 = vmin.xlane.f32.xlu0 %v4476
    %v4478 = vpop.xlane.xlu0 %4477
    %vm4479 = vcmp.eq.f32.partialorder %v4476, %v4478
    %v4480 = vsel %vm4479, %v4475, inf
    %4481 = vmin.xlane.f32.xlu0 %v4480
    %v4482 = vpop.xlane.xlu0 %4481
    %v4483 = vcvt.f32.s32 %v4482
    %v4484 = vcvt.f32.s32 %v4478
    %v4485 = vshll.u32 %v4484, 16
    %v4486 = vadd.s32 %v4485, %v4483
    %vm4487 = vcmp.lt.s32.totalorder %v4367, %v4368
    %v4488 = vsel %vm4487, %v4367, %v4368
    %v4489 = vand.u32 %v4488, 65535
    %v4490 = vshra.s32 %v4488, 16
    %v4491 = vcvt.s32.f32 %v4489
    %v4492 = vcvt.s32.f32 %v4490
    %4493 = vmin.xlane.f32.xlu0 %v4492
    %v4494 = vpop.xlane.xlu0 %4493
    %vm4495 = vcmp.eq.f32.partialorder %v4492, %v4494
    %v4496 = vsel %vm4495, %v4491, inf
    %4497 = vmin.xlane.f32.xlu0 %v4496
    %v4498 = vpop.xlane.xlu0 %4497
    %v4499 = vcvt.f32.s32 %v4498
    %v4500 = vcvt.f32.s32 %v4494
    %v4501 = vshll.u32 %v4500, 16
    %v4502 = vadd.s32 %v4501, %v4499
    %vm4503 = vcmp.lt.s32.totalorder %v4369, %v4370
    %v4504 = vsel %vm4503, %v4369, %v4370
    %v4505 = vand.u32 %v4504, 65535
    %v4506 = vshra.s32 %v4504, 16
    %v4507 = vcvt.s32.f32 %v4505
    %v4508 = vcvt.s32.f32 %v4506
    %4509 = vmin.xlane.f32.xlu0 %v4508
    %v4510 = vpop.xlane.xlu0 %4509
    %vm4511 = vcmp.eq.f32.partialorder %v4508, %v4510
    %v4512 = vsel %vm4511, %v4507, inf
    %4513 = vmin.xlane.f32.xlu0 %v4512
    %v4514 = vpop.xlane.xlu0 %4513
    %v4515 = vcvt.f32.s32 %v4514
    %v4516 = vcvt.f32.s32 %v4510
    %v4517 = vshll.u32 %v4516, 16
    %v4518 = vadd.s32 %v4517, %v4515
    %vm4519 = vcmp.lt.s32.totalorder %v4371, %v4372
    %v4520 = vsel %vm4519, %v4371, %v4372
    %v4521 = vand.u32 %v4520, 65535
    %v4522 = vshra.s32 %v4520, 16
    %v4523 = vcvt.s32.f32 %v4521
    %v4524 = vcvt.s32.f32 %v4522
    %4525 = vmin.xlane.f32.xlu0 %v4524
    %v4526 = vpop.xlane.xlu0 %4525
    %vm4527 = vcmp.eq.f32.partialorder %v4524, %v4526
    %v4528 = vsel %vm4527, %v4523, inf
    %4529 = vmin.xlane.f32.xlu0 %v4528
    %v4530 = vpop.xlane.xlu0 %4529
    %v4531 = vcvt.f32.s32 %v4530
    %v4532 = vcvt.f32.s32 %v4526
    %v4533 = vshll.u32 %v4532, 16
    %v4534 = vadd.s32 %v4533, %v4531
    %vm4535 = vcmp.lt.s32.totalorder %v4373, %v4374
    %v4536 = vsel %vm4535, %v4373, %v4374
    %v4537 = vand.u32 %v4536, 65535
    %v4538 = vshra.s32 %v4536, 16
    %v4539 = vcvt.s32.f32 %v4537
    %v4540 = vcvt.s32.f32 %v4538
    %4541 = vmin.xlane.f32.xlu0 %v4540
    %v4542 = vpop.xlane.xlu0 %4541
    %vm4543 = vcmp.eq.f32.partialorder %v4540, %v4542
    %v4544 = vsel %vm4543, %v4539, inf
    %4545 = vmin.xlane.f32.xlu0 %v4544
    %v4546 = vpop.xlane.xlu0 %4545
    %v4547 = vcvt.f32.s32 %v4546
    %v4548 = vcvt.f32.s32 %v4542
    %v4549 = vshll.u32 %v4548, 16
    %v4550 = vadd.s32 %v4549, %v4547
    %vm4551 = vcmp.lt.s32.totalorder %v4375, %v4376
    %v4552 = vsel %vm4551, %v4375, %v4376
    %v4553 = vand.u32 %v4552, 65535
    %v4554 = vshra.s32 %v4552, 16
    %v4555 = vcvt.s32.f32 %v4553
    %v4556 = vcvt.s32.f32 %v4554
    %4557 = vmin.xlane.f32.xlu0 %v4556
    %v4558 = vpop.xlane.xlu0 %4557
    %vm4559 = vcmp.eq.f32.partialorder %v4556, %v4558
    %v4560 = vsel %vm4559, %v4555, inf
    %4561 = vmin.xlane.f32.xlu0 %v4560
    %v4562 = vpop.xlane.xlu0 %4561
    %v4563 = vcvt.f32.s32 %v4562
    %v4564 = vcvt.f32.s32 %v4558
    %v4565 = vshll.u32 %v4564, 16
    %v4566 = vadd.s32 %v4565, %v4563
    %vm4567 = vcmp.lt.s32.totalorder %v4377, %v4378
    %v4568 = vsel %vm4567, %v4377, %v4378
    %v4569 = vand.u32 %v4568, 65535
    %v4570 = vshra.s32 %v4568, 16
    %v4571 = vcvt.s32.f32 %v4569
    %v4572 = vcvt.s32.f32 %v4570
    %4573 = vmin.xlane.f32.xlu0 %v4572
    %v4574 = vpop.xlane.xlu0 %4573
    %vm4575 = vcmp.eq.f32.partialorder %v4572, %v4574
    %v4576 = vsel %vm4575, %v4571, inf
    %4577 = vmin.xlane.f32.xlu0 %v4576
    %v4578 = vpop.xlane.xlu0 %4577
    %v4579 = vcvt.f32.s32 %v4578
    %v4580 = vcvt.f32.s32 %v4574
    %v4581 = vshll.u32 %v4580, 16
    %v4582 = vadd.s32 %v4581, %v4579
    %vm4583 = vcmp.lt.s32.totalorder %v4379, %v4380
    %v4584 = vsel %vm4583, %v4379, %v4380
    %v4585 = vand.u32 %v4584, 65535
    %v4586 = vshra.s32 %v4584, 16
    %v4587 = vcvt.s32.f32 %v4585
    %v4588 = vcvt.s32.f32 %v4586
    %4589 = vmin.xlane.f32.xlu0 %v4588
    %v4590 = vpop.xlane.xlu0 %4589
    %vm4591 = vcmp.eq.f32.partialorder %v4588, %v4590
    %v4592 = vsel %vm4591, %v4587, inf
    %4593 = vmin.xlane.f32.xlu0 %v4592
    %v4594 = vpop.xlane.xlu0 %4593
    %v4595 = vcvt.f32.s32 %v4594
    %v4596 = vcvt.f32.s32 %v4590
    %v4597 = vshll.u32 %v4596, 16
    %v4598 = vadd.s32 %v4597, %v4595
    %vm4599 = vcmp.lt.s32.totalorder %v4381, %v4382
    %v4600 = vsel %vm4599, %v4381, %v4382
    %v4601 = vand.u32 %v4600, 65535
    %v4602 = vshra.s32 %v4600, 16
    %v4603 = vcvt.s32.f32 %v4601
    %v4604 = vcvt.s32.f32 %v4602
    %4605 = vmin.xlane.f32.xlu0 %v4604
    %v4606 = vpop.xlane.xlu0 %4605
    %vm4607 = vcmp.eq.f32.partialorder %v4604, %v4606
    %v4608 = vsel %vm4607, %v4603, inf
    %4609 = vmin.xlane.f32.xlu0 %v4608
    %v4610 = vpop.xlane.xlu0 %4609
    %v4611 = vcvt.f32.s32 %v4610
    %v4612 = vcvt.f32.s32 %v4606
    %v4613 = vshll.u32 %v4612, 16
    %v4614 = vadd.s32 %v4613, %v4611
    %vm4615 = vcmp.lt.s32.totalorder %v4383, %v4384
    %v4616 = vsel %vm4615, %v4383, %v4384
    %v4617 = vand.u32 %v4616, 65535
    %v4618 = vshra.s32 %v4616, 16
    %v4619 = vcvt.s32.f32 %v4617
    %v4620 = vcvt.s32.f32 %v4618
    %4621 = vmin.xlane.f32.xlu0 %v4620
    %v4622 = vpop.xlane.xlu0 %4621
    %vm4623 = vcmp.eq.f32.partialorder %v4620, %v4622
    %v4624 = vsel %vm4623, %v4619, inf
    %4625 = vmin.xlane.f32.xlu0 %v4624
    %v4626 = vpop.xlane.xlu0 %4625
    %v4627 = vcvt.f32.s32 %v4626
    %v4628 = vcvt.f32.s32 %v4622
    %v4629 = vshll.u32 %v4628, 16
    %v4630 = vadd.s32 %v4629, %v4627
    %vm4631 = vcmp.lt.s32.totalorder %v4385, %v4386
    %v4632 = vsel %vm4631, %v4385, %v4386
    %v4633 = vand.u32 %v4632, 65535
    %v4634 = vshra.s32 %v4632, 16
    %v4635 = vcvt.s32.f32 %v4633
    %v4636 = vcvt.s32.f32 %v4634
    %4637 = vmin.xlane.f32.xlu0 %v4636
    %v4638 = vpop.xlane.xlu0 %4637
    %vm4639 = vcmp.eq.f32.partialorder %v4636, %v4638
    %v4640 = vsel %vm4639, %v4635, inf
    %4641 = vmin.xlane.f32.xlu0 %v4640
    %v4642 = vpop.xlane.xlu0 %4641
    %v4643 = vcvt.f32.s32 %v4642
    %v4644 = vcvt.f32.s32 %v4638
    %v4645 = vshll.u32 %v4644, 16
    %v4646 = vadd.s32 %v4645, %v4643
    %vm4647 = vcmp.lt.s32.totalorder %v4387, %v4388
    %v4648 = vsel %vm4647, %v4387, %v4388
    %v4649 = vand.u32 %v4648, 65535
    %v4650 = vshra.s32 %v4648, 16
    %v4651 = vcvt.s32.f32 %v4649
    %v4652 = vcvt.s32.f32 %v4650
    %4653 = vmin.xlane.f32.xlu0 %v4652
    %v4654 = vpop.xlane.xlu0 %4653
    %vm4655 = vcmp.eq.f32.partialorder %v4652, %v4654
    %v4656 = vsel %vm4655, %v4651, inf
    %4657 = vmin.xlane.f32.xlu0 %v4656
    %v4658 = vpop.xlane.xlu0 %4657
    %v4659 = vcvt.f32.s32 %v4658
    %v4660 = vcvt.f32.s32 %v4654
    %v4661 = vshll.u32 %v4660, 16
    %v4662 = vadd.s32 %v4661, %v4659
    %vm4663 = vcmp.lt.s32.totalorder %v4389, %v4390
    %v4664 = vsel %vm4663, %v4389, %v4390
    %v4665 = vand.u32 %v4664, 65535
    %v4666 = vshra.s32 %v4664, 16
    %v4667 = vcvt.s32.f32 %v4665
    %v4668 = vcvt.s32.f32 %v4666
    %4669 = vmin.xlane.f32.xlu0 %v4668
    %v4670 = vpop.xlane.xlu0 %4669
    %vm4671 = vcmp.eq.f32.partialorder %v4668, %v4670
    %v4672 = vsel %vm4671, %v4667, inf
    %4673 = vmin.xlane.f32.xlu0 %v4672
    %v4674 = vpop.xlane.xlu0 %4673
    %v4675 = vcvt.f32.s32 %v4674
    %v4676 = vcvt.f32.s32 %v4670
    %v4677 = vshll.u32 %v4676, 16
    %v4678 = vadd.s32 %v4677, %v4675
    %vm4679 = vcmp.lt.s32.totalorder %v4391, %v4392
    %v4680 = vsel %vm4679, %v4391, %v4392
    %v4681 = vand.u32 %v4680, 65535
    %v4682 = vshra.s32 %v4680, 16
    %v4683 = vcvt.s32.f32 %v4681
    %v4684 = vcvt.s32.f32 %v4682
    %4685 = vmin.xlane.f32.xlu0 %v4684
    %v4686 = vpop.xlane.xlu0 %4685
    %vm4687 = vcmp.eq.f32.partialorder %v4684, %v4686
    %v4688 = vsel %vm4687, %v4683, inf
    %4689 = vmin.xlane.f32.xlu0 %v4688
    %v4690 = vpop.xlane.xlu0 %4689
    %v4691 = vcvt.f32.s32 %v4690
    %v4692 = vcvt.f32.s32 %v4686
    %v4693 = vshll.u32 %v4692, 16
    %v4694 = vadd.s32 %v4693, %v4691
    %vm4695 = vcmp.lt.s32.totalorder %v4393, %v4394
    %v4696 = vsel %vm4695, %v4393, %v4394
    %v4697 = vand.u32 %v4696, 65535
    %v4698 = vshra.s32 %v4696, 16
    %v4699 = vcvt.s32.f32 %v4697
    %v4700 = vcvt.s32.f32 %v4698
    %4701 = vmin.xlane.f32.xlu0 %v4700
    %v4702 = vpop.xlane.xlu0 %4701
    %vm4703 = vcmp.eq.f32.partialorder %v4700, %v4702
    %v4704 = vsel %vm4703, %v4699, inf
    %4705 = vmin.xlane.f32.xlu0 %v4704
    %v4706 = vpop.xlane.xlu0 %4705
    %v4707 = vcvt.f32.s32 %v4706
    %v4708 = vcvt.f32.s32 %v4702
    %v4709 = vshll.u32 %v4708, 16
    %v4710 = vadd.s32 %v4709, %v4707
    %vm4711 = vcmp.lt.s32.totalorder %v4395, %v4396
    %v4712 = vsel %vm4711, %v4395, %v4396
    %v4713 = vand.u32 %v4712, 65535
    %v4714 = vshra.s32 %v4712, 16
    %v4715 = vcvt.s32.f32 %v4713
    %v4716 = vcvt.s32.f32 %v4714
    %4717 = vmin.xlane.f32.xlu0 %v4716
    %v4718 = vpop.xlane.xlu0 %4717
    %vm4719 = vcmp.eq.f32.partialorder %v4716, %v4718
    %v4720 = vsel %vm4719, %v4715, inf
    %4721 = vmin.xlane.f32.xlu0 %v4720
    %v4722 = vpop.xlane.xlu0 %4721
    %v4723 = vcvt.f32.s32 %v4722
    %v4724 = vcvt.f32.s32 %v4718
    %v4725 = vshll.u32 %v4724, 16
    %v4726 = vadd.s32 %v4725, %v4723
    %vm4727 = vcmp.lt.s32.totalorder %v4397, %v4398
    %v4728 = vsel %vm4727, %v4397, %v4398
    %v4729 = vand.u32 %v4728, 65535
    %v4730 = vshra.s32 %v4728, 16
    %v4731 = vcvt.s32.f32 %v4729
    %v4732 = vcvt.s32.f32 %v4730
    %4733 = vmin.xlane.f32.xlu0 %v4732
    %v4734 = vpop.xlane.xlu0 %4733
    %vm4735 = vcmp.eq.f32.partialorder %v4732, %v4734
    %v4736 = vsel %vm4735, %v4731, inf
    %4737 = vmin.xlane.f32.xlu0 %v4736
    %v4738 = vpop.xlane.xlu0 %4737
    %v4739 = vcvt.f32.s32 %v4738
    %v4740 = vcvt.f32.s32 %v4734
    %v4741 = vshll.u32 %v4740, 16
    %v4742 = vadd.s32 %v4741, %v4739
    %vm4743 = vcmp.lt.s32.totalorder %v4399, %v4400
    %v4744 = vsel %vm4743, %v4399, %v4400
    %v4745 = vand.u32 %v4744, 65535
    %v4746 = vshra.s32 %v4744, 16
    %v4747 = vcvt.s32.f32 %v4745
    %v4748 = vcvt.s32.f32 %v4746
    %4749 = vmin.xlane.f32.xlu0 %v4748
    %v4750 = vpop.xlane.xlu0 %4749
    %vm4751 = vcmp.eq.f32.partialorder %v4748, %v4750
    %v4752 = vsel %vm4751, %v4747, inf
    %4753 = vmin.xlane.f32.xlu0 %v4752
    %v4754 = vpop.xlane.xlu0 %4753
    %v4755 = vcvt.f32.s32 %v4754
    %v4756 = vcvt.f32.s32 %v4750
    %v4757 = vshll.u32 %v4756, 16
    %v4758 = vadd.s32 %v4757, %v4755
    %vm4759 = vcmp.lt.s32.totalorder %v4401, %v4402
    %v4760 = vsel %vm4759, %v4401, %v4402
    %v4761 = vand.u32 %v4760, 65535
    %v4762 = vshra.s32 %v4760, 16
    %v4763 = vcvt.s32.f32 %v4761
    %v4764 = vcvt.s32.f32 %v4762
    %4765 = vmin.xlane.f32.xlu0 %v4764
    %v4766 = vpop.xlane.xlu0 %4765
    %vm4767 = vcmp.eq.f32.partialorder %v4764, %v4766
    %v4768 = vsel %vm4767, %v4763, inf
    %4769 = vmin.xlane.f32.xlu0 %v4768
    %v4770 = vpop.xlane.xlu0 %4769
    %v4771 = vcvt.f32.s32 %v4770
    %v4772 = vcvt.f32.s32 %v4766
    %v4773 = vshll.u32 %v4772, 16
    %v4774 = vadd.s32 %v4773, %v4771
    %vm4775 = vcmp.lt.s32.totalorder %v4403, %v4404
    %v4776 = vsel %vm4775, %v4403, %v4404
    %v4777 = vand.u32 %v4776, 65535
    %v4778 = vshra.s32 %v4776, 16
    %v4779 = vcvt.s32.f32 %v4777
    %v4780 = vcvt.s32.f32 %v4778
    %4781 = vmin.xlane.f32.xlu0 %v4780
    %v4782 = vpop.xlane.xlu0 %4781
    %vm4783 = vcmp.eq.f32.partialorder %v4780, %v4782
    %v4784 = vsel %vm4783, %v4779, inf
    %4785 = vmin.xlane.f32.xlu0 %v4784
    %v4786 = vpop.xlane.xlu0 %4785
    %v4787 = vcvt.f32.s32 %v4786
    %v4788 = vcvt.f32.s32 %v4782
    %v4789 = vshll.u32 %v4788, 16
    %v4790 = vadd.s32 %v4789, %v4787
    %vm4791 = vcmp.lt.s32.totalorder %v4405, %v4406
    %v4792 = vsel %vm4791, %v4405, %v4406
    %v4793 = vand.u32 %v4792, 65535
    %v4794 = vshra.s32 %v4792, 16
    %v4795 = vcvt.s32.f32 %v4793
    %v4796 = vcvt.s32.f32 %v4794
    %4797 = vmin.xlane.f32.xlu0 %v4796
    %v4798 = vpop.xlane.xlu0 %4797
    %vm4799 = vcmp.eq.f32.partialorder %v4796, %v4798
    %v4800 = vsel %vm4799, %v4795, inf
    %4801 = vmin.xlane.f32.xlu0 %v4800
    %v4802 = vpop.xlane.xlu0 %4801
    %v4803 = vcvt.f32.s32 %v4802
    %v4804 = vcvt.f32.s32 %v4798
    %v4805 = vshll.u32 %v4804, 16
    %v4806 = vadd.s32 %v4805, %v4803
    %vm4807 = vcmp.lt.s32.totalorder %v4407, %v4408
    %v4808 = vsel %vm4807, %v4407, %v4408
    %v4809 = vand.u32 %v4808, 65535
    %v4810 = vshra.s32 %v4808, 16
    %v4811 = vcvt.s32.f32 %v4809
    %v4812 = vcvt.s32.f32 %v4810
    %4813 = vmin.xlane.f32.xlu0 %v4812
    %v4814 = vpop.xlane.xlu0 %4813
    %vm4815 = vcmp.eq.f32.partialorder %v4812, %v4814
    %v4816 = vsel %vm4815, %v4811, inf
    %4817 = vmin.xlane.f32.xlu0 %v4816
    %v4818 = vpop.xlane.xlu0 %4817
    %v4819 = vcvt.f32.s32 %v4818
    %v4820 = vcvt.f32.s32 %v4814
    %v4821 = vshll.u32 %v4820, 16
    %v4822 = vadd.s32 %v4821, %v4819
    %vm4823 = vcmp.lt.s32.totalorder %v4409, %v4410
    %v4824 = vsel %vm4823, %v4409, %v4410
    %v4825 = vand.u32 %v4824, 65535
    %v4826 = vshra.s32 %v4824, 16
    %v4827 = vcvt.s32.f32 %v4825
    %v4828 = vcvt.s32.f32 %v4826
    %4829 = vmin.xlane.f32.xlu0 %v4828
    %v4830 = vpop.xlane.xlu0 %4829
    %vm4831 = vcmp.eq.f32.partialorder %v4828, %v4830
    %v4832 = vsel %vm4831, %v4827, inf
    %4833 = vmin.xlane.f32.xlu0 %v4832
    %v4834 = vpop.xlane.xlu0 %4833
    %v4835 = vcvt.f32.s32 %v4834
    %v4836 = vcvt.f32.s32 %v4830
    %v4837 = vshll.u32 %v4836, 16
    %v4838 = vadd.s32 %v4837, %v4835
    %vm4839 = vcmp.lt.s32.totalorder %v4411, %v4412
    %v4840 = vsel %vm4839, %v4411, %v4412
    %v4841 = vand.u32 %v4840, 65535
    %v4842 = vshra.s32 %v4840, 16
    %v4843 = vcvt.s32.f32 %v4841
    %v4844 = vcvt.s32.f32 %v4842
    %4845 = vmin.xlane.f32.xlu0 %v4844
    %v4846 = vpop.xlane.xlu0 %4845
    %vm4847 = vcmp.eq.f32.partialorder %v4844, %v4846
    %v4848 = vsel %vm4847, %v4843, inf
    %4849 = vmin.xlane.f32.xlu0 %v4848
    %v4850 = vpop.xlane.xlu0 %4849
    %v4851 = vcvt.f32.s32 %v4850
    %v4852 = vcvt.f32.s32 %v4846
    %v4853 = vshll.u32 %v4852, 16
    %v4854 = vadd.s32 %v4853, %v4851
    %vm4855 = vcmp.lt.s32.totalorder %v4413, %v4414
    %v4856 = vsel %vm4855, %v4413, %v4414
    %v4857 = vand.u32 %v4856, 65535
    %v4858 = vshra.s32 %v4856, 16
    %v4859 = vcvt.s32.f32 %v4857
    %v4860 = vcvt.s32.f32 %v4858
    %4861 = vmin.xlane.f32.xlu0 %v4860
    %v4862 = vpop.xlane.xlu0 %4861
    %vm4863 = vcmp.eq.f32.partialorder %v4860, %v4862
    %v4864 = vsel %vm4863, %v4859, inf
    %4865 = vmin.xlane.f32.xlu0 %v4864
    %v4866 = vpop.xlane.xlu0 %4865
    %v4867 = vcvt.f32.s32 %v4866
    %v4868 = vcvt.f32.s32 %v4862
    %v4869 = vshll.u32 %v4868, 16
    %v4870 = vadd.s32 %v4869, %v4867
    %vm4871 = vcmp.lt.s32.totalorder %v4415, %v4416
    %v4872 = vsel %vm4871, %v4415, %v4416
    %v4873 = vand.u32 %v4872, 65535
    %v4874 = vshra.s32 %v4872, 16
    %v4875 = vcvt.s32.f32 %v4873
    %v4876 = vcvt.s32.f32 %v4874
    %4877 = vmin.xlane.f32.xlu0 %v4876
    %v4878 = vpop.xlane.xlu0 %4877
    %vm4879 = vcmp.eq.f32.partialorder %v4876, %v4878
    %v4880 = vsel %vm4879, %v4875, inf
    %4881 = vmin.xlane.f32.xlu0 %v4880
    %v4882 = vpop.xlane.xlu0 %4881
    %v4883 = vcvt.f32.s32 %v4882
    %v4884 = vcvt.f32.s32 %v4878
    %v4885 = vshll.u32 %v4884, 16
    %v4886 = vadd.s32 %v4885, %v4883
    %vm4887 = vcmp.lt.s32.totalorder %v4417, %v4418
    %v4888 = vsel %vm4887, %v4417, %v4418
    %v4889 = vand.u32 %v4888, 65535
    %v4890 = vshra.s32 %v4888, 16
    %v4891 = vcvt.s32.f32 %v4889
    %v4892 = vcvt.s32.f32 %v4890
    %4893 = vmin.xlane.f32.xlu0 %v4892
    %v4894 = vpop.xlane.xlu0 %4893
    %vm4895 = vcmp.eq.f32.partialorder %v4892, %v4894
    %v4896 = vsel %vm4895, %v4891, inf
    %4897 = vmin.xlane.f32.xlu0 %v4896
    %v4898 = vpop.xlane.xlu0 %4897
    %v4899 = vcvt.f32.s32 %v4898
    %v4900 = vcvt.f32.s32 %v4894
    %v4901 = vshll.u32 %v4900, 16
    %v4902 = vadd.s32 %v4901, %v4899
    %vm4903 = vcmp.lt.s32.totalorder %v4419, %v4420
    %v4904 = vsel %vm4903, %v4419, %v4420
    %v4905 = vand.u32 %v4904, 65535
    %v4906 = vshra.s32 %v4904, 16
    %v4907 = vcvt.s32.f32 %v4905
    %v4908 = vcvt.s32.f32 %v4906
    %4909 = vmin.xlane.f32.xlu0 %v4908
    %v4910 = vpop.xlane.xlu0 %4909
    %vm4911 = vcmp.eq.f32.partialorder %v4908, %v4910
    %v4912 = vsel %vm4911, %v4907, inf
    %4913 = vmin.xlane.f32.xlu0 %v4912
    %v4914 = vpop.xlane.xlu0 %4913
    %v4915 = vcvt.f32.s32 %v4914
    %v4916 = vcvt.f32.s32 %v4910
    %v4917 = vshll.u32 %v4916, 16
    %v4918 = vadd.s32 %v4917, %v4915
    %vm4919 = vcmp.lt.s32.totalorder %v4421, %v4422
    %v4920 = vsel %vm4919, %v4421, %v4422
    %v4921 = vand.u32 %v4920, 65535
    %v4922 = vshra.s32 %v4920, 16
    %v4923 = vcvt.s32.f32 %v4921
    %v4924 = vcvt.s32.f32 %v4922
    %4925 = vmin.xlane.f32.xlu0 %v4924
    %v4926 = vpop.xlane.xlu0 %4925
    %vm4927 = vcmp.eq.f32.partialorder %v4924, %v4926
    %v4928 = vsel %vm4927, %v4923, inf
    %4929 = vmin.xlane.f32.xlu0 %v4928
    %v4930 = vpop.xlane.xlu0 %4929
    %v4931 = vcvt.f32.s32 %v4930
    %v4932 = vcvt.f32.s32 %v4926
    %v4933 = vshll.u32 %v4932, 16
    %v4934 = vadd.s32 %v4933, %v4931
    %vm4935 = vcmp.eq.s32.totalorder %v4359, %v4438
    %vm4936 = vcmp.eq.s32.totalorder %v4360, %v4438
    %vm4937 = vcmp.eq.s32.totalorder %v4361, %v4454
    %vm4938 = vcmp.eq.s32.totalorder %v4362, %v4454
    %vm4939 = vcmp.eq.s32.totalorder %v4363, %v4470
    %vm4940 = vcmp.eq.s32.totalorder %v4364, %v4470
    %vm4941 = vcmp.eq.s32.totalorder %v4365, %v4486
    %vm4942 = vcmp.eq.s32.totalorder %v4366, %v4486
    %vm4943 = vcmp.eq.s32.totalorder %v4367, %v4502
    %vm4944 = vcmp.eq.s32.totalorder %v4368, %v4502
    %vm4945 = vcmp.eq.s32.totalorder %v4369, %v4518
    %vm4946 = vcmp.eq.s32.totalorder %v4370, %v4518
    %vm4947 = vcmp.eq.s32.totalorder %v4371, %v4534
    %vm4948 = vcmp.eq.s32.totalorder %v4372, %v4534
    %vm4949 = vcmp.eq.s32.totalorder %v4373, %v4550
    %vm4950 = vcmp.eq.s32.totalorder %v4374, %v4550
    %vm4951 = vcmp.eq.s32.totalorder %v4375, %v4566
    %vm4952 = vcmp.eq.s32.totalorder %v4376, %v4566
    %vm4953 = vcmp.eq.s32.totalorder %v4377, %v4582
    %vm4954 = vcmp.eq.s32.totalorder %v4378, %v4582
    %vm4955 = vcmp.eq.s32.totalorder %v4379, %v4598
    %vm4956 = vcmp.eq.s32.totalorder %v4380, %v4598
    %vm4957 = vcmp.eq.s32.totalorder %v4381, %v4614
    %vm4958 = vcmp.eq.s32.totalorder %v4382, %v4614
    %vm4959 = vcmp.eq.s32.totalorder %v4383, %v4630
    %vm4960 = vcmp.eq.s32.totalorder %v4384, %v4630
    %vm4961 = vcmp.eq.s32.totalorder %v4385, %v4646
    %vm4962 = vcmp.eq.s32.totalorder %v4386, %v4646
    %vm4963 = vcmp.eq.s32.totalorder %v4387, %v4662
    %vm4964 = vcmp.eq.s32.totalorder %v4388, %v4662
    %vm4965 = vcmp.eq.s32.totalorder %v4389, %v4678
    %vm4966 = vcmp.eq.s32.totalorder %v4390, %v4678
    %vm4967 = vcmp.eq.s32.totalorder %v4391, %v4694
    %vm4968 = vcmp.eq.s32.totalorder %v4392, %v4694
    %vm4969 = vcmp.eq.s32.totalorder %v4393, %v4710
    %vm4970 = vcmp.eq.s32.totalorder %v4394, %v4710
    %vm4971 = vcmp.eq.s32.totalorder %v4395, %v4726
    %vm4972 = vcmp.eq.s32.totalorder %v4396, %v4726
    %vm4973 = vcmp.eq.s32.totalorder %v4397, %v4742
    %vm4974 = vcmp.eq.s32.totalorder %v4398, %v4742
    %vm4975 = vcmp.eq.s32.totalorder %v4399, %v4758
    %vm4976 = vcmp.eq.s32.totalorder %v4400, %v4758
    %vm4977 = vcmp.eq.s32.totalorder %v4401, %v4774
    %vm4978 = vcmp.eq.s32.totalorder %v4402, %v4774
    %vm4979 = vcmp.eq.s32.totalorder %v4403, %v4790
    %vm4980 = vcmp.eq.s32.totalorder %v4404, %v4790
    %vm4981 = vcmp.eq.s32.totalorder %v4405, %v4806
    %vm4982 = vcmp.eq.s32.totalorder %v4406, %v4806
    %vm4983 = vcmp.eq.s32.totalorder %v4407, %v4822
    %vm4984 = vcmp.eq.s32.totalorder %v4408, %v4822
    %vm4985 = vcmp.eq.s32.totalorder %v4409, %v4838
    %vm4986 = vcmp.eq.s32.totalorder %v4410, %v4838
    %vm4987 = vcmp.eq.s32.totalorder %v4411, %v4854
    %vm4988 = vcmp.eq.s32.totalorder %v4412, %v4854
    %vm4989 = vcmp.eq.s32.totalorder %v4413, %v4870
    %vm4990 = vcmp.eq.s32.totalorder %v4414, %v4870
    %vm4991 = vcmp.eq.s32.totalorder %v4415, %v4886
    %vm4992 = vcmp.eq.s32.totalorder %v4416, %v4886
    %vm4993 = vcmp.eq.s32.totalorder %v4417, %v4902
    %vm4994 = vcmp.eq.s32.totalorder %v4418, %v4902
    %vm4995 = vcmp.eq.s32.totalorder %v4419, %v4918
    %vm4996 = vcmp.eq.s32.totalorder %v4420, %v4918
    %vm4997 = vcmp.eq.s32.totalorder %v4421, %v4934
    %vm4998 = vcmp.eq.s32.totalorder %v4422, %v4934
    %v4999 = vld [vmem:[#allocation5] sm:$0xff]
    %v5000 = vld [vmem:[#allocation5 + $0x8] sm:$0xff]
    %v5001 = vld [vmem:[#allocation5 + $0x10] sm:$0xff]
    %v5002 = vld [vmem:[#allocation5 + $0x18] sm:$0xff]
    %v5003 = vld [vmem:[#allocation5 + $0x20] sm:$0xff]
    %v5004 = vld [vmem:[#allocation5 + $0x28] sm:$0xff]
    %v5005 = vld [vmem:[#allocation5 + $0x30] sm:$0xff]
    %v5006 = vld [vmem:[#allocation5 + $0x38] sm:$0xff]
    %v5007 = vld [vmem:[#allocation5 + $0x40] sm:$0xff]
    %v5008 = vld [vmem:[#allocation5 + $0x48] sm:$0xff]
    %v5009 = vld [vmem:[#allocation5 + $0x50] sm:$0xff]
    %v5010 = vld [vmem:[#allocation5 + $0x58] sm:$0xff]
    %v5011 = vld [vmem:[#allocation5 + $0x60] sm:$0xff]
    %v5012 = vld [vmem:[#allocation5 + $0x68] sm:$0xff]
    %v5013 = vld [vmem:[#allocation5 + $0x70] sm:$0xff]
    %v5014 = vld [vmem:[#allocation5 + $0x78] sm:$0xff]
    %v5015 = vld [vmem:[#allocation5 + $0x80] sm:$0xff]
    %v5016 = vld [vmem:[#allocation5 + $0x88] sm:$0xff]
    %v5017 = vld [vmem:[#allocation5 + $0x90] sm:$0xff]
    %v5018 = vld [vmem:[#allocation5 + $0x98] sm:$0xff]
    %v5019 = vld [vmem:[#allocation5 + $0xa0] sm:$0xff]
    %v5020 = vld [vmem:[#allocation5 + $0xa8] sm:$0xff]
    %v5021 = vld [vmem:[#allocation5 + $0xb0] sm:$0xff]
    %v5022 = vld [vmem:[#allocation5 + $0xb8] sm:$0xff]
    %v5023 = vld [vmem:[#allocation5 + $0xc0] sm:$0xff]
    %v5024 = vld [vmem:[#allocation5 + $0xc8] sm:$0xff]
    %v5025 = vld [vmem:[#allocation5 + $0xd0] sm:$0xff]
    %v5026 = vld [vmem:[#allocation5 + $0xd8] sm:$0xff]
    %v5027 = vld [vmem:[#allocation5 + $0xe0] sm:$0xff]
    %v5028 = vld [vmem:[#allocation5 + $0xe8] sm:$0xff]
    %v5029 = vld [vmem:[#allocation5 + $0xf0] sm:$0xff]
    %v5030 = vld [vmem:[#allocation5 + $0xf8] sm:$0xff]
    %v5031 = vld [vmem:[#allocation5 + $0x100] sm:$0xff]
    %v5032 = vld [vmem:[#allocation5 + $0x108] sm:$0xff]
    %v5033 = vld [vmem:[#allocation5 + $0x110] sm:$0xff]
    %v5034 = vld [vmem:[#allocation5 + $0x118] sm:$0xff]
    %v5035 = vld [vmem:[#allocation5 + $0x120] sm:$0xff]
    %v5036 = vld [vmem:[#allocation5 + $0x128] sm:$0xff]
    %v5037 = vld [vmem:[#allocation5 + $0x130] sm:$0xff]
    %v5038 = vld [vmem:[#allocation5 + $0x138] sm:$0xff]
    %v5039 = vld [vmem:[#allocation5 + $0x140] sm:$0xff]
    %v5040 = vld [vmem:[#allocation5 + $0x148] sm:$0xff]
    %v5041 = vld [vmem:[#allocation5 + $0x150] sm:$0xff]
    %v5042 = vld [vmem:[#allocation5 + $0x158] sm:$0xff]
    %v5043 = vld [vmem:[#allocation5 + $0x160] sm:$0xff]
    %v5044 = vld [vmem:[#allocation5 + $0x168] sm:$0xff]
    %v5045 = vld [vmem:[#allocation5 + $0x170] sm:$0xff]
    %v5046 = vld [vmem:[#allocation5 + $0x178] sm:$0xff]
    %v5047 = vld [vmem:[#allocation5 + $0x180] sm:$0xff]
    %v5048 = vld [vmem:[#allocation5 + $0x188] sm:$0xff]
    %v5049 = vld [vmem:[#allocation5 + $0x190] sm:$0xff]
    %v5050 = vld [vmem:[#allocation5 + $0x198] sm:$0xff]
    %v5051 = vld [vmem:[#allocation5 + $0x1a0] sm:$0xff]
    %v5052 = vld [vmem:[#allocation5 + $0x1a8] sm:$0xff]
    %v5053 = vld [vmem:[#allocation5 + $0x1b0] sm:$0xff]
    %v5054 = vld [vmem:[#allocation5 + $0x1b8] sm:$0xff]
    %v5055 = vld [vmem:[#allocation5 + $0x1c0] sm:$0xff]
    %v5056 = vld [vmem:[#allocation5 + $0x1c8] sm:$0xff]
    %v5057 = vld [vmem:[#allocation5 + $0x1d0] sm:$0xff]
    %v5058 = vld [vmem:[#allocation5 + $0x1d8] sm:$0xff]
    %v5059 = vld [vmem:[#allocation5 + $0x1e0] sm:$0xff]
    %v5060 = vld [vmem:[#allocation5 + $0x1e8] sm:$0xff]
    %v5061 = vld [vmem:[#allocation5 + $0x1f0] sm:$0xff]
    %v5062 = vld [vmem:[#allocation5 + $0x1f8] sm:$0xff]
    %v5063 = vsel %vm4935, %v4999, 0.0
    %v5064 = vsel %vm4936, %v5000, 0.0
    %v5065 = vsel %vm4937, %v5001, 0.0
    %v5066 = vsel %vm4938, %v5002, 0.0
    %v5067 = vsel %vm4939, %v5003, 0.0
    %v5068 = vsel %vm4940, %v5004, 0.0
    %v5069 = vsel %vm4941, %v5005, 0.0
    %v5070 = vsel %vm4942, %v5006, 0.0
    %v5071 = vsel %vm4943, %v5007, 0.0
    %v5072 = vsel %vm4944, %v5008, 0.0
    %v5073 = vsel %vm4945, %v5009, 0.0
    %v5074 = vsel %vm4946, %v5010, 0.0
    %v5075 = vsel %vm4947, %v5011, 0.0
    %v5076 = vsel %vm4948, %v5012, 0.0
    %v5077 = vsel %vm4949, %v5013, 0.0
    %v5078 = vsel %vm4950, %v5014, 0.0
    %v5079 = vsel %vm4951, %v5015, 0.0
    %v5080 = vsel %vm4952, %v5016, 0.0
    %v5081 = vsel %vm4953, %v5017, 0.0
    %v5082 = vsel %vm4954, %v5018, 0.0
    %v5083 = vsel %vm4955, %v5019, 0.0
    %v5084 = vsel %vm4956, %v5020, 0.0
    %v5085 = vsel %vm4957, %v5021, 0.0
    %v5086 = vsel %vm4958, %v5022, 0.0
    %v5087 = vsel %vm4959, %v5023, 0.0
    %v5088 = vsel %vm4960, %v5024, 0.0
    %v5089 = vsel %vm4961, %v5025, 0.0
    %v5090 = vsel %vm4962, %v5026, 0.0
    %v5091 = vsel %vm4963, %v5027, 0.0
    %v5092 = vsel %vm4964, %v5028, 0.0
    %v5093 = vsel %vm4965, %v5029, 0.0
    %v5094 = vsel %vm4966, %v5030, 0.0
    %v5095 = vsel %vm4967, %v5031, 0.0
    %v5096 = vsel %vm4968, %v5032, 0.0
    %v5097 = vsel %vm4969, %v5033, 0.0
    %v5098 = vsel %vm4970, %v5034, 0.0
    %v5099 = vsel %vm4971, %v5035, 0.0
    %v5100 = vsel %vm4972, %v5036, 0.0
    %v5101 = vsel %vm4973, %v5037, 0.0
    %v5102 = vsel %vm4974, %v5038, 0.0
    %v5103 = vsel %vm4975, %v5039, 0.0
    %v5104 = vsel %vm4976, %v5040, 0.0
    %v5105 = vsel %vm4977, %v5041, 0.0
    %v5106 = vsel %vm4978, %v5042, 0.0
    %v5107 = vsel %vm4979, %v5043, 0.0
    %v5108 = vsel %vm4980, %v5044, 0.0
    %v5109 = vsel %vm4981, %v5045, 0.0
    %v5110 = vsel %vm4982, %v5046, 0.0
    %v5111 = vsel %vm4983, %v5047, 0.0
    %v5112 = vsel %vm4984, %v5048, 0.0
    %v5113 = vsel %vm4985, %v5049, 0.0
    %v5114 = vsel %vm4986, %v5050, 0.0
    %v5115 = vsel %vm4987, %v5051, 0.0
    %v5116 = vsel %vm4988, %v5052, 0.0
    %v5117 = vsel %vm4989, %v5053, 0.0
    %v5118 = vsel %vm4990, %v5054, 0.0
    %v5119 = vsel %vm4991, %v5055, 0.0
    %v5120 = vsel %vm4992, %v5056, 0.0
    %v5121 = vsel %vm4993, %v5057, 0.0
    %v5122 = vsel %vm4994, %v5058, 0.0
    %v5123 = vsel %vm4995, %v5059, 0.0
    %v5124 = vsel %vm4996, %v5060, 0.0
    %v5125 = vsel %vm4997, %v5061, 0.0
    %v5126 = vsel %vm4998, %v5062, 0.0
    %v5127 = vadd.f32 %v5063, %v5064
    %5128 = vadd.xlane.f32.xlu0 %v5127
    %v5129 = vpop.xlane.xlu0 %5128
    %v5130 = vadd.f32 %v5065, %v5066
    %5131 = vadd.xlane.f32.xlu0 %v5130
    %v5132 = vpop.xlane.xlu0 %5131
    %v5133 = vadd.f32 %v5067, %v5068
    %5134 = vadd.xlane.f32.xlu0 %v5133
    %v5135 = vpop.xlane.xlu0 %5134
    %v5136 = vadd.f32 %v5069, %v5070
    %5137 = vadd.xlane.f32.xlu0 %v5136
    %v5138 = vpop.xlane.xlu0 %5137
    %v5139 = vadd.f32 %v5071, %v5072
    %5140 = vadd.xlane.f32.xlu0 %v5139
    %v5141 = vpop.xlane.xlu0 %5140
    %v5142 = vadd.f32 %v5073, %v5074
    %5143 = vadd.xlane.f32.xlu0 %v5142
    %v5144 = vpop.xlane.xlu0 %5143
    %v5145 = vadd.f32 %v5075, %v5076
    %5146 = vadd.xlane.f32.xlu0 %v5145
    %v5147 = vpop.xlane.xlu0 %5146
    %v5148 = vadd.f32 %v5077, %v5078
    %5149 = vadd.xlane.f32.xlu0 %v5148
    %v5150 = vpop.xlane.xlu0 %5149
    %v5151 = vadd.f32 %v5079, %v5080
    %5152 = vadd.xlane.f32.xlu0 %v5151
    %v5153 = vpop.xlane.xlu0 %5152
    %v5154 = vadd.f32 %v5081, %v5082
    %5155 = vadd.xlane.f32.xlu0 %v5154
    %v5156 = vpop.xlane.xlu0 %5155
    %v5157 = vadd.f32 %v5083, %v5084
    %5158 = vadd.xlane.f32.xlu0 %v5157
    %v5159 = vpop.xlane.xlu0 %5158
    %v5160 = vadd.f32 %v5085, %v5086
    %5161 = vadd.xlane.f32.xlu0 %v5160
    %v5162 = vpop.xlane.xlu0 %5161
    %v5163 = vadd.f32 %v5087, %v5088
    %5164 = vadd.xlane.f32.xlu0 %v5163
    %v5165 = vpop.xlane.xlu0 %5164
    %v5166 = vadd.f32 %v5089, %v5090
    %5167 = vadd.xlane.f32.xlu0 %v5166
    %v5168 = vpop.xlane.xlu0 %5167
    %v5169 = vadd.f32 %v5091, %v5092
    %5170 = vadd.xlane.f32.xlu0 %v5169
    %v5171 = vpop.xlane.xlu0 %5170
    %v5172 = vadd.f32 %v5093, %v5094
    %5173 = vadd.xlane.f32.xlu0 %v5172
    %v5174 = vpop.xlane.xlu0 %5173
    %v5175 = vadd.f32 %v5095, %v5096
    %5176 = vadd.xlane.f32.xlu0 %v5175
    %v5177 = vpop.xlane.xlu0 %5176
    %v5178 = vadd.f32 %v5097, %v5098
    %5179 = vadd.xlane.f32.xlu0 %v5178
    %v5180 = vpop.xlane.xlu0 %5179
    %v5181 = vadd.f32 %v5099, %v5100
    %5182 = vadd.xlane.f32.xlu0 %v5181
    %v5183 = vpop.xlane.xlu0 %5182
    %v5184 = vadd.f32 %v5101, %v5102
    %5185 = vadd.xlane.f32.xlu0 %v5184
    %v5186 = vpop.xlane.xlu0 %5185
    %v5187 = vadd.f32 %v5103, %v5104
    %5188 = vadd.xlane.f32.xlu0 %v5187
    %v5189 = vpop.xlane.xlu0 %5188
    %v5190 = vadd.f32 %v5105, %v5106
    %5191 = vadd.xlane.f32.xlu0 %v5190
    %v5192 = vpop.xlane.xlu0 %5191
    %v5193 = vadd.f32 %v5107, %v5108
    %5194 = vadd.xlane.f32.xlu0 %v5193
    %v5195 = vpop.xlane.xlu0 %5194
    %v5196 = vadd.f32 %v5109, %v5110
    %5197 = vadd.xlane.f32.xlu0 %v5196
    %v5198 = vpop.xlane.xlu0 %5197
    %v5199 = vadd.f32 %v5111, %v5112
    %5200 = vadd.xlane.f32.xlu0 %v5199
    %v5201 = vpop.xlane.xlu0 %5200
    %v5202 = vadd.f32 %v5113, %v5114
    %5203 = vadd.xlane.f32.xlu0 %v5202
    %v5204 = vpop.xlane.xlu0 %5203
    %v5205 = vadd.f32 %v5115, %v5116
    %5206 = vadd.xlane.f32.xlu0 %v5205
    %v5207 = vpop.xlane.xlu0 %5206
    %v5208 = vadd.f32 %v5117, %v5118
    %5209 = vadd.xlane.f32.xlu0 %v5208
    %v5210 = vpop.xlane.xlu0 %5209
    %v5211 = vadd.f32 %v5119, %v5120
    %5212 = vadd.xlane.f32.xlu0 %v5211
    %v5213 = vpop.xlane.xlu0 %5212
    %v5214 = vadd.f32 %v5121, %v5122
    %5215 = vadd.xlane.f32.xlu0 %v5214
    %v5216 = vpop.xlane.xlu0 %5215
    %v5217 = vadd.f32 %v5123, %v5124
    %5218 = vadd.xlane.f32.xlu0 %v5217
    %v5219 = vpop.xlane.xlu0 %5218
    %v5220 = vadd.f32 %v5125, %v5126
    %5221 = vadd.xlane.f32.xlu0 %v5220
    %v5222 = vpop.xlane.xlu0 %5221
    %v5223 = vld [vmem:[#allocation8] sm:$0xff]
    %v5224 = vld [vmem:[#allocation8 + $0x8] sm:$0xff]
    %v5225 = vld [vmem:[#allocation8 + $0x10] sm:$0xff]
    %v5226 = vld [vmem:[#allocation8 + $0x18] sm:$0xff]
    %v5227 = vld [vmem:[#allocation8 + $0x20] sm:$0xff]
    %v5228 = vld [vmem:[#allocation8 + $0x28] sm:$0xff]
    %v5229 = vld [vmem:[#allocation8 + $0x30] sm:$0xff]
    %v5230 = vld [vmem:[#allocation8 + $0x38] sm:$0xff]
    %v5231 = vld [vmem:[#allocation8 + $0x40] sm:$0xff]
    %v5232 = vld [vmem:[#allocation8 + $0x48] sm:$0xff]
    %v5233 = vld [vmem:[#allocation8 + $0x50] sm:$0xff]
    %v5234 = vld [vmem:[#allocation8 + $0x58] sm:$0xff]
    %v5235 = vld [vmem:[#allocation8 + $0x60] sm:$0xff]
    %v5236 = vld [vmem:[#allocation8 + $0x68] sm:$0xff]
    %v5237 = vld [vmem:[#allocation8 + $0x70] sm:$0xff]
    %v5238 = vld [vmem:[#allocation8 + $0x78] sm:$0xff]
    %v5239 = vld [vmem:[#allocation8 + $0x80] sm:$0xff]
    %v5240 = vld [vmem:[#allocation8 + $0x88] sm:$0xff]
    %v5241 = vld [vmem:[#allocation8 + $0x90] sm:$0xff]
    %v5242 = vld [vmem:[#allocation8 + $0x98] sm:$0xff]
    %v5243 = vld [vmem:[#allocation8 + $0xa0] sm:$0xff]
    %v5244 = vld [vmem:[#allocation8 + $0xa8] sm:$0xff]
    %v5245 = vld [vmem:[#allocation8 + $0xb0] sm:$0xff]
    %v5246 = vld [vmem:[#allocation8 + $0xb8] sm:$0xff]
    %v5247 = vld [vmem:[#allocation8 + $0xc0] sm:$0xff]
    %v5248 = vld [vmem:[#allocation8 + $0xc8] sm:$0xff]
    %v5249 = vld [vmem:[#allocation8 + $0xd0] sm:$0xff]
    %v5250 = vld [vmem:[#allocation8 + $0xd8] sm:$0xff]
    %v5251 = vld [vmem:[#allocation8 + $0xe0] sm:$0xff]
    %v5252 = vld [vmem:[#allocation8 + $0xe8] sm:$0xff]
    %v5253 = vld [vmem:[#allocation8 + $0xf0] sm:$0xff]
    %v5254 = vld [vmem:[#allocation8 + $0xf8] sm:$0xff]
    %v5255 = vld [vmem:[#allocation8 + $0x100] sm:$0xff]
    %v5256 = vld [vmem:[#allocation8 + $0x108] sm:$0xff]
    %v5257 = vld [vmem:[#allocation8 + $0x110] sm:$0xff]
    %v5258 = vld [vmem:[#allocation8 + $0x118] sm:$0xff]
    %v5259 = vld [vmem:[#allocation8 + $0x120] sm:$0xff]
    %v5260 = vld [vmem:[#allocation8 + $0x128] sm:$0xff]
    %v5261 = vld [vmem:[#allocation8 + $0x130] sm:$0xff]
    %v5262 = vld [vmem:[#allocation8 + $0x138] sm:$0xff]
    %v5263 = vld [vmem:[#allocation8 + $0x140] sm:$0xff]
    %v5264 = vld [vmem:[#allocation8 + $0x148] sm:$0xff]
    %v5265 = vld [vmem:[#allocation8 + $0x150] sm:$0xff]
    %v5266 = vld [vmem:[#allocation8 + $0x158] sm:$0xff]
    %v5267 = vld [vmem:[#allocation8 + $0x160] sm:$0xff]
    %v5268 = vld [vmem:[#allocation8 + $0x168] sm:$0xff]
    %v5269 = vld [vmem:[#allocation8 + $0x170] sm:$0xff]
    %v5270 = vld [vmem:[#allocation8 + $0x178] sm:$0xff]
    %v5271 = vld [vmem:[#allocation8 + $0x180] sm:$0xff]
    %v5272 = vld [vmem:[#allocation8 + $0x188] sm:$0xff]
    %v5273 = vld [vmem:[#allocation8 + $0x190] sm:$0xff]
    %v5274 = vld [vmem:[#allocation8 + $0x198] sm:$0xff]
    %v5275 = vld [vmem:[#allocation8 + $0x1a0] sm:$0xff]
    %v5276 = vld [vmem:[#allocation8 + $0x1a8] sm:$0xff]
    %v5277 = vld [vmem:[#allocation8 + $0x1b0] sm:$0xff]
    %v5278 = vld [vmem:[#allocation8 + $0x1b8] sm:$0xff]
    %v5279 = vld [vmem:[#allocation8 + $0x1c0] sm:$0xff]
    %v5280 = vld [vmem:[#allocation8 + $0x1c8] sm:$0xff]
    %v5281 = vld [vmem:[#allocation8 + $0x1d0] sm:$0xff]
    %v5282 = vld [vmem:[#allocation8 + $0x1d8] sm:$0xff]
    %v5283 = vld [vmem:[#allocation8 + $0x1e0] sm:$0xff]
    %v5284 = vld [vmem:[#allocation8 + $0x1e8] sm:$0xff]
    %v5285 = vld [vmem:[#allocation8 + $0x1f0] sm:$0xff]
    %v5286 = vld [vmem:[#allocation8 + $0x1f8] sm:$0xff]
    %vm5287 = vcmp.lt.s32.totalorder %v5223, %v5224
    %v5288 = vsel %vm5287, %v5223, %v5224
    %v5289 = vand.u32 %v5288, 65535
    %v5290 = vshra.s32 %v5288, 16
    %v5291 = vcvt.s32.f32 %v5289
    %v5292 = vcvt.s32.f32 %v5290
    %5293 = vmin.xlane.f32.xlu0 %v5292
    %v5294 = vpop.xlane.xlu0 %5293
    %vm5295 = vcmp.eq.f32.partialorder %v5292, %v5294
    %v5296 = vsel %vm5295, %v5291, inf
    %5297 = vmin.xlane.f32.xlu0 %v5296
    %v5298 = vpop.xlane.xlu0 %5297
    %v5299 = vcvt.f32.s32 %v5298
    %v5300 = vcvt.f32.s32 %v5294
    %v5301 = vshll.u32 %v5300, 16
    %v5302 = vadd.s32 %v5301, %v5299
    %vm5303 = vcmp.lt.s32.totalorder %v5225, %v5226
    %v5304 = vsel %vm5303, %v5225, %v5226
    %v5305 = vand.u32 %v5304, 65535
    %v5306 = vshra.s32 %v5304, 16
    %v5307 = vcvt.s32.f32 %v5305
    %v5308 = vcvt.s32.f32 %v5306
    %5309 = vmin.xlane.f32.xlu0 %v5308
    %v5310 = vpop.xlane.xlu0 %5309
    %vm5311 = vcmp.eq.f32.partialorder %v5308, %v5310
    %v5312 = vsel %vm5311, %v5307, inf
    %5313 = vmin.xlane.f32.xlu0 %v5312
    %v5314 = vpop.xlane.xlu0 %5313
    %v5315 = vcvt.f32.s32 %v5314
    %v5316 = vcvt.f32.s32 %v5310
    %v5317 = vshll.u32 %v5316, 16
    %v5318 = vadd.s32 %v5317, %v5315
    %vm5319 = vcmp.lt.s32.totalorder %v5227, %v5228
    %v5320 = vsel %vm5319, %v5227, %v5228
    %v5321 = vand.u32 %v5320, 65535
    %v5322 = vshra.s32 %v5320, 16
    %v5323 = vcvt.s32.f32 %v5321
    %v5324 = vcvt.s32.f32 %v5322
    %5325 = vmin.xlane.f32.xlu0 %v5324
    %v5326 = vpop.xlane.xlu0 %5325
    %vm5327 = vcmp.eq.f32.partialorder %v5324, %v5326
    %v5328 = vsel %vm5327, %v5323, inf
    %5329 = vmin.xlane.f32.xlu0 %v5328
    %v5330 = vpop.xlane.xlu0 %5329
    %v5331 = vcvt.f32.s32 %v5330
    %v5332 = vcvt.f32.s32 %v5326
    %v5333 = vshll.u32 %v5332, 16
    %v5334 = vadd.s32 %v5333, %v5331
    %vm5335 = vcmp.lt.s32.totalorder %v5229, %v5230
    %v5336 = vsel %vm5335, %v5229, %v5230
    %v5337 = vand.u32 %v5336, 65535
    %v5338 = vshra.s32 %v5336, 16
    %v5339 = vcvt.s32.f32 %v5337
    %v5340 = vcvt.s32.f32 %v5338
    %5341 = vmin.xlane.f32.xlu0 %v5340
    %v5342 = vpop.xlane.xlu0 %5341
    %vm5343 = vcmp.eq.f32.partialorder %v5340, %v5342
    %v5344 = vsel %vm5343, %v5339, inf
    %5345 = vmin.xlane.f32.xlu0 %v5344
    %v5346 = vpop.xlane.xlu0 %5345
    %v5347 = vcvt.f32.s32 %v5346
    %v5348 = vcvt.f32.s32 %v5342
    %v5349 = vshll.u32 %v5348, 16
    %v5350 = vadd.s32 %v5349, %v5347
    %vm5351 = vcmp.lt.s32.totalorder %v5231, %v5232
    %v5352 = vsel %vm5351, %v5231, %v5232
    %v5353 = vand.u32 %v5352, 65535
    %v5354 = vshra.s32 %v5352, 16
    %v5355 = vcvt.s32.f32 %v5353
    %v5356 = vcvt.s32.f32 %v5354
    %5357 = vmin.xlane.f32.xlu0 %v5356
    %v5358 = vpop.xlane.xlu0 %5357
    %vm5359 = vcmp.eq.f32.partialorder %v5356, %v5358
    %v5360 = vsel %vm5359, %v5355, inf
    %5361 = vmin.xlane.f32.xlu0 %v5360
    %v5362 = vpop.xlane.xlu0 %5361
    %v5363 = vcvt.f32.s32 %v5362
    %v5364 = vcvt.f32.s32 %v5358
    %v5365 = vshll.u32 %v5364, 16
    %v5366 = vadd.s32 %v5365, %v5363
    %vm5367 = vcmp.lt.s32.totalorder %v5233, %v5234
    %v5368 = vsel %vm5367, %v5233, %v5234
    %v5369 = vand.u32 %v5368, 65535
    %v5370 = vshra.s32 %v5368, 16
    %v5371 = vcvt.s32.f32 %v5369
    %v5372 = vcvt.s32.f32 %v5370
    %5373 = vmin.xlane.f32.xlu0 %v5372
    %v5374 = vpop.xlane.xlu0 %5373
    %vm5375 = vcmp.eq.f32.partialorder %v5372, %v5374
    %v5376 = vsel %vm5375, %v5371, inf
    %5377 = vmin.xlane.f32.xlu0 %v5376
    %v5378 = vpop.xlane.xlu0 %5377
    %v5379 = vcvt.f32.s32 %v5378
    %v5380 = vcvt.f32.s32 %v5374
    %v5381 = vshll.u32 %v5380, 16
    %v5382 = vadd.s32 %v5381, %v5379
    %vm5383 = vcmp.lt.s32.totalorder %v5235, %v5236
    %v5384 = vsel %vm5383, %v5235, %v5236
    %v5385 = vand.u32 %v5384, 65535
    %v5386 = vshra.s32 %v5384, 16
    %v5387 = vcvt.s32.f32 %v5385
    %v5388 = vcvt.s32.f32 %v5386
    %5389 = vmin.xlane.f32.xlu0 %v5388
    %v5390 = vpop.xlane.xlu0 %5389
    %vm5391 = vcmp.eq.f32.partialorder %v5388, %v5390
    %v5392 = vsel %vm5391, %v5387, inf
    %5393 = vmin.xlane.f32.xlu0 %v5392
    %v5394 = vpop.xlane.xlu0 %5393
    %v5395 = vcvt.f32.s32 %v5394
    %v5396 = vcvt.f32.s32 %v5390
    %v5397 = vshll.u32 %v5396, 16
    %v5398 = vadd.s32 %v5397, %v5395
    %vm5399 = vcmp.lt.s32.totalorder %v5237, %v5238
    %v5400 = vsel %vm5399, %v5237, %v5238
    %v5401 = vand.u32 %v5400, 65535
    %v5402 = vshra.s32 %v5400, 16
    %v5403 = vcvt.s32.f32 %v5401
    %v5404 = vcvt.s32.f32 %v5402
    %5405 = vmin.xlane.f32.xlu0 %v5404
    %v5406 = vpop.xlane.xlu0 %5405
    %vm5407 = vcmp.eq.f32.partialorder %v5404, %v5406
    %v5408 = vsel %vm5407, %v5403, inf
    %5409 = vmin.xlane.f32.xlu0 %v5408
    %v5410 = vpop.xlane.xlu0 %5409
    %v5411 = vcvt.f32.s32 %v5410
    %v5412 = vcvt.f32.s32 %v5406
    %v5413 = vshll.u32 %v5412, 16
    %v5414 = vadd.s32 %v5413, %v5411
    %vm5415 = vcmp.lt.s32.totalorder %v5239, %v5240
    %v5416 = vsel %vm5415, %v5239, %v5240
    %v5417 = vand.u32 %v5416, 65535
    %v5418 = vshra.s32 %v5416, 16
    %v5419 = vcvt.s32.f32 %v5417
    %v5420 = vcvt.s32.f32 %v5418
    %5421 = vmin.xlane.f32.xlu0 %v5420
    %v5422 = vpop.xlane.xlu0 %5421
    %vm5423 = vcmp.eq.f32.partialorder %v5420, %v5422
    %v5424 = vsel %vm5423, %v5419, inf
    %5425 = vmin.xlane.f32.xlu0 %v5424
    %v5426 = vpop.xlane.xlu0 %5425
    %v5427 = vcvt.f32.s32 %v5426
    %v5428 = vcvt.f32.s32 %v5422
    %v5429 = vshll.u32 %v5428, 16
    %v5430 = vadd.s32 %v5429, %v5427
    %vm5431 = vcmp.lt.s32.totalorder %v5241, %v5242
    %v5432 = vsel %vm5431, %v5241, %v5242
    %v5433 = vand.u32 %v5432, 65535
    %v5434 = vshra.s32 %v5432, 16
    %v5435 = vcvt.s32.f32 %v5433
    %v5436 = vcvt.s32.f32 %v5434
    %5437 = vmin.xlane.f32.xlu0 %v5436
    %v5438 = vpop.xlane.xlu0 %5437
    %vm5439 = vcmp.eq.f32.partialorder %v5436, %v5438
    %v5440 = vsel %vm5439, %v5435, inf
    %5441 = vmin.xlane.f32.xlu0 %v5440
    %v5442 = vpop.xlane.xlu0 %5441
    %v5443 = vcvt.f32.s32 %v5442
    %v5444 = vcvt.f32.s32 %v5438
    %v5445 = vshll.u32 %v5444, 16
    %v5446 = vadd.s32 %v5445, %v5443
    %vm5447 = vcmp.lt.s32.totalorder %v5243, %v5244
    %v5448 = vsel %vm5447, %v5243, %v5244
    %v5449 = vand.u32 %v5448, 65535
    %v5450 = vshra.s32 %v5448, 16
    %v5451 = vcvt.s32.f32 %v5449
    %v5452 = vcvt.s32.f32 %v5450
    %5453 = vmin.xlane.f32.xlu0 %v5452
    %v5454 = vpop.xlane.xlu0 %5453
    %vm5455 = vcmp.eq.f32.partialorder %v5452, %v5454
    %v5456 = vsel %vm5455, %v5451, inf
    %5457 = vmin.xlane.f32.xlu0 %v5456
    %v5458 = vpop.xlane.xlu0 %5457
    %v5459 = vcvt.f32.s32 %v5458
    %v5460 = vcvt.f32.s32 %v5454
    %v5461 = vshll.u32 %v5460, 16
    %v5462 = vadd.s32 %v5461, %v5459
    %vm5463 = vcmp.lt.s32.totalorder %v5245, %v5246
    %v5464 = vsel %vm5463, %v5245, %v5246
    %v5465 = vand.u32 %v5464, 65535
    %v5466 = vshra.s32 %v5464, 16
    %v5467 = vcvt.s32.f32 %v5465
    %v5468 = vcvt.s32.f32 %v5466
    %5469 = vmin.xlane.f32.xlu0 %v5468
    %v5470 = vpop.xlane.xlu0 %5469
    %vm5471 = vcmp.eq.f32.partialorder %v5468, %v5470
    %v5472 = vsel %vm5471, %v5467, inf
    %5473 = vmin.xlane.f32.xlu0 %v5472
    %v5474 = vpop.xlane.xlu0 %5473
    %v5475 = vcvt.f32.s32 %v5474
    %v5476 = vcvt.f32.s32 %v5470
    %v5477 = vshll.u32 %v5476, 16
    %v5478 = vadd.s32 %v5477, %v5475
    %vm5479 = vcmp.lt.s32.totalorder %v5247, %v5248
    %v5480 = vsel %vm5479, %v5247, %v5248
    %v5481 = vand.u32 %v5480, 65535
    %v5482 = vshra.s32 %v5480, 16
    %v5483 = vcvt.s32.f32 %v5481
    %v5484 = vcvt.s32.f32 %v5482
    %5485 = vmin.xlane.f32.xlu0 %v5484
    %v5486 = vpop.xlane.xlu0 %5485
    %vm5487 = vcmp.eq.f32.partialorder %v5484, %v5486
    %v5488 = vsel %vm5487, %v5483, inf
    %5489 = vmin.xlane.f32.xlu0 %v5488
    %v5490 = vpop.xlane.xlu0 %5489
    %v5491 = vcvt.f32.s32 %v5490
    %v5492 = vcvt.f32.s32 %v5486
    %v5493 = vshll.u32 %v5492, 16
    %v5494 = vadd.s32 %v5493, %v5491
    %vm5495 = vcmp.lt.s32.totalorder %v5249, %v5250
    %v5496 = vsel %vm5495, %v5249, %v5250
    %v5497 = vand.u32 %v5496, 65535
    %v5498 = vshra.s32 %v5496, 16
    %v5499 = vcvt.s32.f32 %v5497
    %v5500 = vcvt.s32.f32 %v5498
    %5501 = vmin.xlane.f32.xlu0 %v5500
    %v5502 = vpop.xlane.xlu0 %5501
    %vm5503 = vcmp.eq.f32.partialorder %v5500, %v5502
    %v5504 = vsel %vm5503, %v5499, inf
    %5505 = vmin.xlane.f32.xlu0 %v5504
    %v5506 = vpop.xlane.xlu0 %5505
    %v5507 = vcvt.f32.s32 %v5506
    %v5508 = vcvt.f32.s32 %v5502
    %v5509 = vshll.u32 %v5508, 16
    %v5510 = vadd.s32 %v5509, %v5507
    %vm5511 = vcmp.lt.s32.totalorder %v5251, %v5252
    %v5512 = vsel %vm5511, %v5251, %v5252
    %v5513 = vand.u32 %v5512, 65535
    %v5514 = vshra.s32 %v5512, 16
    %v5515 = vcvt.s32.f32 %v5513
    %v5516 = vcvt.s32.f32 %v5514
    %5517 = vmin.xlane.f32.xlu0 %v5516
    %v5518 = vpop.xlane.xlu0 %5517
    %vm5519 = vcmp.eq.f32.partialorder %v5516, %v5518
    %v5520 = vsel %vm5519, %v5515, inf
    %5521 = vmin.xlane.f32.xlu0 %v5520
    %v5522 = vpop.xlane.xlu0 %5521
    %v5523 = vcvt.f32.s32 %v5522
    %v5524 = vcvt.f32.s32 %v5518
    %v5525 = vshll.u32 %v5524, 16
    %v5526 = vadd.s32 %v5525, %v5523
    %vm5527 = vcmp.lt.s32.totalorder %v5253, %v5254
    %v5528 = vsel %vm5527, %v5253, %v5254
    %v5529 = vand.u32 %v5528, 65535
    %v5530 = vshra.s32 %v5528, 16
    %v5531 = vcvt.s32.f32 %v5529
    %v5532 = vcvt.s32.f32 %v5530
    %5533 = vmin.xlane.f32.xlu0 %v5532
    %v5534 = vpop.xlane.xlu0 %5533
    %vm5535 = vcmp.eq.f32.partialorder %v5532, %v5534
    %v5536 = vsel %vm5535, %v5531, inf
    %5537 = vmin.xlane.f32.xlu0 %v5536
    %v5538 = vpop.xlane.xlu0 %5537
    %v5539 = vcvt.f32.s32 %v5538
    %v5540 = vcvt.f32.s32 %v5534
    %v5541 = vshll.u32 %v5540, 16
    %v5542 = vadd.s32 %v5541, %v5539
    %vm5543 = vcmp.lt.s32.totalorder %v5255, %v5256
    %v5544 = vsel %vm5543, %v5255, %v5256
    %v5545 = vand.u32 %v5544, 65535
    %v5546 = vshra.s32 %v5544, 16
    %v5547 = vcvt.s32.f32 %v5545
    %v5548 = vcvt.s32.f32 %v5546
    %5549 = vmin.xlane.f32.xlu0 %v5548
    %v5550 = vpop.xlane.xlu0 %5549
    %vm5551 = vcmp.eq.f32.partialorder %v5548, %v5550
    %v5552 = vsel %vm5551, %v5547, inf
    %5553 = vmin.xlane.f32.xlu0 %v5552
    %v5554 = vpop.xlane.xlu0 %5553
    %v5555 = vcvt.f32.s32 %v5554
    %v5556 = vcvt.f32.s32 %v5550
    %v5557 = vshll.u32 %v5556, 16
    %v5558 = vadd.s32 %v5557, %v5555
    %vm5559 = vcmp.lt.s32.totalorder %v5257, %v5258
    %v5560 = vsel %vm5559, %v5257, %v5258
    %v5561 = vand.u32 %v5560, 65535
    %v5562 = vshra.s32 %v5560, 16
    %v5563 = vcvt.s32.f32 %v5561
    %v5564 = vcvt.s32.f32 %v5562
    %5565 = vmin.xlane.f32.xlu0 %v5564
    %v5566 = vpop.xlane.xlu0 %5565
    %vm5567 = vcmp.eq.f32.partialorder %v5564, %v5566
    %v5568 = vsel %vm5567, %v5563, inf
    %5569 = vmin.xlane.f32.xlu0 %v5568
    %v5570 = vpop.xlane.xlu0 %5569
    %v5571 = vcvt.f32.s32 %v5570
    %v5572 = vcvt.f32.s32 %v5566
    %v5573 = vshll.u32 %v5572, 16
    %v5574 = vadd.s32 %v5573, %v5571
    %vm5575 = vcmp.lt.s32.totalorder %v5259, %v5260
    %v5576 = vsel %vm5575, %v5259, %v5260
    %v5577 = vand.u32 %v5576, 65535
    %v5578 = vshra.s32 %v5576, 16
    %v5579 = vcvt.s32.f32 %v5577
    %v5580 = vcvt.s32.f32 %v5578
    %5581 = vmin.xlane.f32.xlu0 %v5580
    %v5582 = vpop.xlane.xlu0 %5581
    %vm5583 = vcmp.eq.f32.partialorder %v5580, %v5582
    %v5584 = vsel %vm5583, %v5579, inf
    %5585 = vmin.xlane.f32.xlu0 %v5584
    %v5586 = vpop.xlane.xlu0 %5585
    %v5587 = vcvt.f32.s32 %v5586
    %v5588 = vcvt.f32.s32 %v5582
    %v5589 = vshll.u32 %v5588, 16
    %v5590 = vadd.s32 %v5589, %v5587
    %vm5591 = vcmp.lt.s32.totalorder %v5261, %v5262
    %v5592 = vsel %vm5591, %v5261, %v5262
    %v5593 = vand.u32 %v5592, 65535
    %v5594 = vshra.s32 %v5592, 16
    %v5595 = vcvt.s32.f32 %v5593
    %v5596 = vcvt.s32.f32 %v5594
    %5597 = vmin.xlane.f32.xlu0 %v5596
    %v5598 = vpop.xlane.xlu0 %5597
    %vm5599 = vcmp.eq.f32.partialorder %v5596, %v5598
    %v5600 = vsel %vm5599, %v5595, inf
    %5601 = vmin.xlane.f32.xlu0 %v5600
    %v5602 = vpop.xlane.xlu0 %5601
    %v5603 = vcvt.f32.s32 %v5602
    %v5604 = vcvt.f32.s32 %v5598
    %v5605 = vshll.u32 %v5604, 16
    %v5606 = vadd.s32 %v5605, %v5603
    %vm5607 = vcmp.lt.s32.totalorder %v5263, %v5264
    %v5608 = vsel %vm5607, %v5263, %v5264
    %v5609 = vand.u32 %v5608, 65535
    %v5610 = vshra.s32 %v5608, 16
    %v5611 = vcvt.s32.f32 %v5609
    %v5612 = vcvt.s32.f32 %v5610
    %5613 = vmin.xlane.f32.xlu0 %v5612
    %v5614 = vpop.xlane.xlu0 %5613
    %vm5615 = vcmp.eq.f32.partialorder %v5612, %v5614
    %v5616 = vsel %vm5615, %v5611, inf
    %5617 = vmin.xlane.f32.xlu0 %v5616
    %v5618 = vpop.xlane.xlu0 %5617
    %v5619 = vcvt.f32.s32 %v5618
    %v5620 = vcvt.f32.s32 %v5614
    %v5621 = vshll.u32 %v5620, 16
    %v5622 = vadd.s32 %v5621, %v5619
    %vm5623 = vcmp.lt.s32.totalorder %v5265, %v5266
    %v5624 = vsel %vm5623, %v5265, %v5266
    %v5625 = vand.u32 %v5624, 65535
    %v5626 = vshra.s32 %v5624, 16
    %v5627 = vcvt.s32.f32 %v5625
    %v5628 = vcvt.s32.f32 %v5626
    %5629 = vmin.xlane.f32.xlu0 %v5628
    %v5630 = vpop.xlane.xlu0 %5629
    %vm5631 = vcmp.eq.f32.partialorder %v5628, %v5630
    %v5632 = vsel %vm5631, %v5627, inf
    %5633 = vmin.xlane.f32.xlu0 %v5632
    %v5634 = vpop.xlane.xlu0 %5633
    %v5635 = vcvt.f32.s32 %v5634
    %v5636 = vcvt.f32.s32 %v5630
    %v5637 = vshll.u32 %v5636, 16
    %v5638 = vadd.s32 %v5637, %v5635
    %vm5639 = vcmp.lt.s32.totalorder %v5267, %v5268
    %v5640 = vsel %vm5639, %v5267, %v5268
    %v5641 = vand.u32 %v5640, 65535
    %v5642 = vshra.s32 %v5640, 16
    %v5643 = vcvt.s32.f32 %v5641
    %v5644 = vcvt.s32.f32 %v5642
    %5645 = vmin.xlane.f32.xlu0 %v5644
    %v5646 = vpop.xlane.xlu0 %5645
    %vm5647 = vcmp.eq.f32.partialorder %v5644, %v5646
    %v5648 = vsel %vm5647, %v5643, inf
    %5649 = vmin.xlane.f32.xlu0 %v5648
    %v5650 = vpop.xlane.xlu0 %5649
    %v5651 = vcvt.f32.s32 %v5650
    %v5652 = vcvt.f32.s32 %v5646
    %v5653 = vshll.u32 %v5652, 16
    %v5654 = vadd.s32 %v5653, %v5651
    %vm5655 = vcmp.lt.s32.totalorder %v5269, %v5270
    %v5656 = vsel %vm5655, %v5269, %v5270
    %v5657 = vand.u32 %v5656, 65535
    %v5658 = vshra.s32 %v5656, 16
    %v5659 = vcvt.s32.f32 %v5657
    %v5660 = vcvt.s32.f32 %v5658
    %5661 = vmin.xlane.f32.xlu0 %v5660
    %v5662 = vpop.xlane.xlu0 %5661
    %vm5663 = vcmp.eq.f32.partialorder %v5660, %v5662
    %v5664 = vsel %vm5663, %v5659, inf
    %5665 = vmin.xlane.f32.xlu0 %v5664
    %v5666 = vpop.xlane.xlu0 %5665
    %v5667 = vcvt.f32.s32 %v5666
    %v5668 = vcvt.f32.s32 %v5662
    %v5669 = vshll.u32 %v5668, 16
    %v5670 = vadd.s32 %v5669, %v5667
    %vm5671 = vcmp.lt.s32.totalorder %v5271, %v5272
    %v5672 = vsel %vm5671, %v5271, %v5272
    %v5673 = vand.u32 %v5672, 65535
    %v5674 = vshra.s32 %v5672, 16
    %v5675 = vcvt.s32.f32 %v5673
    %v5676 = vcvt.s32.f32 %v5674
    %5677 = vmin.xlane.f32.xlu0 %v5676
    %v5678 = vpop.xlane.xlu0 %5677
    %vm5679 = vcmp.eq.f32.partialorder %v5676, %v5678
    %v5680 = vsel %vm5679, %v5675, inf
    %5681 = vmin.xlane.f32.xlu0 %v5680
    %v5682 = vpop.xlane.xlu0 %5681
    %v5683 = vcvt.f32.s32 %v5682
    %v5684 = vcvt.f32.s32 %v5678
    %v5685 = vshll.u32 %v5684, 16
    %v5686 = vadd.s32 %v5685, %v5683
    %vm5687 = vcmp.lt.s32.totalorder %v5273, %v5274
    %v5688 = vsel %vm5687, %v5273, %v5274
    %v5689 = vand.u32 %v5688, 65535
    %v5690 = vshra.s32 %v5688, 16
    %v5691 = vcvt.s32.f32 %v5689
    %v5692 = vcvt.s32.f32 %v5690
    %5693 = vmin.xlane.f32.xlu0 %v5692
    %v5694 = vpop.xlane.xlu0 %5693
    %vm5695 = vcmp.eq.f32.partialorder %v5692, %v5694
    %v5696 = vsel %vm5695, %v5691, inf
    %5697 = vmin.xlane.f32.xlu0 %v5696
    %v5698 = vpop.xlane.xlu0 %5697
    %v5699 = vcvt.f32.s32 %v5698
    %v5700 = vcvt.f32.s32 %v5694
    %v5701 = vshll.u32 %v5700, 16
    %v5702 = vadd.s32 %v5701, %v5699
    %vm5703 = vcmp.lt.s32.totalorder %v5275, %v5276
    %v5704 = vsel %vm5703, %v5275, %v5276
    %v5705 = vand.u32 %v5704, 65535
    %v5706 = vshra.s32 %v5704, 16
    %v5707 = vcvt.s32.f32 %v5705
    %v5708 = vcvt.s32.f32 %v5706
    %5709 = vmin.xlane.f32.xlu0 %v5708
    %v5710 = vpop.xlane.xlu0 %5709
    %vm5711 = vcmp.eq.f32.partialorder %v5708, %v5710
    %v5712 = vsel %vm5711, %v5707, inf
    %5713 = vmin.xlane.f32.xlu0 %v5712
    %v5714 = vpop.xlane.xlu0 %5713
    %v5715 = vcvt.f32.s32 %v5714
    %v5716 = vcvt.f32.s32 %v5710
    %v5717 = vshll.u32 %v5716, 16
    %v5718 = vadd.s32 %v5717, %v5715
    %vm5719 = vcmp.lt.s32.totalorder %v5277, %v5278
    %v5720 = vsel %vm5719, %v5277, %v5278
    %v5721 = vand.u32 %v5720, 65535
    %v5722 = vshra.s32 %v5720, 16
    %v5723 = vcvt.s32.f32 %v5721
    %v5724 = vcvt.s32.f32 %v5722
    %5725 = vmin.xlane.f32.xlu0 %v5724
    %v5726 = vpop.xlane.xlu0 %5725
    %vm5727 = vcmp.eq.f32.partialorder %v5724, %v5726
    %v5728 = vsel %vm5727, %v5723, inf
    %5729 = vmin.xlane.f32.xlu0 %v5728
    %v5730 = vpop.xlane.xlu0 %5729
    %v5731 = vcvt.f32.s32 %v5730
    %v5732 = vcvt.f32.s32 %v5726
    %v5733 = vshll.u32 %v5732, 16
    %v5734 = vadd.s32 %v5733, %v5731
    %vm5735 = vcmp.lt.s32.totalorder %v5279, %v5280
    %v5736 = vsel %vm5735, %v5279, %v5280
    %v5737 = vand.u32 %v5736, 65535
    %v5738 = vshra.s32 %v5736, 16
    %v5739 = vcvt.s32.f32 %v5737
    %v5740 = vcvt.s32.f32 %v5738
    %5741 = vmin.xlane.f32.xlu0 %v5740
    %v5742 = vpop.xlane.xlu0 %5741
    %vm5743 = vcmp.eq.f32.partialorder %v5740, %v5742
    %v5744 = vsel %vm5743, %v5739, inf
    %5745 = vmin.xlane.f32.xlu0 %v5744
    %v5746 = vpop.xlane.xlu0 %5745
    %v5747 = vcvt.f32.s32 %v5746
    %v5748 = vcvt.f32.s32 %v5742
    %v5749 = vshll.u32 %v5748, 16
    %v5750 = vadd.s32 %v5749, %v5747
    %vm5751 = vcmp.lt.s32.totalorder %v5281, %v5282
    %v5752 = vsel %vm5751, %v5281, %v5282
    %v5753 = vand.u32 %v5752, 65535
    %v5754 = vshra.s32 %v5752, 16
    %v5755 = vcvt.s32.f32 %v5753
    %v5756 = vcvt.s32.f32 %v5754
    %5757 = vmin.xlane.f32.xlu0 %v5756
    %v5758 = vpop.xlane.xlu0 %5757
    %vm5759 = vcmp.eq.f32.partialorder %v5756, %v5758
    %v5760 = vsel %vm5759, %v5755, inf
    %5761 = vmin.xlane.f32.xlu0 %v5760
    %v5762 = vpop.xlane.xlu0 %5761
    %v5763 = vcvt.f32.s32 %v5762
    %v5764 = vcvt.f32.s32 %v5758
    %v5765 = vshll.u32 %v5764, 16
    %v5766 = vadd.s32 %v5765, %v5763
    %vm5767 = vcmp.lt.s32.totalorder %v5283, %v5284
    %v5768 = vsel %vm5767, %v5283, %v5284
    %v5769 = vand.u32 %v5768, 65535
    %v5770 = vshra.s32 %v5768, 16
    %v5771 = vcvt.s32.f32 %v5769
    %v5772 = vcvt.s32.f32 %v5770
    %5773 = vmin.xlane.f32.xlu0 %v5772
    %v5774 = vpop.xlane.xlu0 %5773
    %vm5775 = vcmp.eq.f32.partialorder %v5772, %v5774
    %v5776 = vsel %vm5775, %v5771, inf
    %5777 = vmin.xlane.f32.xlu0 %v5776
    %v5778 = vpop.xlane.xlu0 %5777
    %v5779 = vcvt.f32.s32 %v5778
    %v5780 = vcvt.f32.s32 %v5774
    %v5781 = vshll.u32 %v5780, 16
    %v5782 = vadd.s32 %v5781, %v5779
    %vm5783 = vcmp.lt.s32.totalorder %v5285, %v5286
    %v5784 = vsel %vm5783, %v5285, %v5286
    %v5785 = vand.u32 %v5784, 65535
    %v5786 = vshra.s32 %v5784, 16
    %v5787 = vcvt.s32.f32 %v5785
    %v5788 = vcvt.s32.f32 %v5786
    %5789 = vmin.xlane.f32.xlu0 %v5788
    %v5790 = vpop.xlane.xlu0 %5789
    %vm5791 = vcmp.eq.f32.partialorder %v5788, %v5790
    %v5792 = vsel %vm5791, %v5787, inf
    %5793 = vmin.xlane.f32.xlu0 %v5792
    %v5794 = vpop.xlane.xlu0 %5793
    %v5795 = vcvt.f32.s32 %v5794
    %v5796 = vcvt.f32.s32 %v5790
    %v5797 = vshll.u32 %v5796, 16
    %v5798 = vadd.s32 %v5797, %v5795
    %vm5799 = vcmp.eq.s32.totalorder %v5223, %v5302
    %vm5800 = vcmp.eq.s32.totalorder %v5224, %v5302
    %vm5801 = vcmp.eq.s32.totalorder %v5225, %v5318
    %vm5802 = vcmp.eq.s32.totalorder %v5226, %v5318
    %vm5803 = vcmp.eq.s32.totalorder %v5227, %v5334
    %vm5804 = vcmp.eq.s32.totalorder %v5228, %v5334
    %vm5805 = vcmp.eq.s32.totalorder %v5229, %v5350
    %vm5806 = vcmp.eq.s32.totalorder %v5230, %v5350
    %vm5807 = vcmp.eq.s32.totalorder %v5231, %v5366
    %vm5808 = vcmp.eq.s32.totalorder %v5232, %v5366
    %vm5809 = vcmp.eq.s32.totalorder %v5233, %v5382
    %vm5810 = vcmp.eq.s32.totalorder %v5234, %v5382
    %vm5811 = vcmp.eq.s32.totalorder %v5235, %v5398
    %vm5812 = vcmp.eq.s32.totalorder %v5236, %v5398
    %vm5813 = vcmp.eq.s32.totalorder %v5237, %v5414
    %vm5814 = vcmp.eq.s32.totalorder %v5238, %v5414
    %vm5815 = vcmp.eq.s32.totalorder %v5239, %v5430
    %vm5816 = vcmp.eq.s32.totalorder %v5240, %v5430
    %vm5817 = vcmp.eq.s32.totalorder %v5241, %v5446
    %vm5818 = vcmp.eq.s32.totalorder %v5242, %v5446
    %vm5819 = vcmp.eq.s32.totalorder %v5243, %v5462
    %vm5820 = vcmp.eq.s32.totalorder %v5244, %v5462
    %vm5821 = vcmp.eq.s32.totalorder %v5245, %v5478
    %vm5822 = vcmp.eq.s32.totalorder %v5246, %v5478
    %vm5823 = vcmp.eq.s32.totalorder %v5247, %v5494
    %vm5824 = vcmp.eq.s32.totalorder %v5248, %v5494
    %vm5825 = vcmp.eq.s32.totalorder %v5249, %v5510
    %vm5826 = vcmp.eq.s32.totalorder %v5250, %v5510
    %vm5827 = vcmp.eq.s32.totalorder %v5251, %v5526
    %vm5828 = vcmp.eq.s32.totalorder %v5252, %v5526
    %vm5829 = vcmp.eq.s32.totalorder %v5253, %v5542
    %vm5830 = vcmp.eq.s32.totalorder %v5254, %v5542
    %vm5831 = vcmp.eq.s32.totalorder %v5255, %v5558
    %vm5832 = vcmp.eq.s32.totalorder %v5256, %v5558
    %vm5833 = vcmp.eq.s32.totalorder %v5257, %v5574
    %vm5834 = vcmp.eq.s32.totalorder %v5258, %v5574
    %vm5835 = vcmp.eq.s32.totalorder %v5259, %v5590
    %vm5836 = vcmp.eq.s32.totalorder %v5260, %v5590
    %vm5837 = vcmp.eq.s32.totalorder %v5261, %v5606
    %vm5838 = vcmp.eq.s32.totalorder %v5262, %v5606
    %vm5839 = vcmp.eq.s32.totalorder %v5263, %v5622
    %vm5840 = vcmp.eq.s32.totalorder %v5264, %v5622
    %vm5841 = vcmp.eq.s32.totalorder %v5265, %v5638
    %vm5842 = vcmp.eq.s32.totalorder %v5266, %v5638
    %vm5843 = vcmp.eq.s32.totalorder %v5267, %v5654
    %vm5844 = vcmp.eq.s32.totalorder %v5268, %v5654
    %vm5845 = vcmp.eq.s32.totalorder %v5269, %v5670
    %vm5846 = vcmp.eq.s32.totalorder %v5270, %v5670
    %vm5847 = vcmp.eq.s32.totalorder %v5271, %v5686
    %vm5848 = vcmp.eq.s32.totalorder %v5272, %v5686
    %vm5849 = vcmp.eq.s32.totalorder %v5273, %v5702
    %vm5850 = vcmp.eq.s32.totalorder %v5274, %v5702
    %vm5851 = vcmp.eq.s32.totalorder %v5275, %v5718
    %vm5852 = vcmp.eq.s32.totalorder %v5276, %v5718
    %vm5853 = vcmp.eq.s32.totalorder %v5277, %v5734
    %vm5854 = vcmp.eq.s32.totalorder %v5278, %v5734
    %vm5855 = vcmp.eq.s32.totalorder %v5279, %v5750
    %vm5856 = vcmp.eq.s32.totalorder %v5280, %v5750
    %vm5857 = vcmp.eq.s32.totalorder %v5281, %v5766
    %vm5858 = vcmp.eq.s32.totalorder %v5282, %v5766
    %vm5859 = vcmp.eq.s32.totalorder %v5283, %v5782
    %vm5860 = vcmp.eq.s32.totalorder %v5284, %v5782
    %vm5861 = vcmp.eq.s32.totalorder %v5285, %v5798
    %vm5862 = vcmp.eq.s32.totalorder %v5286, %v5798
    %v5863 = vld [vmem:[#allocation9] sm:$0xff]
    %v5864 = vld [vmem:[#allocation9 + $0x8] sm:$0xff]
    %v5865 = vld [vmem:[#allocation9 + $0x10] sm:$0xff]
    %v5866 = vld [vmem:[#allocation9 + $0x18] sm:$0xff]
    %v5867 = vld [vmem:[#allocation9 + $0x20] sm:$0xff]
    %v5868 = vld [vmem:[#allocation9 + $0x28] sm:$0xff]
    %v5869 = vld [vmem:[#allocation9 + $0x30] sm:$0xff]
    %v5870 = vld [vmem:[#allocation9 + $0x38] sm:$0xff]
    %v5871 = vld [vmem:[#allocation9 + $0x40] sm:$0xff]
    %v5872 = vld [vmem:[#allocation9 + $0x48] sm:$0xff]
    %v5873 = vld [vmem:[#allocation9 + $0x50] sm:$0xff]
    %v5874 = vld [vmem:[#allocation9 + $0x58] sm:$0xff]
    %v5875 = vld [vmem:[#allocation9 + $0x60] sm:$0xff]
    %v5876 = vld [vmem:[#allocation9 + $0x68] sm:$0xff]
    %v5877 = vld [vmem:[#allocation9 + $0x70] sm:$0xff]
    %v5878 = vld [vmem:[#allocation9 + $0x78] sm:$0xff]
    %v5879 = vld [vmem:[#allocation9 + $0x80] sm:$0xff]
    %v5880 = vld [vmem:[#allocation9 + $0x88] sm:$0xff]
    %v5881 = vld [vmem:[#allocation9 + $0x90] sm:$0xff]
    %v5882 = vld [vmem:[#allocation9 + $0x98] sm:$0xff]
    %v5883 = vld [vmem:[#allocation9 + $0xa0] sm:$0xff]
    %v5884 = vld [vmem:[#allocation9 + $0xa8] sm:$0xff]
    %v5885 = vld [vmem:[#allocation9 + $0xb0] sm:$0xff]
    %v5886 = vld [vmem:[#allocation9 + $0xb8] sm:$0xff]
    %v5887 = vld [vmem:[#allocation9 + $0xc0] sm:$0xff]
    %v5888 = vld [vmem:[#allocation9 + $0xc8] sm:$0xff]
    %v5889 = vld [vmem:[#allocation9 + $0xd0] sm:$0xff]
    %v5890 = vld [vmem:[#allocation9 + $0xd8] sm:$0xff]
    %v5891 = vld [vmem:[#allocation9 + $0xe0] sm:$0xff]
    %v5892 = vld [vmem:[#allocation9 + $0xe8] sm:$0xff]
    %v5893 = vld [vmem:[#allocation9 + $0xf0] sm:$0xff]
    %v5894 = vld [vmem:[#allocation9 + $0xf8] sm:$0xff]
    %v5895 = vld [vmem:[#allocation9 + $0x100] sm:$0xff]
    %v5896 = vld [vmem:[#allocation9 + $0x108] sm:$0xff]
    %v5897 = vld [vmem:[#allocation9 + $0x110] sm:$0xff]
    %v5898 = vld [vmem:[#allocation9 + $0x118] sm:$0xff]
    %v5899 = vld [vmem:[#allocation9 + $0x120] sm:$0xff]
    %v5900 = vld [vmem:[#allocation9 + $0x128] sm:$0xff]
    %v5901 = vld [vmem:[#allocation9 + $0x130] sm:$0xff]
    %v5902 = vld [vmem:[#allocation9 + $0x138] sm:$0xff]
    %v5903 = vld [vmem:[#allocation9 + $0x140] sm:$0xff]
    %v5904 = vld [vmem:[#allocation9 + $0x148] sm:$0xff]
    %v5905 = vld [vmem:[#allocation9 + $0x150] sm:$0xff]
    %v5906 = vld [vmem:[#allocation9 + $0x158] sm:$0xff]
    %v5907 = vld [vmem:[#allocation9 + $0x160] sm:$0xff]
    %v5908 = vld [vmem:[#allocation9 + $0x168] sm:$0xff]
    %v5909 = vld [vmem:[#allocation9 + $0x170] sm:$0xff]
    %v5910 = vld [vmem:[#allocation9 + $0x178] sm:$0xff]
    %v5911 = vld [vmem:[#allocation9 + $0x180] sm:$0xff]
    %v5912 = vld [vmem:[#allocation9 + $0x188] sm:$0xff]
    %v5913 = vld [vmem:[#allocation9 + $0x190] sm:$0xff]
    %v5914 = vld [vmem:[#allocation9 + $0x198] sm:$0xff]
    %v5915 = vld [vmem:[#allocation9 + $0x1a0] sm:$0xff]
    %v5916 = vld [vmem:[#allocation9 + $0x1a8] sm:$0xff]
    %v5917 = vld [vmem:[#allocation9 + $0x1b0] sm:$0xff]
    %v5918 = vld [vmem:[#allocation9 + $0x1b8] sm:$0xff]
    %v5919 = vld [vmem:[#allocation9 + $0x1c0] sm:$0xff]
    %v5920 = vld [vmem:[#allocation9 + $0x1c8] sm:$0xff]
    %v5921 = vld [vmem:[#allocation9 + $0x1d0] sm:$0xff]
    %v5922 = vld [vmem:[#allocation9 + $0x1d8] sm:$0xff]
    %v5923 = vld [vmem:[#allocation9 + $0x1e0] sm:$0xff]
    %v5924 = vld [vmem:[#allocation9 + $0x1e8] sm:$0xff]
    %v5925 = vld [vmem:[#allocation9 + $0x1f0] sm:$0xff]
    %v5926 = vld [vmem:[#allocation9 + $0x1f8] sm:$0xff]
    %v5927 = vsel %vm5799, %v5863, 0.0
    %v5928 = vsel %vm5800, %v5864, 0.0
    %v5929 = vsel %vm5801, %v5865, 0.0
    %v5930 = vsel %vm5802, %v5866, 0.0
    %v5931 = vsel %vm5803, %v5867, 0.0
    %v5932 = vsel %vm5804, %v5868, 0.0
    %v5933 = vsel %vm5805, %v5869, 0.0
    %v5934 = vsel %vm5806, %v5870, 0.0
    %v5935 = vsel %vm5807, %v5871, 0.0
    %v5936 = vsel %vm5808, %v5872, 0.0
    %v5937 = vsel %vm5809, %v5873, 0.0
    %v5938 = vsel %vm5810, %v5874, 0.0
    %v5939 = vsel %vm5811, %v5875, 0.0
    %v5940 = vsel %vm5812, %v5876, 0.0
    %v5941 = vsel %vm5813, %v5877, 0.0
    %v5942 = vsel %vm5814, %v5878, 0.0
    %v5943 = vsel %vm5815, %v5879, 0.0
    %v5944 = vsel %vm5816, %v5880, 0.0
    %v5945 = vsel %vm5817, %v5881, 0.0
    %v5946 = vsel %vm5818, %v5882, 0.0
    %v5947 = vsel %vm5819, %v5883, 0.0
    %v5948 = vsel %vm5820, %v5884, 0.0
    %v5949 = vsel %vm5821, %v5885, 0.0
    %v5950 = vsel %vm5822, %v5886, 0.0
    %v5951 = vsel %vm5823, %v5887, 0.0
    %v5952 = vsel %vm5824, %v5888, 0.0
    %v5953 = vsel %vm5825, %v5889, 0.0
    %v5954 = vsel %vm5826, %v5890, 0.0
    %v5955 = vsel %vm5827, %v5891, 0.0
    %v5956 = vsel %vm5828, %v5892, 0.0
    %v5957 = vsel %vm5829, %v5893, 0.0
    %v5958 = vsel %vm5830, %v5894, 0.0
    %v5959 = vsel %vm5831, %v5895, 0.0
    %v5960 = vsel %vm5832, %v5896, 0.0
    %v5961 = vsel %vm5833, %v5897, 0.0
    %v5962 = vsel %vm5834, %v5898, 0.0
    %v5963 = vsel %vm5835, %v5899, 0.0
    %v5964 = vsel %vm5836, %v5900, 0.0
    %v5965 = vsel %vm5837, %v5901, 0.0
    %v5966 = vsel %vm5838, %v5902, 0.0
    %v5967 = vsel %vm5839, %v5903, 0.0
    %v5968 = vsel %vm5840, %v5904, 0.0
    %v5969 = vsel %vm5841, %v5905, 0.0
    %v5970 = vsel %vm5842, %v5906, 0.0
    %v5971 = vsel %vm5843, %v5907, 0.0
    %v5972 = vsel %vm5844, %v5908, 0.0
    %v5973 = vsel %vm5845, %v5909, 0.0
    %v5974 = vsel %vm5846, %v5910, 0.0
    %v5975 = vsel %vm5847, %v5911, 0.0
    %v5976 = vsel %vm5848, %v5912, 0.0
    %v5977 = vsel %vm5849, %v5913, 0.0
    %v5978 = vsel %vm5850, %v5914, 0.0
    %v5979 = vsel %vm5851, %v5915, 0.0
    %v5980 = vsel %vm5852, %v5916, 0.0
    %v5981 = vsel %vm5853, %v5917, 0.0
    %v5982 = vsel %vm5854, %v5918, 0.0
    %v5983 = vsel %vm5855, %v5919, 0.0
    %v5984 = vsel %vm5856, %v5920, 0.0
    %v5985 = vsel %vm5857, %v5921, 0.0
    %v5986 = vsel %vm5858, %v5922, 0.0
    %v5987 = vsel %vm5859, %v5923, 0.0
    %v5988 = vsel %vm5860, %v5924, 0.0
    %v5989 = vsel %vm5861, %v5925, 0.0
    %v5990 = vsel %vm5862, %v5926, 0.0
    %v5991 = vadd.f32 %v5927, %v5928
    %5992 = vadd.xlane.f32.xlu0 %v5991
    %v5993 = vpop.xlane.xlu0 %5992
    %v5994 = vadd.f32 %v5929, %v5930
    %5995 = vadd.xlane.f32.xlu0 %v5994
    %v5996 = vpop.xlane.xlu0 %5995
    %v5997 = vadd.f32 %v5931, %v5932
    %5998 = vadd.xlane.f32.xlu0 %v5997
    %v5999 = vpop.xlane.xlu0 %5998
    %v6000 = vadd.f32 %v5933, %v5934
    %6001 = vadd.xlane.f32.xlu0 %v6000
    %v6002 = vpop.xlane.xlu0 %6001
    %v6003 = vadd.f32 %v5935, %v5936
    %6004 = vadd.xlane.f32.xlu0 %v6003
    %v6005 = vpop.xlane.xlu0 %6004
    %v6006 = vadd.f32 %v5937, %v5938
    %6007 = vadd.xlane.f32.xlu0 %v6006
    %v6008 = vpop.xlane.xlu0 %6007
    %v6009 = vadd.f32 %v5939, %v5940
    %6010 = vadd.xlane.f32.xlu0 %v6009
    %v6011 = vpop.xlane.xlu0 %6010
    %v6012 = vadd.f32 %v5941, %v5942
    %6013 = vadd.xlane.f32.xlu0 %v6012
    %v6014 = vpop.xlane.xlu0 %6013
    %v6015 = vadd.f32 %v5943, %v5944
    %6016 = vadd.xlane.f32.xlu0 %v6015
    %v6017 = vpop.xlane.xlu0 %6016
    %v6018 = vadd.f32 %v5945, %v5946
    %6019 = vadd.xlane.f32.xlu0 %v6018
    %v6020 = vpop.xlane.xlu0 %6019
    %v6021 = vadd.f32 %v5947, %v5948
    %6022 = vadd.xlane.f32.xlu0 %v6021
    %v6023 = vpop.xlane.xlu0 %6022
    %v6024 = vadd.f32 %v5949, %v5950
    %6025 = vadd.xlane.f32.xlu0 %v6024
    %v6026 = vpop.xlane.xlu0 %6025
    %v6027 = vadd.f32 %v5951, %v5952
    %6028 = vadd.xlane.f32.xlu0 %v6027
    %v6029 = vpop.xlane.xlu0 %6028
    %v6030 = vadd.f32 %v5953, %v5954
    %6031 = vadd.xlane.f32.xlu0 %v6030
    %v6032 = vpop.xlane.xlu0 %6031
    %v6033 = vadd.f32 %v5955, %v5956
    %6034 = vadd.xlane.f32.xlu0 %v6033
    %v6035 = vpop.xlane.xlu0 %6034
    %v6036 = vadd.f32 %v5957, %v5958
    %6037 = vadd.xlane.f32.xlu0 %v6036
    %v6038 = vpop.xlane.xlu0 %6037
    %v6039 = vadd.f32 %v5959, %v5960
    %6040 = vadd.xlane.f32.xlu0 %v6039
    %v6041 = vpop.xlane.xlu0 %6040
    %v6042 = vadd.f32 %v5961, %v5962
    %6043 = vadd.xlane.f32.xlu0 %v6042
    %v6044 = vpop.xlane.xlu0 %6043
    %v6045 = vadd.f32 %v5963, %v5964
    %6046 = vadd.xlane.f32.xlu0 %v6045
    %v6047 = vpop.xlane.xlu0 %6046
    %v6048 = vadd.f32 %v5965, %v5966
    %6049 = vadd.xlane.f32.xlu0 %v6048
    %v6050 = vpop.xlane.xlu0 %6049
    %v6051 = vadd.f32 %v5967, %v5968
    %6052 = vadd.xlane.f32.xlu0 %v6051
    %v6053 = vpop.xlane.xlu0 %6052
    %v6054 = vadd.f32 %v5969, %v5970
    %6055 = vadd.xlane.f32.xlu0 %v6054
    %v6056 = vpop.xlane.xlu0 %6055
    %v6057 = vadd.f32 %v5971, %v5972
    %6058 = vadd.xlane.f32.xlu0 %v6057
    %v6059 = vpop.xlane.xlu0 %6058
    %v6060 = vadd.f32 %v5973, %v5974
    %6061 = vadd.xlane.f32.xlu0 %v6060
    %v6062 = vpop.xlane.xlu0 %6061
    %v6063 = vadd.f32 %v5975, %v5976
    %6064 = vadd.xlane.f32.xlu0 %v6063
    %v6065 = vpop.xlane.xlu0 %6064
    %v6066 = vadd.f32 %v5977, %v5978
    %6067 = vadd.xlane.f32.xlu0 %v6066
    %v6068 = vpop.xlane.xlu0 %6067
    %v6069 = vadd.f32 %v5979, %v5980
    %6070 = vadd.xlane.f32.xlu0 %v6069
    %v6071 = vpop.xlane.xlu0 %6070
    %v6072 = vadd.f32 %v5981, %v5982
    %6073 = vadd.xlane.f32.xlu0 %v6072
    %v6074 = vpop.xlane.xlu0 %6073
    %v6075 = vadd.f32 %v5983, %v5984
    %6076 = vadd.xlane.f32.xlu0 %v6075
    %v6077 = vpop.xlane.xlu0 %6076
    %v6078 = vadd.f32 %v5985, %v5986
    %6079 = vadd.xlane.f32.xlu0 %v6078
    %v6080 = vpop.xlane.xlu0 %6079
    %v6081 = vadd.f32 %v5987, %v5988
    %6082 = vadd.xlane.f32.xlu0 %v6081
    %v6083 = vpop.xlane.xlu0 %6082
    %v6084 = vadd.f32 %v5989, %v5990
    %6085 = vadd.xlane.f32.xlu0 %v6084
    %v6086 = vpop.xlane.xlu0 %6085
    %v6087 = vmul.f32 %v3785, 2.0
    %v6088 = vmul.f32 %v3788, 2.0
    %v6089 = vmul.f32 %v3791, 2.0
    %v6090 = vmul.f32 %v3794, 2.0
    %v6091 = vmul.f32 %v3797, 2.0
    %v6092 = vmul.f32 %v3800, 2.0
    %v6093 = vmul.f32 %v3803, 2.0
    %v6094 = vmul.f32 %v3806, 2.0
    %v6095 = vmul.f32 %v3809, 2.0
    %v6096 = vmul.f32 %v3812, 2.0
    %v6097 = vmul.f32 %v3815, 2.0
    %v6098 = vmul.f32 %v3818, 2.0
    %v6099 = vmul.f32 %v3821, 2.0
    %v6100 = vmul.f32 %v3824, 2.0
    %v6101 = vmul.f32 %v3827, 2.0
    %v6102 = vmul.f32 %v3830, 2.0
    %v6103 = vmul.f32 %v3833, 2.0
    %v6104 = vmul.f32 %v3836, 2.0
    %v6105 = vmul.f32 %v3839, 2.0
    %v6106 = vmul.f32 %v3842, 2.0
    %v6107 = vmul.f32 %v3845, 2.0
    %v6108 = vmul.f32 %v3848, 2.0
    %v6109 = vmul.f32 %v3851, 2.0
    %v6110 = vmul.f32 %v3854, 2.0
    %v6111 = vmul.f32 %v3857, 2.0
    %v6112 = vmul.f32 %v3860, 2.0
    %v6113 = vmul.f32 %v3863, 2.0
    %v6114 = vmul.f32 %v3866, 2.0
    %v6115 = vmul.f32 %v3869, 2.0
    %v6116 = vmul.f32 %v3872, 2.0
    %v6117 = vmul.f32 %v3875, 2.0
    %v6118 = vmul.f32 %v3878, 2.0
    %v6119 = vadd.f32 %v3945, 1e-05
    %v6120 = vadd.f32 %v3948, 1e-05
    %v6121 = vadd.f32 %v3951, 1e-05
    %v6122 = vadd.f32 %v3954, 1e-05
    %v6123 = vadd.f32 %v3957, 1e-05
    %v6124 = vadd.f32 %v3960, 1e-05
    %v6125 = vadd.f32 %v3963, 1e-05
    %v6126 = vadd.f32 %v3966, 1e-05
    %v6127 = vadd.f32 %v3969, 1e-05
    %v6128 = vadd.f32 %v3972, 1e-05
    %v6129 = vadd.f32 %v3975, 1e-05
    %v6130 = vadd.f32 %v3978, 1e-05
    %v6131 = vadd.f32 %v3981, 1e-05
    %v6132 = vadd.f32 %v3984, 1e-05
    %v6133 = vadd.f32 %v3987, 1e-05
    %v6134 = vadd.f32 %v3990, 1e-05
    %v6135 = vadd.f32 %v3993, 1e-05
    %v6136 = vadd.f32 %v3996, 1e-05
    %v6137 = vadd.f32 %v3999, 1e-05
    %v6138 = vadd.f32 %v4002, 1e-05
    %v6139 = vadd.f32 %v4005, 1e-05
    %v6140 = vadd.f32 %v4008, 1e-05
    %v6141 = vadd.f32 %v4011, 1e-05
    %v6142 = vadd.f32 %v4014, 1e-05
    %v6143 = vadd.f32 %v4017, 1e-05
    %v6144 = vadd.f32 %v4020, 1e-05
    %v6145 = vadd.f32 %v4023, 1e-05
    %v6146 = vadd.f32 %v4026, 1e-05
    %v6147 = vadd.f32 %v4029, 1e-05
    %v6148 = vadd.f32 %v4032, 1e-05
    %v6149 = vadd.f32 %v4035, 1e-05
    %v6150 = vadd.f32 %v4038, 1e-05
    %vm6151 = vcmp.gt.f32.partialorder %v6087, %v6119
    %vm6152 = vcmp.gt.f32.partialorder %v6088, %v6120
    %vm6153 = vcmp.gt.f32.partialorder %v6089, %v6121
    %vm6154 = vcmp.gt.f32.partialorder %v6090, %v6122
    %vm6155 = vcmp.gt.f32.partialorder %v6091, %v6123
    %vm6156 = vcmp.gt.f32.partialorder %v6092, %v6124
    %vm6157 = vcmp.gt.f32.partialorder %v6093, %v6125
    %vm6158 = vcmp.gt.f32.partialorder %v6094, %v6126
    %vm6159 = vcmp.gt.f32.partialorder %v6095, %v6127
    %vm6160 = vcmp.gt.f32.partialorder %v6096, %v6128
    %vm6161 = vcmp.gt.f32.partialorder %v6097, %v6129
    %vm6162 = vcmp.gt.f32.partialorder %v6098, %v6130
    %vm6163 = vcmp.gt.f32.partialorder %v6099, %v6131
    %vm6164 = vcmp.gt.f32.partialorder %v6100, %v6132
    %vm6165 = vcmp.gt.f32.partialorder %v6101, %v6133
    %vm6166 = vcmp.gt.f32.partialorder %v6102, %v6134
    %vm6167 = vcmp.gt.f32.partialorder %v6103, %v6135
    %vm6168 = vcmp.gt.f32.partialorder %v6104, %v6136
    %vm6169 = vcmp.gt.f32.partialorder %v6105, %v6137
    %vm6170 = vcmp.gt.f32.partialorder %v6106, %v6138
    %vm6171 = vcmp.gt.f32.partialorder %v6107, %v6139
    %vm6172 = vcmp.gt.f32.partialorder %v6108, %v6140
    %vm6173 = vcmp.gt.f32.partialorder %v6109, %v6141
    %vm6174 = vcmp.gt.f32.partialorder %v6110, %v6142
    %vm6175 = vcmp.gt.f32.partialorder %v6111, %v6143
    %vm6176 = vcmp.gt.f32.partialorder %v6112, %v6144
    %vm6177 = vcmp.gt.f32.partialorder %v6113, %v6145
    %vm6178 = vcmp.gt.f32.partialorder %v6114, %v6146
    %vm6179 = vcmp.gt.f32.partialorder %v6115, %v6147
    %vm6180 = vcmp.gt.f32.partialorder %v6116, %v6148
    %vm6181 = vcmp.gt.f32.partialorder %v6117, %v6149
    %vm6182 = vcmp.gt.f32.partialorder %v6118, %v6150
    %v6183 = vmul.f32 %v4105, 2.0
    %v6184 = vmul.f32 %v4108, 2.0
    %v6185 = vmul.f32 %v4111, 2.0
    %v6186 = vmul.f32 %v4114, 2.0
    %v6187 = vmul.f32 %v4117, 2.0
    %v6188 = vmul.f32 %v4120, 2.0
    %v6189 = vmul.f32 %v4123, 2.0
    %v6190 = vmul.f32 %v4126, 2.0
    %v6191 = vmul.f32 %v4129, 2.0
    %v6192 = vmul.f32 %v4132, 2.0
    %v6193 = vmul.f32 %v4135, 2.0
    %v6194 = vmul.f32 %v4138, 2.0
    %v6195 = vmul.f32 %v4141, 2.0
    %v6196 = vmul.f32 %v4144, 2.0
    %v6197 = vmul.f32 %v4147, 2.0
    %v6198 = vmul.f32 %v4150, 2.0
    %v6199 = vmul.f32 %v4153, 2.0
    %v6200 = vmul.f32 %v4156, 2.0
    %v6201 = vmul.f32 %v4159, 2.0
    %v6202 = vmul.f32 %v4162, 2.0
    %v6203 = vmul.f32 %v4165, 2.0
    %v6204 = vmul.f32 %v4168, 2.0
    %v6205 = vmul.f32 %v4171, 2.0
    %v6206 = vmul.f32 %v4174, 2.0
    %v6207 = vmul.f32 %v4177, 2.0
    %v6208 = vmul.f32 %v4180, 2.0
    %v6209 = vmul.f32 %v4183, 2.0
    %v6210 = vmul.f32 %v4186, 2.0
    %v6211 = vmul.f32 %v4189, 2.0
    %v6212 = vmul.f32 %v4192, 2.0
    %v6213 = vmul.f32 %v4195, 2.0
    %v6214 = vmul.f32 %v4198, 2.0
    %v6215 = vadd.f32 %v4265, 1e-05
    %v6216 = vadd.f32 %v4268, 1e-05
    %v6217 = vadd.f32 %v4271, 1e-05
    %v6218 = vadd.f32 %v4274, 1e-05
    %v6219 = vadd.f32 %v4277, 1e-05
    %v6220 = vadd.f32 %v4280, 1e-05
    %v6221 = vadd.f32 %v4283, 1e-05
    %v6222 = vadd.f32 %v4286, 1e-05
    %v6223 = vadd.f32 %v4289, 1e-05
    %v6224 = vadd.f32 %v4292, 1e-05
    %v6225 = vadd.f32 %v4295, 1e-05
    %v6226 = vadd.f32 %v4298, 1e-05
    %v6227 = vadd.f32 %v4301, 1e-05
    %v6228 = vadd.f32 %v4304, 1e-05
    %v6229 = vadd.f32 %v4307, 1e-05
    %v6230 = vadd.f32 %v4310, 1e-05
    %v6231 = vadd.f32 %v4313, 1e-05
    %v6232 = vadd.f32 %v4316, 1e-05
    %v6233 = vadd.f32 %v4319, 1e-05
    %v6234 = vadd.f32 %v4322, 1e-05
    %v6235 = vadd.f32 %v4325, 1e-05
    %v6236 = vadd.f32 %v4328, 1e-05
    %v6237 = vadd.f32 %v4331, 1e-05
    %v6238 = vadd.f32 %v4334, 1e-05
    %v6239 = vadd.f32 %v4337, 1e-05
    %v6240 = vadd.f32 %v4340, 1e-05
    %v6241 = vadd.f32 %v4343, 1e-05
    %v6242 = vadd.f32 %v4346, 1e-05
    %v6243 = vadd.f32 %v4349, 1e-05
    %v6244 = vadd.f32 %v4352, 1e-05
    %v6245 = vadd.f32 %v4355, 1e-05
    %v6246 = vadd.f32 %v4358, 1e-05
    %vm6247 = vcmp.gt.f32.partialorder %v6183, %v6215
    %vm6248 = vcmp.gt.f32.partialorder %v6184, %v6216
    %vm6249 = vcmp.gt.f32.partialorder %v6185, %v6217
    %vm6250 = vcmp.gt.f32.partialorder %v6186, %v6218
    %vm6251 = vcmp.gt.f32.partialorder %v6187, %v6219
    %vm6252 = vcmp.gt.f32.partialorder %v6188, %v6220
    %vm6253 = vcmp.gt.f32.partialorder %v6189, %v6221
    %vm6254 = vcmp.gt.f32.partialorder %v6190, %v6222
    %vm6255 = vcmp.gt.f32.partialorder %v6191, %v6223
    %vm6256 = vcmp.gt.f32.partialorder %v6192, %v6224
    %vm6257 = vcmp.gt.f32.partialorder %v6193, %v6225
    %vm6258 = vcmp.gt.f32.partialorder %v6194, %v6226
    %vm6259 = vcmp.gt.f32.partialorder %v6195, %v6227
    %vm6260 = vcmp.gt.f32.partialorder %v6196, %v6228
    %vm6261 = vcmp.gt.f32.partialorder %v6197, %v6229
    %vm6262 = vcmp.gt.f32.partialorder %v6198, %v6230
    %vm6263 = vcmp.gt.f32.partialorder %v6199, %v6231
    %vm6264 = vcmp.gt.f32.partialorder %v6200, %v6232
    %vm6265 = vcmp.gt.f32.partialorder %v6201, %v6233
    %vm6266 = vcmp.gt.f32.partialorder %v6202, %v6234
    %vm6267 = vcmp.gt.f32.partialorder %v6203, %v6235
    %vm6268 = vcmp.gt.f32.partialorder %v6204, %v6236
    %vm6269 = vcmp.gt.f32.partialorder %v6205, %v6237
    %vm6270 = vcmp.gt.f32.partialorder %v6206, %v6238
    %vm6271 = vcmp.gt.f32.partialorder %v6207, %v6239
    %vm6272 = vcmp.gt.f32.partialorder %v6208, %v6240
    %vm6273 = vcmp.gt.f32.partialorder %v6209, %v6241
    %vm6274 = vcmp.gt.f32.partialorder %v6210, %v6242
    %vm6275 = vcmp.gt.f32.partialorder %v6211, %v6243
    %vm6276 = vcmp.gt.f32.partialorder %v6212, %v6244
    %vm6277 = vcmp.gt.f32.partialorder %v6213, %v6245
    %vm6278 = vcmp.gt.f32.partialorder %v6214, %v6246
    %v6279 = vsel %vm6151, %v5129, 0.0
    %v6280 = vsel %vm6152, %v5132, 0.0
    %v6281 = vsel %vm6153, %v5135, 0.0
    %v6282 = vsel %vm6154, %v5138, 0.0
    %v6283 = vsel %vm6155, %v5141, 0.0
    %v6284 = vsel %vm6156, %v5144, 0.0
    %v6285 = vsel %vm6157, %v5147, 0.0
    %v6286 = vsel %vm6158, %v5150, 0.0
    %v6287 = vsel %vm6159, %v5153, 0.0
    %v6288 = vsel %vm6160, %v5156, 0.0
    %v6289 = vsel %vm6161, %v5159, 0.0
    %v6290 = vsel %vm6162, %v5162, 0.0
    %v6291 = vsel %vm6163, %v5165, 0.0
    %v6292 = vsel %vm6164, %v5168, 0.0
    %v6293 = vsel %vm6165, %v5171, 0.0
    %v6294 = vsel %vm6166, %v5174, 0.0
    %v6295 = vsel %vm6167, %v5177, 0.0
    %v6296 = vsel %vm6168, %v5180, 0.0
    %v6297 = vsel %vm6169, %v5183, 0.0
    %v6298 = vsel %vm6170, %v5186, 0.0
    %v6299 = vsel %vm6171, %v5189, 0.0
    %v6300 = vsel %vm6172, %v5192, 0.0
    %v6301 = vsel %vm6173, %v5195, 0.0
    %v6302 = vsel %vm6174, %v5198, 0.0
    %v6303 = vsel %vm6175, %v5201, 0.0
    %v6304 = vsel %vm6176, %v5204, 0.0
    %v6305 = vsel %vm6177, %v5207, 0.0
    %v6306 = vsel %vm6178, %v5210, 0.0
    %v6307 = vsel %vm6179, %v5213, 0.0
    %v6308 = vsel %vm6180, %v5216, 0.0
    %v6309 = vsel %vm6181, %v5219, 0.0
    %v6310 = vsel %vm6182, %v5222, 0.0
    %v6311 = vsel %vm6247, %v5993, 0.0
    %v6312 = vsel %vm6248, %v5996, 0.0
    %v6313 = vsel %vm6249, %v5999, 0.0
    %v6314 = vsel %vm6250, %v6002, 0.0
    %v6315 = vsel %vm6251, %v6005, 0.0
    %v6316 = vsel %vm6252, %v6008, 0.0
    %v6317 = vsel %vm6253, %v6011, 0.0
    %v6318 = vsel %vm6254, %v6014, 0.0
    %v6319 = vsel %vm6255, %v6017, 0.0
    %v6320 = vsel %vm6256, %v6020, 0.0
    %v6321 = vsel %vm6257, %v6023, 0.0
    %v6322 = vsel %vm6258, %v6026, 0.0
    %v6323 = vsel %vm6259, %v6029, 0.0
    %v6324 = vsel %vm6260, %v6032, 0.0
    %v6325 = vsel %vm6261, %v6035, 0.0
    %v6326 = vsel %vm6262, %v6038, 0.0
    %v6327 = vsel %vm6263, %v6041, 0.0
    %v6328 = vsel %vm6264, %v6044, 0.0
    %v6329 = vsel %vm6265, %v6047, 0.0
    %v6330 = vsel %vm6266, %v6050, 0.0
    %v6331 = vsel %vm6267, %v6053, 0.0
    %v6332 = vsel %vm6268, %v6056, 0.0
    %v6333 = vsel %vm6269, %v6059, 0.0
    %v6334 = vsel %vm6270, %v6062, 0.0
    %v6335 = vsel %vm6271, %v6065, 0.0
    %v6336 = vsel %vm6272, %v6068, 0.0
    %v6337 = vsel %vm6273, %v6071, 0.0
    %v6338 = vsel %vm6274, %v6074, 0.0
    %v6339 = vsel %vm6275, %v6077, 0.0
    %v6340 = vsel %vm6276, %v6080, 0.0
    %v6341 = vsel %vm6277, %v6083, 0.0
    %v6342 = vsel %vm6278, %v6086, 0.0
    %v6343 = vadd.f32 %v6279, %v6311
    %v6344 = vadd.f32 %v6280, %v6312
    %v6345 = vadd.f32 %v6281, %v6313
    %v6346 = vadd.f32 %v6282, %v6314
    %v6347 = vadd.f32 %v6283, %v6315
    %v6348 = vadd.f32 %v6284, %v6316
    %v6349 = vadd.f32 %v6285, %v6317
    %v6350 = vadd.f32 %v6286, %v6318
    %v6351 = vadd.f32 %v6287, %v6319
    %v6352 = vadd.f32 %v6288, %v6320
    %v6353 = vadd.f32 %v6289, %v6321
    %v6354 = vadd.f32 %v6290, %v6322
    %v6355 = vadd.f32 %v6291, %v6323
    %v6356 = vadd.f32 %v6292, %v6324
    %v6357 = vadd.f32 %v6293, %v6325
    %v6358 = vadd.f32 %v6294, %v6326
    %v6359 = vadd.f32 %v6295, %v6327
    %v6360 = vadd.f32 %v6296, %v6328
    %v6361 = vadd.f32 %v6297, %v6329
    %v6362 = vadd.f32 %v6298, %v6330
    %v6363 = vadd.f32 %v6299, %v6331
    %v6364 = vadd.f32 %v6300, %v6332
    %v6365 = vadd.f32 %v6301, %v6333
    %v6366 = vadd.f32 %v6302, %v6334
    %v6367 = vadd.f32 %v6303, %v6335
    %v6368 = vadd.f32 %v6304, %v6336
    %v6369 = vadd.f32 %v6305, %v6337
    %v6370 = vadd.f32 %v6306, %v6338
    %v6371 = vadd.f32 %v6307, %v6339
    %v6372 = vadd.f32 %v6308, %v6340
    %v6373 = vadd.f32 %v6309, %v6341
    %v6374 = vadd.f32 %v6310, %v6342
    %s6375 = smul.u32 0, 256
    %v6376 = vlaneseq
    %v6377 = vshrl.u32 %v6376, 7
    %v6378 = vadd.s32 %v6377, 8
    %v6379 = vadd.s32 %v6377, 16
    %v6380 = vadd.s32 %v6377, 24
    %v6381 = vadd.s32 %v6377, 32
    %v6382 = vadd.s32 %v6377, 40
    %v6383 = vadd.s32 %v6377, 48
    %v6384 = vadd.s32 %v6377, 56
    %v6385 = vadd.s32 %v6377, 64
    %v6386 = vadd.s32 %v6377, 72
    %v6387 = vadd.s32 %v6377, 80
    %v6388 = vadd.s32 %v6377, 88
    %v6389 = vadd.s32 %v6377, 96
    %v6390 = vadd.s32 %v6377, 104
    %v6391 = vadd.s32 %v6377, 112
    %v6392 = vadd.s32 %v6377, 120
    %v6393 = vadd.s32 %v6377, 128
    %v6394 = vadd.s32 %v6377, 136
    %v6395 = vadd.s32 %v6377, 144
    %v6396 = vadd.s32 %v6377, 152
    %v6397 = vadd.s32 %v6377, 160
    %v6398 = vadd.s32 %v6377, 168
    %v6399 = vadd.s32 %v6377, 176
    %v6400 = vadd.s32 %v6377, 184
    %v6401 = vadd.s32 %v6377, 192
    %v6402 = vadd.s32 %v6377, 200
    %v6403 = vadd.s32 %v6377, 208
    %v6404 = vadd.s32 %v6377, 216
    %v6405 = vadd.s32 %v6377, 224
    %v6406 = vadd.s32 %v6377, 232
    %v6407 = vadd.s32 %v6377, 240
    %v6408 = vadd.s32 %v6377, 248
    %v6409 = vstv %s6375
    %v6410 = vadd.s32 %v6409, %v6377
    %v6411 = vadd.s32 %v6409, %v6378
    %v6412 = vadd.s32 %v6409, %v6379
    %v6413 = vadd.s32 %v6409, %v6380
    %v6414 = vadd.s32 %v6409, %v6381
    %v6415 = vadd.s32 %v6409, %v6382
    %v6416 = vadd.s32 %v6409, %v6383
    %v6417 = vadd.s32 %v6409, %v6384
    %v6418 = vadd.s32 %v6409, %v6385
    %v6419 = vadd.s32 %v6409, %v6386
    %v6420 = vadd.s32 %v6409, %v6387
    %v6421 = vadd.s32 %v6409, %v6388
    %v6422 = vadd.s32 %v6409, %v6389
    %v6423 = vadd.s32 %v6409, %v6390
    %v6424 = vadd.s32 %v6409, %v6391
    %v6425 = vadd.s32 %v6409, %v6392
    %v6426 = vadd.s32 %v6409, %v6393
    %v6427 = vadd.s32 %v6409, %v6394
    %v6428 = vadd.s32 %v6409, %v6395
    %v6429 = vadd.s32 %v6409, %v6396
    %v6430 = vadd.s32 %v6409, %v6397
    %v6431 = vadd.s32 %v6409, %v6398
    %v6432 = vadd.s32 %v6409, %v6399
    %v6433 = vadd.s32 %v6409, %v6400
    %v6434 = vadd.s32 %v6409, %v6401
    %v6435 = vadd.s32 %v6409, %v6402
    %v6436 = vadd.s32 %v6409, %v6403
    %v6437 = vadd.s32 %v6409, %v6404
    %v6438 = vadd.s32 %v6409, %v6405
    %v6439 = vadd.s32 %v6409, %v6406
    %v6440 = vadd.s32 %v6409, %v6407
    %v6441 = vadd.s32 %v6409, %v6408
    %vm6442 = vcmp.lt.s32.totalorder %v6410, 200
    %vm6443 = vcmp.lt.s32.totalorder %v6411, 200
    %vm6444 = vcmp.lt.s32.totalorder %v6412, 200
    %vm6445 = vcmp.lt.s32.totalorder %v6413, 200
    %vm6446 = vcmp.lt.s32.totalorder %v6414, 200
    %vm6447 = vcmp.lt.s32.totalorder %v6415, 200
    %vm6448 = vcmp.lt.s32.totalorder %v6416, 200
    %vm6449 = vcmp.lt.s32.totalorder %v6417, 200
    %vm6450 = vcmp.lt.s32.totalorder %v6418, 200
    %vm6451 = vcmp.lt.s32.totalorder %v6419, 200
    %vm6452 = vcmp.lt.s32.totalorder %v6420, 200
    %vm6453 = vcmp.lt.s32.totalorder %v6421, 200
    %vm6454 = vcmp.lt.s32.totalorder %v6422, 200
    %vm6455 = vcmp.lt.s32.totalorder %v6423, 200
    %vm6456 = vcmp.lt.s32.totalorder %v6424, 200
    %vm6457 = vcmp.lt.s32.totalorder %v6425, 200
    %vm6458 = vcmp.lt.s32.totalorder %v6426, 200
    %vm6459 = vcmp.lt.s32.totalorder %v6427, 200
    %vm6460 = vcmp.lt.s32.totalorder %v6428, 200
    %vm6461 = vcmp.lt.s32.totalorder %v6429, 200
    %vm6462 = vcmp.lt.s32.totalorder %v6430, 200
    %vm6463 = vcmp.lt.s32.totalorder %v6431, 200
    %vm6464 = vcmp.lt.s32.totalorder %v6432, 200
    %vm6465 = vcmp.lt.s32.totalorder %v6433, 200
    %vm6466 = vcmp.lt.s32.totalorder %v6434, 200
    %vm6467 = vcmp.lt.s32.totalorder %v6435, 200
    %vm6468 = vcmp.lt.s32.totalorder %v6436, 200
    %vm6469 = vcmp.lt.s32.totalorder %v6437, 200
    %vm6470 = vcmp.lt.s32.totalorder %v6438, 200
    %vm6471 = vcmp.lt.s32.totalorder %v6439, 200
    %vm6472 = vcmp.lt.s32.totalorder %v6440, 200
    %vm6473 = vcmp.lt.s32.totalorder %v6441, 200
    %v6474 = vsel %vm6442, %v6343, 0.0
    %v6475 = vsel %vm6443, %v6344, 0.0
    %v6476 = vsel %vm6444, %v6345, 0.0
    %v6477 = vsel %vm6445, %v6346, 0.0
    %v6478 = vsel %vm6446, %v6347, 0.0
    %v6479 = vsel %vm6447, %v6348, 0.0
    %v6480 = vsel %vm6448, %v6349, 0.0
    %v6481 = vsel %vm6449, %v6350, 0.0
    %v6482 = vsel %vm6450, %v6351, 0.0
    %v6483 = vsel %vm6451, %v6352, 0.0
    %v6484 = vsel %vm6452, %v6353, 0.0
    %v6485 = vsel %vm6453, %v6354, 0.0
    %v6486 = vsel %vm6454, %v6355, 0.0
    %v6487 = vsel %vm6455, %v6356, 0.0
    %v6488 = vsel %vm6456, %v6357, 0.0
    %v6489 = vsel %vm6457, %v6358, 0.0
    %v6490 = vsel %vm6458, %v6359, 0.0
    %v6491 = vsel %vm6459, %v6360, 0.0
    %v6492 = vsel %vm6460, %v6361, 0.0
    %v6493 = vsel %vm6461, %v6362, 0.0
    %v6494 = vsel %vm6462, %v6363, 0.0
    %v6495 = vsel %vm6463, %v6364, 0.0
    %v6496 = vsel %vm6464, %v6365, 0.0
    %v6497 = vsel %vm6465, %v6366, 0.0
    %v6498 = vsel %vm6466, %v6367, 0.0
    %v6499 = vsel %vm6467, %v6368, 0.0
    %v6500 = vsel %vm6468, %v6369, 0.0
    %v6501 = vsel %vm6469, %v6370, 0.0
    %v6502 = vsel %vm6470, %v6371, 0.0
    %v6503 = vsel %vm6471, %v6372, 0.0
    %v6504 = vsel %vm6472, %v6373, 0.0
    %v6505 = vsel %vm6473, %v6374, 0.0
    %vm6506 = vcmask 7168
    %6507 = vst.msk [vmem:[%s5] sm:$0xff] %vm6506, %v6474
    %6508 = vst.msk [vmem:[%s5 + $0x8] sm:$0xff] %vm6506, %v6475
    %6509 = vst.msk [vmem:[%s5 + $0x10] sm:$0xff] %vm6506, %v6476
    %6510 = vst.msk [vmem:[%s5 + $0x18] sm:$0xff] %vm6506, %v6477
    %6511 = vst.msk [vmem:[%s5 + $0x20] sm:$0xff] %vm6506, %v6478
    %6512 = vst.msk [vmem:[%s5 + $0x28] sm:$0xff] %vm6506, %v6479
    %6513 = vst.msk [vmem:[%s5 + $0x30] sm:$0xff] %vm6506, %v6480
    %6514 = vst.msk [vmem:[%s5 + $0x38] sm:$0xff] %vm6506, %v6481
    %6515 = vst.msk [vmem:[%s5 + $0x40] sm:$0xff] %vm6506, %v6482
    %6516 = vst.msk [vmem:[%s5 + $0x48] sm:$0xff] %vm6506, %v6483
    %6517 = vst.msk [vmem:[%s5 + $0x50] sm:$0xff] %vm6506, %v6484
    %6518 = vst.msk [vmem:[%s5 + $0x58] sm:$0xff] %vm6506, %v6485
    %6519 = vst.msk [vmem:[%s5 + $0x60] sm:$0xff] %vm6506, %v6486
    %6520 = vst.msk [vmem:[%s5 + $0x68] sm:$0xff] %vm6506, %v6487
    %6521 = vst.msk [vmem:[%s5 + $0x70] sm:$0xff] %vm6506, %v6488
    %6522 = vst.msk [vmem:[%s5 + $0x78] sm:$0xff] %vm6506, %v6489
    %6523 = vst.msk [vmem:[%s5 + $0x80] sm:$0xff] %vm6506, %v6490
    %6524 = vst.msk [vmem:[%s5 + $0x88] sm:$0xff] %vm6506, %v6491
    %6525 = vst.msk [vmem:[%s5 + $0x90] sm:$0xff] %vm6506, %v6492
    %6526 = vst.msk [vmem:[%s5 + $0x98] sm:$0xff] %vm6506, %v6493
    %6527 = vst.msk [vmem:[%s5 + $0xa0] sm:$0xff] %vm6506, %v6494
    %6528 = vst.msk [vmem:[%s5 + $0xa8] sm:$0xff] %vm6506, %v6495
    %6529 = vst.msk [vmem:[%s5 + $0xb0] sm:$0xff] %vm6506, %v6496
    %6530 = vst.msk [vmem:[%s5 + $0xb8] sm:$0xff] %vm6506, %v6497
    %6531 = vst.msk [vmem:[%s5 + $0xc0] sm:$0xff] %vm6506, %v6498
    %6532 = vst.msk [vmem:[%s5 + $0xc8] sm:$0xff] %vm6506, %v6499
    %6533 = vst.msk [vmem:[%s5 + $0xd0] sm:$0xff] %vm6506, %v6500
    %6534 = vst.msk [vmem:[%s5 + $0xd8] sm:$0xff] %vm6506, %v6501
    %6535 = vst.msk [vmem:[%s5 + $0xe0] sm:$0xff] %vm6506, %v6502
    %6536 = vst.msk [vmem:[%s5 + $0xe8] sm:$0xff] %vm6506, %v6503
    %6537 = vst.msk [vmem:[%s5 + $0xf0] sm:$0xff] %vm6506, %v6504
    %6538 = vst.msk [vmem:[%s5 + $0xf8] sm:$0xff] %vm6506, %v6505
  $region33: #{tpu_custom_call.1} parent=0 // pred_fallthru
    _
  // Predicated region
  $region34: #{tpu_custom_call.1} parent=0 // pred_check
    _
  $region35: #{tpu_custom_call.1} parent=0 // pred_check_branch
    %6540 = sbr.rel (0) target = $region37
  $region36: #{tpu_custom_call.1} parent=0 // pred_region
    _
  $region37: #{tpu_custom_call.1} parent=0 // pred_fallthru
    _
  // Predicated region
  $region38: #{tpu_custom_call.1} parent=0 // pred_check
    _
  $region39: #{tpu_custom_call.1} parent=0 // pred_check_branch
    %6542 = sbr.rel (0) target = $region41
  $region40: #{tpu_custom_call.1} parent=0 // pred_region
    _
  $region41: #{tpu_custom_call.1} parent=0 // pred_fallthru
    _

</llo_original>
